<compile_context>
chip_gen: v5e
topology: v5e:2x2
jax: 0.10.0
libtpu: 0.0.40
codegen_flags: <defaults>
</compile_context>

<pallas_src>
import functools

import jax
import jax.numpy as jnp
from jax import lax
from jax.experimental import pallas as pl
from jax.experimental.pallas import tpu as pltpu

_NUM_HEADS = 8     # nn.MultiheadAttention(in_features, 8)
_LN_EPS = 1e-5     # nn.LayerNorm default eps


def _default_vmem_limit():
    # Generation-aware scoped-VMEM budget: ~48 MiB on 64 MiB parts (v7x),
    # ~100 MiB on 128 MiB parts (v5e / v6e).
    try:
        cap = pltpu.get_tpu_info().vmem_capacity_bytes
    except Exception:
        return 48 * 1024 * 1024
    if cap >= 120 * 1024 * 1024:
        return 100 * 1024 * 1024
    return min(48 * 1024 * 1024, int(cap * 3 // 4))


def _erf(x):
    # Abramowitz & Stegun 7.1.26 (max abs err ~1.5e-7): matches torch.nn.GELU's
    # exact erf-based GELU to float32 tolerance, lowers with exp only (EUP).
    a1, a2, a3, a4, a5 = (0.254829592, -0.284496736, 1.421413741,
                          -1.453152027, 1.061405429)
    pcoef = 0.3275911
    sgn = jnp.where(x >= 0.0, 1.0, -1.0)
    ax = jnp.abs(x)
    t = 1.0 / (1.0 + pcoef * ax)
    poly = ((((a5 * t + a4) * t + a3) * t + a2) * t + a1) * t
    return sgn * (1.0 - poly * jnp.exp(-ax * ax))


def _gelu_exact(x):
    return 0.5 * x * (1.0 + _erf(x * 0.7071067811865476))


def _encoder_kernel(x_ref, ln_w_ref, ln_b_ref, wqkv_ref, bqkv_ref,
                    wo_ref, bo_ref, w1_ref, b1_ref, w2_ref, b2_ref,
                    alpha_ref, o_ref, *, num_heads, block_batch):
    layer = pl.program_id(1)

    @pl.when(layer == 0)
    def _():
        # First layer for this batch block: seed the resident activation. For
        # layers > 0 o_ref still holds the previous layer's output (its block
        # index is constant along the "arbitrary" layer axis).
        o_ref[...] = x_ref[...]

    B = block_batch
    _, L, E = x_ref.shape
    M = B * L
    H = num_heads
    Dh = E // H
    bf16 = jnp.bfloat16
    f32 = jnp.float32

    x = o_ref[...].reshape(M, E).astype(f32)        # (M, E), M = B*L
    ln_w = ln_w_ref[...]                            # (1, E) f32
    ln_b = ln_b_ref[...]                            # (1, E) f32
    alpha = alpha_ref[layer]                        # rezero re_alpha (SMEM)

    def layer_norm(v):
        # One-pass statistics; the module reuses norm1 for both normalizations.
        mu = jnp.mean(v, axis=-1, keepdims=True)
        ms = jnp.mean(v * v, axis=-1, keepdims=True)
        var = ms - mu * mu
        return (v - mu) * lax.rsqrt(var + _LN_EPS) * ln_w + ln_b

    # ---- multi-head self-attention (nn.MultiheadAttention semantics) ----
    y1 = layer_norm(x)
    qkv = jnp.dot(y1.astype(bf16), wqkv_ref[...],
                  preferred_element_type=f32) + bqkv_ref[...]       # (M, 3E) f32

    scale = 1.0 / float(Dh) ** 0.5
    # Lane-aligned slices of the fused QKV output; scale folded into q; cast to
    # bf16 once, where each tensor is produced.
    q = (qkv[:, :E] * scale).astype(bf16)
    k = qkv[:, E:2 * E].astype(bf16)
    v = qkv[:, 2 * E:].astype(bf16)

    def head_split(t):                  # (M, E) -> (H, M, Dh), heads leading
        return jnp.stack([t[:, h * Dh:(h + 1) * Dh] for h in range(H)], axis=0)

    q3, k3, v3 = head_split(q), head_split(k), head_split(v)

    bo = bo_ref[...]                                                # (1, E) f32
    attn_rows = []
    for b in range(B):      # static loop: attention mixes seq only per element
        r0 = b * L
        qb = q3[:, r0:r0 + L, :]
        kb = k3[:, r0:r0 + L, :]
        vb = v3[:, r0:r0 + L, :]
        s = jnp.einsum("hqd,hkd->hqk", qb, kb,
                       preferred_element_type=f32)                  # (H, L, L)
        s = s - jnp.max(s, axis=-1, keepdims=True)                  # f32 softmax
        p = jnp.exp(s)
        p = p * pl.reciprocal(jnp.sum(p, axis=-1, keepdims=True), approx=True)
        ctx = jnp.einsum("hqk,hkd->hqd", p.astype(bf16), vb,
                         preferred_element_type=f32).astype(bf16)   # (H, L, Dh)
        # Out-projection accumulated per head directly into (L, E): equivalent
        # to concat(heads) @ Wo^T, without an (H, L, E) f32 intermediate or a
        # cross-head reduce. Wo row blocks are sublane-aligned bf16 slices.
        ab = bo
        for h in range(H):
            ab = ab + jnp.dot(ctx[h], wo_ref[h * Dh:(h + 1) * Dh, :],
                              preferred_element_type=f32)
        attn_rows.append(ab)
    attn = attn_rows[0] if B == 1 else jnp.concatenate(attn_rows, axis=0)
    y = x + alpha * attn

    # ---- position-wise FFN: Linear -> GELU -> Linear ----
    y2 = layer_norm(y)
    h1 = jnp.dot(y2.astype(bf16), w1_ref[...],
                 preferred_element_type=f32) + b1_ref[...]
    g = _gelu_exact(h1)
    f = jnp.dot(g.astype(bf16), w2_ref[...],
                preferred_element_type=f32) + b2_ref[...]
    o_ref[...] = (y + alpha * f).reshape(B, L, E).astype(o_ref.dtype)


def transformer_encoder_pallas(x, params, *, block_batch=2, vmem_limit_bytes=None):
    """x: (N, L, E) float32. params: per-layer params stacked on a leading axis."""
    N, L, E = x.shape
    H = _NUM_HEADS
    assert E % H == 0 and (E // H) % 16 == 0, (
        "head_dim must be a multiple of 16 (bf16 sublane tile)")
    assert N % block_batch == 0, "block_batch must divide the batch size"
    NB = params["wqkv_t"].shape[0]
    F = params["w1_t"].shape[-1]
    bf16 = jnp.bfloat16

    # bf16 MXU weights (halves weight VMEM/DMA); biases/LN stay f32.
    wqkv = params["wqkv_t"].astype(bf16)
    wo = params["wo_t"].astype(bf16)
    w1 = params["w1_t"].astype(bf16)
    w2 = params["w2_t"].astype(bf16)

    if vmem_limit_bytes is None:
        vmem_limit_bytes = _default_vmem_limit()

    sq = pl.Squeezed()

    def wspec(shape):
        # Per-layer weight: leading layer axis squeezed, block index follows the
        # inner "arbitrary" layer grid axis -> default double buffering prefetches
        # layer l+1 weights behind layer l compute.
        return pl.BlockSpec((sq,) + shape, lambda n, l: (l,) + (0,) * len(shape))

    act_spec = pl.BlockSpec((block_batch, L, E), lambda n, l: (n, 0, 0))
    kernel = functools.partial(_encoder_kernel, num_heads=H,
                               block_batch=block_batch)

    return pl.pallas_call(
        kernel,
        out_shape=jax.ShapeDtypeStruct((N, L, E), x.dtype),
        grid=(N // block_batch, NB),
        in_specs=[
            act_spec,              # x (constant along the layer axis)
            wspec((1, E)),         # LayerNorm weight (norm1, reused)
            wspec((1, E)),         # LayerNorm bias
            wspec((E, 3 * E)),     # in_proj_weight^T   (bf16)
            wspec((1, 3 * E)),     # in_proj_bias       (f32)
            wspec((E, E)),         # out_proj.weight^T  (bf16)
            wspec((1, E)),         # out_proj.bias      (f32)
            wspec((E, F)),         # FFN linear1 W^T    (bf16)
            wspec((1, F)),         # FFN linear1 b      (f32)
            wspec((F, E)),         # FFN linear2 W^T    (bf16)
            wspec((1, E)),         # FFN linear2 b      (f32)
            pl.BlockSpec(memory_space=pltpu.MemorySpace.SMEM),  # re_alpha (NB,)
        ],
        out_specs=act_spec,        # resident across the layer axis
        compiler_params=pltpu.CompilerParams(
            dimension_semantics=("parallel", "arbitrary"),
            vmem_limit_bytes=int(vmem_limit_bytes)),
    )(x, params["ln_w"], params["ln_b"], wqkv, params["bqkv"], wo,
      params["bo"], w1, params["b1"], w2, params["b2"], params["alpha"])


def init_encoder_params(key, n_blocks, E, F):
    keys = jax.random.split(key, n_blocks)
    s = 0.08

    def one(k):
        ks = jax.random.split(k, 8)

        def w(kk, shape):
            # Master weights rounded to bf16-representable values so the f32
            # reference and the kernel's bf16 weights are numerically identical.
            return (s * jax.random.normal(kk, shape, jnp.float32)
                    ).astype(jnp.bfloat16).astype(jnp.float32)

        return {
            "ln_w": jnp.ones((1, E), jnp.float32),
            "ln_b": jnp.zeros((1, E), jnp.float32),
            # Linear weights stored pre-transposed (in, out): kernel does x @ W.
            "wqkv_t": w(ks[0], (E, 3 * E)),
            "bqkv":   s * jax.random.normal(ks[1], (1, 3 * E), jnp.float32),
            "wo_t":   w(ks[2], (E, E)),
            "bo":     s * jax.random.normal(ks[3], (1, E), jnp.float32),
            "w1_t":   w(ks[4], (E, F)),
            "b1":     s * jax.random.normal(ks[5], (1, F), jnp.float32),
            "w2_t":   w(ks[6], (F, E)),
            "b2":     s * jax.random.normal(ks[7], (1, E), jnp.float32),
            # PyTorch rezero inits re_alpha to 0 (output == input); we use a
            # deterministic nonzero value so both residual branches are exercised.
            "alpha":  jnp.full((), 0.1, jnp.float32),
        }

    blocks = [one(k) for k in keys]
    return jax.tree.map(lambda *xs: jnp.stack(xs, axis=0), *blocks)


# -------- pure-JAX references --------
def _ref_trans_block(x, p, *, bf16_ops):
    """bf16_ops=False mirrors the PyTorch float32 forward exactly;
    bf16_ops=True mirrors the kernel numerics (bf16 GEMM operands, f32 accum)."""
    N, L, E = x.shape
    H, Dh = _NUM_HEADS, E // _NUM_HEADS
    cast = (lambda a: a.astype(jnp.bfloat16)) if bf16_ops else (lambda a: a)
    f32 = jnp.float32
    ln_w, ln_b = p["ln_w"][0], p["ln_b"][0]

    def ln(v):
        mu = jnp.mean(v, -1, keepdims=True)
        var = jnp.mean((v - mu) ** 2, -1, keepdims=True)
        return (v - mu) * lax.rsqrt(var + _LN_EPS) * ln_w + ln_b

    alpha = p["alpha"]
    scale = 1.0 / float(Dh) ** 0.5
    y1 = ln(x)
    qkv = jnp.einsum("nle,ef->nlf", cast(y1), cast(p["wqkv_t"]),
                     preferred_element_type=f32) + p["bqkv"][0]
    q, k, v = jnp.split(qkv, 3, axis=-1)
    q = cast(q * scale).reshape(N, L, H, Dh)
    k = cast(k).reshape(N, L, H, Dh)
    v = cast(v).reshape(N, L, H, Dh)
    s = jnp.einsum("nqhd,nkhd->nhqk", q, k, preferred_element_type=f32)
    probs = jax.nn.softmax(s, axis=-1)
    ctx = jnp.einsum("nhqk,nkhd->nqhd", cast(probs), v,
                     preferred_element_type=f32).reshape(N, L, E)
    attn = jnp.einsum("nle,ef->nlf", cast(ctx), cast(p["wo_t"]),
                      preferred_element_type=f32) + p["bo"][0]
    y = x + alpha * attn

    y2 = ln(y)
    h1 = jnp.einsum("nle,ef->nlf", cast(y2), cast(p["w1_t"]),
                    preferred_element_type=f32) + p["b1"][0]
    g = jax.nn.gelu(h1, approximate=False)
    f = jnp.einsum("nlf,fe->nle", cast(g), cast(p["w2_t"]),
                   preferred_element_type=f32) + p["b2"][0]
    return y + alpha * f


if __name__ == "__main__":
    # Lane-dense config: E multiple of 128 (unmasked stores), B*L = 128 feeds the
    # MXU M dimension, batch grid of 2 splits evenly across v7x's 2 TensorCores.
    N, L, E, FFN, NBLOCKS, B = 4, 64, 128, 256, 2, 2
    key = jax.random.PRNGKey(0)
    kx, kp = jax.random.split(key)
    x = jax.random.normal(kx, (N, L, E), jnp.float32)
    params = init_encoder_params(kp, NBLOCKS, E, FFN)

    fn = jax.jit(functools.partial(transformer_encoder_pallas, block_batch=B))
    y = jax.block_until_ready(fn(x, params))

    # References: bf16-matched (tight) and pure-f32 PyTorch mirror (loose: only
    # bf16 operand rounding + approx reciprocal separate the kernel from it).
    y_match, y_f32 = x, x
    for layer in range(NBLOCKS):
        p_l = jax.tree.map(lambda a: a[layer], params)
        y_match = _ref_trans_block(y_match, p_l, bf16_ops=True)
        y_f32 = _ref_trans_block(y_f32, p_l, bf16_ops=False)

    assert y.shape == (N, L, E)
    err_match = float(jnp.max(jnp.abs(y - y_match)))
    err_f32 = float(jnp.max(jnp.abs(y - y_f32)))
    assert err_match < 5e-3, f"kernel vs bf16-matched reference: {err_match}"
    assert err_f32 < 2e-2, f"kernel vs float32 reference: {err_f32}"
    print("KERNEL_OK")
</pallas_src>

<mosaic_0001>
module attributes {stable_mosaic.version = 11 : i64} {
  func.func @_encoder_kernel(%arg0: i32, %arg1: i32, %arg2: memref<2x64x128xf32, #tpu.memory_space<vmem>>, %arg3: memref<1x1x128xf32, #tpu.memory_space<vmem>>, %arg4: memref<1x1x128xf32, #tpu.memory_space<vmem>>, %arg5: memref<1x128x384xbf16, #tpu.memory_space<vmem>>, %arg6: memref<1x1x384xf32, #tpu.memory_space<vmem>>, %arg7: memref<1x128x128xbf16, #tpu.memory_space<vmem>>, %arg8: memref<1x1x128xf32, #tpu.memory_space<vmem>>, %arg9: memref<1x128x256xbf16, #tpu.memory_space<vmem>>, %arg10: memref<1x1x256xf32, #tpu.memory_space<vmem>>, %arg11: memref<1x256x128xbf16, #tpu.memory_space<vmem>>, %arg12: memref<1x1x128xf32, #tpu.memory_space<vmem>>, %arg13: memref<2xf32, #tpu.memory_space<smem>>, %arg14: memref<2x64x128xf32, #tpu.memory_space<vmem>>) attributes {dimension_semantics = [#tpu.dimension_semantics<parallel>, #tpu.dimension_semantics<arbitrary>], iteration_bounds = array<i64: 2, 2>, scalar_prefetch = 0 : i64, scratch_operands = 0 : i64, tpu.core_type = #tpu.core_type<tc>, window_params = [{transform_indices = @transform_0, window_bounds = array<i64: 2, 64, 128>}, {transform_indices = @transform_1, window_bounds = array<i64: 1, 1, 128>}, {transform_indices = @transform_2, window_bounds = array<i64: 1, 1, 128>}, {transform_indices = @transform_3, window_bounds = array<i64: 1, 128, 384>}, {transform_indices = @transform_4, window_bounds = array<i64: 1, 1, 384>}, {transform_indices = @transform_5, window_bounds = array<i64: 1, 128, 128>}, {transform_indices = @transform_6, window_bounds = array<i64: 1, 1, 128>}, {transform_indices = @transform_7, window_bounds = array<i64: 1, 128, 256>}, {transform_indices = @transform_8, window_bounds = array<i64: 1, 1, 256>}, {transform_indices = @transform_9, window_bounds = array<i64: 1, 256, 128>}, {transform_indices = @transform_10, window_bounds = array<i64: 1, 1, 128>}, {transform_indices = @transform_11, window_bounds = array<i64: 2>}, {transform_indices = @transform_12, window_bounds = array<i64: 2, 64, 128>}]} {
    %c0_i32 = arith.constant 0 : i32
    %0 = arith.cmpi eq, %arg1, %c0_i32 : i32
    %1 = arith.extui %0 : i1 to i32
    %c0_i32_0 = arith.constant 0 : i32
    %2 = arith.cmpi ne, %1, %c0_i32_0 : i32
    scf.if %2 {
      %c0_127 = arith.constant 0 : index
      %c0_128 = arith.constant 0 : index
      %c0_129 = arith.constant 0 : index
      %322 = vector.load %arg2[%c0_127, %c0_128, %c0_129] : memref<2x64x128xf32, #tpu.memory_space<vmem>>, vector<2x64x128xf32>
      %c0_130 = arith.constant 0 : index
      %c0_131 = arith.constant 0 : index
      %c0_132 = arith.constant 0 : index
      %323 = vector.load %arg14[%c0_130, %c0_131, %c0_132] : memref<2x64x128xf32, #tpu.memory_space<vmem>>, vector<2x64x128xf32>
      tpu.vector_store %arg14[%c0_130, %c0_131, %c0_132], %322 {strides = array<i32>} : memref<2x64x128xf32, #tpu.memory_space<vmem>>, vector<2x64x128xf32>,
    } else {
    }
    %c0 = arith.constant 0 : index
    %c0_1 = arith.constant 0 : index
    %c0_2 = arith.constant 0 : index
    %3 = vector.load %arg14[%c0, %c0_1, %c0_2] : memref<2x64x128xf32, #tpu.memory_space<vmem>>, vector<2x64x128xf32>
    %4 = vector.shape_cast %3 : vector<2x64x128xf32> to vector<128x128xf32>
    %c0_3 = arith.constant 0 : index
    %c0_4 = arith.constant 0 : index
    %c0_5 = arith.constant 0 : index
    %5 = vector.load %arg3[%c0_3, %c0_4, %c0_5] : memref<1x1x128xf32, #tpu.memory_space<vmem>>, vector<1x1x128xf32>
    %6 = vector.shape_cast %5 : vector<1x1x128xf32> to vector<1x128xf32>
    %c0_6 = arith.constant 0 : index
    %c0_7 = arith.constant 0 : index
    %c0_8 = arith.constant 0 : index
    %7 = vector.load %arg4[%c0_6, %c0_7, %c0_8] : memref<1x1x128xf32, #tpu.memory_space<vmem>>, vector<1x1x128xf32>
    %8 = vector.shape_cast %7 : vector<1x1x128xf32> to vector<1x128xf32>
    %9 = arith.index_cast %arg1 : i32 to index
    %10 = memref.load %arg13[%9] : memref<2xf32, #tpu.memory_space<smem>>
    %cst = arith.constant dense<0.000000e+00> : vector<128xf32>
    %11 = vector.multi_reduction <add>, %4, %cst [1] : vector<128x128xf32> to vector<128xf32>
    %12 = vector.shape_cast %11 : vector<128xf32> to vector<128x1xf32>
    %cst_9 = arith.constant 1.280000e+02 : f32
    %13 = vector.broadcast %cst_9 : f32 to vector<128x1xf32>
    %14 = arith.divf %12, %13 : vector<128x1xf32>
    %15 = arith.mulf %4, %4 : vector<128x128xf32>
    %cst_10 = arith.constant dense<0.000000e+00> : vector<128xf32>
    %16 = vector.multi_reduction <add>, %15, %cst_10 [1] : vector<128x128xf32> to vector<128xf32>
    %17 = vector.shape_cast %16 : vector<128xf32> to vector<128x1xf32>
    %cst_11 = arith.constant 1.280000e+02 : f32
    %18 = vector.broadcast %cst_11 : f32 to vector<128x1xf32>
    %19 = arith.divf %17, %18 : vector<128x1xf32>
    %20 = arith.mulf %14, %14 : vector<128x1xf32>
    %21 = arith.subf %19, %20 : vector<128x1xf32>
    %22 = vector.broadcast %14 : vector<128x1xf32> to vector<128x128xf32>
    %23 = arith.subf %4, %22 : vector<128x128xf32>
    %cst_12 = arith.constant 9.99999974E-6 : f32
    %24 = vector.broadcast %cst_12 : f32 to vector<128x1xf32>
    %25 = arith.addf %21, %24 : vector<128x1xf32>
    %26 = math.rsqrt %25 : vector<128x1xf32>
    %27 = vector.broadcast %26 : vector<128x1xf32> to vector<128x128xf32>
    %28 = arith.mulf %23, %27 : vector<128x128xf32>
    %29 = vector.broadcast %6 : vector<1x128xf32> to vector<128x128xf32>
    %30 = arith.mulf %28, %29 : vector<128x128xf32>
    %31 = vector.broadcast %8 : vector<1x128xf32> to vector<128x128xf32>
    %32 = arith.addf %30, %31 : vector<128x128xf32>
    %33 = arith.truncf %32 : vector<128x128xf32> to vector<128x128xbf16>
    %c0_13 = arith.constant 0 : index
    %c0_14 = arith.constant 0 : index
    %c0_15 = arith.constant 0 : index
    %34 = vector.load %arg5[%c0_13, %c0_14, %c0_15] : memref<1x128x384xbf16, #tpu.memory_space<vmem>>, vector<1x128x384xbf16>
    %35 = vector.shape_cast %34 : vector<1x128x384xbf16> to vector<128x384xbf16>
    %cst_16 = arith.constant dense<0.000000e+00> : vector<128x384xf32>
    %36 = tpu.matmul %33, %35, %cst_16 {dimension_numbers = #tpu.dot_dimension_numbers<[1], [0], [0], [1], [0, 0, 1, 1], [], []>} : vector<128x128xbf16>, vector<128x384xbf16>, vector<128x384xf32> -> vector<128x384xf32>
    %c0_17 = arith.constant 0 : index
    %c0_18 = arith.constant 0 : index
    %c0_19 = arith.constant 0 : index
    %37 = vector.load %arg6[%c0_17, %c0_18, %c0_19] : memref<1x1x384xf32, #tpu.memory_space<vmem>>, vector<1x1x384xf32>
    %38 = vector.shape_cast %37 : vector<1x1x384xf32> to vector<1x384xf32>
    %39 = vector.broadcast %38 : vector<1x384xf32> to vector<128x384xf32>
    %40 = arith.addf %36, %39 : vector<128x384xf32>
    %41 = vector.extract_strided_slice %40 {offsets = [0, 0], sizes = [128, 128], strides = [1, 1]} : vector<128x384xf32> to vector<128x128xf32>
    %cst_20 = arith.constant 2.500000e-01 : f32
    %42 = vector.broadcast %cst_20 : f32 to vector<128x128xf32>
    %43 = arith.mulf %41, %42 : vector<128x128xf32>
    %44 = arith.truncf %43 : vector<128x128xf32> to vector<128x128xbf16>
    %45 = vector.extract_strided_slice %40 {offsets = [0, 128], sizes = [128, 128], strides = [1, 1]} : vector<128x384xf32> to vector<128x128xf32>
    %46 = arith.truncf %45 : vector<128x128xf32> to vector<128x128xbf16>
    %47 = vector.extract_strided_slice %40 {offsets = [0, 256], sizes = [128, 128], strides = [1, 1]} : vector<128x384xf32> to vector<128x128xf32>
    %48 = arith.truncf %47 : vector<128x128xf32> to vector<128x128xbf16>
    %49 = vector.extract_strided_slice %44 {offsets = [0, 0], sizes = [128, 16], strides = [1, 1]} : vector<128x128xbf16> to vector<128x16xbf16>
    %50 = vector.extract_strided_slice %44 {offsets = [0, 16], sizes = [128, 16], strides = [1, 1]} : vector<128x128xbf16> to vector<128x16xbf16>
    %51 = vector.extract_strided_slice %44 {offsets = [0, 32], sizes = [128, 16], strides = [1, 1]} : vector<128x128xbf16> to vector<128x16xbf16>
    %52 = vector.extract_strided_slice %44 {offsets = [0, 48], sizes = [128, 16], strides = [1, 1]} : vector<128x128xbf16> to vector<128x16xbf16>
    %53 = vector.extract_strided_slice %44 {offsets = [0, 64], sizes = [128, 16], strides = [1, 1]} : vector<128x128xbf16> to vector<128x16xbf16>
    %54 = vector.extract_strided_slice %44 {offsets = [0, 80], sizes = [128, 16], strides = [1, 1]} : vector<128x128xbf16> to vector<128x16xbf16>
    %55 = vector.extract_strided_slice %44 {offsets = [0, 96], sizes = [128, 16], strides = [1, 1]} : vector<128x128xbf16> to vector<128x16xbf16>
    %56 = vector.extract_strided_slice %44 {offsets = [0, 112], sizes = [128, 16], strides = [1, 1]} : vector<128x128xbf16> to vector<128x16xbf16>
    %57 = vector.shape_cast %49 : vector<128x16xbf16> to vector<1x128x16xbf16>
    %58 = vector.shape_cast %50 : vector<128x16xbf16> to vector<1x128x16xbf16>
    %59 = vector.shape_cast %51 : vector<128x16xbf16> to vector<1x128x16xbf16>
    %60 = vector.shape_cast %52 : vector<128x16xbf16> to vector<1x128x16xbf16>
    %61 = vector.shape_cast %53 : vector<128x16xbf16> to vector<1x128x16xbf16>
    %62 = vector.shape_cast %54 : vector<128x16xbf16> to vector<1x128x16xbf16>
    %63 = vector.shape_cast %55 : vector<128x16xbf16> to vector<1x128x16xbf16>
    %64 = vector.shape_cast %56 : vector<128x16xbf16> to vector<1x128x16xbf16>
    %65 = tpu.concatenate %57, %58, %59, %60, %61, %62, %63, %64 in 0 : vector<1x128x16xbf16>, vector<1x128x16xbf16>, vector<1x128x16xbf16>, vector<1x128x16xbf16>, vector<1x128x16xbf16>, vector<1x128x16xbf16>, vector<1x128x16xbf16>, vector<1x128x16xbf16> -> vector<8x128x16xbf16>
    %66 = vector.extract_strided_slice %46 {offsets = [0, 0], sizes = [128, 16], strides = [1, 1]} : vector<128x128xbf16> to vector<128x16xbf16>
    %67 = vector.extract_strided_slice %46 {offsets = [0, 16], sizes = [128, 16], strides = [1, 1]} : vector<128x128xbf16> to vector<128x16xbf16>
    %68 = vector.extract_strided_slice %46 {offsets = [0, 32], sizes = [128, 16], strides = [1, 1]} : vector<128x128xbf16> to vector<128x16xbf16>
    %69 = vector.extract_strided_slice %46 {offsets = [0, 48], sizes = [128, 16], strides = [1, 1]} : vector<128x128xbf16> to vector<128x16xbf16>
    %70 = vector.extract_strided_slice %46 {offsets = [0, 64], sizes = [128, 16], strides = [1, 1]} : vector<128x128xbf16> to vector<128x16xbf16>
    %71 = vector.extract_strided_slice %46 {offsets = [0, 80], sizes = [128, 16], strides = [1, 1]} : vector<128x128xbf16> to vector<128x16xbf16>
    %72 = vector.extract_strided_slice %46 {offsets = [0, 96], sizes = [128, 16], strides = [1, 1]} : vector<128x128xbf16> to vector<128x16xbf16>
    %73 = vector.extract_strided_slice %46 {offsets = [0, 112], sizes = [128, 16], strides = [1, 1]} : vector<128x128xbf16> to vector<128x16xbf16>
    %74 = vector.shape_cast %66 : vector<128x16xbf16> to vector<1x128x16xbf16>
    %75 = vector.shape_cast %67 : vector<128x16xbf16> to vector<1x128x16xbf16>
    %76 = vector.shape_cast %68 : vector<128x16xbf16> to vector<1x128x16xbf16>
    %77 = vector.shape_cast %69 : vector<128x16xbf16> to vector<1x128x16xbf16>
    %78 = vector.shape_cast %70 : vector<128x16xbf16> to vector<1x128x16xbf16>
    %79 = vector.shape_cast %71 : vector<128x16xbf16> to vector<1x128x16xbf16>
    %80 = vector.shape_cast %72 : vector<128x16xbf16> to vector<1x128x16xbf16>
    %81 = vector.shape_cast %73 : vector<128x16xbf16> to vector<1x128x16xbf16>
    %82 = tpu.concatenate %74, %75, %76, %77, %78, %79, %80, %81 in 0 : vector<1x128x16xbf16>, vector<1x128x16xbf16>, vector<1x128x16xbf16>, vector<1x128x16xbf16>, vector<1x128x16xbf16>, vector<1x128x16xbf16>, vector<1x128x16xbf16>, vector<1x128x16xbf16> -> vector<8x128x16xbf16>
    %83 = vector.extract_strided_slice %48 {offsets = [0, 0], sizes = [128, 16], strides = [1, 1]} : vector<128x128xbf16> to vector<128x16xbf16>
    %84 = vector.extract_strided_slice %48 {offsets = [0, 16], sizes = [128, 16], strides = [1, 1]} : vector<128x128xbf16> to vector<128x16xbf16>
    %85 = vector.extract_strided_slice %48 {offsets = [0, 32], sizes = [128, 16], strides = [1, 1]} : vector<128x128xbf16> to vector<128x16xbf16>
    %86 = vector.extract_strided_slice %48 {offsets = [0, 48], sizes = [128, 16], strides = [1, 1]} : vector<128x128xbf16> to vector<128x16xbf16>
    %87 = vector.extract_strided_slice %48 {offsets = [0, 64], sizes = [128, 16], strides = [1, 1]} : vector<128x128xbf16> to vector<128x16xbf16>
    %88 = vector.extract_strided_slice %48 {offsets = [0, 80], sizes = [128, 16], strides = [1, 1]} : vector<128x128xbf16> to vector<128x16xbf16>
    %89 = vector.extract_strided_slice %48 {offsets = [0, 96], sizes = [128, 16], strides = [1, 1]} : vector<128x128xbf16> to vector<128x16xbf16>
    %90 = vector.extract_strided_slice %48 {offsets = [0, 112], sizes = [128, 16], strides = [1, 1]} : vector<128x128xbf16> to vector<128x16xbf16>
    %91 = vector.shape_cast %83 : vector<128x16xbf16> to vector<1x128x16xbf16>
    %92 = vector.shape_cast %84 : vector<128x16xbf16> to vector<1x128x16xbf16>
    %93 = vector.shape_cast %85 : vector<128x16xbf16> to vector<1x128x16xbf16>
    %94 = vector.shape_cast %86 : vector<128x16xbf16> to vector<1x128x16xbf16>
    %95 = vector.shape_cast %87 : vector<128x16xbf16> to vector<1x128x16xbf16>
    %96 = vector.shape_cast %88 : vector<128x16xbf16> to vector<1x128x16xbf16>
    %97 = vector.shape_cast %89 : vector<128x16xbf16> to vector<1x128x16xbf16>
    %98 = vector.shape_cast %90 : vector<128x16xbf16> to vector<1x128x16xbf16>
    %99 = tpu.concatenate %91, %92, %93, %94, %95, %96, %97, %98 in 0 : vector<1x128x16xbf16>, vector<1x128x16xbf16>, vector<1x128x16xbf16>, vector<1x128x16xbf16>, vector<1x128x16xbf16>, vector<1x128x16xbf16>, vector<1x128x16xbf16>, vector<1x128x16xbf16> -> vector<8x128x16xbf16>
    %c0_21 = arith.constant 0 : index
    %c0_22 = arith.constant 0 : index
    %c0_23 = arith.constant 0 : index
    %100 = vector.load %arg8[%c0_21, %c0_22, %c0_23] : memref<1x1x128xf32, #tpu.memory_space<vmem>>, vector<1x1x128xf32>
    %101 = vector.shape_cast %100 : vector<1x1x128xf32> to vector<1x128xf32>
    %102 = vector.extract_strided_slice %65 {offsets = [0, 0, 0], sizes = [8, 64, 16], strides = [1, 1, 1]} : vector<8x128x16xbf16> to vector<8x64x16xbf16>
    %103 = vector.extract_strided_slice %82 {offsets = [0, 0, 0], sizes = [8, 64, 16], strides = [1, 1, 1]} : vector<8x128x16xbf16> to vector<8x64x16xbf16>
    %104 = vector.extract_strided_slice %99 {offsets = [0, 0, 0], sizes = [8, 64, 16], strides = [1, 1, 1]} : vector<8x128x16xbf16> to vector<8x64x16xbf16>
    "tpu.trace_start"() <{level = 10 : i32, message = "hqd,hkd->hqk"}> : () -> ()
    %cst_24 = arith.constant dense<0.000000e+00> : vector<8x64x64xf32>
    %105 = tpu.matmul %102, %103, %cst_24 {dimension_numbers = #tpu.dot_dimension_numbers<[2], [2], [1], [1], [0, 0, 0, 1, 1, 1], [0], [0]>} : vector<8x64x16xbf16>, vector<8x64x16xbf16>, vector<8x64x64xf32> -> vector<8x64x64xf32>
    "tpu.trace_stop"() : () -> ()
    %cst_25 = arith.constant dense<0xFF800000> : vector<8x64xf32>
    %106 = vector.multi_reduction <maximumf>, %105, %cst_25 [2] : vector<8x64x64xf32> to vector<8x64xf32>
    %107 = vector.shape_cast %106 : vector<8x64xf32> to vector<8x64x1xf32>
    %108 = vector.broadcast %107 : vector<8x64x1xf32> to vector<8x64x64xf32>
    %109 = arith.subf %105, %108 : vector<8x64x64xf32>
    %110 = math.exp %109 : vector<8x64x64xf32>
    %cst_26 = arith.constant dense<0.000000e+00> : vector<8x64xf32>
    %111 = vector.multi_reduction <add>, %110, %cst_26 [2] : vector<8x64x64xf32> to vector<8x64xf32>
    %112 = vector.shape_cast %111 : vector<8x64xf32> to vector<8x64x1xf32>
    %113 = tpu.reciprocal %112 {approx = true} : vector<8x64x1xf32> -> vector<8x64x1xf32>
    %114 = vector.broadcast %113 : vector<8x64x1xf32> to vector<8x64x64xf32>
    %115 = arith.mulf %110, %114 : vector<8x64x64xf32>
    %116 = arith.truncf %115 : vector<8x64x64xf32> to vector<8x64x64xbf16>
    "tpu.trace_start"() <{level = 10 : i32, message = "hqk,hkd->hqd"}> : () -> ()
    %cst_27 = arith.constant dense<0.000000e+00> : vector<8x64x16xf32>
    %117 = tpu.matmul %116, %104, %cst_27 {dimension_numbers = #tpu.dot_dimension_numbers<[2], [1], [1], [2], [0, 0, 0, 1, 1, 2], [0], [0]>} : vector<8x64x64xbf16>, vector<8x64x16xbf16>, vector<8x64x16xf32> -> vector<8x64x16xf32>
    "tpu.trace_stop"() : () -> ()
    %118 = arith.truncf %117 : vector<8x64x16xf32> to vector<8x64x16xbf16>
    %119 = vector.extract_strided_slice %118 {offsets = [0, 0, 0], sizes = [1, 64, 16], strides = [1, 1, 1]} : vector<8x64x16xbf16> to vector<1x64x16xbf16>
    %120 = vector.shape_cast %119 : vector<1x64x16xbf16> to vector<64x16xbf16>
    %c0_28 = arith.constant 0 : index
    %c0_29 = arith.constant 0 : index
    %c0_30 = arith.constant 0 : index
    %121 = vector.load %arg7[%c0_28, %c0_29, %c0_30] : memref<1x128x128xbf16, #tpu.memory_space<vmem>>, vector<1x16x128xbf16>
    %122 = vector.shape_cast %121 : vector<1x16x128xbf16> to vector<16x128xbf16>
    %cst_31 = arith.constant dense<0.000000e+00> : vector<64x128xf32>
    %123 = tpu.matmul %120, %122, %cst_31 {dimension_numbers = #tpu.dot_dimension_numbers<[1], [0], [0], [1], [0, 0, 1, 1], [], []>} : vector<64x16xbf16>, vector<16x128xbf16>, vector<64x128xf32> -> vector<64x128xf32>
    %124 = vector.broadcast %101 : vector<1x128xf32> to vector<64x128xf32>
    %125 = arith.addf %124, %123 : vector<64x128xf32>
    %126 = vector.extract_strided_slice %118 {offsets = [1, 0, 0], sizes = [1, 64, 16], strides = [1, 1, 1]} : vector<8x64x16xbf16> to vector<1x64x16xbf16>
    %127 = vector.shape_cast %126 : vector<1x64x16xbf16> to vector<64x16xbf16>
    %c0_32 = arith.constant 0 : index
    %c16 = arith.constant 16 : index
    %c0_33 = arith.constant 0 : index
    %128 = vector.load %arg7[%c0_32, %c16, %c0_33] : memref<1x128x128xbf16, #tpu.memory_space<vmem>>, vector<1x16x128xbf16>
    %129 = vector.shape_cast %128 : vector<1x16x128xbf16> to vector<16x128xbf16>
    %cst_34 = arith.constant dense<0.000000e+00> : vector<64x128xf32>
    %130 = tpu.matmul %127, %129, %cst_34 {dimension_numbers = #tpu.dot_dimension_numbers<[1], [0], [0], [1], [0, 0, 1, 1], [], []>} : vector<64x16xbf16>, vector<16x128xbf16>, vector<64x128xf32> -> vector<64x128xf32>
    %131 = arith.addf %125, %130 : vector<64x128xf32>
    %132 = vector.extract_strided_slice %118 {offsets = [2, 0, 0], sizes = [1, 64, 16], strides = [1, 1, 1]} : vector<8x64x16xbf16> to vector<1x64x16xbf16>
    %133 = vector.shape_cast %132 : vector<1x64x16xbf16> to vector<64x16xbf16>
    %c0_35 = arith.constant 0 : index
    %c32 = arith.constant 32 : index
    %c0_36 = arith.constant 0 : index
    %134 = vector.load %arg7[%c0_35, %c32, %c0_36] : memref<1x128x128xbf16, #tpu.memory_space<vmem>>, vector<1x16x128xbf16>
    %135 = vector.shape_cast %134 : vector<1x16x128xbf16> to vector<16x128xbf16>
    %cst_37 = arith.constant dense<0.000000e+00> : vector<64x128xf32>
    %136 = tpu.matmul %133, %135, %cst_37 {dimension_numbers = #tpu.dot_dimension_numbers<[1], [0], [0], [1], [0, 0, 1, 1], [], []>} : vector<64x16xbf16>, vector<16x128xbf16>, vector<64x128xf32> -> vector<64x128xf32>
    %137 = arith.addf %131, %136 : vector<64x128xf32>
    %138 = vector.extract_strided_slice %118 {offsets = [3, 0, 0], sizes = [1, 64, 16], strides = [1, 1, 1]} : vector<8x64x16xbf16> to vector<1x64x16xbf16>
    %139 = vector.shape_cast %138 : vector<1x64x16xbf16> to vector<64x16xbf16>
    %c0_38 = arith.constant 0 : index
    %c48 = arith.constant 48 : index
    %c0_39 = arith.constant 0 : index
    %140 = vector.load %arg7[%c0_38, %c48, %c0_39] : memref<1x128x128xbf16, #tpu.memory_space<vmem>>, vector<1x16x128xbf16>
    %141 = vector.shape_cast %140 : vector<1x16x128xbf16> to vector<16x128xbf16>
    %cst_40 = arith.constant dense<0.000000e+00> : vector<64x128xf32>
    %142 = tpu.matmul %139, %141, %cst_40 {dimension_numbers = #tpu.dot_dimension_numbers<[1], [0], [0], [1], [0, 0, 1, 1], [], []>} : vector<64x16xbf16>, vector<16x128xbf16>, vector<64x128xf32> -> vector<64x128xf32>
    %143 = arith.addf %137, %142 : vector<64x128xf32>
    %144 = vector.extract_strided_slice %118 {offsets = [4, 0, 0], sizes = [1, 64, 16], strides = [1, 1, 1]} : vector<8x64x16xbf16> to vector<1x64x16xbf16>
    %145 = vector.shape_cast %144 : vector<1x64x16xbf16> to vector<64x16xbf16>
    %c0_41 = arith.constant 0 : index
    %c64 = arith.constant 64 : index
    %c0_42 = arith.constant 0 : index
    %146 = vector.load %arg7[%c0_41, %c64, %c0_42] : memref<1x128x128xbf16, #tpu.memory_space<vmem>>, vector<1x16x128xbf16>
    %147 = vector.shape_cast %146 : vector<1x16x128xbf16> to vector<16x128xbf16>
    %cst_43 = arith.constant dense<0.000000e+00> : vector<64x128xf32>
    %148 = tpu.matmul %145, %147, %cst_43 {dimension_numbers = #tpu.dot_dimension_numbers<[1], [0], [0], [1], [0, 0, 1, 1], [], []>} : vector<64x16xbf16>, vector<16x128xbf16>, vector<64x128xf32> -> vector<64x128xf32>
    %149 = arith.addf %143, %148 : vector<64x128xf32>
    %150 = vector.extract_strided_slice %118 {offsets = [5, 0, 0], sizes = [1, 64, 16], strides = [1, 1, 1]} : vector<8x64x16xbf16> to vector<1x64x16xbf16>
    %151 = vector.shape_cast %150 : vector<1x64x16xbf16> to vector<64x16xbf16>
    %c0_44 = arith.constant 0 : index
    %c80 = arith.constant 80 : index
    %c0_45 = arith.constant 0 : index
    %152 = vector.load %arg7[%c0_44, %c80, %c0_45] : memref<1x128x128xbf16, #tpu.memory_space<vmem>>, vector<1x16x128xbf16>
    %153 = vector.shape_cast %152 : vector<1x16x128xbf16> to vector<16x128xbf16>
    %cst_46 = arith.constant dense<0.000000e+00> : vector<64x128xf32>
    %154 = tpu.matmul %151, %153, %cst_46 {dimension_numbers = #tpu.dot_dimension_numbers<[1], [0], [0], [1], [0, 0, 1, 1], [], []>} : vector<64x16xbf16>, vector<16x128xbf16>, vector<64x128xf32> -> vector<64x128xf32>
    %155 = arith.addf %149, %154 : vector<64x128xf32>
    %156 = vector.extract_strided_slice %118 {offsets = [6, 0, 0], sizes = [1, 64, 16], strides = [1, 1, 1]} : vector<8x64x16xbf16> to vector<1x64x16xbf16>
    %157 = vector.shape_cast %156 : vector<1x64x16xbf16> to vector<64x16xbf16>
    %c0_47 = arith.constant 0 : index
    %c96 = arith.constant 96 : index
    %c0_48 = arith.constant 0 : index
    %158 = vector.load %arg7[%c0_47, %c96, %c0_48] : memref<1x128x128xbf16, #tpu.memory_space<vmem>>, vector<1x16x128xbf16>
    %159 = vector.shape_cast %158 : vector<1x16x128xbf16> to vector<16x128xbf16>
    %cst_49 = arith.constant dense<0.000000e+00> : vector<64x128xf32>
    %160 = tpu.matmul %157, %159, %cst_49 {dimension_numbers = #tpu.dot_dimension_numbers<[1], [0], [0], [1], [0, 0, 1, 1], [], []>} : vector<64x16xbf16>, vector<16x128xbf16>, vector<64x128xf32> -> vector<64x128xf32>
    %161 = arith.addf %155, %160 : vector<64x128xf32>
    %162 = vector.extract_strided_slice %118 {offsets = [7, 0, 0], sizes = [1, 64, 16], strides = [1, 1, 1]} : vector<8x64x16xbf16> to vector<1x64x16xbf16>
    %163 = vector.shape_cast %162 : vector<1x64x16xbf16> to vector<64x16xbf16>
    %c0_50 = arith.constant 0 : index
    %c112 = arith.constant 112 : index
    %c0_51 = arith.constant 0 : index
    %164 = vector.load %arg7[%c0_50, %c112, %c0_51] : memref<1x128x128xbf16, #tpu.memory_space<vmem>>, vector<1x16x128xbf16>
    %165 = vector.shape_cast %164 : vector<1x16x128xbf16> to vector<16x128xbf16>
    %cst_52 = arith.constant dense<0.000000e+00> : vector<64x128xf32>
    %166 = tpu.matmul %163, %165, %cst_52 {dimension_numbers = #tpu.dot_dimension_numbers<[1], [0], [0], [1], [0, 0, 1, 1], [], []>} : vector<64x16xbf16>, vector<16x128xbf16>, vector<64x128xf32> -> vector<64x128xf32>
    %167 = arith.addf %161, %166 : vector<64x128xf32>
    %168 = vector.extract_strided_slice %65 {offsets = [0, 64, 0], sizes = [8, 64, 16], strides = [1, 1, 1]} : vector<8x128x16xbf16> to vector<8x64x16xbf16>
    %169 = vector.extract_strided_slice %82 {offsets = [0, 64, 0], sizes = [8, 64, 16], strides = [1, 1, 1]} : vector<8x128x16xbf16> to vector<8x64x16xbf16>
    %170 = vector.extract_strided_slice %99 {offsets = [0, 64, 0], sizes = [8, 64, 16], strides = [1, 1, 1]} : vector<8x128x16xbf16> to vector<8x64x16xbf16>
    "tpu.trace_start"() <{level = 10 : i32, message = "hqd,hkd->hqk"}> : () -> ()
    %cst_53 = arith.constant dense<0.000000e+00> : vector<8x64x64xf32>
    %171 = tpu.matmul %168, %169, %cst_53 {dimension_numbers = #tpu.dot_dimension_numbers<[2], [2], [1], [1], [0, 0, 0, 1, 1, 1], [0], [0]>} : vector<8x64x16xbf16>, vector<8x64x16xbf16>, vector<8x64x64xf32> -> vector<8x64x64xf32>
    "tpu.trace_stop"() : () -> ()
    %cst_54 = arith.constant dense<0xFF800000> : vector<8x64xf32>
    %172 = vector.multi_reduction <maximumf>, %171, %cst_54 [2] : vector<8x64x64xf32> to vector<8x64xf32>
    %173 = vector.shape_cast %172 : vector<8x64xf32> to vector<8x64x1xf32>
    %174 = vector.broadcast %173 : vector<8x64x1xf32> to vector<8x64x64xf32>
    %175 = arith.subf %171, %174 : vector<8x64x64xf32>
    %176 = math.exp %175 : vector<8x64x64xf32>
    %cst_55 = arith.constant dense<0.000000e+00> : vector<8x64xf32>
    %177 = vector.multi_reduction <add>, %176, %cst_55 [2] : vector<8x64x64xf32> to vector<8x64xf32>
    %178 = vector.shape_cast %177 : vector<8x64xf32> to vector<8x64x1xf32>
    %179 = tpu.reciprocal %178 {approx = true} : vector<8x64x1xf32> -> vector<8x64x1xf32>
    %180 = vector.broadcast %179 : vector<8x64x1xf32> to vector<8x64x64xf32>
    %181 = arith.mulf %176, %180 : vector<8x64x64xf32>
    %182 = arith.truncf %181 : vector<8x64x64xf32> to vector<8x64x64xbf16>
    "tpu.trace_start"() <{level = 10 : i32, message = "hqk,hkd->hqd"}> : () -> ()
    %cst_56 = arith.constant dense<0.000000e+00> : vector<8x64x16xf32>
    %183 = tpu.matmul %182, %170, %cst_56 {dimension_numbers = #tpu.dot_dimension_numbers<[2], [1], [1], [2], [0, 0, 0, 1, 1, 2], [0], [0]>} : vector<8x64x64xbf16>, vector<8x64x16xbf16>, vector<8x64x16xf32> -> vector<8x64x16xf32>
    "tpu.trace_stop"() : () -> ()
    %184 = arith.truncf %183 : vector<8x64x16xf32> to vector<8x64x16xbf16>
    %185 = vector.extract_strided_slice %184 {offsets = [0, 0, 0], sizes = [1, 64, 16], strides = [1, 1, 1]} : vector<8x64x16xbf16> to vector<1x64x16xbf16>
    %186 = vector.shape_cast %185 : vector<1x64x16xbf16> to vector<64x16xbf16>
    %c0_57 = arith.constant 0 : index
    %c0_58 = arith.constant 0 : index
    %c0_59 = arith.constant 0 : index
    %187 = vector.load %arg7[%c0_57, %c0_58, %c0_59] : memref<1x128x128xbf16, #tpu.memory_space<vmem>>, vector<1x16x128xbf16>
    %188 = vector.shape_cast %187 : vector<1x16x128xbf16> to vector<16x128xbf16>
    %cst_60 = arith.constant dense<0.000000e+00> : vector<64x128xf32>
    %189 = tpu.matmul %186, %188, %cst_60 {dimension_numbers = #tpu.dot_dimension_numbers<[1], [0], [0], [1], [0, 0, 1, 1], [], []>} : vector<64x16xbf16>, vector<16x128xbf16>, vector<64x128xf32> -> vector<64x128xf32>
    %190 = vector.broadcast %101 : vector<1x128xf32> to vector<64x128xf32>
    %191 = arith.addf %190, %189 : vector<64x128xf32>
    %192 = vector.extract_strided_slice %184 {offsets = [1, 0, 0], sizes = [1, 64, 16], strides = [1, 1, 1]} : vector<8x64x16xbf16> to vector<1x64x16xbf16>
    %193 = vector.shape_cast %192 : vector<1x64x16xbf16> to vector<64x16xbf16>
    %c0_61 = arith.constant 0 : index
    %c16_62 = arith.constant 16 : index
    %c0_63 = arith.constant 0 : index
    %194 = vector.load %arg7[%c0_61, %c16_62, %c0_63] : memref<1x128x128xbf16, #tpu.memory_space<vmem>>, vector<1x16x128xbf16>
    %195 = vector.shape_cast %194 : vector<1x16x128xbf16> to vector<16x128xbf16>
    %cst_64 = arith.constant dense<0.000000e+00> : vector<64x128xf32>
    %196 = tpu.matmul %193, %195, %cst_64 {dimension_numbers = #tpu.dot_dimension_numbers<[1], [0], [0], [1], [0, 0, 1, 1], [], []>} : vector<64x16xbf16>, vector<16x128xbf16>, vector<64x128xf32> -> vector<64x128xf32>
    %197 = arith.addf %191, %196 : vector<64x128xf32>
    %198 = vector.extract_strided_slice %184 {offsets = [2, 0, 0], sizes = [1, 64, 16], strides = [1, 1, 1]} : vector<8x64x16xbf16> to vector<1x64x16xbf16>
    %199 = vector.shape_cast %198 : vector<1x64x16xbf16> to vector<64x16xbf16>
    %c0_65 = arith.constant 0 : index
    %c32_66 = arith.constant 32 : index
    %c0_67 = arith.constant 0 : index
    %200 = vector.load %arg7[%c0_65, %c32_66, %c0_67] : memref<1x128x128xbf16, #tpu.memory_space<vmem>>, vector<1x16x128xbf16>
    %201 = vector.shape_cast %200 : vector<1x16x128xbf16> to vector<16x128xbf16>
    %cst_68 = arith.constant dense<0.000000e+00> : vector<64x128xf32>
    %202 = tpu.matmul %199, %201, %cst_68 {dimension_numbers = #tpu.dot_dimension_numbers<[1], [0], [0], [1], [0, 0, 1, 1], [], []>} : vector<64x16xbf16>, vector<16x128xbf16>, vector<64x128xf32> -> vector<64x128xf32>
    %203 = arith.addf %197, %202 : vector<64x128xf32>
    %204 = vector.extract_strided_slice %184 {offsets = [3, 0, 0], sizes = [1, 64, 16], strides = [1, 1, 1]} : vector<8x64x16xbf16> to vector<1x64x16xbf16>
    %205 = vector.shape_cast %204 : vector<1x64x16xbf16> to vector<64x16xbf16>
    %c0_69 = arith.constant 0 : index
    %c48_70 = arith.constant 48 : index
    %c0_71 = arith.constant 0 : index
    %206 = vector.load %arg7[%c0_69, %c48_70, %c0_71] : memref<1x128x128xbf16, #tpu.memory_space<vmem>>, vector<1x16x128xbf16>
    %207 = vector.shape_cast %206 : vector<1x16x128xbf16> to vector<16x128xbf16>
    %cst_72 = arith.constant dense<0.000000e+00> : vector<64x128xf32>
    %208 = tpu.matmul %205, %207, %cst_72 {dimension_numbers = #tpu.dot_dimension_numbers<[1], [0], [0], [1], [0, 0, 1, 1], [], []>} : vector<64x16xbf16>, vector<16x128xbf16>, vector<64x128xf32> -> vector<64x128xf32>
    %209 = arith.addf %203, %208 : vector<64x128xf32>
    %210 = vector.extract_strided_slice %184 {offsets = [4, 0, 0], sizes = [1, 64, 16], strides = [1, 1, 1]} : vector<8x64x16xbf16> to vector<1x64x16xbf16>
    %211 = vector.shape_cast %210 : vector<1x64x16xbf16> to vector<64x16xbf16>
    %c0_73 = arith.constant 0 : index
    %c64_74 = arith.constant 64 : index
    %c0_75 = arith.constant 0 : index
    %212 = vector.load %arg7[%c0_73, %c64_74, %c0_75] : memref<1x128x128xbf16, #tpu.memory_space<vmem>>, vector<1x16x128xbf16>
    %213 = vector.shape_cast %212 : vector<1x16x128xbf16> to vector<16x128xbf16>
    %cst_76 = arith.constant dense<0.000000e+00> : vector<64x128xf32>
    %214 = tpu.matmul %211, %213, %cst_76 {dimension_numbers = #tpu.dot_dimension_numbers<[1], [0], [0], [1], [0, 0, 1, 1], [], []>} : vector<64x16xbf16>, vector<16x128xbf16>, vector<64x128xf32> -> vector<64x128xf32>
    %215 = arith.addf %209, %214 : vector<64x128xf32>
    %216 = vector.extract_strided_slice %184 {offsets = [5, 0, 0], sizes = [1, 64, 16], strides = [1, 1, 1]} : vector<8x64x16xbf16> to vector<1x64x16xbf16>
    %217 = vector.shape_cast %216 : vector<1x64x16xbf16> to vector<64x16xbf16>
    %c0_77 = arith.constant 0 : index
    %c80_78 = arith.constant 80 : index
    %c0_79 = arith.constant 0 : index
    %218 = vector.load %arg7[%c0_77, %c80_78, %c0_79] : memref<1x128x128xbf16, #tpu.memory_space<vmem>>, vector<1x16x128xbf16>
    %219 = vector.shape_cast %218 : vector<1x16x128xbf16> to vector<16x128xbf16>
    %cst_80 = arith.constant dense<0.000000e+00> : vector<64x128xf32>
    %220 = tpu.matmul %217, %219, %cst_80 {dimension_numbers = #tpu.dot_dimension_numbers<[1], [0], [0], [1], [0, 0, 1, 1], [], []>} : vector<64x16xbf16>, vector<16x128xbf16>, vector<64x128xf32> -> vector<64x128xf32>
    %221 = arith.addf %215, %220 : vector<64x128xf32>
    %222 = vector.extract_strided_slice %184 {offsets = [6, 0, 0], sizes = [1, 64, 16], strides = [1, 1, 1]} : vector<8x64x16xbf16> to vector<1x64x16xbf16>
    %223 = vector.shape_cast %222 : vector<1x64x16xbf16> to vector<64x16xbf16>
    %c0_81 = arith.constant 0 : index
    %c96_82 = arith.constant 96 : index
    %c0_83 = arith.constant 0 : index
    %224 = vector.load %arg7[%c0_81, %c96_82, %c0_83] : memref<1x128x128xbf16, #tpu.memory_space<vmem>>, vector<1x16x128xbf16>
    %225 = vector.shape_cast %224 : vector<1x16x128xbf16> to vector<16x128xbf16>
    %cst_84 = arith.constant dense<0.000000e+00> : vector<64x128xf32>
    %226 = tpu.matmul %223, %225, %cst_84 {dimension_numbers = #tpu.dot_dimension_numbers<[1], [0], [0], [1], [0, 0, 1, 1], [], []>} : vector<64x16xbf16>, vector<16x128xbf16>, vector<64x128xf32> -> vector<64x128xf32>
    %227 = arith.addf %221, %226 : vector<64x128xf32>
    %228 = vector.extract_strided_slice %184 {offsets = [7, 0, 0], sizes = [1, 64, 16], strides = [1, 1, 1]} : vector<8x64x16xbf16> to vector<1x64x16xbf16>
    %229 = vector.shape_cast %228 : vector<1x64x16xbf16> to vector<64x16xbf16>
    %c0_85 = arith.constant 0 : index
    %c112_86 = arith.constant 112 : index
    %c0_87 = arith.constant 0 : index
    %230 = vector.load %arg7[%c0_85, %c112_86, %c0_87] : memref<1x128x128xbf16, #tpu.memory_space<vmem>>, vector<1x16x128xbf16>
    %231 = vector.shape_cast %230 : vector<1x16x128xbf16> to vector<16x128xbf16>
    %cst_88 = arith.constant dense<0.000000e+00> : vector<64x128xf32>
    %232 = tpu.matmul %229, %231, %cst_88 {dimension_numbers = #tpu.dot_dimension_numbers<[1], [0], [0], [1], [0, 0, 1, 1], [], []>} : vector<64x16xbf16>, vector<16x128xbf16>, vector<64x128xf32> -> vector<64x128xf32>
    %233 = arith.addf %227, %232 : vector<64x128xf32>
    %234 = tpu.concatenate %167, %233 in 0 : vector<64x128xf32>, vector<64x128xf32> -> vector<128x128xf32>
    %235 = vector.broadcast %10 : f32 to vector<128x128xf32>
    %236 = arith.mulf %235, %234 : vector<128x128xf32>
    %237 = arith.addf %4, %236 : vector<128x128xf32>
    %cst_89 = arith.constant dense<0.000000e+00> : vector<128xf32>
    %238 = vector.multi_reduction <add>, %237, %cst_89 [1] : vector<128x128xf32> to vector<128xf32>
    %239 = vector.shape_cast %238 : vector<128xf32> to vector<128x1xf32>
    %cst_90 = arith.constant 1.280000e+02 : f32
    %240 = vector.broadcast %cst_90 : f32 to vector<128x1xf32>
    %241 = arith.divf %239, %240 : vector<128x1xf32>
    %242 = arith.mulf %237, %237 : vector<128x128xf32>
    %cst_91 = arith.constant dense<0.000000e+00> : vector<128xf32>
    %243 = vector.multi_reduction <add>, %242, %cst_91 [1] : vector<128x128xf32> to vector<128xf32>
    %244 = vector.shape_cast %243 : vector<128xf32> to vector<128x1xf32>
    %cst_92 = arith.constant 1.280000e+02 : f32
    %245 = vector.broadcast %cst_92 : f32 to vector<128x1xf32>
    %246 = arith.divf %244, %245 : vector<128x1xf32>
    %247 = arith.mulf %241, %241 : vector<128x1xf32>
    %248 = arith.subf %246, %247 : vector<128x1xf32>
    %249 = vector.broadcast %241 : vector<128x1xf32> to vector<128x128xf32>
    %250 = arith.subf %237, %249 : vector<128x128xf32>
    %cst_93 = arith.constant 9.99999974E-6 : f32
    %251 = vector.broadcast %cst_93 : f32 to vector<128x1xf32>
    %252 = arith.addf %248, %251 : vector<128x1xf32>
    %253 = math.rsqrt %252 : vector<128x1xf32>
    %254 = vector.broadcast %253 : vector<128x1xf32> to vector<128x128xf32>
    %255 = arith.mulf %250, %254 : vector<128x128xf32>
    %256 = vector.broadcast %6 : vector<1x128xf32> to vector<128x128xf32>
    %257 = arith.mulf %255, %256 : vector<128x128xf32>
    %258 = vector.broadcast %8 : vector<1x128xf32> to vector<128x128xf32>
    %259 = arith.addf %257, %258 : vector<128x128xf32>
    %260 = arith.truncf %259 : vector<128x128xf32> to vector<128x128xbf16>
    %c0_94 = arith.constant 0 : index
    %c0_95 = arith.constant 0 : index
    %c0_96 = arith.constant 0 : index
    %261 = vector.load %arg9[%c0_94, %c0_95, %c0_96] : memref<1x128x256xbf16, #tpu.memory_space<vmem>>, vector<1x128x256xbf16>
    %262 = vector.shape_cast %261 : vector<1x128x256xbf16> to vector<128x256xbf16>
    %cst_97 = arith.constant dense<0.000000e+00> : vector<128x256xf32>
    %263 = tpu.matmul %260, %262, %cst_97 {dimension_numbers = #tpu.dot_dimension_numbers<[1], [0], [0], [1], [0, 0, 1, 1], [], []>} : vector<128x128xbf16>, vector<128x256xbf16>, vector<128x256xf32> -> vector<128x256xf32>
    %c0_98 = arith.constant 0 : index
    %c0_99 = arith.constant 0 : index
    %c0_100 = arith.constant 0 : index
    %264 = vector.load %arg10[%c0_98, %c0_99, %c0_100] : memref<1x1x256xf32, #tpu.memory_space<vmem>>, vector<1x1x256xf32>
    %265 = vector.shape_cast %264 : vector<1x1x256xf32> to vector<1x256xf32>
    %266 = vector.broadcast %265 : vector<1x256xf32> to vector<128x256xf32>
    %267 = arith.addf %263, %266 : vector<128x256xf32>
    %cst_101 = arith.constant 5.000000e-01 : f32
    %268 = vector.broadcast %cst_101 : f32 to vector<128x256xf32>
    %269 = arith.mulf %268, %267 : vector<128x256xf32>
    %cst_102 = arith.constant 0.707106769 : f32
    %270 = vector.broadcast %cst_102 : f32 to vector<128x256xf32>
    %271 = arith.mulf %267, %270 : vector<128x256xf32>
    %cst_103 = arith.constant 0.000000e+00 : f32
    %272 = vector.broadcast %cst_103 : f32 to vector<128x256xf32>
    %273 = arith.cmpf oge, %271, %272 : vector<128x256xf32>
    %cst_104 = arith.constant 1.000000e+00 : f32
    %cst_105 = arith.constant -1.000000e+00 : f32
    %274 = vector.broadcast %cst_104 : f32 to vector<128x256xf32>
    %275 = vector.broadcast %cst_105 : f32 to vector<128x256xf32>
    %276 = arith.select %273, %274, %275 : vector<128x256xi1>, vector<128x256xf32>
    %277 = math.absf %271 : vector<128x256xf32>
    %cst_106 = arith.constant 0.327591091 : f32
    %278 = vector.broadcast %cst_106 : f32 to vector<128x256xf32>
    %279 = arith.mulf %278, %277 : vector<128x256xf32>
    %cst_107 = arith.constant 1.000000e+00 : f32
    %280 = vector.broadcast %cst_107 : f32 to vector<128x256xf32>
    %281 = arith.addf %280, %279 : vector<128x256xf32>
    %cst_108 = arith.constant 1.000000e+00 : f32
    %282 = vector.broadcast %cst_108 : f32 to vector<128x256xf32>
    %283 = arith.divf %282, %281 : vector<128x256xf32>
    %cst_109 = arith.constant 1.06140542 : f32
    %284 = vector.broadcast %cst_109 : f32 to vector<128x256xf32>
    %285 = arith.mulf %284, %283 : vector<128x256xf32>
    %cst_110 = arith.constant -1.45315206 : f32
    %286 = vector.broadcast %cst_110 : f32 to vector<128x256xf32>
    %287 = arith.addf %285, %286 : vector<128x256xf32>
    %288 = arith.mulf %287, %283 : vector<128x256xf32>
    %cst_111 = arith.constant 1.42141378 : f32
    %289 = vector.broadcast %cst_111 : f32 to vector<128x256xf32>
    %290 = arith.addf %288, %289 : vector<128x256xf32>
    %291 = arith.mulf %290, %283 : vector<128x256xf32>
    %cst_112 = arith.constant -0.284496725 : f32
    %292 = vector.broadcast %cst_112 : f32 to vector<128x256xf32>
    %293 = arith.addf %291, %292 : vector<128x256xf32>
    %294 = arith.mulf %293, %283 : vector<128x256xf32>
    %cst_113 = arith.constant 0.254829586 : f32
    %295 = vector.broadcast %cst_113 : f32 to vector<128x256xf32>
    %296 = arith.addf %294, %295 : vector<128x256xf32>
    %297 = arith.mulf %296, %283 : vector<128x256xf32>
    %cst_114 = arith.constant 0.000000e+00 : f32
    %298 = vector.broadcast %cst_114 : f32 to vector<128x256xf32>
    %299 = arith.subf %298, %277 : vector<128x256xf32>
    %300 = arith.mulf %299, %277 : vector<128x256xf32>
    %301 = math.exp %300 : vector<128x256xf32>
    %302 = arith.mulf %297, %301 : vector<128x256xf32>
    %cst_115 = arith.constant 1.000000e+00 : f32
    %303 = vector.broadcast %cst_115 : f32 to vector<128x256xf32>
    %304 = arith.subf %303, %302 : vector<128x256xf32>
    %305 = arith.mulf %276, %304 : vector<128x256xf32>
    %cst_116 = arith.constant 1.000000e+00 : f32
    %306 = vector.broadcast %cst_116 : f32 to vector<128x256xf32>
    %307 = arith.addf %306, %305 : vector<128x256xf32>
    %308 = arith.mulf %269, %307 : vector<128x256xf32>
    %309 = arith.truncf %308 : vector<128x256xf32> to vector<128x256xbf16>
    %c0_117 = arith.constant 0 : index
    %c0_118 = arith.constant 0 : index
    %c0_119 = arith.constant 0 : index
    %310 = vector.load %arg11[%c0_117, %c0_118, %c0_119] : memref<1x256x128xbf16, #tpu.memory_space<vmem>>, vector<1x256x128xbf16>
    %311 = vector.shape_cast %310 : vector<1x256x128xbf16> to vector<256x128xbf16>
    %cst_120 = arith.constant dense<0.000000e+00> : vector<128x128xf32>
    %312 = tpu.matmul %309, %311, %cst_120 {dimension_numbers = #tpu.dot_dimension_numbers<[1], [0], [0], [1], [0, 0, 1, 1], [], []>} : vector<128x256xbf16>, vector<256x128xbf16>, vector<128x128xf32> -> vector<128x128xf32>
    %c0_121 = arith.constant 0 : index
    %c0_122 = arith.constant 0 : index
    %c0_123 = arith.constant 0 : index
    %313 = vector.load %arg12[%c0_121, %c0_122, %c0_123] : memref<1x1x128xf32, #tpu.memory_space<vmem>>, vector<1x1x128xf32>
    %314 = vector.shape_cast %313 : vector<1x1x128xf32> to vector<1x128xf32>
    %315 = vector.broadcast %314 : vector<1x128xf32> to vector<128x128xf32>
    %316 = arith.addf %312, %315 : vector<128x128xf32>
    %317 = vector.broadcast %10 : f32 to vector<128x128xf32>
    %318 = arith.mulf %317, %316 : vector<128x128xf32>
    %319 = arith.addf %237, %318 : vector<128x128xf32>
    %320 = vector.shape_cast %319 : vector<128x128xf32> to vector<2x64x128xf32>
    %c0_124 = arith.constant 0 : index
    %c0_125 = arith.constant 0 : index
    %c0_126 = arith.constant 0 : index
    %321 = vector.load %arg14[%c0_124, %c0_125, %c0_126] : memref<2x64x128xf32, #tpu.memory_space<vmem>>, vector<2x64x128xf32>
    tpu.vector_store %arg14[%c0_124, %c0_125, %c0_126], %320 {strides = array<i32>} : memref<2x64x128xf32, #tpu.memory_space<vmem>>, vector<2x64x128xf32>,
    return
  }
  func.func @transform_0(%arg0: i32, %arg1: i32) -> (i32, i32, i32) {
    %c0_i32 = arith.constant 0 : i32
    %c0_i32_0 = arith.constant 0 : i32
    %c0_i32_1 = arith.constant 0 : i32
    return %arg0, %c0_i32, %c0_i32_0 : i32, i32, i32
  }
  func.func @transform_1(%arg0: i32, %arg1: i32) -> (i32, i32, i32) {
    %c0_i32 = arith.constant 0 : i32
    %c0_i32_0 = arith.constant 0 : i32
    %c0_i32_1 = arith.constant 0 : i32
    return %arg1, %c0_i32, %c0_i32_0 : i32, i32, i32
  }
  func.func @transform_2(%arg0: i32, %arg1: i32) -> (i32, i32, i32) {
    %c0_i32 = arith.constant 0 : i32
    %c0_i32_0 = arith.constant 0 : i32
    %c0_i32_1 = arith.constant 0 : i32
    return %arg1, %c0_i32, %c0_i32_0 : i32, i32, i32
  }
  func.func @transform_3(%arg0: i32, %arg1: i32) -> (i32, i32, i32) {
    %c0_i32 = arith.constant 0 : i32
    %c0_i32_0 = arith.constant 0 : i32
    %c0_i32_1 = arith.constant 0 : i32
    return %arg1, %c0_i32, %c0_i32_0 : i32, i32, i32
  }
  func.func @transform_4(%arg0: i32, %arg1: i32) -> (i32, i32, i32) {
    %c0_i32 = arith.constant 0 : i32
    %c0_i32_0 = arith.constant 0 : i32
    %c0_i32_1 = arith.constant 0 : i32
    return %arg1, %c0_i32, %c0_i32_0 : i32, i32, i32
  }
  func.func @transform_5(%arg0: i32, %arg1: i32) -> (i32, i32, i32) {
    %c0_i32 = arith.constant 0 : i32
    %c0_i32_0 = arith.constant 0 : i32
    %c0_i32_1 = arith.constant 0 : i32
    return %arg1, %c0_i32, %c0_i32_0 : i32, i32, i32
  }
  func.func @transform_6(%arg0: i32, %arg1: i32) -> (i32, i32, i32) {
    %c0_i32 = arith.constant 0 : i32
    %c0_i32_0 = arith.constant 0 : i32
    %c0_i32_1 = arith.constant 0 : i32
    return %arg1, %c0_i32, %c0_i32_0 : i32, i32, i32
  }
  func.func @transform_7(%arg0: i32, %arg1: i32) -> (i32, i32, i32) {
    %c0_i32 = arith.constant 0 : i32
    %c0_i32_0 = arith.constant 0 : i32
    %c0_i32_1 = arith.constant 0 : i32
    return %arg1, %c0_i32, %c0_i32_0 : i32, i32, i32
  }
  func.func @transform_8(%arg0: i32, %arg1: i32) -> (i32, i32, i32) {
    %c0_i32 = arith.constant 0 : i32
    %c0_i32_0 = arith.constant 0 : i32
    %c0_i32_1 = arith.constant 0 : i32
    return %arg1, %c0_i32, %c0_i32_0 : i32, i32, i32
  }
  func.func @transform_9(%arg0: i32, %arg1: i32) -> (i32, i32, i32) {
    %c0_i32 = arith.constant 0 : i32
    %c0_i32_0 = arith.constant 0 : i32
    %c0_i32_1 = arith.constant 0 : i32
    return %arg1, %c0_i32, %c0_i32_0 : i32, i32, i32
  }
  func.func @transform_10(%arg0: i32, %arg1: i32) -> (i32, i32, i32) {
    %c0_i32 = arith.constant 0 : i32
    %c0_i32_0 = arith.constant 0 : i32
    %c0_i32_1 = arith.constant 0 : i32
    return %arg1, %c0_i32, %c0_i32_0 : i32, i32, i32
  }
  func.func @transform_11(%arg0: i32, %arg1: i32) -> i32 {
    %c0_i32 = arith.constant 0 : i32
    %c0_i32_0 = arith.constant 0 : i32
    return %c0_i32 : i32
  }
  func.func @transform_12(%arg0: i32, %arg1: i32) -> (i32, i32, i32) {
    %c0_i32 = arith.constant 0 : i32
    %c0_i32_0 = arith.constant 0 : i32
    %c0_i32_1 = arith.constant 0 : i32
    return %arg0, %c0_i32, %c0_i32_0 : i32, i32, i32
  }
}

</mosaic_0001>

<llo_original>
// kernel: transformer_encoder_pallas.1
$region0: #{transformer_encoder_pallas.1}
  #allocation0 [shape = 'u32[]', space=smem, size = 0x4, offset = 0x4, fixed_abs, tag = 'smem constant byte address 0x4 - core index']
  #allocation1 [shape = 'u32[72,128]{1,0:T(1,128)}', space=vmem, size = 0x9000, scoped, tag = 'internal scratch']
  %s0 = inlined_call_operand.vmem [shape: f32[4,64,128], index: 0, kind: input, shape index: {}]
  %s1 = inlined_call_operand.vmem [shape: f32[2,1,128], index: 1, kind: input, shape index: {}]
  %s2 = inlined_call_operand.vmem [shape: f32[2,1,128], index: 2, kind: input, shape index: {}]
  %s3 = inlined_call_operand.vmem [shape: bf16[2,128,384], index: 3, kind: input, shape index: {}]
  %s4 = inlined_call_operand.vmem [shape: f32[2,1,384], index: 4, kind: input, shape index: {}]
  %s5 = inlined_call_operand.vmem [shape: bf16[2,128,128], index: 5, kind: input, shape index: {}]
  %s6 = inlined_call_operand.vmem [shape: f32[2,1,128], index: 6, kind: input, shape index: {}]
  %s7 = inlined_call_operand.vmem [shape: bf16[2,128,256], index: 7, kind: input, shape index: {}]
  %s8 = inlined_call_operand.vmem [shape: f32[2,1,256], index: 8, kind: input, shape index: {}]
  %s9 = inlined_call_operand.vmem [shape: bf16[2,256,128], index: 9, kind: input, shape index: {}]
  %s10 = inlined_call_operand.vmem [shape: f32[2,1,128], index: 10, kind: input, shape index: {}]
  %s11 = inlined_call_operand.vmem [shape: f32[2], index: 11, kind: input, shape index: {}]
  %s12 = inlined_call_operand.hbm [shape: f32[4,64,128], index: 12, kind: output, shape index: {}]
  %s13 = sld [smem:[#allocation0]]
  $region89: #{transformer_encoder_pallas.1} parent=0
    _
  %s15 = ssub.s32 1, %s13
  %s16 = scalar_select 0, %s15, %s13
  $region1: #{transformer_encoder_pallas.1} parent=0
    #allocation2 [shape = 'u8[512]{0}', space=smem, size = 0x200, scoped, tag = 'input window, operand 11, single buffered']
    #allocation3 [shape = 's32[2]{0}', space=sflag, size = 0x8, scoped, tag = 'scoped memory for transformer_encoder_pallas.1']
    #allocation4 [shape = 's32[2]{0}', space=sflag, size = 0x8, scoped, tag = 'scoped memory for transformer_encoder_pallas.1']
    #allocation5 [shape = 'u8[131072]{0}', space=vmem, size = 0x20000, scoped, tag = 'output window, operand 0']
    %17 = vsyncpa [#allocation4], 0
    %18 = vsyncpa [#allocation3], 0
    %s19 = scalar_lea.sflag [#allocation3], 1
    %20 = vsyncpa %s19, 0
    loop: start=0, step=1, limit=6
    $region2: #{transformer_encoder_pallas.1} parent=1 // loop_pre_header
      _
    $region3: #{transformer_encoder_pallas.1} parent=1 // loop_header
      %s22 = sphi 0, %s26
      %p23 = scmp.ge.s32.totalorder %s22, 6
      %s29 = sphi 0, %s41
      %s30 = sphi 0, %s37
      %s31 = sphi 0, %s29
      %s32 = sphi 0, %s30
      %s33 = sphi 0, %s31
      %s34 = sphi 0, %s32
      %s44 = sphi 0, %s46
      %s47 = sphi 0, %s44
      %s48 = sphi 0, %s47
      %s64 = sphi 0, %s48
      %s70 = sphi 0, %s72
      %s73 = sphi 0, %s70
      %s74 = sphi 0, %s73
      %s90 = sphi 0, %s74
      %s96 = sphi 0, %s98
      %s99 = sphi 0, %s96
      %s100 = sphi 0, %s99
      %s116 = sphi 0, %s100
      %s122 = sphi 0, %s124
      %s125 = sphi 0, %s122
      %s126 = sphi 0, %s125
      %s142 = sphi 0, %s126
      %s148 = sphi 0, %s150
      %s151 = sphi 0, %s148
      %s152 = sphi 0, %s151
      %s168 = sphi 0, %s152
      %s174 = sphi 0, %s176
      %s177 = sphi 0, %s174
      %s178 = sphi 0, %s177
      %s194 = sphi 0, %s178
      %s200 = sphi 0, %s202
      %s203 = sphi 0, %s200
      %s204 = sphi 0, %s203
      %s220 = sphi 0, %s204
      %s226 = sphi 0, %s228
      %s229 = sphi 0, %s226
      %s230 = sphi 0, %s229
      %s246 = sphi 0, %s230
      %s252 = sphi 0, %s254
      %s255 = sphi 0, %s252
      %s256 = sphi 0, %s255
      %s272 = sphi 0, %s256
      %s278 = sphi 0, %s280
      %s281 = sphi 0, %s278
      %s282 = sphi 0, %s281
      %s298 = sphi 0, %s282
      %s304 = sphi 0, %s306
      %s307 = sphi 0, %s304
      %s308 = sphi 0, %s307
      %s324 = sphi 0, %s308
      %s328 = sphi 0, %s328
      %s330 = sphi 0, %s328
      %s331 = sphi 0, %s330
      %s345 = sphi 0, %s331
      %s351 = sphi 0, %s353
      %s354 = sphi 0, %s351
      %s355 = sphi 0, %s354
      %s371 = sphi 0, %s355
    $region4: #{transformer_encoder_pallas.1} parent=1 // loop_header_branch
      %25 = sbr.rel (%p23) target = $region8
    $region5: #{transformer_encoder_pallas.1} parent=1 // loop_body
      %s27 = ssub.s32 %s22, 1
      %s28 = ssub.s32 %s22, 2
      %s35 = sadd.s32 1, %s30
      %p36 = scmp.ge.s32.totalorder %s35, 2
      %s37 = scalar_select %p36, 0, %s35
      %s38 = sadd.s32 1, %s29
      %s39 = scalar_select %p36, %s38, %s29
      %p40 = scmp.ge.s32.totalorder %s39, 2
      %s41 = scalar_select %p40, 0, %s39
      %s42 = ssub.s32 %s29, %s41
      %p43 = scmp.eq.s32.totalorder %s42, 0
      %s45 = sadd.s32 %s44, 1
      %s46 = scalar_select %p43, %s44, %s45
      %p49 = pneg %p43
      %p50 = scmp.eq.s32.totalorder %s22, 3
      %p51 = por %p49, %p50
      %p52 = scmp.ne.s32.totalorder %s44, %s47
      %p53 = scmp.eq.s32.totalorder %s22, 0
      %p54 = por %p52, %p53
      %p55 = scmp.ne.s32.totalorder %s44, %s47
      %p56 = scmp.eq.s32.totalorder %s27, 3
      %p57 = por %p55, %p56
      %p58 = scmp.ne.s32.totalorder %s47, %s48
      %p59 = scmp.eq.s32.totalorder %s27, 0
      %p60 = por %p58, %p59
      %p61 = scmp.ne.s32.totalorder %s47, %s48
      %p62 = scmp.eq.s32.totalorder %s28, 3
      %p63 = por %p61, %p62
      %p65 = scmp.ne.s32.totalorder %s48, %s64
      %p66 = scmp.eq.s32.totalorder %s28, 0
      %p67 = por %p65, %p66
      %s68 = ssub.s32 %s30, %s37
      %p69 = scmp.eq.s32.totalorder %s68, 0
      %s71 = sadd.s32 %s70, 1
      %s72 = scalar_select %p69, %s70, %s71
      %p75 = pneg %p69
      %p76 = scmp.eq.s32.totalorder %s22, 3
      %p77 = por %p75, %p76
      %p78 = scmp.ne.s32.totalorder %s70, %s73
      %p79 = scmp.eq.s32.totalorder %s22, 0
      %p80 = por %p78, %p79
      %p81 = scmp.ne.s32.totalorder %s70, %s73
      %p82 = scmp.eq.s32.totalorder %s27, 3
      %p83 = por %p81, %p82
      %p84 = scmp.ne.s32.totalorder %s73, %s74
      %p85 = scmp.eq.s32.totalorder %s27, 0
      %p86 = por %p84, %p85
      %p87 = scmp.ne.s32.totalorder %s73, %s74
      %p88 = scmp.eq.s32.totalorder %s28, 3
      %p89 = por %p87, %p88
      %p91 = scmp.ne.s32.totalorder %s74, %s90
      %p92 = scmp.eq.s32.totalorder %s28, 0
      %p93 = por %p91, %p92
      %s94 = ssub.s32 %s30, %s37
      %p95 = scmp.eq.s32.totalorder %s94, 0
      %s97 = sadd.s32 %s96, 1
      %s98 = scalar_select %p95, %s96, %s97
      %p101 = pneg %p95
      %p102 = scmp.eq.s32.totalorder %s22, 3
      %p103 = por %p101, %p102
      %p104 = scmp.ne.s32.totalorder %s96, %s99
      %p105 = scmp.eq.s32.totalorder %s22, 0
      %p106 = por %p104, %p105
      %p107 = scmp.ne.s32.totalorder %s96, %s99
      %p108 = scmp.eq.s32.totalorder %s27, 3
      %p109 = por %p107, %p108
      %p110 = scmp.ne.s32.totalorder %s99, %s100
      %p111 = scmp.eq.s32.totalorder %s27, 0
      %p112 = por %p110, %p111
      %p113 = scmp.ne.s32.totalorder %s99, %s100
      %p114 = scmp.eq.s32.totalorder %s28, 3
      %p115 = por %p113, %p114
      %p117 = scmp.ne.s32.totalorder %s100, %s116
      %p118 = scmp.eq.s32.totalorder %s28, 0
      %p119 = por %p117, %p118
      %s120 = ssub.s32 %s30, %s37
      %p121 = scmp.eq.s32.totalorder %s120, 0
      %s123 = sadd.s32 %s122, 1
      %s124 = scalar_select %p121, %s122, %s123
      %p127 = pneg %p121
      %p128 = scmp.eq.s32.totalorder %s22, 3
      %p129 = por %p127, %p128
      %p130 = scmp.ne.s32.totalorder %s122, %s125
      %p131 = scmp.eq.s32.totalorder %s22, 0
      %p132 = por %p130, %p131
      %p133 = scmp.ne.s32.totalorder %s122, %s125
      %p134 = scmp.eq.s32.totalorder %s27, 3
      %p135 = por %p133, %p134
      %p136 = scmp.ne.s32.totalorder %s125, %s126
      %p137 = scmp.eq.s32.totalorder %s27, 0
      %p138 = por %p136, %p137
      %p139 = scmp.ne.s32.totalorder %s125, %s126
      %p140 = scmp.eq.s32.totalorder %s28, 3
      %p141 = por %p139, %p140
      %p143 = scmp.ne.s32.totalorder %s126, %s142
      %p144 = scmp.eq.s32.totalorder %s28, 0
      %p145 = por %p143, %p144
      %s146 = ssub.s32 %s30, %s37
      %p147 = scmp.eq.s32.totalorder %s146, 0
      %s149 = sadd.s32 %s148, 1
      %s150 = scalar_select %p147, %s148, %s149
      %p153 = pneg %p147
      %p154 = scmp.eq.s32.totalorder %s22, 3
      %p155 = por %p153, %p154
      %p156 = scmp.ne.s32.totalorder %s148, %s151
      %p157 = scmp.eq.s32.totalorder %s22, 0
      %p158 = por %p156, %p157
      %p159 = scmp.ne.s32.totalorder %s148, %s151
      %p160 = scmp.eq.s32.totalorder %s27, 3
      %p161 = por %p159, %p160
      %p162 = scmp.ne.s32.totalorder %s151, %s152
      %p163 = scmp.eq.s32.totalorder %s27, 0
      %p164 = por %p162, %p163
      %p165 = scmp.ne.s32.totalorder %s151, %s152
      %p166 = scmp.eq.s32.totalorder %s28, 3
      %p167 = por %p165, %p166
      %p169 = scmp.ne.s32.totalorder %s152, %s168
      %p170 = scmp.eq.s32.totalorder %s28, 0
      %p171 = por %p169, %p170
      %s172 = ssub.s32 %s30, %s37
      %p173 = scmp.eq.s32.totalorder %s172, 0
      %s175 = sadd.s32 %s174, 1
      %s176 = scalar_select %p173, %s174, %s175
      %p179 = pneg %p173
      %p180 = scmp.eq.s32.totalorder %s22, 3
      %p181 = por %p179, %p180
      %p182 = scmp.ne.s32.totalorder %s174, %s177
      %p183 = scmp.eq.s32.totalorder %s22, 0
      %p184 = por %p182, %p183
      %p185 = scmp.ne.s32.totalorder %s174, %s177
      %p186 = scmp.eq.s32.totalorder %s27, 3
      %p187 = por %p185, %p186
      %p188 = scmp.ne.s32.totalorder %s177, %s178
      %p189 = scmp.eq.s32.totalorder %s27, 0
      %p190 = por %p188, %p189
      %p191 = scmp.ne.s32.totalorder %s177, %s178
      %p192 = scmp.eq.s32.totalorder %s28, 3
      %p193 = por %p191, %p192
      %p195 = scmp.ne.s32.totalorder %s178, %s194
      %p196 = scmp.eq.s32.totalorder %s28, 0
      %p197 = por %p195, %p196
      %s198 = ssub.s32 %s30, %s37
      %p199 = scmp.eq.s32.totalorder %s198, 0
      %s201 = sadd.s32 %s200, 1
      %s202 = scalar_select %p199, %s200, %s201
      %p205 = pneg %p199
      %p206 = scmp.eq.s32.totalorder %s22, 3
      %p207 = por %p205, %p206
      %p208 = scmp.ne.s32.totalorder %s200, %s203
      %p209 = scmp.eq.s32.totalorder %s22, 0
      %p210 = por %p208, %p209
      %p211 = scmp.ne.s32.totalorder %s200, %s203
      %p212 = scmp.eq.s32.totalorder %s27, 3
      %p213 = por %p211, %p212
      %p214 = scmp.ne.s32.totalorder %s203, %s204
      %p215 = scmp.eq.s32.totalorder %s27, 0
      %p216 = por %p214, %p215
      %p217 = scmp.ne.s32.totalorder %s203, %s204
      %p218 = scmp.eq.s32.totalorder %s28, 3
      %p219 = por %p217, %p218
      %p221 = scmp.ne.s32.totalorder %s204, %s220
      %p222 = scmp.eq.s32.totalorder %s28, 0
      %p223 = por %p221, %p222
      %s224 = ssub.s32 %s30, %s37
      %p225 = scmp.eq.s32.totalorder %s224, 0
      %s227 = sadd.s32 %s226, 1
      %s228 = scalar_select %p225, %s226, %s227
      %p231 = pneg %p225
      %p232 = scmp.eq.s32.totalorder %s22, 3
      %p233 = por %p231, %p232
      %p234 = scmp.ne.s32.totalorder %s226, %s229
      %p235 = scmp.eq.s32.totalorder %s22, 0
      %p236 = por %p234, %p235
      %p237 = scmp.ne.s32.totalorder %s226, %s229
      %p238 = scmp.eq.s32.totalorder %s27, 3
      %p239 = por %p237, %p238
      %p240 = scmp.ne.s32.totalorder %s229, %s230
      %p241 = scmp.eq.s32.totalorder %s27, 0
      %p242 = por %p240, %p241
      %p243 = scmp.ne.s32.totalorder %s229, %s230
      %p244 = scmp.eq.s32.totalorder %s28, 3
      %p245 = por %p243, %p244
      %p247 = scmp.ne.s32.totalorder %s230, %s246
      %p248 = scmp.eq.s32.totalorder %s28, 0
      %p249 = por %p247, %p248
      %s250 = ssub.s32 %s30, %s37
      %p251 = scmp.eq.s32.totalorder %s250, 0
      %s253 = sadd.s32 %s252, 1
      %s254 = scalar_select %p251, %s252, %s253
      %p257 = pneg %p251
      %p258 = scmp.eq.s32.totalorder %s22, 3
      %p259 = por %p257, %p258
      %p260 = scmp.ne.s32.totalorder %s252, %s255
      %p261 = scmp.eq.s32.totalorder %s22, 0
      %p262 = por %p260, %p261
      %p263 = scmp.ne.s32.totalorder %s252, %s255
      %p264 = scmp.eq.s32.totalorder %s27, 3
      %p265 = por %p263, %p264
      %p266 = scmp.ne.s32.totalorder %s255, %s256
      %p267 = scmp.eq.s32.totalorder %s27, 0
      %p268 = por %p266, %p267
      %p269 = scmp.ne.s32.totalorder %s255, %s256
      %p270 = scmp.eq.s32.totalorder %s28, 3
      %p271 = por %p269, %p270
      %p273 = scmp.ne.s32.totalorder %s256, %s272
      %p274 = scmp.eq.s32.totalorder %s28, 0
      %p275 = por %p273, %p274
      %s276 = ssub.s32 %s30, %s37
      %p277 = scmp.eq.s32.totalorder %s276, 0
      %s279 = sadd.s32 %s278, 1
      %s280 = scalar_select %p277, %s278, %s279
      %p283 = pneg %p277
      %p284 = scmp.eq.s32.totalorder %s22, 3
      %p285 = por %p283, %p284
      %p286 = scmp.ne.s32.totalorder %s278, %s281
      %p287 = scmp.eq.s32.totalorder %s22, 0
      %p288 = por %p286, %p287
      %p289 = scmp.ne.s32.totalorder %s278, %s281
      %p290 = scmp.eq.s32.totalorder %s27, 3
      %p291 = por %p289, %p290
      %p292 = scmp.ne.s32.totalorder %s281, %s282
      %p293 = scmp.eq.s32.totalorder %s27, 0
      %p294 = por %p292, %p293
      %p295 = scmp.ne.s32.totalorder %s281, %s282
      %p296 = scmp.eq.s32.totalorder %s28, 3
      %p297 = por %p295, %p296
      %p299 = scmp.ne.s32.totalorder %s282, %s298
      %p300 = scmp.eq.s32.totalorder %s28, 0
      %p301 = por %p299, %p300
      %s302 = ssub.s32 %s30, %s37
      %p303 = scmp.eq.s32.totalorder %s302, 0
      %s305 = sadd.s32 %s304, 1
      %s306 = scalar_select %p303, %s304, %s305
      %p309 = pneg %p303
      %p310 = scmp.eq.s32.totalorder %s22, 3
      %p311 = por %p309, %p310
      %p312 = scmp.ne.s32.totalorder %s304, %s307
      %p313 = scmp.eq.s32.totalorder %s22, 0
      %p314 = por %p312, %p313
      %p315 = scmp.ne.s32.totalorder %s304, %s307
      %p316 = scmp.eq.s32.totalorder %s27, 3
      %p317 = por %p315, %p316
      %p318 = scmp.ne.s32.totalorder %s307, %s308
      %p319 = scmp.eq.s32.totalorder %s27, 0
      %p320 = por %p318, %p319
      %p321 = scmp.ne.s32.totalorder %s307, %s308
      %p322 = scmp.eq.s32.totalorder %s28, 3
      %p323 = por %p321, %p322
      %p325 = scmp.ne.s32.totalorder %s308, %s324
      %p326 = scmp.eq.s32.totalorder %s28, 0
      %p327 = por %p325, %p326
      %s329 = sadd.s32 %s328, 1
      %p332 = scmp.eq.s32.totalorder %s22, 3
      %p333 = scmp.ne.s32.totalorder %s328, %s330
      %p334 = scmp.eq.s32.totalorder %s22, 0
      %p335 = por %p333, %p334
      %p336 = scmp.ne.s32.totalorder %s328, %s330
      %p337 = scmp.eq.s32.totalorder %s27, 3
      %p338 = por %p336, %p337
      %p339 = scmp.ne.s32.totalorder %s330, %s331
      %p340 = scmp.eq.s32.totalorder %s27, 0
      %p341 = por %p339, %p340
      %p342 = scmp.ne.s32.totalorder %s330, %s331
      %p343 = scmp.eq.s32.totalorder %s28, 3
      %p344 = por %p342, %p343
      %p346 = scmp.ne.s32.totalorder %s331, %s345
      %p347 = scmp.eq.s32.totalorder %s28, 0
      %p348 = por %p346, %p347
      %s349 = ssub.s32 %s29, %s41
      %p350 = scmp.eq.s32.totalorder %s349, 0
      %s352 = sadd.s32 %s351, 1
      %s353 = scalar_select %p350, %s351, %s352
      %p356 = pneg %p350
      %p357 = scmp.eq.s32.totalorder %s22, 3
      %p358 = por %p356, %p357
      %p359 = scmp.ne.s32.totalorder %s351, %s354
      %p360 = scmp.eq.s32.totalorder %s22, 0
      %p361 = por %p359, %p360
      %p362 = scmp.ne.s32.totalorder %s351, %s354
      %p363 = scmp.eq.s32.totalorder %s27, 3
      %p364 = por %p362, %p363
      %p365 = scmp.ne.s32.totalorder %s354, %s355
      %p366 = scmp.eq.s32.totalorder %s27, 0
      %p367 = por %p365, %p366
      %p368 = scmp.ne.s32.totalorder %s354, %s355
      %p369 = scmp.eq.s32.totalorder %s28, 3
      %p370 = por %p368, %p369
      %p372 = scmp.ne.s32.totalorder %s355, %s371
      %p373 = scmp.eq.s32.totalorder %s28, 0
      %p374 = por %p372, %p373
      %p375 = scmp.le.s32.totalorder 1, %s22
      %p376 = scmp.lt.s32.totalorder %s22, 5
      %p377 = pnand %p375, %p376
      %p378 = pneg %p377
      // Predicated region
      $region9: #{transformer_encoder_pallas.1} parent=5 // pred_check
        _
      $region10: #{transformer_encoder_pallas.1} parent=5 // pred_check_branch
        %380 = sbr.rel (%p377) target = $region12
      $region11: #{transformer_encoder_pallas.1} parent=5 // pred_region
        %s381 = ssub.s32 %s22, 1
        // Predicated region
        $region13: #{transformer_encoder_pallas.1} parent=11 // pred_check
          %p382 = pneg %p341
        $region14: #{transformer_encoder_pallas.1} parent=11 // pred_check_branch
          %384 = sbr.rel (%p382) target = $region16
        $region15: #{transformer_encoder_pallas.1} parent=11 // pred_region
          %386 = vsyncadd [#allocation4], 0
          %s388 = sshll.u32 %s11, 4
          %s389 = int_to_ptr.vmem [resolvable:$true] %s388
          %391 = dma.vmem_to_smem %s389, 16, [#allocation2], [#allocation4]
        $region16: #{transformer_encoder_pallas.1} parent=11 // pred_fallthru
          _
      $region12: #{transformer_encoder_pallas.1} parent=5 // pred_fallthru
        _
      %p392 = scmp.lt.s32.totalorder %s22, 4
      // Predicated region
      $region17: #{transformer_encoder_pallas.1} parent=5 // pred_check
        %p393 = pneg %p392
      $region18: #{transformer_encoder_pallas.1} parent=5 // pred_check_branch
        %395 = sbr.rel (%p393) target = $region20
      $region19: #{transformer_encoder_pallas.1} parent=5 // pred_region
        // Predicated region
        $region21: #{transformer_encoder_pallas.1} parent=19 // pred_check
          %p396 = pneg %p54
        $region22: #{transformer_encoder_pallas.1} parent=19 // pred_check_branch
          %398 = sbr.rel (%p396) target = $region24
        $region23: #{transformer_encoder_pallas.1} parent=19 // pred_region
          %s399 = smul.u32 2, %s29
          %p400 = scmp.lt.s32.totalorder %s399, 3
          %s401 = scalar_select %p400, %s399, 3
          %s402 = smul.addr %s401, 8
          %s403 = smul.addr %s402, 8
          %s404 = scalar_lea.vmem %s0, %s403
          %s405 = smul.u32 2, %s29
        $region24: #{transformer_encoder_pallas.1} parent=19 // pred_fallthru
          _
        // Predicated region
        $region25: #{transformer_encoder_pallas.1} parent=19 // pred_check
          %p406 = pneg %p80
        $region26: #{transformer_encoder_pallas.1} parent=19 // pred_check_branch
          %408 = sbr.rel (%p406) target = $region28
        $region27: #{transformer_encoder_pallas.1} parent=19 // pred_region
          %p409 = scmp.lt.s32.totalorder %s30, 1
          %s410 = scalar_select %p409, %s30, 1
          %s411 = scalar_lea.vmem %s1, %s410
        $region28: #{transformer_encoder_pallas.1} parent=19 // pred_fallthru
          _
        // Predicated region
        $region29: #{transformer_encoder_pallas.1} parent=19 // pred_check
          %p412 = pneg %p106
        $region30: #{transformer_encoder_pallas.1} parent=19 // pred_check_branch
          %414 = sbr.rel (%p412) target = $region32
        $region31: #{transformer_encoder_pallas.1} parent=19 // pred_region
          %p415 = scmp.lt.s32.totalorder %s30, 1
          %s416 = scalar_select %p415, %s30, 1
          %s417 = scalar_lea.vmem %s2, %s416
        $region32: #{transformer_encoder_pallas.1} parent=19 // pred_fallthru
          _
        // Predicated region
        $region33: #{transformer_encoder_pallas.1} parent=19 // pred_check
          %p418 = pneg %p132
        $region34: #{transformer_encoder_pallas.1} parent=19 // pred_check_branch
          %420 = sbr.rel (%p418) target = $region36
        $region35: #{transformer_encoder_pallas.1} parent=19 // pred_region
          %p421 = scmp.lt.s32.totalorder %s30, 1
          %s422 = scalar_select %p421, %s30, 1
          %s423 = smul.addr %s422, 48
          %s424 = smul.addr %s423, 4
          %s425 = scalar_lea.vmem %s3, %s424
        $region36: #{transformer_encoder_pallas.1} parent=19 // pred_fallthru
          _
        // Predicated region
        $region37: #{transformer_encoder_pallas.1} parent=19 // pred_check
          %p426 = pneg %p158
        $region38: #{transformer_encoder_pallas.1} parent=19 // pred_check_branch
          %428 = sbr.rel (%p426) target = $region40
        $region39: #{transformer_encoder_pallas.1} parent=19 // pred_region
          %p429 = scmp.lt.s32.totalorder %s30, 1
          %s430 = scalar_select %p429, %s30, 1
          %s431 = smul.addr %s430, 3
          %s432 = scalar_lea.vmem %s4, %s431
        $region40: #{transformer_encoder_pallas.1} parent=19 // pred_fallthru
          _
        // Predicated region
        $region41: #{transformer_encoder_pallas.1} parent=19 // pred_check
          %p433 = pneg %p184
        $region42: #{transformer_encoder_pallas.1} parent=19 // pred_check_branch
          %435 = sbr.rel (%p433) target = $region44
        $region43: #{transformer_encoder_pallas.1} parent=19 // pred_region
          %p436 = scmp.lt.s32.totalorder %s30, 1
          %s437 = scalar_select %p436, %s30, 1
          %s438 = smul.addr %s437, 16
          %s439 = smul.addr %s438, 4
          %s440 = scalar_lea.vmem %s5, %s439
        $region44: #{transformer_encoder_pallas.1} parent=19 // pred_fallthru
          _
        // Predicated region
        $region45: #{transformer_encoder_pallas.1} parent=19 // pred_check
          %p441 = pneg %p210
        $region46: #{transformer_encoder_pallas.1} parent=19 // pred_check_branch
          %443 = sbr.rel (%p441) target = $region48
        $region47: #{transformer_encoder_pallas.1} parent=19 // pred_region
          %p444 = scmp.lt.s32.totalorder %s30, 1
          %s445 = scalar_select %p444, %s30, 1
          %s446 = scalar_lea.vmem %s6, %s445
        $region48: #{transformer_encoder_pallas.1} parent=19 // pred_fallthru
          _
        // Predicated region
        $region49: #{transformer_encoder_pallas.1} parent=19 // pred_check
          %p447 = pneg %p236
        $region50: #{transformer_encoder_pallas.1} parent=19 // pred_check_branch
          %449 = sbr.rel (%p447) target = $region52
        $region51: #{transformer_encoder_pallas.1} parent=19 // pred_region
          %p450 = scmp.lt.s32.totalorder %s30, 1
          %s451 = scalar_select %p450, %s30, 1
          %s452 = smul.addr %s451, 32
          %s453 = smul.addr %s452, 4
          %s454 = scalar_lea.vmem %s7, %s453
        $region52: #{transformer_encoder_pallas.1} parent=19 // pred_fallthru
          _
        // Predicated region
        $region53: #{transformer_encoder_pallas.1} parent=19 // pred_check
          %p455 = pneg %p262
        $region54: #{transformer_encoder_pallas.1} parent=19 // pred_check_branch
          %457 = sbr.rel (%p455) target = $region56
        $region55: #{transformer_encoder_pallas.1} parent=19 // pred_region
          %p458 = scmp.lt.s32.totalorder %s30, 1
          %s459 = scalar_select %p458, %s30, 1
          %s460 = smul.addr %s459, 2
          %s461 = scalar_lea.vmem %s8, %s460
        $region56: #{transformer_encoder_pallas.1} parent=19 // pred_fallthru
          _
        // Predicated region
        $region57: #{transformer_encoder_pallas.1} parent=19 // pred_check
          %p462 = pneg %p288
        $region58: #{transformer_encoder_pallas.1} parent=19 // pred_check_branch
          %464 = sbr.rel (%p462) target = $region60
        $region59: #{transformer_encoder_pallas.1} parent=19 // pred_region
          %p465 = scmp.lt.s32.totalorder %s30, 1
          %s466 = scalar_select %p465, %s30, 1
          %s467 = smul.addr %s466, 32
          %s468 = smul.addr %s467, 4
          %s469 = scalar_lea.vmem %s9, %s468
        $region60: #{transformer_encoder_pallas.1} parent=19 // pred_fallthru
          _
        // Predicated region
        $region61: #{transformer_encoder_pallas.1} parent=19 // pred_check
          %p470 = pneg %p314
        $region62: #{transformer_encoder_pallas.1} parent=19 // pred_check_branch
          %472 = sbr.rel (%p470) target = $region64
        $region63: #{transformer_encoder_pallas.1} parent=19 // pred_region
          %p473 = scmp.lt.s32.totalorder %s30, 1
          %s474 = scalar_select %p473, %s30, 1
          %s475 = scalar_lea.vmem %s10, %s474
        $region64: #{transformer_encoder_pallas.1} parent=19 // pred_fallthru
          _
      $region20: #{transformer_encoder_pallas.1} parent=5 // pred_fallthru
        _
      %p476 = scmp.le.s32.totalorder 1, %s22
      %p477 = scmp.lt.s32.totalorder %s22, 5
      %p478 = pnand %p476, %p477
      %p479 = pneg %p478
      // Predicated region
      $region65: #{transformer_encoder_pallas.1} parent=5 // pred_check
        _
      $region66: #{transformer_encoder_pallas.1} parent=5 // pred_check_branch
        %481 = sbr.rel (%p478) target = $region68
      $region67: #{transformer_encoder_pallas.1} parent=5 // pred_region
        %s482 = ssub.s32 %s22, 1
        // Predicated region
        $region69: #{transformer_encoder_pallas.1} parent=67 // pred_check
          %p483 = pneg %p341
        $region70: #{transformer_encoder_pallas.1} parent=67 // pred_check_branch
          %485 = sbr.rel (%p483) target = $region72
        $region71: #{transformer_encoder_pallas.1} parent=67 // pred_region
          %487 = dma.done [#allocation4], 16
        $region72: #{transformer_encoder_pallas.1} parent=67 // pred_fallthru
          _
        %488 = sfence
        %s489 = smul.u32 2, %s31
        %p490 = scmp.lt.s32.totalorder %s489, 3
        %s491 = scalar_select %p490, %s489, 3
        %s492 = smul.addr %s491, 8
        %s493 = smul.addr %s492, 8
        %s494 = scalar_lea.vmem %s0, %s493
        %p495 = pneg %p60
        %p496 = pneg %p57
        %p497 = scmp.lt.s32.totalorder %s32, 1
        %s498 = scalar_select %p497, %s32, 1
        %s499 = scalar_lea.vmem %s1, %s498
        %p500 = pneg %p86
        %p501 = pneg %p83
        %p502 = scmp.lt.s32.totalorder %s32, 1
        %s503 = scalar_select %p502, %s32, 1
        %s504 = scalar_lea.vmem %s2, %s503
        %p505 = pneg %p112
        %p506 = pneg %p109
        %p507 = scmp.lt.s32.totalorder %s32, 1
        %s508 = scalar_select %p507, %s32, 1
        %s509 = smul.addr %s508, 48
        %s510 = smul.addr %s509, 4
        %s511 = scalar_lea.vmem %s3, %s510
        %p512 = pneg %p138
        %p513 = pneg %p135
        %p514 = scmp.lt.s32.totalorder %s32, 1
        %s515 = scalar_select %p514, %s32, 1
        %s516 = smul.addr %s515, 3
        %s517 = scalar_lea.vmem %s4, %s516
        %p518 = pneg %p164
        %p519 = pneg %p161
        %p520 = scmp.lt.s32.totalorder %s32, 1
        %s521 = scalar_select %p520, %s32, 1
        %s522 = smul.addr %s521, 16
        %s523 = smul.addr %s522, 4
        %s524 = scalar_lea.vmem %s5, %s523
        %p525 = pneg %p190
        %p526 = pneg %p187
        %p527 = scmp.lt.s32.totalorder %s32, 1
        %s528 = scalar_select %p527, %s32, 1
        %s529 = scalar_lea.vmem %s6, %s528
        %p530 = pneg %p216
        %p531 = pneg %p213
        %p532 = scmp.lt.s32.totalorder %s32, 1
        %s533 = scalar_select %p532, %s32, 1
        %s534 = smul.addr %s533, 32
        %s535 = smul.addr %s534, 4
        %s536 = scalar_lea.vmem %s7, %s535
        %p537 = pneg %p242
        %p538 = pneg %p239
        %p539 = scmp.lt.s32.totalorder %s32, 1
        %s540 = scalar_select %p539, %s32, 1
        %s541 = smul.addr %s540, 2
        %s542 = scalar_lea.vmem %s8, %s541
        %p543 = pneg %p268
        %p544 = pneg %p265
        %p545 = scmp.lt.s32.totalorder %s32, 1
        %s546 = scalar_select %p545, %s32, 1
        %s547 = smul.addr %s546, 32
        %s548 = smul.addr %s547, 4
        %s549 = scalar_lea.vmem %s9, %s548
        %p550 = pneg %p294
        %p551 = pneg %p291
        %p552 = scmp.lt.s32.totalorder %s32, 1
        %s553 = scalar_select %p552, %s32, 1
        %s554 = scalar_lea.vmem %s10, %s553
        %p555 = pneg %p320
        %p556 = pneg %p317
        %p557 = pneg %p341
        %p558 = pneg %p338
        %p559 = pneg %p367
        %p560 = pneg %p364
        %s561 = sand.u32 %s354, 1
        %s562 = scalar_lea.sflag [#allocation3], %s561
        %s563 = sand.u32 %s354, 1
        %s564 = smul.addr %s563, 128
        %s565 = scalar_lea.vmem [#allocation5], %s564
        %s566 = smul.u32 2, %s31
        %p567 = scmp.lt.s32.totalorder %s566, 3
        %s568 = scalar_select %p567, %s566, 3
        %s569 = smul.addr %s568, 8
        %s570 = smul.addr %s569, 8
        %s571 = scalar_lea.vmem %s0, %s570
        %s572 = smul.u32 2, %s31
        %p573 = scmp.lt.s32.totalorder %s32, 1
        %s574 = scalar_select %p573, %s32, 1
        %s575 = scalar_lea.vmem %s1, %s574
        %p576 = scmp.lt.s32.totalorder %s32, 1
        %s577 = scalar_select %p576, %s32, 1
        %s578 = scalar_lea.vmem %s2, %s577
        %p579 = scmp.lt.s32.totalorder %s32, 1
        %s580 = scalar_select %p579, %s32, 1
        %s581 = smul.addr %s580, 48
        %s582 = smul.addr %s581, 4
        %s583 = scalar_lea.vmem %s3, %s582
        %p584 = scmp.lt.s32.totalorder %s32, 1
        %s585 = scalar_select %p584, %s32, 1
        %s586 = smul.addr %s585, 3
        %s587 = scalar_lea.vmem %s4, %s586
        %p588 = scmp.lt.s32.totalorder %s32, 1
        %s589 = scalar_select %p588, %s32, 1
        %s590 = smul.addr %s589, 16
        %s591 = smul.addr %s590, 4
        %s592 = scalar_lea.vmem %s5, %s591
        %p593 = scmp.lt.s32.totalorder %s32, 1
        %s594 = scalar_select %p593, %s32, 1
        %s595 = scalar_lea.vmem %s6, %s594
        %p596 = scmp.lt.s32.totalorder %s32, 1
        %s597 = scalar_select %p596, %s32, 1
        %s598 = smul.addr %s597, 32
        %s599 = smul.addr %s598, 4
        %s600 = scalar_lea.vmem %s7, %s599
        %p601 = scmp.lt.s32.totalorder %s32, 1
        %s602 = scalar_select %p601, %s32, 1
        %s603 = smul.addr %s602, 2
        %s604 = scalar_lea.vmem %s8, %s603
        %p605 = scmp.lt.s32.totalorder %s32, 1
        %s606 = scalar_select %p605, %s32, 1
        %s607 = smul.addr %s606, 32
        %s608 = smul.addr %s607, 4
        %s609 = scalar_lea.vmem %s9, %s608
        %p610 = scmp.lt.s32.totalorder %s32, 1
        %s611 = scalar_select %p610, %s32, 1
        %s612 = scalar_lea.vmem %s10, %s611
        %s613 = smul.u32 2, %s31
        %p615 = scmp.eq.s32.totalorder %s32, 0
        // Predicated region
        $region73: #{transformer_encoder_pallas.1} parent=67 // pred_check
          %p616 = pneg %p615
        $region74: #{transformer_encoder_pallas.1} parent=67 // pred_check_branch
          %618 = sbr.rel (%p616) target = $region76
        $region75: #{transformer_encoder_pallas.1} parent=67 // pred_region
          %v619 = vld [vmem:[%s571] sm:$0xff]
          %v620 = vld [vmem:[%s571 + $0x8] sm:$0xff]
          %v621 = vld [vmem:[%s571 + $0x10] sm:$0xff]
          %v622 = vld [vmem:[%s571 + $0x18] sm:$0xff]
          %v623 = vld [vmem:[%s571 + $0x20] sm:$0xff]
          %v624 = vld [vmem:[%s571 + $0x28] sm:$0xff]
          %v625 = vld [vmem:[%s571 + $0x30] sm:$0xff]
          %v626 = vld [vmem:[%s571 + $0x38] sm:$0xff]
          %v627 = vld [vmem:[%s571 + $0x40] sm:$0xff]
          %v628 = vld [vmem:[%s571 + $0x48] sm:$0xff]
          %v629 = vld [vmem:[%s571 + $0x50] sm:$0xff]
          %v630 = vld [vmem:[%s571 + $0x58] sm:$0xff]
          %v631 = vld [vmem:[%s571 + $0x60] sm:$0xff]
          %v632 = vld [vmem:[%s571 + $0x68] sm:$0xff]
          %v633 = vld [vmem:[%s571 + $0x70] sm:$0xff]
          %v634 = vld [vmem:[%s571 + $0x78] sm:$0xff]
          %635 = vst [vmem:[%s565] sm:$0xff] %v619
          %636 = vst [vmem:[%s565 + $0x8] sm:$0xff] %v620
          %637 = vst [vmem:[%s565 + $0x10] sm:$0xff] %v621
          %638 = vst [vmem:[%s565 + $0x18] sm:$0xff] %v622
          %639 = vst [vmem:[%s565 + $0x20] sm:$0xff] %v623
          %640 = vst [vmem:[%s565 + $0x28] sm:$0xff] %v624
          %641 = vst [vmem:[%s565 + $0x30] sm:$0xff] %v625
          %642 = vst [vmem:[%s565 + $0x38] sm:$0xff] %v626
          %643 = vst [vmem:[%s565 + $0x40] sm:$0xff] %v627
          %644 = vst [vmem:[%s565 + $0x48] sm:$0xff] %v628
          %645 = vst [vmem:[%s565 + $0x50] sm:$0xff] %v629
          %646 = vst [vmem:[%s565 + $0x58] sm:$0xff] %v630
          %647 = vst [vmem:[%s565 + $0x60] sm:$0xff] %v631
          %648 = vst [vmem:[%s565 + $0x68] sm:$0xff] %v632
          %649 = vst [vmem:[%s565 + $0x70] sm:$0xff] %v633
          %650 = vst [vmem:[%s565 + $0x78] sm:$0xff] %v634
        $region76: #{transformer_encoder_pallas.1} parent=67 // pred_fallthru
          _
        %v651 = vld [vmem:[%s565] sm:$0xff]
        %v652 = vld [vmem:[%s565 + $0x8] sm:$0xff]
        %v653 = vld [vmem:[%s565 + $0x10] sm:$0xff]
        %v654 = vld [vmem:[%s565 + $0x18] sm:$0xff]
        %v655 = vld [vmem:[%s565 + $0x20] sm:$0xff]
        %v656 = vld [vmem:[%s565 + $0x28] sm:$0xff]
        %v657 = vld [vmem:[%s565 + $0x30] sm:$0xff]
        %v658 = vld [vmem:[%s565 + $0x38] sm:$0xff]
        %v659 = vld [vmem:[%s565 + $0x40] sm:$0xff]
        %v660 = vld [vmem:[%s565 + $0x48] sm:$0xff]
        %v661 = vld [vmem:[%s565 + $0x50] sm:$0xff]
        %v662 = vld [vmem:[%s565 + $0x58] sm:$0xff]
        %v663 = vld [vmem:[%s565 + $0x60] sm:$0xff]
        %v664 = vld [vmem:[%s565 + $0x68] sm:$0xff]
        %v665 = vld [vmem:[%s565 + $0x70] sm:$0xff]
        %v666 = vld [vmem:[%s565 + $0x78] sm:$0xff]
        %v667 = vld [vmem:[%s575] sm:$0x1]
        %v668 = vld [vmem:[%s578] sm:$0x1]
        %s669 = sld [smem:[#allocation2 + %s32]]
        %670 = vadd.xlane.f32.xlu0 %v651
        %v671 = vpop.xlane.xlu0 %670
        %672 = vadd.xlane.f32.xlu0 %v652
        %v673 = vpop.xlane.xlu0 %672
        %674 = vadd.xlane.f32.xlu0 %v653
        %v675 = vpop.xlane.xlu0 %674
        %676 = vadd.xlane.f32.xlu0 %v654
        %v677 = vpop.xlane.xlu0 %676
        %678 = vadd.xlane.f32.xlu0 %v655
        %v679 = vpop.xlane.xlu0 %678
        %680 = vadd.xlane.f32.xlu0 %v656
        %v681 = vpop.xlane.xlu0 %680
        %682 = vadd.xlane.f32.xlu0 %v657
        %v683 = vpop.xlane.xlu0 %682
        %684 = vadd.xlane.f32.xlu0 %v658
        %v685 = vpop.xlane.xlu0 %684
        %686 = vadd.xlane.f32.xlu0 %v659
        %v687 = vpop.xlane.xlu0 %686
        %688 = vadd.xlane.f32.xlu0 %v660
        %v689 = vpop.xlane.xlu0 %688
        %690 = vadd.xlane.f32.xlu0 %v661
        %v691 = vpop.xlane.xlu0 %690
        %692 = vadd.xlane.f32.xlu0 %v662
        %v693 = vpop.xlane.xlu0 %692
        %694 = vadd.xlane.f32.xlu0 %v663
        %v695 = vpop.xlane.xlu0 %694
        %696 = vadd.xlane.f32.xlu0 %v664
        %v697 = vpop.xlane.xlu0 %696
        %698 = vadd.xlane.f32.xlu0 %v665
        %v699 = vpop.xlane.xlu0 %698
        %700 = vadd.xlane.f32.xlu0 %v666
        %v701 = vpop.xlane.xlu0 %700
        %v702 = vrcp.pop 128.0
        %v703 = vmul.f32 128.0, %v702
        %v704 = vsub.f32 1.0, %v703
        %v705 = vmul.f32 %v702, %v704
        %v706 = vadd.f32 %v702, %v705
        %vm707 = vweird.f32 %v702
        %v708 = vsel %vm707, %v702, %v706
        %v709 = vmul.f32 %v671, %v708
        %v710 = vmul.f32 %v673, %v708
        %v711 = vmul.f32 %v675, %v708
        %v712 = vmul.f32 %v677, %v708
        %v713 = vmul.f32 %v679, %v708
        %v714 = vmul.f32 %v681, %v708
        %v715 = vmul.f32 %v683, %v708
        %v716 = vmul.f32 %v685, %v708
        %v717 = vmul.f32 %v687, %v708
        %v718 = vmul.f32 %v689, %v708
        %v719 = vmul.f32 %v691, %v708
        %v720 = vmul.f32 %v693, %v708
        %v721 = vmul.f32 %v695, %v708
        %v722 = vmul.f32 %v697, %v708
        %v723 = vmul.f32 %v699, %v708
        %v724 = vmul.f32 %v701, %v708
        %v725 = vmul.f32 %v651, %v651
        %v726 = vmul.f32 %v652, %v652
        %v727 = vmul.f32 %v653, %v653
        %v728 = vmul.f32 %v654, %v654
        %v729 = vmul.f32 %v655, %v655
        %v730 = vmul.f32 %v656, %v656
        %v731 = vmul.f32 %v657, %v657
        %v732 = vmul.f32 %v658, %v658
        %v733 = vmul.f32 %v659, %v659
        %v734 = vmul.f32 %v660, %v660
        %v735 = vmul.f32 %v661, %v661
        %v736 = vmul.f32 %v662, %v662
        %v737 = vmul.f32 %v663, %v663
        %v738 = vmul.f32 %v664, %v664
        %v739 = vmul.f32 %v665, %v665
        %v740 = vmul.f32 %v666, %v666
        %741 = vadd.xlane.f32.xlu0 %v725
        %v742 = vpop.xlane.xlu0 %741
        %743 = vadd.xlane.f32.xlu0 %v726
        %v744 = vpop.xlane.xlu0 %743
        %745 = vadd.xlane.f32.xlu0 %v727
        %v746 = vpop.xlane.xlu0 %745
        %747 = vadd.xlane.f32.xlu0 %v728
        %v748 = vpop.xlane.xlu0 %747
        %749 = vadd.xlane.f32.xlu0 %v729
        %v750 = vpop.xlane.xlu0 %749
        %751 = vadd.xlane.f32.xlu0 %v730
        %v752 = vpop.xlane.xlu0 %751
        %753 = vadd.xlane.f32.xlu0 %v731
        %v754 = vpop.xlane.xlu0 %753
        %755 = vadd.xlane.f32.xlu0 %v732
        %v756 = vpop.xlane.xlu0 %755
        %757 = vadd.xlane.f32.xlu0 %v733
        %v758 = vpop.xlane.xlu0 %757
        %759 = vadd.xlane.f32.xlu0 %v734
        %v760 = vpop.xlane.xlu0 %759
        %761 = vadd.xlane.f32.xlu0 %v735
        %v762 = vpop.xlane.xlu0 %761
        %763 = vadd.xlane.f32.xlu0 %v736
        %v764 = vpop.xlane.xlu0 %763
        %765 = vadd.xlane.f32.xlu0 %v737
        %v766 = vpop.xlane.xlu0 %765
        %767 = vadd.xlane.f32.xlu0 %v738
        %v768 = vpop.xlane.xlu0 %767
        %769 = vadd.xlane.f32.xlu0 %v739
        %v770 = vpop.xlane.xlu0 %769
        %771 = vadd.xlane.f32.xlu0 %v740
        %v772 = vpop.xlane.xlu0 %771
        %v773 = vmul.f32 %v742, %v708
        %v774 = vmul.f32 %v744, %v708
        %v775 = vmul.f32 %v746, %v708
        %v776 = vmul.f32 %v748, %v708
        %v777 = vmul.f32 %v750, %v708
        %v778 = vmul.f32 %v752, %v708
        %v779 = vmul.f32 %v754, %v708
        %v780 = vmul.f32 %v756, %v708
        %v781 = vmul.f32 %v758, %v708
        %v782 = vmul.f32 %v760, %v708
        %v783 = vmul.f32 %v762, %v708
        %v784 = vmul.f32 %v764, %v708
        %v785 = vmul.f32 %v766, %v708
        %v786 = vmul.f32 %v768, %v708
        %v787 = vmul.f32 %v770, %v708
        %v788 = vmul.f32 %v772, %v708
        %v789 = vmul.f32 %v709, %v709
        %v790 = vmul.f32 %v710, %v710
        %v791 = vmul.f32 %v711, %v711
        %v792 = vmul.f32 %v712, %v712
        %v793 = vmul.f32 %v713, %v713
        %v794 = vmul.f32 %v714, %v714
        %v795 = vmul.f32 %v715, %v715
        %v796 = vmul.f32 %v716, %v716
        %v797 = vmul.f32 %v717, %v717
        %v798 = vmul.f32 %v718, %v718
        %v799 = vmul.f32 %v719, %v719
        %v800 = vmul.f32 %v720, %v720
        %v801 = vmul.f32 %v721, %v721
        %v802 = vmul.f32 %v722, %v722
        %v803 = vmul.f32 %v723, %v723
        %v804 = vmul.f32 %v724, %v724
        %v805 = vsub.f32 %v773, %v789
        %v806 = vsub.f32 %v774, %v790
        %v807 = vsub.f32 %v775, %v791
        %v808 = vsub.f32 %v776, %v792
        %v809 = vsub.f32 %v777, %v793
        %v810 = vsub.f32 %v778, %v794
        %v811 = vsub.f32 %v779, %v795
        %v812 = vsub.f32 %v780, %v796
        %v813 = vsub.f32 %v781, %v797
        %v814 = vsub.f32 %v782, %v798
        %v815 = vsub.f32 %v783, %v799
        %v816 = vsub.f32 %v784, %v800
        %v817 = vsub.f32 %v785, %v801
        %v818 = vsub.f32 %v786, %v802
        %v819 = vsub.f32 %v787, %v803
        %v820 = vsub.f32 %v788, %v804
        %v821 = vsub.f32 %v651, %v709
        %v822 = vsub.f32 %v652, %v710
        %v823 = vsub.f32 %v653, %v711
        %v824 = vsub.f32 %v654, %v712
        %v825 = vsub.f32 %v655, %v713
        %v826 = vsub.f32 %v656, %v714
        %v827 = vsub.f32 %v657, %v715
        %v828 = vsub.f32 %v658, %v716
        %v829 = vsub.f32 %v659, %v717
        %v830 = vsub.f32 %v660, %v718
        %v831 = vsub.f32 %v661, %v719
        %v832 = vsub.f32 %v662, %v720
        %v833 = vsub.f32 %v663, %v721
        %v834 = vsub.f32 %v664, %v722
        %v835 = vsub.f32 %v665, %v723
        %v836 = vsub.f32 %v666, %v724
        %v837 = vadd.f32 %v805, 1e-05
        %v838 = vadd.f32 %v806, 1e-05
        %v839 = vadd.f32 %v807, 1e-05
        %v840 = vadd.f32 %v808, 1e-05
        %v841 = vadd.f32 %v809, 1e-05
        %v842 = vadd.f32 %v810, 1e-05
        %v843 = vadd.f32 %v811, 1e-05
        %v844 = vadd.f32 %v812, 1e-05
        %v845 = vadd.f32 %v813, 1e-05
        %v846 = vadd.f32 %v814, 1e-05
        %v847 = vadd.f32 %v815, 1e-05
        %v848 = vadd.f32 %v816, 1e-05
        %v849 = vadd.f32 %v817, 1e-05
        %v850 = vadd.f32 %v818, 1e-05
        %v851 = vadd.f32 %v819, 1e-05
        %v852 = vadd.f32 %v820, 1e-05
        %v853 = vrsqrt.pop %v837
        %v854 = vmul.f32 %v853, %v837
        %v855 = vmul.f32 %v854, %v853
        %v856 = vmul.f32 0.5, %v855
        %v857 = vsub.f32 1.5, %v856
        %v858 = vmul.f32 %v853, %v857
        %vm859 = vweird.f32 %v837
        %vm860 = vweird.f32 %v853
        %vm861 = vmor %vm859, %vm860
        %v862 = vsel %vm861, %v853, %v858
        %v863 = vrsqrt.pop %v838
        %v864 = vmul.f32 %v863, %v838
        %v865 = vmul.f32 %v864, %v863
        %v866 = vmul.f32 0.5, %v865
        %v867 = vsub.f32 1.5, %v866
        %v868 = vmul.f32 %v863, %v867
        %vm869 = vweird.f32 %v838
        %vm870 = vweird.f32 %v863
        %vm871 = vmor %vm869, %vm870
        %v872 = vsel %vm871, %v863, %v868
        %v873 = vrsqrt.pop %v839
        %v874 = vmul.f32 %v873, %v839
        %v875 = vmul.f32 %v874, %v873
        %v876 = vmul.f32 0.5, %v875
        %v877 = vsub.f32 1.5, %v876
        %v878 = vmul.f32 %v873, %v877
        %vm879 = vweird.f32 %v839
        %vm880 = vweird.f32 %v873
        %vm881 = vmor %vm879, %vm880
        %v882 = vsel %vm881, %v873, %v878
        %v883 = vrsqrt.pop %v840
        %v884 = vmul.f32 %v883, %v840
        %v885 = vmul.f32 %v884, %v883
        %v886 = vmul.f32 0.5, %v885
        %v887 = vsub.f32 1.5, %v886
        %v888 = vmul.f32 %v883, %v887
        %vm889 = vweird.f32 %v840
        %vm890 = vweird.f32 %v883
        %vm891 = vmor %vm889, %vm890
        %v892 = vsel %vm891, %v883, %v888
        %v893 = vrsqrt.pop %v841
        %v894 = vmul.f32 %v893, %v841
        %v895 = vmul.f32 %v894, %v893
        %v896 = vmul.f32 0.5, %v895
        %v897 = vsub.f32 1.5, %v896
        %v898 = vmul.f32 %v893, %v897
        %vm899 = vweird.f32 %v841
        %vm900 = vweird.f32 %v893
        %vm901 = vmor %vm899, %vm900
        %v902 = vsel %vm901, %v893, %v898
        %v903 = vrsqrt.pop %v842
        %v904 = vmul.f32 %v903, %v842
        %v905 = vmul.f32 %v904, %v903
        %v906 = vmul.f32 0.5, %v905
        %v907 = vsub.f32 1.5, %v906
        %v908 = vmul.f32 %v903, %v907
        %vm909 = vweird.f32 %v842
        %vm910 = vweird.f32 %v903
        %vm911 = vmor %vm909, %vm910
        %v912 = vsel %vm911, %v903, %v908
        %v913 = vrsqrt.pop %v843
        %v914 = vmul.f32 %v913, %v843
        %v915 = vmul.f32 %v914, %v913
        %v916 = vmul.f32 0.5, %v915
        %v917 = vsub.f32 1.5, %v916
        %v918 = vmul.f32 %v913, %v917
        %vm919 = vweird.f32 %v843
        %vm920 = vweird.f32 %v913
        %vm921 = vmor %vm919, %vm920
        %v922 = vsel %vm921, %v913, %v918
        %v923 = vrsqrt.pop %v844
        %v924 = vmul.f32 %v923, %v844
        %v925 = vmul.f32 %v924, %v923
        %v926 = vmul.f32 0.5, %v925
        %v927 = vsub.f32 1.5, %v926
        %v928 = vmul.f32 %v923, %v927
        %vm929 = vweird.f32 %v844
        %vm930 = vweird.f32 %v923
        %vm931 = vmor %vm929, %vm930
        %v932 = vsel %vm931, %v923, %v928
        %v933 = vrsqrt.pop %v845
        %v934 = vmul.f32 %v933, %v845
        %v935 = vmul.f32 %v934, %v933
        %v936 = vmul.f32 0.5, %v935
        %v937 = vsub.f32 1.5, %v936
        %v938 = vmul.f32 %v933, %v937
        %vm939 = vweird.f32 %v845
        %vm940 = vweird.f32 %v933
        %vm941 = vmor %vm939, %vm940
        %v942 = vsel %vm941, %v933, %v938
        %v943 = vrsqrt.pop %v846
        %v944 = vmul.f32 %v943, %v846
        %v945 = vmul.f32 %v944, %v943
        %v946 = vmul.f32 0.5, %v945
        %v947 = vsub.f32 1.5, %v946
        %v948 = vmul.f32 %v943, %v947
        %vm949 = vweird.f32 %v846
        %vm950 = vweird.f32 %v943
        %vm951 = vmor %vm949, %vm950
        %v952 = vsel %vm951, %v943, %v948
        %v953 = vrsqrt.pop %v847
        %v954 = vmul.f32 %v953, %v847
        %v955 = vmul.f32 %v954, %v953
        %v956 = vmul.f32 0.5, %v955
        %v957 = vsub.f32 1.5, %v956
        %v958 = vmul.f32 %v953, %v957
        %vm959 = vweird.f32 %v847
        %vm960 = vweird.f32 %v953
        %vm961 = vmor %vm959, %vm960
        %v962 = vsel %vm961, %v953, %v958
        %v963 = vrsqrt.pop %v848
        %v964 = vmul.f32 %v963, %v848
        %v965 = vmul.f32 %v964, %v963
        %v966 = vmul.f32 0.5, %v965
        %v967 = vsub.f32 1.5, %v966
        %v968 = vmul.f32 %v963, %v967
        %vm969 = vweird.f32 %v848
        %vm970 = vweird.f32 %v963
        %vm971 = vmor %vm969, %vm970
        %v972 = vsel %vm971, %v963, %v968
        %v973 = vrsqrt.pop %v849
        %v974 = vmul.f32 %v973, %v849
        %v975 = vmul.f32 %v974, %v973
        %v976 = vmul.f32 0.5, %v975
        %v977 = vsub.f32 1.5, %v976
        %v978 = vmul.f32 %v973, %v977
        %vm979 = vweird.f32 %v849
        %vm980 = vweird.f32 %v973
        %vm981 = vmor %vm979, %vm980
        %v982 = vsel %vm981, %v973, %v978
        %v983 = vrsqrt.pop %v850
        %v984 = vmul.f32 %v983, %v850
        %v985 = vmul.f32 %v984, %v983
        %v986 = vmul.f32 0.5, %v985
        %v987 = vsub.f32 1.5, %v986
        %v988 = vmul.f32 %v983, %v987
        %vm989 = vweird.f32 %v850
        %vm990 = vweird.f32 %v983
        %vm991 = vmor %vm989, %vm990
        %v992 = vsel %vm991, %v983, %v988
        %v993 = vrsqrt.pop %v851
        %v994 = vmul.f32 %v993, %v851
        %v995 = vmul.f32 %v994, %v993
        %v996 = vmul.f32 0.5, %v995
        %v997 = vsub.f32 1.5, %v996
        %v998 = vmul.f32 %v993, %v997
        %vm999 = vweird.f32 %v851
        %vm1000 = vweird.f32 %v993
        %vm1001 = vmor %vm999, %vm1000
        %v1002 = vsel %vm1001, %v993, %v998
        %v1003 = vrsqrt.pop %v852
        %v1004 = vmul.f32 %v1003, %v852
        %v1005 = vmul.f32 %v1004, %v1003
        %v1006 = vmul.f32 0.5, %v1005
        %v1007 = vsub.f32 1.5, %v1006
        %v1008 = vmul.f32 %v1003, %v1007
        %vm1009 = vweird.f32 %v852
        %vm1010 = vweird.f32 %v1003
        %vm1011 = vmor %vm1009, %vm1010
        %v1012 = vsel %vm1011, %v1003, %v1008
        %v1013 = vmul.f32 %v821, %v862
        %v1014 = vmul.f32 %v822, %v872
        %v1015 = vmul.f32 %v823, %v882
        %v1016 = vmul.f32 %v824, %v892
        %v1017 = vmul.f32 %v825, %v902
        %v1018 = vmul.f32 %v826, %v912
        %v1019 = vmul.f32 %v827, %v922
        %v1020 = vmul.f32 %v828, %v932
        %v1021 = vmul.f32 %v829, %v942
        %v1022 = vmul.f32 %v830, %v952
        %v1023 = vmul.f32 %v831, %v962
        %v1024 = vmul.f32 %v832, %v972
        %v1025 = vmul.f32 %v833, %v982
        %v1026 = vmul.f32 %v834, %v992
        %v1027 = vmul.f32 %v835, %v1002
        %v1028 = vmul.f32 %v836, %v1012
        %v1030 = vperm.slane %v667, 0
        %v1032 = vmul.f32 %v1013, %v1030
        %v1033 = vmul.f32 %v1014, %v1030
        %v1034 = vmul.f32 %v1015, %v1030
        %v1035 = vmul.f32 %v1016, %v1030
        %v1036 = vmul.f32 %v1017, %v1030
        %v1037 = vmul.f32 %v1018, %v1030
        %v1038 = vmul.f32 %v1019, %v1030
        %v1039 = vmul.f32 %v1020, %v1030
        %v1040 = vmul.f32 %v1021, %v1030
        %v1041 = vmul.f32 %v1022, %v1030
        %v1042 = vmul.f32 %v1023, %v1030
        %v1043 = vmul.f32 %v1024, %v1030
        %v1044 = vmul.f32 %v1025, %v1030
        %v1045 = vmul.f32 %v1026, %v1030
        %v1046 = vmul.f32 %v1027, %v1030
        %v1047 = vmul.f32 %v1028, %v1030
        %v1049 = vperm.slane %v668, 0
        %v1051 = vadd.f32 %v1032, %v1049
        %v1052 = vadd.f32 %v1033, %v1049
        %v1053 = vadd.f32 %v1034, %v1049
        %v1054 = vadd.f32 %v1035, %v1049
        %v1055 = vadd.f32 %v1036, %v1049
        %v1056 = vadd.f32 %v1037, %v1049
        %v1057 = vadd.f32 %v1038, %v1049
        %v1058 = vadd.f32 %v1039, %v1049
        %v1059 = vadd.f32 %v1040, %v1049
        %v1060 = vadd.f32 %v1041, %v1049
        %v1061 = vadd.f32 %v1042, %v1049
        %v1062 = vadd.f32 %v1043, %v1049
        %v1063 = vadd.f32 %v1044, %v1049
        %v1064 = vadd.f32 %v1045, %v1049
        %v1065 = vadd.f32 %v1046, %v1049
        %v1066 = vadd.f32 %v1047, %v1049
        %v1067 = vpack.c.bf16 %v1052, %v1051
        %v1068 = vpack.c.bf16 %v1054, %v1053
        %v1069 = vpack.c.bf16 %v1056, %v1055
        %v1070 = vpack.c.bf16 %v1058, %v1057
        %v1071 = vpack.c.bf16 %v1060, %v1059
        %v1072 = vpack.c.bf16 %v1062, %v1061
        %v1073 = vpack.c.bf16 %v1064, %v1063
        %v1074 = vpack.c.bf16 %v1066, %v1065
        %v1075 = vld [vmem:[%s583] sm:$0xff]
        %v1076 = vld [vmem:[%s583 + $0x8] sm:$0xf]
        %v1077 = vld [vmem:[%s583 + $0xc] sm:$0xff]
        %v1078 = vld [vmem:[%s583 + $0x14] sm:$0xf]
        %v1079 = vld [vmem:[%s583 + $0x18] sm:$0xff]
        %v1080 = vld [vmem:[%s583 + $0x20] sm:$0xf]
        %v1081 = vld [vmem:[%s583 + $0x24] sm:$0xff]
        %v1082 = vld [vmem:[%s583 + $0x2c] sm:$0xf]
        %v1083 = vld [vmem:[%s583 + $0x30] sm:$0xff]
        %v1084 = vld [vmem:[%s583 + $0x38] sm:$0xf]
        %v1085 = vld [vmem:[%s583 + $0x3c] sm:$0xff]
        %v1086 = vld [vmem:[%s583 + $0x44] sm:$0xf]
        %v1087 = vld [vmem:[%s583 + $0x48] sm:$0xff]
        %v1088 = vld [vmem:[%s583 + $0x50] sm:$0xf]
        %v1089 = vld [vmem:[%s583 + $0x54] sm:$0xff]
        %v1090 = vld [vmem:[%s583 + $0x5c] sm:$0xf]
        %v1091 = vld [vmem:[%s583 + $0x60] sm:$0xff]
        %v1092 = vld [vmem:[%s583 + $0x68] sm:$0xf]
        %v1093 = vld [vmem:[%s583 + $0x6c] sm:$0xff]
        %v1094 = vld [vmem:[%s583 + $0x74] sm:$0xf]
        %v1095 = vld [vmem:[%s583 + $0x78] sm:$0xff]
        %v1096 = vld [vmem:[%s583 + $0x80] sm:$0xf]
        %v1097 = vld [vmem:[%s583 + $0x84] sm:$0xff]
        %v1098 = vld [vmem:[%s583 + $0x8c] sm:$0xf]
        %v1099 = vld [vmem:[%s583 + $0x90] sm:$0xff]
        %v1100 = vld [vmem:[%s583 + $0x98] sm:$0xf]
        %v1101 = vld [vmem:[%s583 + $0x9c] sm:$0xff]
        %v1102 = vld [vmem:[%s583 + $0xa4] sm:$0xf]
        %v1103 = vld [vmem:[%s583 + $0xa8] sm:$0xff]
        %v1104 = vld [vmem:[%s583 + $0xb0] sm:$0xf]
        %v1105 = vld [vmem:[%s583 + $0xb4] sm:$0xff]
        %v1106 = vld [vmem:[%s583 + $0xbc] sm:$0xf]
        %v1107 = vld [vmem:[%s587] sm:$0x7]
        %v1109 = vperm.slane %v1107, 0
        %v1110 = vperm.slane %v1107, 1
        %v1111 = vperm.slane %v1107, 2
        %v1147 = vunpack.c.l.b16 %v1075
        %v1148 = vunpack.c.h.b16 %v1075
        %v1149 = vunpack.c.l.b16 %v1076
        %v1150 = vunpack.c.l.b16 %v1077
        %v1151 = vunpack.c.h.b16 %v1077
        %v1152 = vunpack.c.l.b16 %v1078
        %v1153 = vunpack.c.l.b16 %v1079
        %v1154 = vunpack.c.h.b16 %v1079
        %v1155 = vunpack.c.l.b16 %v1080
        %v1156 = vunpack.c.l.b16 %v1081
        %v1157 = vunpack.c.h.b16 %v1081
        %v1158 = vunpack.c.l.b16 %v1082
        %v1159 = vunpack.c.l.b16 %v1083
        %v1160 = vunpack.c.h.b16 %v1083
        %v1161 = vunpack.c.l.b16 %v1084
        %v1162 = vunpack.c.l.b16 %v1085
        %v1163 = vunpack.c.h.b16 %v1085
        %v1164 = vunpack.c.l.b16 %v1086
        %v1165 = vunpack.c.l.b16 %v1087
        %v1166 = vunpack.c.h.b16 %v1087
        %v1167 = vunpack.c.l.b16 %v1088
        %v1168 = vunpack.c.l.b16 %v1089
        %v1169 = vunpack.c.h.b16 %v1089
        %v1170 = vunpack.c.l.b16 %v1090
        %v1171 = vunpack.c.l.b16 %v1091
        %v1172 = vunpack.c.h.b16 %v1091
        %v1173 = vunpack.c.l.b16 %v1092
        %v1174 = vunpack.c.l.b16 %v1093
        %v1175 = vunpack.c.h.b16 %v1093
        %v1176 = vunpack.c.l.b16 %v1094
        %v1177 = vunpack.c.l.b16 %v1095
        %v1178 = vunpack.c.h.b16 %v1095
        %v1179 = vunpack.c.l.b16 %v1096
        %v1180 = vunpack.c.l.b16 %v1097
        %v1181 = vunpack.c.h.b16 %v1097
        %v1182 = vunpack.c.l.b16 %v1098
        %v1183 = vunpack.c.l.b16 %v1099
        %v1184 = vunpack.c.h.b16 %v1099
        %v1185 = vunpack.c.l.b16 %v1100
        %v1186 = vunpack.c.l.b16 %v1101
        %v1187 = vunpack.c.h.b16 %v1101
        %v1188 = vunpack.c.l.b16 %v1102
        %v1189 = vunpack.c.l.b16 %v1103
        %v1190 = vunpack.c.h.b16 %v1103
        %v1191 = vunpack.c.l.b16 %v1104
        %v1192 = vunpack.c.l.b16 %v1105
        %v1193 = vunpack.c.h.b16 %v1105
        %v1194 = vunpack.c.l.b16 %v1106
        %v1195 = vpack.c.b16 %v1150, %v1147
        %v1196 = vpack.c.b16 %v1151, %v1148
        %v1197 = vpack.c.b16 %v1152, %v1149
        %v1198 = vpack.c.b16 %v1156, %v1153
        %v1199 = vpack.c.b16 %v1157, %v1154
        %v1200 = vpack.c.b16 %v1158, %v1155
        %v1201 = vpack.c.b16 %v1162, %v1159
        %v1202 = vpack.c.b16 %v1163, %v1160
        %v1203 = vpack.c.b16 %v1164, %v1161
        %v1204 = vpack.c.b16 %v1168, %v1165
        %v1205 = vpack.c.b16 %v1169, %v1166
        %v1206 = vpack.c.b16 %v1170, %v1167
        %v1207 = vpack.c.b16 %v1174, %v1171
        %v1208 = vpack.c.b16 %v1175, %v1172
        %v1209 = vpack.c.b16 %v1176, %v1173
        %v1210 = vpack.c.b16 %v1180, %v1177
        %v1211 = vpack.c.b16 %v1181, %v1178
        %v1212 = vpack.c.b16 %v1182, %v1179
        %v1213 = vpack.c.b16 %v1186, %v1183
        %v1214 = vpack.c.b16 %v1187, %v1184
        %v1215 = vpack.c.b16 %v1188, %v1185
        %v1216 = vpack.c.b16 %v1192, %v1189
        %v1217 = vpack.c.b16 %v1193, %v1190
        %v1218 = vpack.c.b16 %v1194, %v1191
        %1243 = vmatpush.bf16.msra.mxu0 %v1216
        %1244 = vmatpush.bf16.msra.mxu0 %v1213
        %1245 = vmatpush.bf16.msra.mxu0 %v1210
        %1246 = vmatpush.bf16.msra.mxu0 %v1207
        %1247 = vmatpush.bf16.msra.mxu0 %v1204
        %1248 = vmatpush.bf16.msra.mxu0 %v1201
        %1249 = vmatpush.bf16.msra.mxu0 %v1198
        %1250 = vmatpush.bf16.msra.mxu0 %v1195
        %1251 = vmatmul.bf16.gmra.mxu0 %v1067
        %v1252 = vpop.f32.mrf.mxu0
        %v1253 = vadd.f32 %v1109, %v1252
        %v1254 = vpop.f32.mrf.mxu0
        %v1255 = vadd.f32 %v1109, %v1254
        %1256 = vmatmul.bf16.gmra.mxu0 %v1068
        %v1257 = vpop.f32.mrf.mxu0
        %v1258 = vadd.f32 %v1109, %v1257
        %v1259 = vpop.f32.mrf.mxu0
        %v1260 = vadd.f32 %v1109, %v1259
        %1261 = vmatmul.bf16.gmra.mxu0 %v1069
        %v1262 = vpop.f32.mrf.mxu0
        %v1263 = vadd.f32 %v1109, %v1262
        %v1264 = vpop.f32.mrf.mxu0
        %v1265 = vadd.f32 %v1109, %v1264
        %1266 = vmatmul.bf16.gmra.mxu0 %v1070
        %v1267 = vpop.f32.mrf.mxu0
        %v1268 = vadd.f32 %v1109, %v1267
        %v1269 = vpop.f32.mrf.mxu0
        %v1270 = vadd.f32 %v1109, %v1269
        %1271 = vmatmul.bf16.gmra.mxu0 %v1071
        %v1272 = vpop.f32.mrf.mxu0
        %v1273 = vadd.f32 %v1109, %v1272
        %v1274 = vpop.f32.mrf.mxu0
        %v1275 = vadd.f32 %v1109, %v1274
        %1276 = vmatmul.bf16.gmra.mxu0 %v1072
        %v1277 = vpop.f32.mrf.mxu0
        %v1278 = vadd.f32 %v1109, %v1277
        %v1279 = vpop.f32.mrf.mxu0
        %v1280 = vadd.f32 %v1109, %v1279
        %1281 = vmatmul.bf16.gmra.mxu0 %v1073
        %v1282 = vpop.f32.mrf.mxu0
        %v1283 = vadd.f32 %v1109, %v1282
        %v1284 = vpop.f32.mrf.mxu0
        %v1285 = vadd.f32 %v1109, %v1284
        %1286 = vmatmul.bf16.gmra.mxu0 %v1074
        %v1287 = vpop.f32.mrf.mxu0
        %v1288 = vadd.f32 %v1109, %v1287
        %v1289 = vpop.f32.mrf.mxu0
        %v1290 = vadd.f32 %v1109, %v1289
        %1291 = vdwg.mxu0
        %1292 = vmatpush.bf16.msra.mxu0 %v1217
        %1293 = vmatpush.bf16.msra.mxu0 %v1214
        %1294 = vmatpush.bf16.msra.mxu0 %v1211
        %1295 = vmatpush.bf16.msra.mxu0 %v1208
        %1296 = vmatpush.bf16.msra.mxu0 %v1205
        %1297 = vmatpush.bf16.msra.mxu0 %v1202
        %1298 = vmatpush.bf16.msra.mxu0 %v1199
        %1299 = vmatpush.bf16.msra.mxu0 %v1196
        %1300 = vmatmul.bf16.gmra.mxu0 %v1067
        %v1301 = vpop.f32.mrf.mxu0
        %v1302 = vadd.f32 %v1110, %v1301
        %v1303 = vpop.f32.mrf.mxu0
        %v1304 = vadd.f32 %v1110, %v1303
        %1305 = vmatmul.bf16.gmra.mxu0 %v1068
        %v1306 = vpop.f32.mrf.mxu0
        %v1307 = vadd.f32 %v1110, %v1306
        %v1308 = vpop.f32.mrf.mxu0
        %v1309 = vadd.f32 %v1110, %v1308
        %1310 = vmatmul.bf16.gmra.mxu0 %v1069
        %v1311 = vpop.f32.mrf.mxu0
        %v1312 = vadd.f32 %v1110, %v1311
        %v1313 = vpop.f32.mrf.mxu0
        %v1314 = vadd.f32 %v1110, %v1313
        %1315 = vmatmul.bf16.gmra.mxu0 %v1070
        %v1316 = vpop.f32.mrf.mxu0
        %v1317 = vadd.f32 %v1110, %v1316
        %v1318 = vpop.f32.mrf.mxu0
        %v1319 = vadd.f32 %v1110, %v1318
        %1320 = vmatmul.bf16.gmra.mxu0 %v1071
        %v1321 = vpop.f32.mrf.mxu0
        %v1322 = vadd.f32 %v1110, %v1321
        %v1323 = vpop.f32.mrf.mxu0
        %v1324 = vadd.f32 %v1110, %v1323
        %1325 = vmatmul.bf16.gmra.mxu0 %v1072
        %v1326 = vpop.f32.mrf.mxu0
        %v1327 = vadd.f32 %v1110, %v1326
        %v1328 = vpop.f32.mrf.mxu0
        %v1329 = vadd.f32 %v1110, %v1328
        %1330 = vmatmul.bf16.gmra.mxu0 %v1073
        %v1331 = vpop.f32.mrf.mxu0
        %v1332 = vadd.f32 %v1110, %v1331
        %v1333 = vpop.f32.mrf.mxu0
        %v1334 = vadd.f32 %v1110, %v1333
        %1335 = vmatmul.bf16.gmra.mxu0 %v1074
        %v1336 = vpop.f32.mrf.mxu0
        %v1337 = vadd.f32 %v1110, %v1336
        %v1338 = vpop.f32.mrf.mxu0
        %v1339 = vadd.f32 %v1110, %v1338
        %1340 = vdwg.mxu0
        %1341 = vmatpush.bf16.msra.mxu0 %v1218
        %1342 = vmatpush.bf16.msra.mxu0 %v1215
        %1343 = vmatpush.bf16.msra.mxu0 %v1212
        %1344 = vmatpush.bf16.msra.mxu0 %v1209
        %1345 = vmatpush.bf16.msra.mxu0 %v1206
        %1346 = vmatpush.bf16.msra.mxu0 %v1203
        %1347 = vmatpush.bf16.msra.mxu0 %v1200
        %1348 = vmatpush.bf16.msra.mxu0 %v1197
        %1349 = vmatmul.bf16.gmra.mxu0 %v1067
        %v1350 = vpop.f32.mrf.mxu0
        %v1351 = vadd.f32 %v1111, %v1350
        %v1352 = vpop.f32.mrf.mxu0
        %v1353 = vadd.f32 %v1111, %v1352
        %1354 = vmatmul.bf16.gmra.mxu0 %v1068
        %v1355 = vpop.f32.mrf.mxu0
        %v1356 = vadd.f32 %v1111, %v1355
        %v1357 = vpop.f32.mrf.mxu0
        %v1358 = vadd.f32 %v1111, %v1357
        %1359 = vmatmul.bf16.gmra.mxu0 %v1069
        %v1360 = vpop.f32.mrf.mxu0
        %v1361 = vadd.f32 %v1111, %v1360
        %v1362 = vpop.f32.mrf.mxu0
        %v1363 = vadd.f32 %v1111, %v1362
        %1364 = vmatmul.bf16.gmra.mxu0 %v1070
        %v1365 = vpop.f32.mrf.mxu0
        %v1366 = vadd.f32 %v1111, %v1365
        %v1367 = vpop.f32.mrf.mxu0
        %v1368 = vadd.f32 %v1111, %v1367
        %1369 = vmatmul.bf16.gmra.mxu0 %v1071
        %v1370 = vpop.f32.mrf.mxu0
        %v1371 = vadd.f32 %v1111, %v1370
        %v1372 = vpop.f32.mrf.mxu0
        %v1373 = vadd.f32 %v1111, %v1372
        %1374 = vmatmul.bf16.gmra.mxu0 %v1072
        %v1375 = vpop.f32.mrf.mxu0
        %v1376 = vadd.f32 %v1111, %v1375
        %v1377 = vpop.f32.mrf.mxu0
        %v1378 = vadd.f32 %v1111, %v1377
        %1379 = vmatmul.bf16.gmra.mxu0 %v1073
        %v1380 = vpop.f32.mrf.mxu0
        %v1381 = vadd.f32 %v1111, %v1380
        %v1382 = vpop.f32.mrf.mxu0
        %v1383 = vadd.f32 %v1111, %v1382
        %1384 = vmatmul.bf16.gmra.mxu0 %v1074
        %v1385 = vpop.f32.mrf.mxu0
        %v1386 = vadd.f32 %v1111, %v1385
        %v1387 = vpop.f32.mrf.mxu0
        %v1388 = vadd.f32 %v1111, %v1387
        %1389 = vdwg.mxu0
        %v1390 = vmul.f32 %v1253, 0.25
        %v1391 = vmul.f32 %v1255, 0.25
        %v1392 = vmul.f32 %v1258, 0.25
        %v1393 = vmul.f32 %v1260, 0.25
        %v1394 = vmul.f32 %v1263, 0.25
        %v1395 = vmul.f32 %v1265, 0.25
        %v1396 = vmul.f32 %v1268, 0.25
        %v1397 = vmul.f32 %v1270, 0.25
        %v1398 = vmul.f32 %v1273, 0.25
        %v1399 = vmul.f32 %v1275, 0.25
        %v1400 = vmul.f32 %v1278, 0.25
        %v1401 = vmul.f32 %v1280, 0.25
        %v1402 = vmul.f32 %v1283, 0.25
        %v1403 = vmul.f32 %v1285, 0.25
        %v1404 = vmul.f32 %v1288, 0.25
        %v1405 = vmul.f32 %v1290, 0.25
        %v1406 = vpack.c.bf16 %v1390, %v1390
        %v1407 = vpack.c.bf16 %v1391, %v1391
        %v1408 = vpack.c.bf16 %v1392, %v1392
        %v1409 = vpack.c.bf16 %v1393, %v1393
        %v1410 = vpack.c.bf16 %v1394, %v1394
        %v1411 = vpack.c.bf16 %v1395, %v1395
        %v1412 = vpack.c.bf16 %v1396, %v1396
        %v1413 = vpack.c.bf16 %v1397, %v1397
        %v1414 = vpack.c.bf16 %v1398, %v1398
        %v1415 = vpack.c.bf16 %v1399, %v1399
        %v1416 = vpack.c.bf16 %v1400, %v1400
        %v1417 = vpack.c.bf16 %v1401, %v1401
        %v1418 = vpack.c.bf16 %v1402, %v1402
        %v1419 = vpack.c.bf16 %v1403, %v1403
        %v1420 = vpack.c.bf16 %v1404, %v1404
        %v1421 = vpack.c.bf16 %v1405, %v1405
        %v1422 = vpack.c.bf16 %v1302, %v1302
        %v1423 = vpack.c.bf16 %v1304, %v1304
        %v1424 = vpack.c.bf16 %v1307, %v1307
        %v1425 = vpack.c.bf16 %v1309, %v1309
        %v1426 = vpack.c.bf16 %v1312, %v1312
        %v1427 = vpack.c.bf16 %v1314, %v1314
        %v1428 = vpack.c.bf16 %v1317, %v1317
        %v1429 = vpack.c.bf16 %v1319, %v1319
        %v1430 = vpack.c.bf16 %v1322, %v1322
        %v1431 = vpack.c.bf16 %v1324, %v1324
        %v1432 = vpack.c.bf16 %v1327, %v1327
        %v1433 = vpack.c.bf16 %v1329, %v1329
        %v1434 = vpack.c.bf16 %v1332, %v1332
        %v1435 = vpack.c.bf16 %v1334, %v1334
        %v1436 = vpack.c.bf16 %v1337, %v1337
        %v1437 = vpack.c.bf16 %v1339, %v1339
        %v1438 = vpack.c.bf16 %v1351, %v1351
        %v1439 = vpack.c.bf16 %v1353, %v1353
        %v1440 = vpack.c.bf16 %v1356, %v1356
        %v1441 = vpack.c.bf16 %v1358, %v1358
        %v1442 = vpack.c.bf16 %v1361, %v1361
        %v1443 = vpack.c.bf16 %v1363, %v1363
        %v1444 = vpack.c.bf16 %v1366, %v1366
        %v1445 = vpack.c.bf16 %v1368, %v1368
        %v1446 = vpack.c.bf16 %v1371, %v1371
        %v1447 = vpack.c.bf16 %v1373, %v1373
        %v1448 = vpack.c.bf16 %v1376, %v1376
        %v1449 = vpack.c.bf16 %v1378, %v1378
        %v1450 = vpack.c.bf16 %v1381, %v1381
        %v1451 = vpack.c.bf16 %v1383, %v1383
        %v1452 = vpack.c.bf16 %v1386, %v1386
        %v1453 = vpack.c.bf16 %v1388, %v1388
        %1470 = vrot.lane.b32.xlu0 %v1406, 112
        %v1471 = vpop.permute.xlu0 %1470
        %1472 = vrot.lane.b32.xlu0 %v1407, 112
        %v1473 = vpop.permute.xlu0 %1472
        %1474 = vrot.lane.b32.xlu0 %v1408, 112
        %v1475 = vpop.permute.xlu0 %1474
        %1476 = vrot.lane.b32.xlu0 %v1409, 112
        %v1477 = vpop.permute.xlu0 %1476
        %1478 = vrot.lane.b32.xlu0 %v1410, 112
        %v1479 = vpop.permute.xlu0 %1478
        %1480 = vrot.lane.b32.xlu0 %v1411, 112
        %v1481 = vpop.permute.xlu0 %1480
        %1482 = vrot.lane.b32.xlu0 %v1412, 112
        %v1483 = vpop.permute.xlu0 %1482
        %1484 = vrot.lane.b32.xlu0 %v1413, 112
        %v1485 = vpop.permute.xlu0 %1484
        %1486 = vrot.lane.b32.xlu0 %v1414, 112
        %v1487 = vpop.permute.xlu0 %1486
        %1488 = vrot.lane.b32.xlu0 %v1415, 112
        %v1489 = vpop.permute.xlu0 %1488
        %1490 = vrot.lane.b32.xlu0 %v1416, 112
        %v1491 = vpop.permute.xlu0 %1490
        %1492 = vrot.lane.b32.xlu0 %v1417, 112
        %v1493 = vpop.permute.xlu0 %1492
        %1494 = vrot.lane.b32.xlu0 %v1418, 112
        %v1495 = vpop.permute.xlu0 %1494
        %1496 = vrot.lane.b32.xlu0 %v1419, 112
        %v1497 = vpop.permute.xlu0 %1496
        %1498 = vrot.lane.b32.xlu0 %v1420, 112
        %v1499 = vpop.permute.xlu0 %1498
        %1500 = vrot.lane.b32.xlu0 %v1421, 112
        %v1501 = vpop.permute.xlu0 %1500
        %1502 = vrot.lane.b32.xlu0 %v1406, 96
        %v1503 = vpop.permute.xlu0 %1502
        %1504 = vrot.lane.b32.xlu0 %v1407, 96
        %v1505 = vpop.permute.xlu0 %1504
        %1506 = vrot.lane.b32.xlu0 %v1408, 96
        %v1507 = vpop.permute.xlu0 %1506
        %1508 = vrot.lane.b32.xlu0 %v1409, 96
        %v1509 = vpop.permute.xlu0 %1508
        %1510 = vrot.lane.b32.xlu0 %v1410, 96
        %v1511 = vpop.permute.xlu0 %1510
        %1512 = vrot.lane.b32.xlu0 %v1411, 96
        %v1513 = vpop.permute.xlu0 %1512
        %1514 = vrot.lane.b32.xlu0 %v1412, 96
        %v1515 = vpop.permute.xlu0 %1514
        %1516 = vrot.lane.b32.xlu0 %v1413, 96
        %v1517 = vpop.permute.xlu0 %1516
        %1518 = vrot.lane.b32.xlu0 %v1414, 96
        %v1519 = vpop.permute.xlu0 %1518
        %1520 = vrot.lane.b32.xlu0 %v1415, 96
        %v1521 = vpop.permute.xlu0 %1520
        %1522 = vrot.lane.b32.xlu0 %v1416, 96
        %v1523 = vpop.permute.xlu0 %1522
        %1524 = vrot.lane.b32.xlu0 %v1417, 96
        %v1525 = vpop.permute.xlu0 %1524
        %1526 = vrot.lane.b32.xlu0 %v1418, 96
        %v1527 = vpop.permute.xlu0 %1526
        %1528 = vrot.lane.b32.xlu0 %v1419, 96
        %v1529 = vpop.permute.xlu0 %1528
        %1530 = vrot.lane.b32.xlu0 %v1420, 96
        %v1531 = vpop.permute.xlu0 %1530
        %1532 = vrot.lane.b32.xlu0 %v1421, 96
        %v1533 = vpop.permute.xlu0 %1532
        %1534 = vrot.lane.b32.xlu0 %v1406, 80
        %v1535 = vpop.permute.xlu0 %1534
        %1536 = vrot.lane.b32.xlu0 %v1407, 80
        %v1537 = vpop.permute.xlu0 %1536
        %1538 = vrot.lane.b32.xlu0 %v1408, 80
        %v1539 = vpop.permute.xlu0 %1538
        %1540 = vrot.lane.b32.xlu0 %v1409, 80
        %v1541 = vpop.permute.xlu0 %1540
        %1542 = vrot.lane.b32.xlu0 %v1410, 80
        %v1543 = vpop.permute.xlu0 %1542
        %1544 = vrot.lane.b32.xlu0 %v1411, 80
        %v1545 = vpop.permute.xlu0 %1544
        %1546 = vrot.lane.b32.xlu0 %v1412, 80
        %v1547 = vpop.permute.xlu0 %1546
        %1548 = vrot.lane.b32.xlu0 %v1413, 80
        %v1549 = vpop.permute.xlu0 %1548
        %1550 = vrot.lane.b32.xlu0 %v1414, 80
        %v1551 = vpop.permute.xlu0 %1550
        %1552 = vrot.lane.b32.xlu0 %v1415, 80
        %v1553 = vpop.permute.xlu0 %1552
        %1554 = vrot.lane.b32.xlu0 %v1416, 80
        %v1555 = vpop.permute.xlu0 %1554
        %1556 = vrot.lane.b32.xlu0 %v1417, 80
        %v1557 = vpop.permute.xlu0 %1556
        %1558 = vrot.lane.b32.xlu0 %v1418, 80
        %v1559 = vpop.permute.xlu0 %1558
        %1560 = vrot.lane.b32.xlu0 %v1419, 80
        %v1561 = vpop.permute.xlu0 %1560
        %1562 = vrot.lane.b32.xlu0 %v1420, 80
        %v1563 = vpop.permute.xlu0 %1562
        %1564 = vrot.lane.b32.xlu0 %v1421, 80
        %v1565 = vpop.permute.xlu0 %1564
        %1566 = vrot.lane.b32.xlu0 %v1406, 64
        %v1567 = vpop.permute.xlu0 %1566
        %1568 = vrot.lane.b32.xlu0 %v1407, 64
        %v1569 = vpop.permute.xlu0 %1568
        %1570 = vrot.lane.b32.xlu0 %v1408, 64
        %v1571 = vpop.permute.xlu0 %1570
        %1572 = vrot.lane.b32.xlu0 %v1409, 64
        %v1573 = vpop.permute.xlu0 %1572
        %1574 = vrot.lane.b32.xlu0 %v1410, 64
        %v1575 = vpop.permute.xlu0 %1574
        %1576 = vrot.lane.b32.xlu0 %v1411, 64
        %v1577 = vpop.permute.xlu0 %1576
        %1578 = vrot.lane.b32.xlu0 %v1412, 64
        %v1579 = vpop.permute.xlu0 %1578
        %1580 = vrot.lane.b32.xlu0 %v1413, 64
        %v1581 = vpop.permute.xlu0 %1580
        %1582 = vrot.lane.b32.xlu0 %v1414, 64
        %v1583 = vpop.permute.xlu0 %1582
        %1584 = vrot.lane.b32.xlu0 %v1415, 64
        %v1585 = vpop.permute.xlu0 %1584
        %1586 = vrot.lane.b32.xlu0 %v1416, 64
        %v1587 = vpop.permute.xlu0 %1586
        %1588 = vrot.lane.b32.xlu0 %v1417, 64
        %v1589 = vpop.permute.xlu0 %1588
        %1590 = vrot.lane.b32.xlu0 %v1418, 64
        %v1591 = vpop.permute.xlu0 %1590
        %1592 = vrot.lane.b32.xlu0 %v1419, 64
        %v1593 = vpop.permute.xlu0 %1592
        %1594 = vrot.lane.b32.xlu0 %v1420, 64
        %v1595 = vpop.permute.xlu0 %1594
        %1596 = vrot.lane.b32.xlu0 %v1421, 64
        %v1597 = vpop.permute.xlu0 %1596
        %1598 = vrot.lane.b32.xlu0 %v1406, 48
        %v1599 = vpop.permute.xlu0 %1598
        %1600 = vrot.lane.b32.xlu0 %v1407, 48
        %v1601 = vpop.permute.xlu0 %1600
        %1602 = vrot.lane.b32.xlu0 %v1408, 48
        %v1603 = vpop.permute.xlu0 %1602
        %1604 = vrot.lane.b32.xlu0 %v1409, 48
        %v1605 = vpop.permute.xlu0 %1604
        %1606 = vrot.lane.b32.xlu0 %v1410, 48
        %v1607 = vpop.permute.xlu0 %1606
        %1608 = vrot.lane.b32.xlu0 %v1411, 48
        %v1609 = vpop.permute.xlu0 %1608
        %1610 = vrot.lane.b32.xlu0 %v1412, 48
        %v1611 = vpop.permute.xlu0 %1610
        %1612 = vrot.lane.b32.xlu0 %v1413, 48
        %v1613 = vpop.permute.xlu0 %1612
        %1614 = vrot.lane.b32.xlu0 %v1414, 48
        %v1615 = vpop.permute.xlu0 %1614
        %1616 = vrot.lane.b32.xlu0 %v1415, 48
        %v1617 = vpop.permute.xlu0 %1616
        %1618 = vrot.lane.b32.xlu0 %v1416, 48
        %v1619 = vpop.permute.xlu0 %1618
        %1620 = vrot.lane.b32.xlu0 %v1417, 48
        %v1621 = vpop.permute.xlu0 %1620
        %1622 = vrot.lane.b32.xlu0 %v1418, 48
        %v1623 = vpop.permute.xlu0 %1622
        %1624 = vrot.lane.b32.xlu0 %v1419, 48
        %v1625 = vpop.permute.xlu0 %1624
        %1626 = vrot.lane.b32.xlu0 %v1420, 48
        %v1627 = vpop.permute.xlu0 %1626
        %1628 = vrot.lane.b32.xlu0 %v1421, 48
        %v1629 = vpop.permute.xlu0 %1628
        %1630 = vrot.lane.b32.xlu0 %v1406, 32
        %v1631 = vpop.permute.xlu0 %1630
        %1632 = vrot.lane.b32.xlu0 %v1407, 32
        %v1633 = vpop.permute.xlu0 %1632
        %1634 = vrot.lane.b32.xlu0 %v1408, 32
        %v1635 = vpop.permute.xlu0 %1634
        %1636 = vrot.lane.b32.xlu0 %v1409, 32
        %v1637 = vpop.permute.xlu0 %1636
        %1638 = vrot.lane.b32.xlu0 %v1410, 32
        %v1639 = vpop.permute.xlu0 %1638
        %1640 = vrot.lane.b32.xlu0 %v1411, 32
        %v1641 = vpop.permute.xlu0 %1640
        %1642 = vrot.lane.b32.xlu0 %v1412, 32
        %v1643 = vpop.permute.xlu0 %1642
        %1644 = vrot.lane.b32.xlu0 %v1413, 32
        %v1645 = vpop.permute.xlu0 %1644
        %1646 = vrot.lane.b32.xlu0 %v1414, 32
        %v1647 = vpop.permute.xlu0 %1646
        %1648 = vrot.lane.b32.xlu0 %v1415, 32
        %v1649 = vpop.permute.xlu0 %1648
        %1650 = vrot.lane.b32.xlu0 %v1416, 32
        %v1651 = vpop.permute.xlu0 %1650
        %1652 = vrot.lane.b32.xlu0 %v1417, 32
        %v1653 = vpop.permute.xlu0 %1652
        %1654 = vrot.lane.b32.xlu0 %v1418, 32
        %v1655 = vpop.permute.xlu0 %1654
        %1656 = vrot.lane.b32.xlu0 %v1419, 32
        %v1657 = vpop.permute.xlu0 %1656
        %1658 = vrot.lane.b32.xlu0 %v1420, 32
        %v1659 = vpop.permute.xlu0 %1658
        %1660 = vrot.lane.b32.xlu0 %v1421, 32
        %v1661 = vpop.permute.xlu0 %1660
        %1662 = vrot.lane.b32.xlu0 %v1406, 16
        %v1663 = vpop.permute.xlu0 %1662
        %1664 = vrot.lane.b32.xlu0 %v1407, 16
        %v1665 = vpop.permute.xlu0 %1664
        %1666 = vrot.lane.b32.xlu0 %v1408, 16
        %v1667 = vpop.permute.xlu0 %1666
        %1668 = vrot.lane.b32.xlu0 %v1409, 16
        %v1669 = vpop.permute.xlu0 %1668
        %1670 = vrot.lane.b32.xlu0 %v1410, 16
        %v1671 = vpop.permute.xlu0 %1670
        %1672 = vrot.lane.b32.xlu0 %v1411, 16
        %v1673 = vpop.permute.xlu0 %1672
        %1674 = vrot.lane.b32.xlu0 %v1412, 16
        %v1675 = vpop.permute.xlu0 %1674
        %1676 = vrot.lane.b32.xlu0 %v1413, 16
        %v1677 = vpop.permute.xlu0 %1676
        %1678 = vrot.lane.b32.xlu0 %v1414, 16
        %v1679 = vpop.permute.xlu0 %1678
        %1680 = vrot.lane.b32.xlu0 %v1415, 16
        %v1681 = vpop.permute.xlu0 %1680
        %1682 = vrot.lane.b32.xlu0 %v1416, 16
        %v1683 = vpop.permute.xlu0 %1682
        %1684 = vrot.lane.b32.xlu0 %v1417, 16
        %v1685 = vpop.permute.xlu0 %1684
        %1686 = vrot.lane.b32.xlu0 %v1418, 16
        %v1687 = vpop.permute.xlu0 %1686
        %1688 = vrot.lane.b32.xlu0 %v1419, 16
        %v1689 = vpop.permute.xlu0 %1688
        %1690 = vrot.lane.b32.xlu0 %v1420, 16
        %v1691 = vpop.permute.xlu0 %1690
        %1692 = vrot.lane.b32.xlu0 %v1421, 16
        %v1693 = vpop.permute.xlu0 %1692
        %1710 = vrot.lane.b32.xlu0 %v1422, 112
        %v1711 = vpop.permute.xlu0 %1710
        %1712 = vrot.lane.b32.xlu0 %v1423, 112
        %v1713 = vpop.permute.xlu0 %1712
        %1714 = vrot.lane.b32.xlu0 %v1424, 112
        %v1715 = vpop.permute.xlu0 %1714
        %1716 = vrot.lane.b32.xlu0 %v1425, 112
        %v1717 = vpop.permute.xlu0 %1716
        %1718 = vrot.lane.b32.xlu0 %v1426, 112
        %v1719 = vpop.permute.xlu0 %1718
        %1720 = vrot.lane.b32.xlu0 %v1427, 112
        %v1721 = vpop.permute.xlu0 %1720
        %1722 = vrot.lane.b32.xlu0 %v1428, 112
        %v1723 = vpop.permute.xlu0 %1722
        %1724 = vrot.lane.b32.xlu0 %v1429, 112
        %v1725 = vpop.permute.xlu0 %1724
        %1726 = vrot.lane.b32.xlu0 %v1430, 112
        %v1727 = vpop.permute.xlu0 %1726
        %1728 = vrot.lane.b32.xlu0 %v1431, 112
        %v1729 = vpop.permute.xlu0 %1728
        %1730 = vrot.lane.b32.xlu0 %v1432, 112
        %v1731 = vpop.permute.xlu0 %1730
        %1732 = vrot.lane.b32.xlu0 %v1433, 112
        %v1733 = vpop.permute.xlu0 %1732
        %1734 = vrot.lane.b32.xlu0 %v1434, 112
        %v1735 = vpop.permute.xlu0 %1734
        %1736 = vrot.lane.b32.xlu0 %v1435, 112
        %v1737 = vpop.permute.xlu0 %1736
        %1738 = vrot.lane.b32.xlu0 %v1436, 112
        %v1739 = vpop.permute.xlu0 %1738
        %1740 = vrot.lane.b32.xlu0 %v1437, 112
        %v1741 = vpop.permute.xlu0 %1740
        %1742 = vrot.lane.b32.xlu0 %v1422, 96
        %v1743 = vpop.permute.xlu0 %1742
        %1744 = vrot.lane.b32.xlu0 %v1423, 96
        %v1745 = vpop.permute.xlu0 %1744
        %1746 = vrot.lane.b32.xlu0 %v1424, 96
        %v1747 = vpop.permute.xlu0 %1746
        %1748 = vrot.lane.b32.xlu0 %v1425, 96
        %v1749 = vpop.permute.xlu0 %1748
        %1750 = vrot.lane.b32.xlu0 %v1426, 96
        %v1751 = vpop.permute.xlu0 %1750
        %1752 = vrot.lane.b32.xlu0 %v1427, 96
        %v1753 = vpop.permute.xlu0 %1752
        %1754 = vrot.lane.b32.xlu0 %v1428, 96
        %v1755 = vpop.permute.xlu0 %1754
        %1756 = vrot.lane.b32.xlu0 %v1429, 96
        %v1757 = vpop.permute.xlu0 %1756
        %1758 = vrot.lane.b32.xlu0 %v1430, 96
        %v1759 = vpop.permute.xlu0 %1758
        %1760 = vrot.lane.b32.xlu0 %v1431, 96
        %v1761 = vpop.permute.xlu0 %1760
        %1762 = vrot.lane.b32.xlu0 %v1432, 96
        %v1763 = vpop.permute.xlu0 %1762
        %1764 = vrot.lane.b32.xlu0 %v1433, 96
        %v1765 = vpop.permute.xlu0 %1764
        %1766 = vrot.lane.b32.xlu0 %v1434, 96
        %v1767 = vpop.permute.xlu0 %1766
        %1768 = vrot.lane.b32.xlu0 %v1435, 96
        %v1769 = vpop.permute.xlu0 %1768
        %1770 = vrot.lane.b32.xlu0 %v1436, 96
        %v1771 = vpop.permute.xlu0 %1770
        %1772 = vrot.lane.b32.xlu0 %v1437, 96
        %v1773 = vpop.permute.xlu0 %1772
        %1774 = vrot.lane.b32.xlu0 %v1422, 80
        %v1775 = vpop.permute.xlu0 %1774
        %1776 = vrot.lane.b32.xlu0 %v1423, 80
        %v1777 = vpop.permute.xlu0 %1776
        %1778 = vrot.lane.b32.xlu0 %v1424, 80
        %v1779 = vpop.permute.xlu0 %1778
        %1780 = vrot.lane.b32.xlu0 %v1425, 80
        %v1781 = vpop.permute.xlu0 %1780
        %1782 = vrot.lane.b32.xlu0 %v1426, 80
        %v1783 = vpop.permute.xlu0 %1782
        %1784 = vrot.lane.b32.xlu0 %v1427, 80
        %v1785 = vpop.permute.xlu0 %1784
        %1786 = vrot.lane.b32.xlu0 %v1428, 80
        %v1787 = vpop.permute.xlu0 %1786
        %1788 = vrot.lane.b32.xlu0 %v1429, 80
        %v1789 = vpop.permute.xlu0 %1788
        %1790 = vrot.lane.b32.xlu0 %v1430, 80
        %v1791 = vpop.permute.xlu0 %1790
        %1792 = vrot.lane.b32.xlu0 %v1431, 80
        %v1793 = vpop.permute.xlu0 %1792
        %1794 = vrot.lane.b32.xlu0 %v1432, 80
        %v1795 = vpop.permute.xlu0 %1794
        %1796 = vrot.lane.b32.xlu0 %v1433, 80
        %v1797 = vpop.permute.xlu0 %1796
        %1798 = vrot.lane.b32.xlu0 %v1434, 80
        %v1799 = vpop.permute.xlu0 %1798
        %1800 = vrot.lane.b32.xlu0 %v1435, 80
        %v1801 = vpop.permute.xlu0 %1800
        %1802 = vrot.lane.b32.xlu0 %v1436, 80
        %v1803 = vpop.permute.xlu0 %1802
        %1804 = vrot.lane.b32.xlu0 %v1437, 80
        %v1805 = vpop.permute.xlu0 %1804
        %1806 = vrot.lane.b32.xlu0 %v1422, 64
        %v1807 = vpop.permute.xlu0 %1806
        %1808 = vrot.lane.b32.xlu0 %v1423, 64
        %v1809 = vpop.permute.xlu0 %1808
        %1810 = vrot.lane.b32.xlu0 %v1424, 64
        %v1811 = vpop.permute.xlu0 %1810
        %1812 = vrot.lane.b32.xlu0 %v1425, 64
        %v1813 = vpop.permute.xlu0 %1812
        %1814 = vrot.lane.b32.xlu0 %v1426, 64
        %v1815 = vpop.permute.xlu0 %1814
        %1816 = vrot.lane.b32.xlu0 %v1427, 64
        %v1817 = vpop.permute.xlu0 %1816
        %1818 = vrot.lane.b32.xlu0 %v1428, 64
        %v1819 = vpop.permute.xlu0 %1818
        %1820 = vrot.lane.b32.xlu0 %v1429, 64
        %v1821 = vpop.permute.xlu0 %1820
        %1822 = vrot.lane.b32.xlu0 %v1430, 64
        %v1823 = vpop.permute.xlu0 %1822
        %1824 = vrot.lane.b32.xlu0 %v1431, 64
        %v1825 = vpop.permute.xlu0 %1824
        %1826 = vrot.lane.b32.xlu0 %v1432, 64
        %v1827 = vpop.permute.xlu0 %1826
        %1828 = vrot.lane.b32.xlu0 %v1433, 64
        %v1829 = vpop.permute.xlu0 %1828
        %1830 = vrot.lane.b32.xlu0 %v1434, 64
        %v1831 = vpop.permute.xlu0 %1830
        %1832 = vrot.lane.b32.xlu0 %v1435, 64
        %v1833 = vpop.permute.xlu0 %1832
        %1834 = vrot.lane.b32.xlu0 %v1436, 64
        %v1835 = vpop.permute.xlu0 %1834
        %1836 = vrot.lane.b32.xlu0 %v1437, 64
        %v1837 = vpop.permute.xlu0 %1836
        %1838 = vrot.lane.b32.xlu0 %v1422, 48
        %v1839 = vpop.permute.xlu0 %1838
        %1840 = vrot.lane.b32.xlu0 %v1423, 48
        %v1841 = vpop.permute.xlu0 %1840
        %1842 = vrot.lane.b32.xlu0 %v1424, 48
        %v1843 = vpop.permute.xlu0 %1842
        %1844 = vrot.lane.b32.xlu0 %v1425, 48
        %v1845 = vpop.permute.xlu0 %1844
        %1846 = vrot.lane.b32.xlu0 %v1426, 48
        %v1847 = vpop.permute.xlu0 %1846
        %1848 = vrot.lane.b32.xlu0 %v1427, 48
        %v1849 = vpop.permute.xlu0 %1848
        %1850 = vrot.lane.b32.xlu0 %v1428, 48
        %v1851 = vpop.permute.xlu0 %1850
        %1852 = vrot.lane.b32.xlu0 %v1429, 48
        %v1853 = vpop.permute.xlu0 %1852
        %1854 = vrot.lane.b32.xlu0 %v1430, 48
        %v1855 = vpop.permute.xlu0 %1854
        %1856 = vrot.lane.b32.xlu0 %v1431, 48
        %v1857 = vpop.permute.xlu0 %1856
        %1858 = vrot.lane.b32.xlu0 %v1432, 48
        %v1859 = vpop.permute.xlu0 %1858
        %1860 = vrot.lane.b32.xlu0 %v1433, 48
        %v1861 = vpop.permute.xlu0 %1860
        %1862 = vrot.lane.b32.xlu0 %v1434, 48
        %v1863 = vpop.permute.xlu0 %1862
        %1864 = vrot.lane.b32.xlu0 %v1435, 48
        %v1865 = vpop.permute.xlu0 %1864
        %1866 = vrot.lane.b32.xlu0 %v1436, 48
        %v1867 = vpop.permute.xlu0 %1866
        %1868 = vrot.lane.b32.xlu0 %v1437, 48
        %v1869 = vpop.permute.xlu0 %1868
        %1870 = vrot.lane.b32.xlu0 %v1422, 32
        %v1871 = vpop.permute.xlu0 %1870
        %1872 = vrot.lane.b32.xlu0 %v1423, 32
        %v1873 = vpop.permute.xlu0 %1872
        %1874 = vrot.lane.b32.xlu0 %v1424, 32
        %v1875 = vpop.permute.xlu0 %1874
        %1876 = vrot.lane.b32.xlu0 %v1425, 32
        %v1877 = vpop.permute.xlu0 %1876
        %1878 = vrot.lane.b32.xlu0 %v1426, 32
        %v1879 = vpop.permute.xlu0 %1878
        %1880 = vrot.lane.b32.xlu0 %v1427, 32
        %v1881 = vpop.permute.xlu0 %1880
        %1882 = vrot.lane.b32.xlu0 %v1428, 32
        %v1883 = vpop.permute.xlu0 %1882
        %1884 = vrot.lane.b32.xlu0 %v1429, 32
        %v1885 = vpop.permute.xlu0 %1884
        %1886 = vrot.lane.b32.xlu0 %v1430, 32
        %v1887 = vpop.permute.xlu0 %1886
        %1888 = vrot.lane.b32.xlu0 %v1431, 32
        %v1889 = vpop.permute.xlu0 %1888
        %1890 = vrot.lane.b32.xlu0 %v1432, 32
        %v1891 = vpop.permute.xlu0 %1890
        %1892 = vrot.lane.b32.xlu0 %v1433, 32
        %v1893 = vpop.permute.xlu0 %1892
        %1894 = vrot.lane.b32.xlu0 %v1434, 32
        %v1895 = vpop.permute.xlu0 %1894
        %1896 = vrot.lane.b32.xlu0 %v1435, 32
        %v1897 = vpop.permute.xlu0 %1896
        %1898 = vrot.lane.b32.xlu0 %v1436, 32
        %v1899 = vpop.permute.xlu0 %1898
        %1900 = vrot.lane.b32.xlu0 %v1437, 32
        %v1901 = vpop.permute.xlu0 %1900
        %1902 = vrot.lane.b32.xlu0 %v1422, 16
        %v1903 = vpop.permute.xlu0 %1902
        %1904 = vrot.lane.b32.xlu0 %v1423, 16
        %v1905 = vpop.permute.xlu0 %1904
        %1906 = vrot.lane.b32.xlu0 %v1424, 16
        %v1907 = vpop.permute.xlu0 %1906
        %1908 = vrot.lane.b32.xlu0 %v1425, 16
        %v1909 = vpop.permute.xlu0 %1908
        %1910 = vrot.lane.b32.xlu0 %v1426, 16
        %v1911 = vpop.permute.xlu0 %1910
        %1912 = vrot.lane.b32.xlu0 %v1427, 16
        %v1913 = vpop.permute.xlu0 %1912
        %1914 = vrot.lane.b32.xlu0 %v1428, 16
        %v1915 = vpop.permute.xlu0 %1914
        %1916 = vrot.lane.b32.xlu0 %v1429, 16
        %v1917 = vpop.permute.xlu0 %1916
        %1918 = vrot.lane.b32.xlu0 %v1430, 16
        %v1919 = vpop.permute.xlu0 %1918
        %1920 = vrot.lane.b32.xlu0 %v1431, 16
        %v1921 = vpop.permute.xlu0 %1920
        %1922 = vrot.lane.b32.xlu0 %v1432, 16
        %v1923 = vpop.permute.xlu0 %1922
        %1924 = vrot.lane.b32.xlu0 %v1433, 16
        %v1925 = vpop.permute.xlu0 %1924
        %1926 = vrot.lane.b32.xlu0 %v1434, 16
        %v1927 = vpop.permute.xlu0 %1926
        %1928 = vrot.lane.b32.xlu0 %v1435, 16
        %v1929 = vpop.permute.xlu0 %1928
        %1930 = vrot.lane.b32.xlu0 %v1436, 16
        %v1931 = vpop.permute.xlu0 %1930
        %1932 = vrot.lane.b32.xlu0 %v1437, 16
        %v1933 = vpop.permute.xlu0 %1932
        %1950 = vrot.lane.b32.xlu0 %v1438, 112
        %v1951 = vpop.permute.xlu0 %1950
        %1952 = vrot.lane.b32.xlu0 %v1439, 112
        %v1953 = vpop.permute.xlu0 %1952
        %1954 = vrot.lane.b32.xlu0 %v1440, 112
        %v1955 = vpop.permute.xlu0 %1954
        %1956 = vrot.lane.b32.xlu0 %v1441, 112
        %v1957 = vpop.permute.xlu0 %1956
        %1958 = vrot.lane.b32.xlu0 %v1442, 112
        %v1959 = vpop.permute.xlu0 %1958
        %1960 = vrot.lane.b32.xlu0 %v1443, 112
        %v1961 = vpop.permute.xlu0 %1960
        %1962 = vrot.lane.b32.xlu0 %v1444, 112
        %v1963 = vpop.permute.xlu0 %1962
        %1964 = vrot.lane.b32.xlu0 %v1445, 112
        %v1965 = vpop.permute.xlu0 %1964
        %1966 = vrot.lane.b32.xlu0 %v1446, 112
        %v1967 = vpop.permute.xlu0 %1966
        %1968 = vrot.lane.b32.xlu0 %v1447, 112
        %v1969 = vpop.permute.xlu0 %1968
        %1970 = vrot.lane.b32.xlu0 %v1448, 112
        %v1971 = vpop.permute.xlu0 %1970
        %1972 = vrot.lane.b32.xlu0 %v1449, 112
        %v1973 = vpop.permute.xlu0 %1972
        %1974 = vrot.lane.b32.xlu0 %v1450, 112
        %v1975 = vpop.permute.xlu0 %1974
        %1976 = vrot.lane.b32.xlu0 %v1451, 112
        %v1977 = vpop.permute.xlu0 %1976
        %1978 = vrot.lane.b32.xlu0 %v1452, 112
        %v1979 = vpop.permute.xlu0 %1978
        %1980 = vrot.lane.b32.xlu0 %v1453, 112
        %v1981 = vpop.permute.xlu0 %1980
        %1982 = vrot.lane.b32.xlu0 %v1438, 96
        %v1983 = vpop.permute.xlu0 %1982
        %1984 = vrot.lane.b32.xlu0 %v1439, 96
        %v1985 = vpop.permute.xlu0 %1984
        %1986 = vrot.lane.b32.xlu0 %v1440, 96
        %v1987 = vpop.permute.xlu0 %1986
        %1988 = vrot.lane.b32.xlu0 %v1441, 96
        %v1989 = vpop.permute.xlu0 %1988
        %1990 = vrot.lane.b32.xlu0 %v1442, 96
        %v1991 = vpop.permute.xlu0 %1990
        %1992 = vrot.lane.b32.xlu0 %v1443, 96
        %v1993 = vpop.permute.xlu0 %1992
        %1994 = vrot.lane.b32.xlu0 %v1444, 96
        %v1995 = vpop.permute.xlu0 %1994
        %1996 = vrot.lane.b32.xlu0 %v1445, 96
        %v1997 = vpop.permute.xlu0 %1996
        %1998 = vrot.lane.b32.xlu0 %v1446, 96
        %v1999 = vpop.permute.xlu0 %1998
        %2000 = vrot.lane.b32.xlu0 %v1447, 96
        %v2001 = vpop.permute.xlu0 %2000
        %2002 = vrot.lane.b32.xlu0 %v1448, 96
        %v2003 = vpop.permute.xlu0 %2002
        %2004 = vrot.lane.b32.xlu0 %v1449, 96
        %v2005 = vpop.permute.xlu0 %2004
        %2006 = vrot.lane.b32.xlu0 %v1450, 96
        %v2007 = vpop.permute.xlu0 %2006
        %2008 = vrot.lane.b32.xlu0 %v1451, 96
        %v2009 = vpop.permute.xlu0 %2008
        %2010 = vrot.lane.b32.xlu0 %v1452, 96
        %v2011 = vpop.permute.xlu0 %2010
        %2012 = vrot.lane.b32.xlu0 %v1453, 96
        %v2013 = vpop.permute.xlu0 %2012
        %2014 = vrot.lane.b32.xlu0 %v1438, 80
        %v2015 = vpop.permute.xlu0 %2014
        %2016 = vrot.lane.b32.xlu0 %v1439, 80
        %v2017 = vpop.permute.xlu0 %2016
        %2018 = vrot.lane.b32.xlu0 %v1440, 80
        %v2019 = vpop.permute.xlu0 %2018
        %2020 = vrot.lane.b32.xlu0 %v1441, 80
        %v2021 = vpop.permute.xlu0 %2020
        %2022 = vrot.lane.b32.xlu0 %v1442, 80
        %v2023 = vpop.permute.xlu0 %2022
        %2024 = vrot.lane.b32.xlu0 %v1443, 80
        %v2025 = vpop.permute.xlu0 %2024
        %2026 = vrot.lane.b32.xlu0 %v1444, 80
        %v2027 = vpop.permute.xlu0 %2026
        %2028 = vrot.lane.b32.xlu0 %v1445, 80
        %v2029 = vpop.permute.xlu0 %2028
        %2030 = vrot.lane.b32.xlu0 %v1446, 80
        %v2031 = vpop.permute.xlu0 %2030
        %2032 = vrot.lane.b32.xlu0 %v1447, 80
        %v2033 = vpop.permute.xlu0 %2032
        %2034 = vrot.lane.b32.xlu0 %v1448, 80
        %v2035 = vpop.permute.xlu0 %2034
        %2036 = vrot.lane.b32.xlu0 %v1449, 80
        %v2037 = vpop.permute.xlu0 %2036
        %2038 = vrot.lane.b32.xlu0 %v1450, 80
        %v2039 = vpop.permute.xlu0 %2038
        %2040 = vrot.lane.b32.xlu0 %v1451, 80
        %v2041 = vpop.permute.xlu0 %2040
        %2042 = vrot.lane.b32.xlu0 %v1452, 80
        %v2043 = vpop.permute.xlu0 %2042
        %2044 = vrot.lane.b32.xlu0 %v1453, 80
        %v2045 = vpop.permute.xlu0 %2044
        %2046 = vrot.lane.b32.xlu0 %v1438, 64
        %v2047 = vpop.permute.xlu0 %2046
        %2048 = vrot.lane.b32.xlu0 %v1439, 64
        %v2049 = vpop.permute.xlu0 %2048
        %2050 = vrot.lane.b32.xlu0 %v1440, 64
        %v2051 = vpop.permute.xlu0 %2050
        %2052 = vrot.lane.b32.xlu0 %v1441, 64
        %v2053 = vpop.permute.xlu0 %2052
        %2054 = vrot.lane.b32.xlu0 %v1442, 64
        %v2055 = vpop.permute.xlu0 %2054
        %2056 = vrot.lane.b32.xlu0 %v1443, 64
        %v2057 = vpop.permute.xlu0 %2056
        %2058 = vrot.lane.b32.xlu0 %v1444, 64
        %v2059 = vpop.permute.xlu0 %2058
        %2060 = vrot.lane.b32.xlu0 %v1445, 64
        %v2061 = vpop.permute.xlu0 %2060
        %2062 = vrot.lane.b32.xlu0 %v1446, 64
        %v2063 = vpop.permute.xlu0 %2062
        %2064 = vrot.lane.b32.xlu0 %v1447, 64
        %v2065 = vpop.permute.xlu0 %2064
        %2066 = vrot.lane.b32.xlu0 %v1448, 64
        %v2067 = vpop.permute.xlu0 %2066
        %2068 = vrot.lane.b32.xlu0 %v1449, 64
        %v2069 = vpop.permute.xlu0 %2068
        %2070 = vrot.lane.b32.xlu0 %v1450, 64
        %v2071 = vpop.permute.xlu0 %2070
        %2072 = vrot.lane.b32.xlu0 %v1451, 64
        %v2073 = vpop.permute.xlu0 %2072
        %2074 = vrot.lane.b32.xlu0 %v1452, 64
        %v2075 = vpop.permute.xlu0 %2074
        %2076 = vrot.lane.b32.xlu0 %v1453, 64
        %v2077 = vpop.permute.xlu0 %2076
        %2078 = vrot.lane.b32.xlu0 %v1438, 48
        %v2079 = vpop.permute.xlu0 %2078
        %2080 = vrot.lane.b32.xlu0 %v1439, 48
        %v2081 = vpop.permute.xlu0 %2080
        %2082 = vrot.lane.b32.xlu0 %v1440, 48
        %v2083 = vpop.permute.xlu0 %2082
        %2084 = vrot.lane.b32.xlu0 %v1441, 48
        %v2085 = vpop.permute.xlu0 %2084
        %2086 = vrot.lane.b32.xlu0 %v1442, 48
        %v2087 = vpop.permute.xlu0 %2086
        %2088 = vrot.lane.b32.xlu0 %v1443, 48
        %v2089 = vpop.permute.xlu0 %2088
        %2090 = vrot.lane.b32.xlu0 %v1444, 48
        %v2091 = vpop.permute.xlu0 %2090
        %2092 = vrot.lane.b32.xlu0 %v1445, 48
        %v2093 = vpop.permute.xlu0 %2092
        %2094 = vrot.lane.b32.xlu0 %v1446, 48
        %v2095 = vpop.permute.xlu0 %2094
        %2096 = vrot.lane.b32.xlu0 %v1447, 48
        %v2097 = vpop.permute.xlu0 %2096
        %2098 = vrot.lane.b32.xlu0 %v1448, 48
        %v2099 = vpop.permute.xlu0 %2098
        %2100 = vrot.lane.b32.xlu0 %v1449, 48
        %v2101 = vpop.permute.xlu0 %2100
        %2102 = vrot.lane.b32.xlu0 %v1450, 48
        %v2103 = vpop.permute.xlu0 %2102
        %2104 = vrot.lane.b32.xlu0 %v1451, 48
        %v2105 = vpop.permute.xlu0 %2104
        %2106 = vrot.lane.b32.xlu0 %v1452, 48
        %v2107 = vpop.permute.xlu0 %2106
        %2108 = vrot.lane.b32.xlu0 %v1453, 48
        %v2109 = vpop.permute.xlu0 %2108
        %2110 = vrot.lane.b32.xlu0 %v1438, 32
        %v2111 = vpop.permute.xlu0 %2110
        %2112 = vrot.lane.b32.xlu0 %v1439, 32
        %v2113 = vpop.permute.xlu0 %2112
        %2114 = vrot.lane.b32.xlu0 %v1440, 32
        %v2115 = vpop.permute.xlu0 %2114
        %2116 = vrot.lane.b32.xlu0 %v1441, 32
        %v2117 = vpop.permute.xlu0 %2116
        %2118 = vrot.lane.b32.xlu0 %v1442, 32
        %v2119 = vpop.permute.xlu0 %2118
        %2120 = vrot.lane.b32.xlu0 %v1443, 32
        %v2121 = vpop.permute.xlu0 %2120
        %2122 = vrot.lane.b32.xlu0 %v1444, 32
        %v2123 = vpop.permute.xlu0 %2122
        %2124 = vrot.lane.b32.xlu0 %v1445, 32
        %v2125 = vpop.permute.xlu0 %2124
        %2126 = vrot.lane.b32.xlu0 %v1446, 32
        %v2127 = vpop.permute.xlu0 %2126
        %2128 = vrot.lane.b32.xlu0 %v1447, 32
        %v2129 = vpop.permute.xlu0 %2128
        %2130 = vrot.lane.b32.xlu0 %v1448, 32
        %v2131 = vpop.permute.xlu0 %2130
        %2132 = vrot.lane.b32.xlu0 %v1449, 32
        %v2133 = vpop.permute.xlu0 %2132
        %2134 = vrot.lane.b32.xlu0 %v1450, 32
        %v2135 = vpop.permute.xlu0 %2134
        %2136 = vrot.lane.b32.xlu0 %v1451, 32
        %v2137 = vpop.permute.xlu0 %2136
        %2138 = vrot.lane.b32.xlu0 %v1452, 32
        %v2139 = vpop.permute.xlu0 %2138
        %2140 = vrot.lane.b32.xlu0 %v1453, 32
        %v2141 = vpop.permute.xlu0 %2140
        %2142 = vrot.lane.b32.xlu0 %v1438, 16
        %v2143 = vpop.permute.xlu0 %2142
        %2144 = vrot.lane.b32.xlu0 %v1439, 16
        %v2145 = vpop.permute.xlu0 %2144
        %2146 = vrot.lane.b32.xlu0 %v1440, 16
        %v2147 = vpop.permute.xlu0 %2146
        %2148 = vrot.lane.b32.xlu0 %v1441, 16
        %v2149 = vpop.permute.xlu0 %2148
        %2150 = vrot.lane.b32.xlu0 %v1442, 16
        %v2151 = vpop.permute.xlu0 %2150
        %2152 = vrot.lane.b32.xlu0 %v1443, 16
        %v2153 = vpop.permute.xlu0 %2152
        %2154 = vrot.lane.b32.xlu0 %v1444, 16
        %v2155 = vpop.permute.xlu0 %2154
        %2156 = vrot.lane.b32.xlu0 %v1445, 16
        %v2157 = vpop.permute.xlu0 %2156
        %2158 = vrot.lane.b32.xlu0 %v1446, 16
        %v2159 = vpop.permute.xlu0 %2158
        %2160 = vrot.lane.b32.xlu0 %v1447, 16
        %v2161 = vpop.permute.xlu0 %2160
        %2162 = vrot.lane.b32.xlu0 %v1448, 16
        %v2163 = vpop.permute.xlu0 %2162
        %2164 = vrot.lane.b32.xlu0 %v1449, 16
        %v2165 = vpop.permute.xlu0 %2164
        %2166 = vrot.lane.b32.xlu0 %v1450, 16
        %v2167 = vpop.permute.xlu0 %2166
        %2168 = vrot.lane.b32.xlu0 %v1451, 16
        %v2169 = vpop.permute.xlu0 %2168
        %2170 = vrot.lane.b32.xlu0 %v1452, 16
        %v2171 = vpop.permute.xlu0 %2170
        %2172 = vrot.lane.b32.xlu0 %v1453, 16
        %v2173 = vpop.permute.xlu0 %2172
        %v2174 = vld [vmem:[%s595] sm:$0x1]
        %v2175 = vunpack.c.l.b16 %v1406
        %v2176 = vunpack.c.l.b16 %v1407
        %v2177 = vunpack.c.l.b16 %v1408
        %v2178 = vunpack.c.l.b16 %v1409
        %v2179 = vunpack.c.l.b16 %v1410
        %v2180 = vunpack.c.l.b16 %v1411
        %v2181 = vunpack.c.l.b16 %v1412
        %v2182 = vunpack.c.l.b16 %v1413
        %v2183 = vpack.c.b16 %v2176, %v2175
        %v2184 = vpack.c.b16 %v2178, %v2177
        %v2185 = vpack.c.b16 %v2180, %v2179
        %v2186 = vpack.c.b16 %v2182, %v2181
        %v2187 = vunpack.c.l.b16 %v1422
        %v2188 = vunpack.c.l.b16 %v1423
        %v2189 = vunpack.c.l.b16 %v1424
        %v2190 = vunpack.c.l.b16 %v1425
        %v2191 = vunpack.c.l.b16 %v1426
        %v2192 = vunpack.c.l.b16 %v1427
        %v2193 = vunpack.c.l.b16 %v1428
        %v2194 = vunpack.c.l.b16 %v1429
        %v2195 = vpack.c.b16 %v2188, %v2187
        %v2196 = vpack.c.b16 %v2190, %v2189
        %v2197 = vpack.c.b16 %v2192, %v2191
        %v2198 = vpack.c.b16 %v2194, %v2193
        %vm2199 = vcmask 130048
        %v2201 = vsel %vm2199, %v2183, 0
        %v2204 = vsel %vm2199, %v2184, 0
        %v2207 = vsel %vm2199, %v2185, 0
        %v2210 = vsel %vm2199, %v2186, 0
        %v2213 = vsel %vm2199, %v2195, 0
        %v2216 = vsel %vm2199, %v2196, 0
        %v2219 = vsel %vm2199, %v2197, 0
        %v2222 = vsel %vm2199, %v2198, 0
        %2224 = vmatpush.bf16.xpose.msra.mxu0 0
        %2225 = vmatpush.bf16.xpose.msra.mxu0 0
        %2226 = vmatpush.bf16.xpose.msra.mxu0 0
        %2227 = vmatpush.bf16.xpose.msra.mxu0 0
        %2228 = vmatpush.bf16.xpose.msra.mxu0 %v2222
        %2229 = vmatpush.bf16.xpose.msra.mxu0 %v2219
        %2230 = vmatpush.bf16.xpose.msra.mxu0 %v2216
        %2231 = vmatpush.bf16.xpose.msra.mxu0 %v2213
        %2232 = vmatmul.bf16.gmra.mxu0 %v2201
        %v2233 = vpop.f32.mrf.mxu0
        %v2234 = vadd.f32 0.0, %v2233
        %v2235 = vpop.f32.mrf.mxu0
        %v2236 = vadd.f32 0.0, %v2235
        %2237 = vmatmul.bf16.gmra.mxu0 %v2204
        %v2238 = vpop.f32.mrf.mxu0
        %v2239 = vadd.f32 0.0, %v2238
        %v2240 = vpop.f32.mrf.mxu0
        %v2241 = vadd.f32 0.0, %v2240
        %2242 = vmatmul.bf16.gmra.mxu0 %v2207
        %v2243 = vpop.f32.mrf.mxu0
        %v2244 = vadd.f32 0.0, %v2243
        %v2245 = vpop.f32.mrf.mxu0
        %v2246 = vadd.f32 0.0, %v2245
        %2247 = vmatmul.bf16.gmra.mxu0 %v2210
        %v2248 = vpop.f32.mrf.mxu0
        %v2249 = vadd.f32 0.0, %v2248
        %v2250 = vpop.f32.mrf.mxu0
        %v2251 = vadd.f32 0.0, %v2250
        %2252 = vdwg.mxu0
        %v2253 = vunpack.c.l.b16 %v1471
        %v2254 = vunpack.c.l.b16 %v1473
        %v2255 = vunpack.c.l.b16 %v1475
        %v2256 = vunpack.c.l.b16 %v1477
        %v2257 = vunpack.c.l.b16 %v1479
        %v2258 = vunpack.c.l.b16 %v1481
        %v2259 = vunpack.c.l.b16 %v1483
        %v2260 = vunpack.c.l.b16 %v1485
        %v2261 = vpack.c.b16 %v2254, %v2253
        %v2262 = vpack.c.b16 %v2256, %v2255
        %v2263 = vpack.c.b16 %v2258, %v2257
        %v2264 = vpack.c.b16 %v2260, %v2259
        %v2265 = vunpack.c.l.b16 %v1711
        %v2266 = vunpack.c.l.b16 %v1713
        %v2267 = vunpack.c.l.b16 %v1715
        %v2268 = vunpack.c.l.b16 %v1717
        %v2269 = vunpack.c.l.b16 %v1719
        %v2270 = vunpack.c.l.b16 %v1721
        %v2271 = vunpack.c.l.b16 %v1723
        %v2272 = vunpack.c.l.b16 %v1725
        %v2273 = vpack.c.b16 %v2266, %v2265
        %v2274 = vpack.c.b16 %v2268, %v2267
        %v2275 = vpack.c.b16 %v2270, %v2269
        %v2276 = vpack.c.b16 %v2272, %v2271
        %v2278 = vsel %vm2199, %v2261, 0
        %v2281 = vsel %vm2199, %v2262, 0
        %v2284 = vsel %vm2199, %v2263, 0
        %v2287 = vsel %vm2199, %v2264, 0
        %v2290 = vsel %vm2199, %v2273, 0
        %v2293 = vsel %vm2199, %v2274, 0
        %v2296 = vsel %vm2199, %v2275, 0
        %v2299 = vsel %vm2199, %v2276, 0
        %2301 = vmatpush.bf16.xpose.msra.mxu0 0
        %2302 = vmatpush.bf16.xpose.msra.mxu0 0
        %2303 = vmatpush.bf16.xpose.msra.mxu0 0
        %2304 = vmatpush.bf16.xpose.msra.mxu0 0
        %2305 = vmatpush.bf16.xpose.msra.mxu0 %v2299
        %2306 = vmatpush.bf16.xpose.msra.mxu0 %v2296
        %2307 = vmatpush.bf16.xpose.msra.mxu0 %v2293
        %2308 = vmatpush.bf16.xpose.msra.mxu0 %v2290
        %2309 = vmatmul.bf16.gmra.mxu0 %v2278
        %v2310 = vpop.f32.mrf.mxu0
        %v2311 = vadd.f32 0.0, %v2310
        %v2312 = vpop.f32.mrf.mxu0
        %v2313 = vadd.f32 0.0, %v2312
        %2314 = vmatmul.bf16.gmra.mxu0 %v2281
        %v2315 = vpop.f32.mrf.mxu0
        %v2316 = vadd.f32 0.0, %v2315
        %v2317 = vpop.f32.mrf.mxu0
        %v2318 = vadd.f32 0.0, %v2317
        %2319 = vmatmul.bf16.gmra.mxu0 %v2284
        %v2320 = vpop.f32.mrf.mxu0
        %v2321 = vadd.f32 0.0, %v2320
        %v2322 = vpop.f32.mrf.mxu0
        %v2323 = vadd.f32 0.0, %v2322
        %2324 = vmatmul.bf16.gmra.mxu0 %v2287
        %v2325 = vpop.f32.mrf.mxu0
        %v2326 = vadd.f32 0.0, %v2325
        %v2327 = vpop.f32.mrf.mxu0
        %v2328 = vadd.f32 0.0, %v2327
        %2329 = vdwg.mxu0
        %v2330 = vunpack.c.l.b16 %v1503
        %v2331 = vunpack.c.l.b16 %v1505
        %v2332 = vunpack.c.l.b16 %v1507
        %v2333 = vunpack.c.l.b16 %v1509
        %v2334 = vunpack.c.l.b16 %v1511
        %v2335 = vunpack.c.l.b16 %v1513
        %v2336 = vunpack.c.l.b16 %v1515
        %v2337 = vunpack.c.l.b16 %v1517
        %v2338 = vpack.c.b16 %v2331, %v2330
        %v2339 = vpack.c.b16 %v2333, %v2332
        %v2340 = vpack.c.b16 %v2335, %v2334
        %v2341 = vpack.c.b16 %v2337, %v2336
        %v2342 = vunpack.c.l.b16 %v1743
        %v2343 = vunpack.c.l.b16 %v1745
        %v2344 = vunpack.c.l.b16 %v1747
        %v2345 = vunpack.c.l.b16 %v1749
        %v2346 = vunpack.c.l.b16 %v1751
        %v2347 = vunpack.c.l.b16 %v1753
        %v2348 = vunpack.c.l.b16 %v1755
        %v2349 = vunpack.c.l.b16 %v1757
        %v2350 = vpack.c.b16 %v2343, %v2342
        %v2351 = vpack.c.b16 %v2345, %v2344
        %v2352 = vpack.c.b16 %v2347, %v2346
        %v2353 = vpack.c.b16 %v2349, %v2348
        %v2355 = vsel %vm2199, %v2338, 0
        %v2358 = vsel %vm2199, %v2339, 0
        %v2361 = vsel %vm2199, %v2340, 0
        %v2364 = vsel %vm2199, %v2341, 0
        %v2367 = vsel %vm2199, %v2350, 0
        %v2370 = vsel %vm2199, %v2351, 0
        %v2373 = vsel %vm2199, %v2352, 0
        %v2376 = vsel %vm2199, %v2353, 0
        %2378 = vmatpush.bf16.xpose.msra.mxu0 0
        %2379 = vmatpush.bf16.xpose.msra.mxu0 0
        %2380 = vmatpush.bf16.xpose.msra.mxu0 0
        %2381 = vmatpush.bf16.xpose.msra.mxu0 0
        %2382 = vmatpush.bf16.xpose.msra.mxu0 %v2376
        %2383 = vmatpush.bf16.xpose.msra.mxu0 %v2373
        %2384 = vmatpush.bf16.xpose.msra.mxu0 %v2370
        %2385 = vmatpush.bf16.xpose.msra.mxu0 %v2367
        %2386 = vmatmul.bf16.gmra.mxu0 %v2355
        %v2387 = vpop.f32.mrf.mxu0
        %v2388 = vadd.f32 0.0, %v2387
        %v2389 = vpop.f32.mrf.mxu0
        %v2390 = vadd.f32 0.0, %v2389
        %2391 = vmatmul.bf16.gmra.mxu0 %v2358
        %v2392 = vpop.f32.mrf.mxu0
        %v2393 = vadd.f32 0.0, %v2392
        %v2394 = vpop.f32.mrf.mxu0
        %v2395 = vadd.f32 0.0, %v2394
        %2396 = vmatmul.bf16.gmra.mxu0 %v2361
        %v2397 = vpop.f32.mrf.mxu0
        %v2398 = vadd.f32 0.0, %v2397
        %v2399 = vpop.f32.mrf.mxu0
        %v2400 = vadd.f32 0.0, %v2399
        %2401 = vmatmul.bf16.gmra.mxu0 %v2364
        %v2402 = vpop.f32.mrf.mxu0
        %v2403 = vadd.f32 0.0, %v2402
        %v2404 = vpop.f32.mrf.mxu0
        %v2405 = vadd.f32 0.0, %v2404
        %2406 = vdwg.mxu0
        %v2407 = vunpack.c.l.b16 %v1535
        %v2408 = vunpack.c.l.b16 %v1537
        %v2409 = vunpack.c.l.b16 %v1539
        %v2410 = vunpack.c.l.b16 %v1541
        %v2411 = vunpack.c.l.b16 %v1543
        %v2412 = vunpack.c.l.b16 %v1545
        %v2413 = vunpack.c.l.b16 %v1547
        %v2414 = vunpack.c.l.b16 %v1549
        %v2415 = vpack.c.b16 %v2408, %v2407
        %v2416 = vpack.c.b16 %v2410, %v2409
        %v2417 = vpack.c.b16 %v2412, %v2411
        %v2418 = vpack.c.b16 %v2414, %v2413
        %v2419 = vunpack.c.l.b16 %v1775
        %v2420 = vunpack.c.l.b16 %v1777
        %v2421 = vunpack.c.l.b16 %v1779
        %v2422 = vunpack.c.l.b16 %v1781
        %v2423 = vunpack.c.l.b16 %v1783
        %v2424 = vunpack.c.l.b16 %v1785
        %v2425 = vunpack.c.l.b16 %v1787
        %v2426 = vunpack.c.l.b16 %v1789
        %v2427 = vpack.c.b16 %v2420, %v2419
        %v2428 = vpack.c.b16 %v2422, %v2421
        %v2429 = vpack.c.b16 %v2424, %v2423
        %v2430 = vpack.c.b16 %v2426, %v2425
        %v2432 = vsel %vm2199, %v2415, 0
        %v2435 = vsel %vm2199, %v2416, 0
        %v2438 = vsel %vm2199, %v2417, 0
        %v2441 = vsel %vm2199, %v2418, 0
        %v2444 = vsel %vm2199, %v2427, 0
        %v2447 = vsel %vm2199, %v2428, 0
        %v2450 = vsel %vm2199, %v2429, 0
        %v2453 = vsel %vm2199, %v2430, 0
        %2455 = vmatpush.bf16.xpose.msra.mxu0 0
        %2456 = vmatpush.bf16.xpose.msra.mxu0 0
        %2457 = vmatpush.bf16.xpose.msra.mxu0 0
        %2458 = vmatpush.bf16.xpose.msra.mxu0 0
        %2459 = vmatpush.bf16.xpose.msra.mxu0 %v2453
        %2460 = vmatpush.bf16.xpose.msra.mxu0 %v2450
        %2461 = vmatpush.bf16.xpose.msra.mxu0 %v2447
        %2462 = vmatpush.bf16.xpose.msra.mxu0 %v2444
        %2463 = vmatmul.bf16.gmra.mxu0 %v2432
        %v2464 = vpop.f32.mrf.mxu0
        %v2465 = vadd.f32 0.0, %v2464
        %v2466 = vpop.f32.mrf.mxu0
        %v2467 = vadd.f32 0.0, %v2466
        %2468 = vmatmul.bf16.gmra.mxu0 %v2435
        %v2469 = vpop.f32.mrf.mxu0
        %v2470 = vadd.f32 0.0, %v2469
        %v2471 = vpop.f32.mrf.mxu0
        %v2472 = vadd.f32 0.0, %v2471
        %2473 = vmatmul.bf16.gmra.mxu0 %v2438
        %v2474 = vpop.f32.mrf.mxu0
        %v2475 = vadd.f32 0.0, %v2474
        %v2476 = vpop.f32.mrf.mxu0
        %v2477 = vadd.f32 0.0, %v2476
        %2478 = vmatmul.bf16.gmra.mxu0 %v2441
        %v2479 = vpop.f32.mrf.mxu0
        %v2480 = vadd.f32 0.0, %v2479
        %v2481 = vpop.f32.mrf.mxu0
        %v2482 = vadd.f32 0.0, %v2481
        %2483 = vdwg.mxu0
        %v2484 = vunpack.c.l.b16 %v1567
        %v2485 = vunpack.c.l.b16 %v1569
        %v2486 = vunpack.c.l.b16 %v1571
        %v2487 = vunpack.c.l.b16 %v1573
        %v2488 = vunpack.c.l.b16 %v1575
        %v2489 = vunpack.c.l.b16 %v1577
        %v2490 = vunpack.c.l.b16 %v1579
        %v2491 = vunpack.c.l.b16 %v1581
        %v2492 = vpack.c.b16 %v2485, %v2484
        %v2493 = vpack.c.b16 %v2487, %v2486
        %v2494 = vpack.c.b16 %v2489, %v2488
        %v2495 = vpack.c.b16 %v2491, %v2490
        %v2496 = vunpack.c.l.b16 %v1807
        %v2497 = vunpack.c.l.b16 %v1809
        %v2498 = vunpack.c.l.b16 %v1811
        %v2499 = vunpack.c.l.b16 %v1813
        %v2500 = vunpack.c.l.b16 %v1815
        %v2501 = vunpack.c.l.b16 %v1817
        %v2502 = vunpack.c.l.b16 %v1819
        %v2503 = vunpack.c.l.b16 %v1821
        %v2504 = vpack.c.b16 %v2497, %v2496
        %v2505 = vpack.c.b16 %v2499, %v2498
        %v2506 = vpack.c.b16 %v2501, %v2500
        %v2507 = vpack.c.b16 %v2503, %v2502
        %v2509 = vsel %vm2199, %v2492, 0
        %v2512 = vsel %vm2199, %v2493, 0
        %v2515 = vsel %vm2199, %v2494, 0
        %v2518 = vsel %vm2199, %v2495, 0
        %v2521 = vsel %vm2199, %v2504, 0
        %v2524 = vsel %vm2199, %v2505, 0
        %v2527 = vsel %vm2199, %v2506, 0
        %v2530 = vsel %vm2199, %v2507, 0
        %2532 = vmatpush.bf16.xpose.msra.mxu0 0
        %2533 = vmatpush.bf16.xpose.msra.mxu0 0
        %2534 = vmatpush.bf16.xpose.msra.mxu0 0
        %2535 = vmatpush.bf16.xpose.msra.mxu0 0
        %2536 = vmatpush.bf16.xpose.msra.mxu0 %v2530
        %2537 = vmatpush.bf16.xpose.msra.mxu0 %v2527
        %2538 = vmatpush.bf16.xpose.msra.mxu0 %v2524
        %2539 = vmatpush.bf16.xpose.msra.mxu0 %v2521
        %2540 = vmatmul.bf16.gmra.mxu0 %v2509
        %v2541 = vpop.f32.mrf.mxu0
        %v2542 = vadd.f32 0.0, %v2541
        %v2543 = vpop.f32.mrf.mxu0
        %v2544 = vadd.f32 0.0, %v2543
        %2545 = vmatmul.bf16.gmra.mxu0 %v2512
        %v2546 = vpop.f32.mrf.mxu0
        %v2547 = vadd.f32 0.0, %v2546
        %v2548 = vpop.f32.mrf.mxu0
        %v2549 = vadd.f32 0.0, %v2548
        %2550 = vmatmul.bf16.gmra.mxu0 %v2515
        %v2551 = vpop.f32.mrf.mxu0
        %v2552 = vadd.f32 0.0, %v2551
        %v2553 = vpop.f32.mrf.mxu0
        %v2554 = vadd.f32 0.0, %v2553
        %2555 = vmatmul.bf16.gmra.mxu0 %v2518
        %v2556 = vpop.f32.mrf.mxu0
        %v2557 = vadd.f32 0.0, %v2556
        %v2558 = vpop.f32.mrf.mxu0
        %v2559 = vadd.f32 0.0, %v2558
        %2560 = vdwg.mxu0
        %v2561 = vunpack.c.l.b16 %v1599
        %v2562 = vunpack.c.l.b16 %v1601
        %v2563 = vunpack.c.l.b16 %v1603
        %v2564 = vunpack.c.l.b16 %v1605
        %v2565 = vunpack.c.l.b16 %v1607
        %v2566 = vunpack.c.l.b16 %v1609
        %v2567 = vunpack.c.l.b16 %v1611
        %v2568 = vunpack.c.l.b16 %v1613
        %v2569 = vpack.c.b16 %v2562, %v2561
        %v2570 = vpack.c.b16 %v2564, %v2563
        %v2571 = vpack.c.b16 %v2566, %v2565
        %v2572 = vpack.c.b16 %v2568, %v2567
        %v2573 = vunpack.c.l.b16 %v1839
        %v2574 = vunpack.c.l.b16 %v1841
        %v2575 = vunpack.c.l.b16 %v1843
        %v2576 = vunpack.c.l.b16 %v1845
        %v2577 = vunpack.c.l.b16 %v1847
        %v2578 = vunpack.c.l.b16 %v1849
        %v2579 = vunpack.c.l.b16 %v1851
        %v2580 = vunpack.c.l.b16 %v1853
        %v2581 = vpack.c.b16 %v2574, %v2573
        %v2582 = vpack.c.b16 %v2576, %v2575
        %v2583 = vpack.c.b16 %v2578, %v2577
        %v2584 = vpack.c.b16 %v2580, %v2579
        %v2586 = vsel %vm2199, %v2569, 0
        %v2589 = vsel %vm2199, %v2570, 0
        %v2592 = vsel %vm2199, %v2571, 0
        %v2595 = vsel %vm2199, %v2572, 0
        %v2598 = vsel %vm2199, %v2581, 0
        %v2601 = vsel %vm2199, %v2582, 0
        %v2604 = vsel %vm2199, %v2583, 0
        %v2607 = vsel %vm2199, %v2584, 0
        %2609 = vmatpush.bf16.xpose.msra.mxu0 0
        %2610 = vmatpush.bf16.xpose.msra.mxu0 0
        %2611 = vmatpush.bf16.xpose.msra.mxu0 0
        %2612 = vmatpush.bf16.xpose.msra.mxu0 0
        %2613 = vmatpush.bf16.xpose.msra.mxu0 %v2607
        %2614 = vmatpush.bf16.xpose.msra.mxu0 %v2604
        %2615 = vmatpush.bf16.xpose.msra.mxu0 %v2601
        %2616 = vmatpush.bf16.xpose.msra.mxu0 %v2598
        %2617 = vmatmul.bf16.gmra.mxu0 %v2586
        %v2618 = vpop.f32.mrf.mxu0
        %v2619 = vadd.f32 0.0, %v2618
        %v2620 = vpop.f32.mrf.mxu0
        %v2621 = vadd.f32 0.0, %v2620
        %2622 = vmatmul.bf16.gmra.mxu0 %v2589
        %v2623 = vpop.f32.mrf.mxu0
        %v2624 = vadd.f32 0.0, %v2623
        %v2625 = vpop.f32.mrf.mxu0
        %v2626 = vadd.f32 0.0, %v2625
        %2627 = vmatmul.bf16.gmra.mxu0 %v2592
        %v2628 = vpop.f32.mrf.mxu0
        %v2629 = vadd.f32 0.0, %v2628
        %v2630 = vpop.f32.mrf.mxu0
        %v2631 = vadd.f32 0.0, %v2630
        %2632 = vmatmul.bf16.gmra.mxu0 %v2595
        %v2633 = vpop.f32.mrf.mxu0
        %v2634 = vadd.f32 0.0, %v2633
        %v2635 = vpop.f32.mrf.mxu0
        %v2636 = vadd.f32 0.0, %v2635
        %2637 = vdwg.mxu0
        %v2638 = vunpack.c.l.b16 %v1631
        %v2639 = vunpack.c.l.b16 %v1633
        %v2640 = vunpack.c.l.b16 %v1635
        %v2641 = vunpack.c.l.b16 %v1637
        %v2642 = vunpack.c.l.b16 %v1639
        %v2643 = vunpack.c.l.b16 %v1641
        %v2644 = vunpack.c.l.b16 %v1643
        %v2645 = vunpack.c.l.b16 %v1645
        %v2646 = vpack.c.b16 %v2639, %v2638
        %v2647 = vpack.c.b16 %v2641, %v2640
        %v2648 = vpack.c.b16 %v2643, %v2642
        %v2649 = vpack.c.b16 %v2645, %v2644
        %v2650 = vunpack.c.l.b16 %v1871
        %v2651 = vunpack.c.l.b16 %v1873
        %v2652 = vunpack.c.l.b16 %v1875
        %v2653 = vunpack.c.l.b16 %v1877
        %v2654 = vunpack.c.l.b16 %v1879
        %v2655 = vunpack.c.l.b16 %v1881
        %v2656 = vunpack.c.l.b16 %v1883
        %v2657 = vunpack.c.l.b16 %v1885
        %v2658 = vpack.c.b16 %v2651, %v2650
        %v2659 = vpack.c.b16 %v2653, %v2652
        %v2660 = vpack.c.b16 %v2655, %v2654
        %v2661 = vpack.c.b16 %v2657, %v2656
        %v2663 = vsel %vm2199, %v2646, 0
        %v2666 = vsel %vm2199, %v2647, 0
        %v2669 = vsel %vm2199, %v2648, 0
        %v2672 = vsel %vm2199, %v2649, 0
        %v2675 = vsel %vm2199, %v2658, 0
        %v2678 = vsel %vm2199, %v2659, 0
        %v2681 = vsel %vm2199, %v2660, 0
        %v2684 = vsel %vm2199, %v2661, 0
        %2686 = vmatpush.bf16.xpose.msra.mxu0 0
        %2687 = vmatpush.bf16.xpose.msra.mxu0 0
        %2688 = vmatpush.bf16.xpose.msra.mxu0 0
        %2689 = vmatpush.bf16.xpose.msra.mxu0 0
        %2690 = vmatpush.bf16.xpose.msra.mxu0 %v2684
        %2691 = vmatpush.bf16.xpose.msra.mxu0 %v2681
        %2692 = vmatpush.bf16.xpose.msra.mxu0 %v2678
        %2693 = vmatpush.bf16.xpose.msra.mxu0 %v2675
        %2694 = vmatmul.bf16.gmra.mxu0 %v2663
        %v2695 = vpop.f32.mrf.mxu0
        %v2696 = vadd.f32 0.0, %v2695
        %v2697 = vpop.f32.mrf.mxu0
        %v2698 = vadd.f32 0.0, %v2697
        %2699 = vmatmul.bf16.gmra.mxu0 %v2666
        %v2700 = vpop.f32.mrf.mxu0
        %v2701 = vadd.f32 0.0, %v2700
        %v2702 = vpop.f32.mrf.mxu0
        %v2703 = vadd.f32 0.0, %v2702
        %2704 = vmatmul.bf16.gmra.mxu0 %v2669
        %v2705 = vpop.f32.mrf.mxu0
        %v2706 = vadd.f32 0.0, %v2705
        %v2707 = vpop.f32.mrf.mxu0
        %v2708 = vadd.f32 0.0, %v2707
        %2709 = vmatmul.bf16.gmra.mxu0 %v2672
        %v2710 = vpop.f32.mrf.mxu0
        %v2711 = vadd.f32 0.0, %v2710
        %v2712 = vpop.f32.mrf.mxu0
        %v2713 = vadd.f32 0.0, %v2712
        %2714 = vdwg.mxu0
        %v2715 = vunpack.c.l.b16 %v1663
        %v2716 = vunpack.c.l.b16 %v1665
        %v2717 = vunpack.c.l.b16 %v1667
        %v2718 = vunpack.c.l.b16 %v1669
        %v2719 = vunpack.c.l.b16 %v1671
        %v2720 = vunpack.c.l.b16 %v1673
        %v2721 = vunpack.c.l.b16 %v1675
        %v2722 = vunpack.c.l.b16 %v1677
        %v2723 = vpack.c.b16 %v2716, %v2715
        %v2724 = vpack.c.b16 %v2718, %v2717
        %v2725 = vpack.c.b16 %v2720, %v2719
        %v2726 = vpack.c.b16 %v2722, %v2721
        %v2727 = vunpack.c.l.b16 %v1903
        %v2728 = vunpack.c.l.b16 %v1905
        %v2729 = vunpack.c.l.b16 %v1907
        %v2730 = vunpack.c.l.b16 %v1909
        %v2731 = vunpack.c.l.b16 %v1911
        %v2732 = vunpack.c.l.b16 %v1913
        %v2733 = vunpack.c.l.b16 %v1915
        %v2734 = vunpack.c.l.b16 %v1917
        %v2735 = vpack.c.b16 %v2728, %v2727
        %v2736 = vpack.c.b16 %v2730, %v2729
        %v2737 = vpack.c.b16 %v2732, %v2731
        %v2738 = vpack.c.b16 %v2734, %v2733
        %v2740 = vsel %vm2199, %v2723, 0
        %v2743 = vsel %vm2199, %v2724, 0
        %v2746 = vsel %vm2199, %v2725, 0
        %v2749 = vsel %vm2199, %v2726, 0
        %v2752 = vsel %vm2199, %v2735, 0
        %v2755 = vsel %vm2199, %v2736, 0
        %v2758 = vsel %vm2199, %v2737, 0
        %v2761 = vsel %vm2199, %v2738, 0
        %2763 = vmatpush.bf16.xpose.msra.mxu0 0
        %2764 = vmatpush.bf16.xpose.msra.mxu0 0
        %2765 = vmatpush.bf16.xpose.msra.mxu0 0
        %2766 = vmatpush.bf16.xpose.msra.mxu0 0
        %2767 = vmatpush.bf16.xpose.msra.mxu0 %v2761
        %2768 = vmatpush.bf16.xpose.msra.mxu0 %v2758
        %2769 = vmatpush.bf16.xpose.msra.mxu0 %v2755
        %2770 = vmatpush.bf16.xpose.msra.mxu0 %v2752
        %2771 = vmatmul.bf16.gmra.mxu0 %v2740
        %v2772 = vpop.f32.mrf.mxu0
        %v2773 = vadd.f32 0.0, %v2772
        %v2774 = vpop.f32.mrf.mxu0
        %v2775 = vadd.f32 0.0, %v2774
        %2776 = vmatmul.bf16.gmra.mxu0 %v2743
        %v2777 = vpop.f32.mrf.mxu0
        %v2778 = vadd.f32 0.0, %v2777
        %v2779 = vpop.f32.mrf.mxu0
        %v2780 = vadd.f32 0.0, %v2779
        %2781 = vmatmul.bf16.gmra.mxu0 %v2746
        %v2782 = vpop.f32.mrf.mxu0
        %v2783 = vadd.f32 0.0, %v2782
        %v2784 = vpop.f32.mrf.mxu0
        %v2785 = vadd.f32 0.0, %v2784
        %2786 = vmatmul.bf16.gmra.mxu0 %v2749
        %v2787 = vpop.f32.mrf.mxu0
        %v2788 = vadd.f32 0.0, %v2787
        %v2789 = vpop.f32.mrf.mxu0
        %v2790 = vadd.f32 0.0, %v2789
        %2791 = vdwg.mxu0
        %vm2792 = vcmask 523264
        %v2793 = vsel %vm2792, %v2234, -inf
        %2794 = vmax.xlane.f32.xlu0 %v2793
        %v2795 = vpop.xlane.xlu0 %2794
        %v2796 = vsel %vm2792, %v2236, -inf
        %2797 = vmax.xlane.f32.xlu0 %v2796
        %v2798 = vpop.xlane.xlu0 %2797
        %v2799 = vsel %vm2792, %v2239, -inf
        %2800 = vmax.xlane.f32.xlu0 %v2799
        %v2801 = vpop.xlane.xlu0 %2800
        %v2802 = vsel %vm2792, %v2241, -inf
        %2803 = vmax.xlane.f32.xlu0 %v2802
        %v2804 = vpop.xlane.xlu0 %2803
        %v2805 = vsel %vm2792, %v2244, -inf
        %2806 = vmax.xlane.f32.xlu0 %v2805
        %v2807 = vpop.xlane.xlu0 %2806
        %v2808 = vsel %vm2792, %v2246, -inf
        %2809 = vmax.xlane.f32.xlu0 %v2808
        %v2810 = vpop.xlane.xlu0 %2809
        %v2811 = vsel %vm2792, %v2249, -inf
        %2812 = vmax.xlane.f32.xlu0 %v2811
        %v2813 = vpop.xlane.xlu0 %2812
        %v2814 = vsel %vm2792, %v2251, -inf
        %2815 = vmax.xlane.f32.xlu0 %v2814
        %v2816 = vpop.xlane.xlu0 %2815
        %v2817 = vsel %vm2792, %v2311, -inf
        %2818 = vmax.xlane.f32.xlu0 %v2817
        %v2819 = vpop.xlane.xlu0 %2818
        %v2820 = vsel %vm2792, %v2313, -inf
        %2821 = vmax.xlane.f32.xlu0 %v2820
        %v2822 = vpop.xlane.xlu0 %2821
        %v2823 = vsel %vm2792, %v2316, -inf
        %2824 = vmax.xlane.f32.xlu0 %v2823
        %v2825 = vpop.xlane.xlu0 %2824
        %v2826 = vsel %vm2792, %v2318, -inf
        %2827 = vmax.xlane.f32.xlu0 %v2826
        %v2828 = vpop.xlane.xlu0 %2827
        %v2829 = vsel %vm2792, %v2321, -inf
        %2830 = vmax.xlane.f32.xlu0 %v2829
        %v2831 = vpop.xlane.xlu0 %2830
        %v2832 = vsel %vm2792, %v2323, -inf
        %2833 = vmax.xlane.f32.xlu0 %v2832
        %v2834 = vpop.xlane.xlu0 %2833
        %v2835 = vsel %vm2792, %v2326, -inf
        %2836 = vmax.xlane.f32.xlu0 %v2835
        %v2837 = vpop.xlane.xlu0 %2836
        %v2838 = vsel %vm2792, %v2328, -inf
        %2839 = vmax.xlane.f32.xlu0 %v2838
        %v2840 = vpop.xlane.xlu0 %2839
        %v2841 = vsel %vm2792, %v2388, -inf
        %2842 = vmax.xlane.f32.xlu0 %v2841
        %v2843 = vpop.xlane.xlu0 %2842
        %v2844 = vsel %vm2792, %v2390, -inf
        %2845 = vmax.xlane.f32.xlu0 %v2844
        %v2846 = vpop.xlane.xlu0 %2845
        %v2847 = vsel %vm2792, %v2393, -inf
        %2848 = vmax.xlane.f32.xlu0 %v2847
        %v2849 = vpop.xlane.xlu0 %2848
        %v2850 = vsel %vm2792, %v2395, -inf
        %2851 = vmax.xlane.f32.xlu0 %v2850
        %v2852 = vpop.xlane.xlu0 %2851
        %v2853 = vsel %vm2792, %v2398, -inf
        %2854 = vmax.xlane.f32.xlu0 %v2853
        %v2855 = vpop.xlane.xlu0 %2854
        %v2856 = vsel %vm2792, %v2400, -inf
        %2857 = vmax.xlane.f32.xlu0 %v2856
        %v2858 = vpop.xlane.xlu0 %2857
        %v2859 = vsel %vm2792, %v2403, -inf
        %2860 = vmax.xlane.f32.xlu0 %v2859
        %v2861 = vpop.xlane.xlu0 %2860
        %v2862 = vsel %vm2792, %v2405, -inf
        %2863 = vmax.xlane.f32.xlu0 %v2862
        %v2864 = vpop.xlane.xlu0 %2863
        %v2865 = vsel %vm2792, %v2465, -inf
        %2866 = vmax.xlane.f32.xlu0 %v2865
        %v2867 = vpop.xlane.xlu0 %2866
        %v2868 = vsel %vm2792, %v2467, -inf
        %2869 = vmax.xlane.f32.xlu0 %v2868
        %v2870 = vpop.xlane.xlu0 %2869
        %v2871 = vsel %vm2792, %v2470, -inf
        %2872 = vmax.xlane.f32.xlu0 %v2871
        %v2873 = vpop.xlane.xlu0 %2872
        %v2874 = vsel %vm2792, %v2472, -inf
        %2875 = vmax.xlane.f32.xlu0 %v2874
        %v2876 = vpop.xlane.xlu0 %2875
        %v2877 = vsel %vm2792, %v2475, -inf
        %2878 = vmax.xlane.f32.xlu0 %v2877
        %v2879 = vpop.xlane.xlu0 %2878
        %v2880 = vsel %vm2792, %v2477, -inf
        %2881 = vmax.xlane.f32.xlu0 %v2880
        %v2882 = vpop.xlane.xlu0 %2881
        %v2883 = vsel %vm2792, %v2480, -inf
        %2884 = vmax.xlane.f32.xlu0 %v2883
        %v2885 = vpop.xlane.xlu0 %2884
        %v2886 = vsel %vm2792, %v2482, -inf
        %2887 = vmax.xlane.f32.xlu0 %v2886
        %v2888 = vpop.xlane.xlu0 %2887
        %v2889 = vsel %vm2792, %v2542, -inf
        %2890 = vmax.xlane.f32.xlu0 %v2889
        %v2891 = vpop.xlane.xlu0 %2890
        %v2892 = vsel %vm2792, %v2544, -inf
        %2893 = vmax.xlane.f32.xlu0 %v2892
        %v2894 = vpop.xlane.xlu0 %2893
        %v2895 = vsel %vm2792, %v2547, -inf
        %2896 = vmax.xlane.f32.xlu0 %v2895
        %v2897 = vpop.xlane.xlu0 %2896
        %v2898 = vsel %vm2792, %v2549, -inf
        %2899 = vmax.xlane.f32.xlu0 %v2898
        %v2900 = vpop.xlane.xlu0 %2899
        %v2901 = vsel %vm2792, %v2552, -inf
        %2902 = vmax.xlane.f32.xlu0 %v2901
        %v2903 = vpop.xlane.xlu0 %2902
        %v2904 = vsel %vm2792, %v2554, -inf
        %2905 = vmax.xlane.f32.xlu0 %v2904
        %v2906 = vpop.xlane.xlu0 %2905
        %v2907 = vsel %vm2792, %v2557, -inf
        %2908 = vmax.xlane.f32.xlu0 %v2907
        %v2909 = vpop.xlane.xlu0 %2908
        %v2910 = vsel %vm2792, %v2559, -inf
        %2911 = vmax.xlane.f32.xlu0 %v2910
        %v2912 = vpop.xlane.xlu0 %2911
        %v2913 = vsel %vm2792, %v2619, -inf
        %2914 = vmax.xlane.f32.xlu0 %v2913
        %v2915 = vpop.xlane.xlu0 %2914
        %v2916 = vsel %vm2792, %v2621, -inf
        %2917 = vmax.xlane.f32.xlu0 %v2916
        %v2918 = vpop.xlane.xlu0 %2917
        %v2919 = vsel %vm2792, %v2624, -inf
        %2920 = vmax.xlane.f32.xlu0 %v2919
        %v2921 = vpop.xlane.xlu0 %2920
        %v2922 = vsel %vm2792, %v2626, -inf
        %2923 = vmax.xlane.f32.xlu0 %v2922
        %v2924 = vpop.xlane.xlu0 %2923
        %v2925 = vsel %vm2792, %v2629, -inf
        %2926 = vmax.xlane.f32.xlu0 %v2925
        %v2927 = vpop.xlane.xlu0 %2926
        %v2928 = vsel %vm2792, %v2631, -inf
        %2929 = vmax.xlane.f32.xlu0 %v2928
        %v2930 = vpop.xlane.xlu0 %2929
        %v2931 = vsel %vm2792, %v2634, -inf
        %2932 = vmax.xlane.f32.xlu0 %v2931
        %v2933 = vpop.xlane.xlu0 %2932
        %v2934 = vsel %vm2792, %v2636, -inf
        %2935 = vmax.xlane.f32.xlu0 %v2934
        %v2936 = vpop.xlane.xlu0 %2935
        %v2937 = vsel %vm2792, %v2696, -inf
        %2938 = vmax.xlane.f32.xlu0 %v2937
        %v2939 = vpop.xlane.xlu0 %2938
        %v2940 = vsel %vm2792, %v2698, -inf
        %2941 = vmax.xlane.f32.xlu0 %v2940
        %v2942 = vpop.xlane.xlu0 %2941
        %v2943 = vsel %vm2792, %v2701, -inf
        %2944 = vmax.xlane.f32.xlu0 %v2943
        %v2945 = vpop.xlane.xlu0 %2944
        %v2946 = vsel %vm2792, %v2703, -inf
        %2947 = vmax.xlane.f32.xlu0 %v2946
        %v2948 = vpop.xlane.xlu0 %2947
        %v2949 = vsel %vm2792, %v2706, -inf
        %2950 = vmax.xlane.f32.xlu0 %v2949
        %v2951 = vpop.xlane.xlu0 %2950
        %v2952 = vsel %vm2792, %v2708, -inf
        %2953 = vmax.xlane.f32.xlu0 %v2952
        %v2954 = vpop.xlane.xlu0 %2953
        %v2955 = vsel %vm2792, %v2711, -inf
        %2956 = vmax.xlane.f32.xlu0 %v2955
        %v2957 = vpop.xlane.xlu0 %2956
        %v2958 = vsel %vm2792, %v2713, -inf
        %2959 = vmax.xlane.f32.xlu0 %v2958
        %v2960 = vpop.xlane.xlu0 %2959
        %v2961 = vsel %vm2792, %v2773, -inf
        %2962 = vmax.xlane.f32.xlu0 %v2961
        %v2963 = vpop.xlane.xlu0 %2962
        %v2964 = vsel %vm2792, %v2775, -inf
        %2965 = vmax.xlane.f32.xlu0 %v2964
        %v2966 = vpop.xlane.xlu0 %2965
        %v2967 = vsel %vm2792, %v2778, -inf
        %2968 = vmax.xlane.f32.xlu0 %v2967
        %v2969 = vpop.xlane.xlu0 %2968
        %v2970 = vsel %vm2792, %v2780, -inf
        %2971 = vmax.xlane.f32.xlu0 %v2970
        %v2972 = vpop.xlane.xlu0 %2971
        %v2973 = vsel %vm2792, %v2783, -inf
        %2974 = vmax.xlane.f32.xlu0 %v2973
        %v2975 = vpop.xlane.xlu0 %2974
        %v2976 = vsel %vm2792, %v2785, -inf
        %2977 = vmax.xlane.f32.xlu0 %v2976
        %v2978 = vpop.xlane.xlu0 %2977
        %v2979 = vsel %vm2792, %v2788, -inf
        %2980 = vmax.xlane.f32.xlu0 %v2979
        %v2981 = vpop.xlane.xlu0 %2980
        %v2982 = vsel %vm2792, %v2790, -inf
        %2983 = vmax.xlane.f32.xlu0 %v2982
        %v2984 = vpop.xlane.xlu0 %2983
        %v2985 = vsub.f32 %v2234, %v2795
        %v2986 = vsub.f32 %v2236, %v2798
        %v2987 = vsub.f32 %v2239, %v2801
        %v2988 = vsub.f32 %v2241, %v2804
        %v2989 = vsub.f32 %v2244, %v2807
        %v2990 = vsub.f32 %v2246, %v2810
        %v2991 = vsub.f32 %v2249, %v2813
        %v2992 = vsub.f32 %v2251, %v2816
        %v2993 = vsub.f32 %v2311, %v2819
        %v2994 = vsub.f32 %v2313, %v2822
        %v2995 = vsub.f32 %v2316, %v2825
        %v2996 = vsub.f32 %v2318, %v2828
        %v2997 = vsub.f32 %v2321, %v2831
        %v2998 = vsub.f32 %v2323, %v2834
        %v2999 = vsub.f32 %v2326, %v2837
        %v3000 = vsub.f32 %v2328, %v2840
        %v3001 = vsub.f32 %v2388, %v2843
        %v3002 = vsub.f32 %v2390, %v2846
        %v3003 = vsub.f32 %v2393, %v2849
        %v3004 = vsub.f32 %v2395, %v2852
        %v3005 = vsub.f32 %v2398, %v2855
        %v3006 = vsub.f32 %v2400, %v2858
        %v3007 = vsub.f32 %v2403, %v2861
        %v3008 = vsub.f32 %v2405, %v2864
        %v3009 = vsub.f32 %v2465, %v2867
        %v3010 = vsub.f32 %v2467, %v2870
        %v3011 = vsub.f32 %v2470, %v2873
        %v3012 = vsub.f32 %v2472, %v2876
        %v3013 = vsub.f32 %v2475, %v2879
        %v3014 = vsub.f32 %v2477, %v2882
        %v3015 = vsub.f32 %v2480, %v2885
        %v3016 = vsub.f32 %v2482, %v2888
        %v3017 = vsub.f32 %v2542, %v2891
        %v3018 = vsub.f32 %v2544, %v2894
        %v3019 = vsub.f32 %v2547, %v2897
        %v3020 = vsub.f32 %v2549, %v2900
        %v3021 = vsub.f32 %v2552, %v2903
        %v3022 = vsub.f32 %v2554, %v2906
        %v3023 = vsub.f32 %v2557, %v2909
        %v3024 = vsub.f32 %v2559, %v2912
        %v3025 = vsub.f32 %v2619, %v2915
        %v3026 = vsub.f32 %v2621, %v2918
        %v3027 = vsub.f32 %v2624, %v2921
        %v3028 = vsub.f32 %v2626, %v2924
        %v3029 = vsub.f32 %v2629, %v2927
        %v3030 = vsub.f32 %v2631, %v2930
        %v3031 = vsub.f32 %v2634, %v2933
        %v3032 = vsub.f32 %v2636, %v2936
        %v3033 = vsub.f32 %v2696, %v2939
        %v3034 = vsub.f32 %v2698, %v2942
        %v3035 = vsub.f32 %v2701, %v2945
        %v3036 = vsub.f32 %v2703, %v2948
        %v3037 = vsub.f32 %v2706, %v2951
        %v3038 = vsub.f32 %v2708, %v2954
        %v3039 = vsub.f32 %v2711, %v2957
        %v3040 = vsub.f32 %v2713, %v2960
        %v3041 = vsub.f32 %v2773, %v2963
        %v3042 = vsub.f32 %v2775, %v2966
        %v3043 = vsub.f32 %v2778, %v2969
        %v3044 = vsub.f32 %v2780, %v2972
        %v3045 = vsub.f32 %v2783, %v2975
        %v3046 = vsub.f32 %v2785, %v2978
        %v3047 = vsub.f32 %v2788, %v2981
        %v3048 = vsub.f32 %v2790, %v2984
        %v3049 = vmul.f32 %v2985, 1.442695
        %v3050 = vpow.pop %v3049
        %v3051 = vmul.f32 %v2986, 1.442695
        %v3052 = vpow.pop %v3051
        %v3053 = vmul.f32 %v2987, 1.442695
        %v3054 = vpow.pop %v3053
        %v3055 = vmul.f32 %v2988, 1.442695
        %v3056 = vpow.pop %v3055
        %v3057 = vmul.f32 %v2989, 1.442695
        %v3058 = vpow.pop %v3057
        %v3059 = vmul.f32 %v2990, 1.442695
        %v3060 = vpow.pop %v3059
        %v3061 = vmul.f32 %v2991, 1.442695
        %v3062 = vpow.pop %v3061
        %v3063 = vmul.f32 %v2992, 1.442695
        %v3064 = vpow.pop %v3063
        %v3065 = vmul.f32 %v2993, 1.442695
        %v3066 = vpow.pop %v3065
        %v3067 = vmul.f32 %v2994, 1.442695
        %v3068 = vpow.pop %v3067
        %v3069 = vmul.f32 %v2995, 1.442695
        %v3070 = vpow.pop %v3069
        %v3071 = vmul.f32 %v2996, 1.442695
        %v3072 = vpow.pop %v3071
        %v3073 = vmul.f32 %v2997, 1.442695
        %v3074 = vpow.pop %v3073
        %v3075 = vmul.f32 %v2998, 1.442695
        %v3076 = vpow.pop %v3075
        %v3077 = vmul.f32 %v2999, 1.442695
        %v3078 = vpow.pop %v3077
        %v3079 = vmul.f32 %v3000, 1.442695
        %v3080 = vpow.pop %v3079
        %v3081 = vmul.f32 %v3001, 1.442695
        %v3082 = vpow.pop %v3081
        %v3083 = vmul.f32 %v3002, 1.442695
        %v3084 = vpow.pop %v3083
        %v3085 = vmul.f32 %v3003, 1.442695
        %v3086 = vpow.pop %v3085
        %v3087 = vmul.f32 %v3004, 1.442695
        %v3088 = vpow.pop %v3087
        %v3089 = vmul.f32 %v3005, 1.442695
        %v3090 = vpow.pop %v3089
        %v3091 = vmul.f32 %v3006, 1.442695
        %v3092 = vpow.pop %v3091
        %v3093 = vmul.f32 %v3007, 1.442695
        %v3094 = vpow.pop %v3093
        %v3095 = vmul.f32 %v3008, 1.442695
        %v3096 = vpow.pop %v3095
        %v3097 = vmul.f32 %v3009, 1.442695
        %v3098 = vpow.pop %v3097
        %v3099 = vmul.f32 %v3010, 1.442695
        %v3100 = vpow.pop %v3099
        %v3101 = vmul.f32 %v3011, 1.442695
        %v3102 = vpow.pop %v3101
        %v3103 = vmul.f32 %v3012, 1.442695
        %v3104 = vpow.pop %v3103
        %v3105 = vmul.f32 %v3013, 1.442695
        %v3106 = vpow.pop %v3105
        %v3107 = vmul.f32 %v3014, 1.442695
        %v3108 = vpow.pop %v3107
        %v3109 = vmul.f32 %v3015, 1.442695
        %v3110 = vpow.pop %v3109
        %v3111 = vmul.f32 %v3016, 1.442695
        %v3112 = vpow.pop %v3111
        %v3113 = vmul.f32 %v3017, 1.442695
        %v3114 = vpow.pop %v3113
        %v3115 = vmul.f32 %v3018, 1.442695
        %v3116 = vpow.pop %v3115
        %v3117 = vmul.f32 %v3019, 1.442695
        %v3118 = vpow.pop %v3117
        %v3119 = vmul.f32 %v3020, 1.442695
        %v3120 = vpow.pop %v3119
        %v3121 = vmul.f32 %v3021, 1.442695
        %v3122 = vpow.pop %v3121
        %v3123 = vmul.f32 %v3022, 1.442695
        %v3124 = vpow.pop %v3123
        %v3125 = vmul.f32 %v3023, 1.442695
        %v3126 = vpow.pop %v3125
        %v3127 = vmul.f32 %v3024, 1.442695
        %v3128 = vpow.pop %v3127
        %v3129 = vmul.f32 %v3025, 1.442695
        %v3130 = vpow.pop %v3129
        %v3131 = vmul.f32 %v3026, 1.442695
        %v3132 = vpow.pop %v3131
        %v3133 = vmul.f32 %v3027, 1.442695
        %v3134 = vpow.pop %v3133
        %v3135 = vmul.f32 %v3028, 1.442695
        %v3136 = vpow.pop %v3135
        %v3137 = vmul.f32 %v3029, 1.442695
        %v3138 = vpow.pop %v3137
        %v3139 = vmul.f32 %v3030, 1.442695
        %v3140 = vpow.pop %v3139
        %v3141 = vmul.f32 %v3031, 1.442695
        %v3142 = vpow.pop %v3141
        %v3143 = vmul.f32 %v3032, 1.442695
        %v3144 = vpow.pop %v3143
        %v3145 = vmul.f32 %v3033, 1.442695
        %v3146 = vpow.pop %v3145
        %v3147 = vmul.f32 %v3034, 1.442695
        %v3148 = vpow.pop %v3147
        %v3149 = vmul.f32 %v3035, 1.442695
        %v3150 = vpow.pop %v3149
        %v3151 = vmul.f32 %v3036, 1.442695
        %v3152 = vpow.pop %v3151
        %v3153 = vmul.f32 %v3037, 1.442695
        %v3154 = vpow.pop %v3153
        %v3155 = vmul.f32 %v3038, 1.442695
        %v3156 = vpow.pop %v3155
        %v3157 = vmul.f32 %v3039, 1.442695
        %v3158 = vpow.pop %v3157
        %v3159 = vmul.f32 %v3040, 1.442695
        %v3160 = vpow.pop %v3159
        %v3161 = vmul.f32 %v3041, 1.442695
        %v3162 = vpow.pop %v3161
        %v3163 = vmul.f32 %v3042, 1.442695
        %v3164 = vpow.pop %v3163
        %v3165 = vmul.f32 %v3043, 1.442695
        %v3166 = vpow.pop %v3165
        %v3167 = vmul.f32 %v3044, 1.442695
        %v3168 = vpow.pop %v3167
        %v3169 = vmul.f32 %v3045, 1.442695
        %v3170 = vpow.pop %v3169
        %v3171 = vmul.f32 %v3046, 1.442695
        %v3172 = vpow.pop %v3171
        %v3173 = vmul.f32 %v3047, 1.442695
        %v3174 = vpow.pop %v3173
        %v3175 = vmul.f32 %v3048, 1.442695
        %v3176 = vpow.pop %v3175
        %v3177 = vsel %vm2792, %v3050, 0.0
        %3178 = vadd.xlane.f32.xlu0 %v3177
        %v3179 = vpop.xlane.xlu0 %3178
        %v3180 = vsel %vm2792, %v3052, 0.0
        %3181 = vadd.xlane.f32.xlu0 %v3180
        %v3182 = vpop.xlane.xlu0 %3181
        %v3183 = vsel %vm2792, %v3054, 0.0
        %3184 = vadd.xlane.f32.xlu0 %v3183
        %v3185 = vpop.xlane.xlu0 %3184
        %v3186 = vsel %vm2792, %v3056, 0.0
        %3187 = vadd.xlane.f32.xlu0 %v3186
        %v3188 = vpop.xlane.xlu0 %3187
        %v3189 = vsel %vm2792, %v3058, 0.0
        %3190 = vadd.xlane.f32.xlu0 %v3189
        %v3191 = vpop.xlane.xlu0 %3190
        %v3192 = vsel %vm2792, %v3060, 0.0
        %3193 = vadd.xlane.f32.xlu0 %v3192
        %v3194 = vpop.xlane.xlu0 %3193
        %v3195 = vsel %vm2792, %v3062, 0.0
        %3196 = vadd.xlane.f32.xlu0 %v3195
        %v3197 = vpop.xlane.xlu0 %3196
        %v3198 = vsel %vm2792, %v3064, 0.0
        %3199 = vadd.xlane.f32.xlu0 %v3198
        %v3200 = vpop.xlane.xlu0 %3199
        %v3201 = vsel %vm2792, %v3066, 0.0
        %3202 = vadd.xlane.f32.xlu0 %v3201
        %v3203 = vpop.xlane.xlu0 %3202
        %v3204 = vsel %vm2792, %v3068, 0.0
        %3205 = vadd.xlane.f32.xlu0 %v3204
        %v3206 = vpop.xlane.xlu0 %3205
        %v3207 = vsel %vm2792, %v3070, 0.0
        %3208 = vadd.xlane.f32.xlu0 %v3207
        %v3209 = vpop.xlane.xlu0 %3208
        %v3210 = vsel %vm2792, %v3072, 0.0
        %3211 = vadd.xlane.f32.xlu0 %v3210
        %v3212 = vpop.xlane.xlu0 %3211
        %v3213 = vsel %vm2792, %v3074, 0.0
        %3214 = vadd.xlane.f32.xlu0 %v3213
        %v3215 = vpop.xlane.xlu0 %3214
        %v3216 = vsel %vm2792, %v3076, 0.0
        %3217 = vadd.xlane.f32.xlu0 %v3216
        %v3218 = vpop.xlane.xlu0 %3217
        %v3219 = vsel %vm2792, %v3078, 0.0
        %3220 = vadd.xlane.f32.xlu0 %v3219
        %v3221 = vpop.xlane.xlu0 %3220
        %v3222 = vsel %vm2792, %v3080, 0.0
        %3223 = vadd.xlane.f32.xlu0 %v3222
        %v3224 = vpop.xlane.xlu0 %3223
        %v3225 = vsel %vm2792, %v3082, 0.0
        %3226 = vadd.xlane.f32.xlu0 %v3225
        %v3227 = vpop.xlane.xlu0 %3226
        %v3228 = vsel %vm2792, %v3084, 0.0
        %3229 = vadd.xlane.f32.xlu0 %v3228
        %v3230 = vpop.xlane.xlu0 %3229
        %v3231 = vsel %vm2792, %v3086, 0.0
        %3232 = vadd.xlane.f32.xlu0 %v3231
        %v3233 = vpop.xlane.xlu0 %3232
        %v3234 = vsel %vm2792, %v3088, 0.0
        %3235 = vadd.xlane.f32.xlu0 %v3234
        %v3236 = vpop.xlane.xlu0 %3235
        %v3237 = vsel %vm2792, %v3090, 0.0
        %3238 = vadd.xlane.f32.xlu0 %v3237
        %v3239 = vpop.xlane.xlu0 %3238
        %v3240 = vsel %vm2792, %v3092, 0.0
        %3241 = vadd.xlane.f32.xlu0 %v3240
        %v3242 = vpop.xlane.xlu0 %3241
        %v3243 = vsel %vm2792, %v3094, 0.0
        %3244 = vadd.xlane.f32.xlu0 %v3243
        %v3245 = vpop.xlane.xlu0 %3244
        %v3246 = vsel %vm2792, %v3096, 0.0
        %3247 = vadd.xlane.f32.xlu0 %v3246
        %v3248 = vpop.xlane.xlu0 %3247
        %v3249 = vsel %vm2792, %v3098, 0.0
        %3250 = vadd.xlane.f32.xlu0 %v3249
        %v3251 = vpop.xlane.xlu0 %3250
        %v3252 = vsel %vm2792, %v3100, 0.0
        %3253 = vadd.xlane.f32.xlu0 %v3252
        %v3254 = vpop.xlane.xlu0 %3253
        %v3255 = vsel %vm2792, %v3102, 0.0
        %3256 = vadd.xlane.f32.xlu0 %v3255
        %v3257 = vpop.xlane.xlu0 %3256
        %v3258 = vsel %vm2792, %v3104, 0.0
        %3259 = vadd.xlane.f32.xlu0 %v3258
        %v3260 = vpop.xlane.xlu0 %3259
        %v3261 = vsel %vm2792, %v3106, 0.0
        %3262 = vadd.xlane.f32.xlu0 %v3261
        %v3263 = vpop.xlane.xlu0 %3262
        %v3264 = vsel %vm2792, %v3108, 0.0
        %3265 = vadd.xlane.f32.xlu0 %v3264
        %v3266 = vpop.xlane.xlu0 %3265
        %v3267 = vsel %vm2792, %v3110, 0.0
        %3268 = vadd.xlane.f32.xlu0 %v3267
        %v3269 = vpop.xlane.xlu0 %3268
        %v3270 = vsel %vm2792, %v3112, 0.0
        %3271 = vadd.xlane.f32.xlu0 %v3270
        %v3272 = vpop.xlane.xlu0 %3271
        %v3273 = vsel %vm2792, %v3114, 0.0
        %3274 = vadd.xlane.f32.xlu0 %v3273
        %v3275 = vpop.xlane.xlu0 %3274
        %v3276 = vsel %vm2792, %v3116, 0.0
        %3277 = vadd.xlane.f32.xlu0 %v3276
        %v3278 = vpop.xlane.xlu0 %3277
        %v3279 = vsel %vm2792, %v3118, 0.0
        %3280 = vadd.xlane.f32.xlu0 %v3279
        %v3281 = vpop.xlane.xlu0 %3280
        %v3282 = vsel %vm2792, %v3120, 0.0
        %3283 = vadd.xlane.f32.xlu0 %v3282
        %v3284 = vpop.xlane.xlu0 %3283
        %v3285 = vsel %vm2792, %v3122, 0.0
        %3286 = vadd.xlane.f32.xlu0 %v3285
        %v3287 = vpop.xlane.xlu0 %3286
        %v3288 = vsel %vm2792, %v3124, 0.0
        %3289 = vadd.xlane.f32.xlu0 %v3288
        %v3290 = vpop.xlane.xlu0 %3289
        %v3291 = vsel %vm2792, %v3126, 0.0
        %3292 = vadd.xlane.f32.xlu0 %v3291
        %v3293 = vpop.xlane.xlu0 %3292
        %v3294 = vsel %vm2792, %v3128, 0.0
        %3295 = vadd.xlane.f32.xlu0 %v3294
        %v3296 = vpop.xlane.xlu0 %3295
        %v3297 = vsel %vm2792, %v3130, 0.0
        %3298 = vadd.xlane.f32.xlu0 %v3297
        %v3299 = vpop.xlane.xlu0 %3298
        %v3300 = vsel %vm2792, %v3132, 0.0
        %3301 = vadd.xlane.f32.xlu0 %v3300
        %v3302 = vpop.xlane.xlu0 %3301
        %v3303 = vsel %vm2792, %v3134, 0.0
        %3304 = vadd.xlane.f32.xlu0 %v3303
        %v3305 = vpop.xlane.xlu0 %3304
        %v3306 = vsel %vm2792, %v3136, 0.0
        %3307 = vadd.xlane.f32.xlu0 %v3306
        %v3308 = vpop.xlane.xlu0 %3307
        %v3309 = vsel %vm2792, %v3138, 0.0
        %3310 = vadd.xlane.f32.xlu0 %v3309
        %v3311 = vpop.xlane.xlu0 %3310
        %v3312 = vsel %vm2792, %v3140, 0.0
        %3313 = vadd.xlane.f32.xlu0 %v3312
        %v3314 = vpop.xlane.xlu0 %3313
        %v3315 = vsel %vm2792, %v3142, 0.0
        %3316 = vadd.xlane.f32.xlu0 %v3315
        %v3317 = vpop.xlane.xlu0 %3316
        %v3318 = vsel %vm2792, %v3144, 0.0
        %3319 = vadd.xlane.f32.xlu0 %v3318
        %v3320 = vpop.xlane.xlu0 %3319
        %v3321 = vsel %vm2792, %v3146, 0.0
        %3322 = vadd.xlane.f32.xlu0 %v3321
        %v3323 = vpop.xlane.xlu0 %3322
        %v3324 = vsel %vm2792, %v3148, 0.0
        %3325 = vadd.xlane.f32.xlu0 %v3324
        %v3326 = vpop.xlane.xlu0 %3325
        %v3327 = vsel %vm2792, %v3150, 0.0
        %3328 = vadd.xlane.f32.xlu0 %v3327
        %v3329 = vpop.xlane.xlu0 %3328
        %v3330 = vsel %vm2792, %v3152, 0.0
        %3331 = vadd.xlane.f32.xlu0 %v3330
        %v3332 = vpop.xlane.xlu0 %3331
        %v3333 = vsel %vm2792, %v3154, 0.0
        %3334 = vadd.xlane.f32.xlu0 %v3333
        %v3335 = vpop.xlane.xlu0 %3334
        %v3336 = vsel %vm2792, %v3156, 0.0
        %3337 = vadd.xlane.f32.xlu0 %v3336
        %v3338 = vpop.xlane.xlu0 %3337
        %v3339 = vsel %vm2792, %v3158, 0.0
        %3340 = vadd.xlane.f32.xlu0 %v3339
        %v3341 = vpop.xlane.xlu0 %3340
        %v3342 = vsel %vm2792, %v3160, 0.0
        %3343 = vadd.xlane.f32.xlu0 %v3342
        %v3344 = vpop.xlane.xlu0 %3343
        %v3345 = vsel %vm2792, %v3162, 0.0
        %3346 = vadd.xlane.f32.xlu0 %v3345
        %v3347 = vpop.xlane.xlu0 %3346
        %v3348 = vsel %vm2792, %v3164, 0.0
        %3349 = vadd.xlane.f32.xlu0 %v3348
        %v3350 = vpop.xlane.xlu0 %3349
        %v3351 = vsel %vm2792, %v3166, 0.0
        %3352 = vadd.xlane.f32.xlu0 %v3351
        %v3353 = vpop.xlane.xlu0 %3352
        %v3354 = vsel %vm2792, %v3168, 0.0
        %3355 = vadd.xlane.f32.xlu0 %v3354
        %v3356 = vpop.xlane.xlu0 %3355
        %v3357 = vsel %vm2792, %v3170, 0.0
        %3358 = vadd.xlane.f32.xlu0 %v3357
        %v3359 = vpop.xlane.xlu0 %3358
        %v3360 = vsel %vm2792, %v3172, 0.0
        %3361 = vadd.xlane.f32.xlu0 %v3360
        %v3362 = vpop.xlane.xlu0 %3361
        %v3363 = vsel %vm2792, %v3174, 0.0
        %3364 = vadd.xlane.f32.xlu0 %v3363
        %v3365 = vpop.xlane.xlu0 %3364
        %v3366 = vsel %vm2792, %v3176, 0.0
        %3367 = vadd.xlane.f32.xlu0 %v3366
        %v3368 = vpop.xlane.xlu0 %3367
        %v3369 = vrcp.pop %v3179
        %v3370 = vrcp.pop %v3182
        %v3371 = vrcp.pop %v3185
        %v3372 = vrcp.pop %v3188
        %v3373 = vrcp.pop %v3191
        %v3374 = vrcp.pop %v3194
        %v3375 = vrcp.pop %v3197
        %v3376 = vrcp.pop %v3200
        %v3377 = vrcp.pop %v3203
        %v3378 = vrcp.pop %v3206
        %v3379 = vrcp.pop %v3209
        %v3380 = vrcp.pop %v3212
        %v3381 = vrcp.pop %v3215
        %v3382 = vrcp.pop %v3218
        %v3383 = vrcp.pop %v3221
        %v3384 = vrcp.pop %v3224
        %v3385 = vrcp.pop %v3227
        %v3386 = vrcp.pop %v3230
        %v3387 = vrcp.pop %v3233
        %v3388 = vrcp.pop %v3236
        %v3389 = vrcp.pop %v3239
        %v3390 = vrcp.pop %v3242
        %v3391 = vrcp.pop %v3245
        %v3392 = vrcp.pop %v3248
        %v3393 = vrcp.pop %v3251
        %v3394 = vrcp.pop %v3254
        %v3395 = vrcp.pop %v3257
        %v3396 = vrcp.pop %v3260
        %v3397 = vrcp.pop %v3263
        %v3398 = vrcp.pop %v3266
        %v3399 = vrcp.pop %v3269
        %v3400 = vrcp.pop %v3272
        %v3401 = vrcp.pop %v3275
        %v3402 = vrcp.pop %v3278
        %v3403 = vrcp.pop %v3281
        %v3404 = vrcp.pop %v3284
        %v3405 = vrcp.pop %v3287
        %v3406 = vrcp.pop %v3290
        %v3407 = vrcp.pop %v3293
        %v3408 = vrcp.pop %v3296
        %v3409 = vrcp.pop %v3299
        %v3410 = vrcp.pop %v3302
        %v3411 = vrcp.pop %v3305
        %v3412 = vrcp.pop %v3308
        %v3413 = vrcp.pop %v3311
        %v3414 = vrcp.pop %v3314
        %v3415 = vrcp.pop %v3317
        %v3416 = vrcp.pop %v3320
        %v3417 = vrcp.pop %v3323
        %v3418 = vrcp.pop %v3326
        %v3419 = vrcp.pop %v3329
        %v3420 = vrcp.pop %v3332
        %v3421 = vrcp.pop %v3335
        %v3422 = vrcp.pop %v3338
        %v3423 = vrcp.pop %v3341
        %v3424 = vrcp.pop %v3344
        %v3425 = vrcp.pop %v3347
        %v3426 = vrcp.pop %v3350
        %v3427 = vrcp.pop %v3353
        %v3428 = vrcp.pop %v3356
        %v3429 = vrcp.pop %v3359
        %v3430 = vrcp.pop %v3362
        %v3431 = vrcp.pop %v3365
        %v3432 = vrcp.pop %v3368
        %v3433 = vmul.f32 %v3050, %v3369
        %v3434 = vmul.f32 %v3052, %v3370
        %v3435 = vmul.f32 %v3054, %v3371
        %v3436 = vmul.f32 %v3056, %v3372
        %v3437 = vmul.f32 %v3058, %v3373
        %v3438 = vmul.f32 %v3060, %v3374
        %v3439 = vmul.f32 %v3062, %v3375
        %v3440 = vmul.f32 %v3064, %v3376
        %v3441 = vmul.f32 %v3066, %v3377
        %v3442 = vmul.f32 %v3068, %v3378
        %v3443 = vmul.f32 %v3070, %v3379
        %v3444 = vmul.f32 %v3072, %v3380
        %v3445 = vmul.f32 %v3074, %v3381
        %v3446 = vmul.f32 %v3076, %v3382
        %v3447 = vmul.f32 %v3078, %v3383
        %v3448 = vmul.f32 %v3080, %v3384
        %v3449 = vmul.f32 %v3082, %v3385
        %v3450 = vmul.f32 %v3084, %v3386
        %v3451 = vmul.f32 %v3086, %v3387
        %v3452 = vmul.f32 %v3088, %v3388
        %v3453 = vmul.f32 %v3090, %v3389
        %v3454 = vmul.f32 %v3092, %v3390
        %v3455 = vmul.f32 %v3094, %v3391
        %v3456 = vmul.f32 %v3096, %v3392
        %v3457 = vmul.f32 %v3098, %v3393
        %v3458 = vmul.f32 %v3100, %v3394
        %v3459 = vmul.f32 %v3102, %v3395
        %v3460 = vmul.f32 %v3104, %v3396
        %v3461 = vmul.f32 %v3106, %v3397
        %v3462 = vmul.f32 %v3108, %v3398
        %v3463 = vmul.f32 %v3110, %v3399
        %v3464 = vmul.f32 %v3112, %v3400
        %v3465 = vmul.f32 %v3114, %v3401
        %v3466 = vmul.f32 %v3116, %v3402
        %v3467 = vmul.f32 %v3118, %v3403
        %v3468 = vmul.f32 %v3120, %v3404
        %v3469 = vmul.f32 %v3122, %v3405
        %v3470 = vmul.f32 %v3124, %v3406
        %v3471 = vmul.f32 %v3126, %v3407
        %v3472 = vmul.f32 %v3128, %v3408
        %v3473 = vmul.f32 %v3130, %v3409
        %v3474 = vmul.f32 %v3132, %v3410
        %v3475 = vmul.f32 %v3134, %v3411
        %v3476 = vmul.f32 %v3136, %v3412
        %v3477 = vmul.f32 %v3138, %v3413
        %v3478 = vmul.f32 %v3140, %v3414
        %v3479 = vmul.f32 %v3142, %v3415
        %v3480 = vmul.f32 %v3144, %v3416
        %v3481 = vmul.f32 %v3146, %v3417
        %v3482 = vmul.f32 %v3148, %v3418
        %v3483 = vmul.f32 %v3150, %v3419
        %v3484 = vmul.f32 %v3152, %v3420
        %v3485 = vmul.f32 %v3154, %v3421
        %v3486 = vmul.f32 %v3156, %v3422
        %v3487 = vmul.f32 %v3158, %v3423
        %v3488 = vmul.f32 %v3160, %v3424
        %v3489 = vmul.f32 %v3162, %v3425
        %v3490 = vmul.f32 %v3164, %v3426
        %v3491 = vmul.f32 %v3166, %v3427
        %v3492 = vmul.f32 %v3168, %v3428
        %v3493 = vmul.f32 %v3170, %v3429
        %v3494 = vmul.f32 %v3172, %v3430
        %v3495 = vmul.f32 %v3174, %v3431
        %v3496 = vmul.f32 %v3176, %v3432
        %v3497 = vpack.c.bf16 %v3433, %v3433
        %v3498 = vpack.c.bf16 %v3434, %v3434
        %v3499 = vpack.c.bf16 %v3435, %v3435
        %v3500 = vpack.c.bf16 %v3436, %v3436
        %v3501 = vpack.c.bf16 %v3437, %v3437
        %v3502 = vpack.c.bf16 %v3438, %v3438
        %v3503 = vpack.c.bf16 %v3439, %v3439
        %v3504 = vpack.c.bf16 %v3440, %v3440
        %v3505 = vpack.c.bf16 %v3441, %v3441
        %v3506 = vpack.c.bf16 %v3442, %v3442
        %v3507 = vpack.c.bf16 %v3443, %v3443
        %v3508 = vpack.c.bf16 %v3444, %v3444
        %v3509 = vpack.c.bf16 %v3445, %v3445
        %v3510 = vpack.c.bf16 %v3446, %v3446
        %v3511 = vpack.c.bf16 %v3447, %v3447
        %v3512 = vpack.c.bf16 %v3448, %v3448
        %v3513 = vpack.c.bf16 %v3449, %v3449
        %v3514 = vpack.c.bf16 %v3450, %v3450
        %v3515 = vpack.c.bf16 %v3451, %v3451
        %v3516 = vpack.c.bf16 %v3452, %v3452
        %v3517 = vpack.c.bf16 %v3453, %v3453
        %v3518 = vpack.c.bf16 %v3454, %v3454
        %v3519 = vpack.c.bf16 %v3455, %v3455
        %v3520 = vpack.c.bf16 %v3456, %v3456
        %v3521 = vpack.c.bf16 %v3457, %v3457
        %v3522 = vpack.c.bf16 %v3458, %v3458
        %v3523 = vpack.c.bf16 %v3459, %v3459
        %v3524 = vpack.c.bf16 %v3460, %v3460
        %v3525 = vpack.c.bf16 %v3461, %v3461
        %v3526 = vpack.c.bf16 %v3462, %v3462
        %v3527 = vpack.c.bf16 %v3463, %v3463
        %v3528 = vpack.c.bf16 %v3464, %v3464
        %v3529 = vpack.c.bf16 %v3465, %v3465
        %v3530 = vpack.c.bf16 %v3466, %v3466
        %v3531 = vpack.c.bf16 %v3467, %v3467
        %v3532 = vpack.c.bf16 %v3468, %v3468
        %v3533 = vpack.c.bf16 %v3469, %v3469
        %v3534 = vpack.c.bf16 %v3470, %v3470
        %v3535 = vpack.c.bf16 %v3471, %v3471
        %v3536 = vpack.c.bf16 %v3472, %v3472
        %v3537 = vpack.c.bf16 %v3473, %v3473
        %v3538 = vpack.c.bf16 %v3474, %v3474
        %v3539 = vpack.c.bf16 %v3475, %v3475
        %v3540 = vpack.c.bf16 %v3476, %v3476
        %v3541 = vpack.c.bf16 %v3477, %v3477
        %v3542 = vpack.c.bf16 %v3478, %v3478
        %v3543 = vpack.c.bf16 %v3479, %v3479
        %v3544 = vpack.c.bf16 %v3480, %v3480
        %v3545 = vpack.c.bf16 %v3481, %v3481
        %v3546 = vpack.c.bf16 %v3482, %v3482
        %v3547 = vpack.c.bf16 %v3483, %v3483
        %v3548 = vpack.c.bf16 %v3484, %v3484
        %v3549 = vpack.c.bf16 %v3485, %v3485
        %v3550 = vpack.c.bf16 %v3486, %v3486
        %v3551 = vpack.c.bf16 %v3487, %v3487
        %v3552 = vpack.c.bf16 %v3488, %v3488
        %v3553 = vpack.c.bf16 %v3489, %v3489
        %v3554 = vpack.c.bf16 %v3490, %v3490
        %v3555 = vpack.c.bf16 %v3491, %v3491
        %v3556 = vpack.c.bf16 %v3492, %v3492
        %v3557 = vpack.c.bf16 %v3493, %v3493
        %v3558 = vpack.c.bf16 %v3494, %v3494
        %v3559 = vpack.c.bf16 %v3495, %v3495
        %v3560 = vpack.c.bf16 %v3496, %v3496
        %v3569 = vunpack.c.l.b16 %v3497
        %v3570 = vunpack.c.l.b16 %v3498
        %v3571 = vunpack.c.l.b16 %v3499
        %v3572 = vunpack.c.l.b16 %v3500
        %v3573 = vunpack.c.l.b16 %v3501
        %v3574 = vunpack.c.l.b16 %v3502
        %v3575 = vunpack.c.l.b16 %v3503
        %v3576 = vunpack.c.l.b16 %v3504
        %v3577 = vpack.c.b16 %v3570, %v3569
        %v3578 = vpack.c.b16 %v3572, %v3571
        %v3579 = vpack.c.b16 %v3574, %v3573
        %v3580 = vpack.c.b16 %v3576, %v3575
        %v3581 = vunpack.c.l.b16 %v1438
        %v3582 = vunpack.c.l.b16 %v1439
        %v3583 = vunpack.c.l.b16 %v1440
        %v3584 = vunpack.c.l.b16 %v1441
        %v3585 = vunpack.c.l.b16 %v1442
        %v3586 = vunpack.c.l.b16 %v1443
        %v3587 = vunpack.c.l.b16 %v1444
        %v3588 = vunpack.c.l.b16 %v1445
        %v3589 = vpack.c.b16 %v3582, %v3581
        %v3590 = vpack.c.b16 %v3584, %v3583
        %v3591 = vpack.c.b16 %v3586, %v3585
        %v3592 = vpack.c.b16 %v3588, %v3587
        %v3598 = vsel %vm2792, %v3577, 0
        %v3601 = vsel %vm2792, %v3578, 0
        %v3604 = vsel %vm2792, %v3579, 0
        %v3607 = vsel %vm2792, %v3580, 0
        %3609 = vmatpush.bf16.msra.mxu0 0
        %3610 = vmatpush.bf16.msra.mxu0 0
        %3611 = vmatpush.bf16.msra.mxu0 0
        %3612 = vmatpush.bf16.msra.mxu0 0
        %3613 = vmatpush.bf16.msra.mxu0 %v3592
        %3614 = vmatpush.bf16.msra.mxu0 %v3591
        %3615 = vmatpush.bf16.msra.mxu0 %v3590
        %3616 = vmatpush.bf16.msra.mxu0 %v3589
        %3617 = vmatmul.bf16.gmra.mxu0 %v3598
        %v3618 = vpop.f32.mrf.mxu0
        %v3619 = vadd.f32 0.0, %v3618
        %v3620 = vpop.f32.mrf.mxu0
        %v3621 = vadd.f32 0.0, %v3620
        %3622 = vmatmul.bf16.gmra.mxu0 %v3601
        %v3623 = vpop.f32.mrf.mxu0
        %v3624 = vadd.f32 0.0, %v3623
        %v3625 = vpop.f32.mrf.mxu0
        %v3626 = vadd.f32 0.0, %v3625
        %3627 = vmatmul.bf16.gmra.mxu0 %v3604
        %v3628 = vpop.f32.mrf.mxu0
        %v3629 = vadd.f32 0.0, %v3628
        %v3630 = vpop.f32.mrf.mxu0
        %v3631 = vadd.f32 0.0, %v3630
        %3632 = vmatmul.bf16.gmra.mxu0 %v3607
        %v3633 = vpop.f32.mrf.mxu0
        %v3634 = vadd.f32 0.0, %v3633
        %v3635 = vpop.f32.mrf.mxu0
        %v3636 = vadd.f32 0.0, %v3635
        %3637 = vdwg.mxu0
        %v3646 = vunpack.c.l.b16 %v3505
        %v3647 = vunpack.c.l.b16 %v3506
        %v3648 = vunpack.c.l.b16 %v3507
        %v3649 = vunpack.c.l.b16 %v3508
        %v3650 = vunpack.c.l.b16 %v3509
        %v3651 = vunpack.c.l.b16 %v3510
        %v3652 = vunpack.c.l.b16 %v3511
        %v3653 = vunpack.c.l.b16 %v3512
        %v3654 = vpack.c.b16 %v3647, %v3646
        %v3655 = vpack.c.b16 %v3649, %v3648
        %v3656 = vpack.c.b16 %v3651, %v3650
        %v3657 = vpack.c.b16 %v3653, %v3652
        %v3658 = vunpack.c.l.b16 %v1951
        %v3659 = vunpack.c.l.b16 %v1953
        %v3660 = vunpack.c.l.b16 %v1955
        %v3661 = vunpack.c.l.b16 %v1957
        %v3662 = vunpack.c.l.b16 %v1959
        %v3663 = vunpack.c.l.b16 %v1961
        %v3664 = vunpack.c.l.b16 %v1963
        %v3665 = vunpack.c.l.b16 %v1965
        %v3666 = vpack.c.b16 %v3659, %v3658
        %v3667 = vpack.c.b16 %v3661, %v3660
        %v3668 = vpack.c.b16 %v3663, %v3662
        %v3669 = vpack.c.b16 %v3665, %v3664
        %v3675 = vsel %vm2792, %v3654, 0
        %v3678 = vsel %vm2792, %v3655, 0
        %v3681 = vsel %vm2792, %v3656, 0
        %v3684 = vsel %vm2792, %v3657, 0
        %3686 = vmatpush.bf16.msra.mxu0 0
        %3687 = vmatpush.bf16.msra.mxu0 0
        %3688 = vmatpush.bf16.msra.mxu0 0
        %3689 = vmatpush.bf16.msra.mxu0 0
        %3690 = vmatpush.bf16.msra.mxu0 %v3669
        %3691 = vmatpush.bf16.msra.mxu0 %v3668
        %3692 = vmatpush.bf16.msra.mxu0 %v3667
        %3693 = vmatpush.bf16.msra.mxu0 %v3666
        %3694 = vmatmul.bf16.gmra.mxu0 %v3675
        %v3695 = vpop.f32.mrf.mxu0
        %v3696 = vadd.f32 0.0, %v3695
        %v3697 = vpop.f32.mrf.mxu0
        %v3698 = vadd.f32 0.0, %v3697
        %3699 = vmatmul.bf16.gmra.mxu0 %v3678
        %v3700 = vpop.f32.mrf.mxu0
        %v3701 = vadd.f32 0.0, %v3700
        %v3702 = vpop.f32.mrf.mxu0
        %v3703 = vadd.f32 0.0, %v3702
        %3704 = vmatmul.bf16.gmra.mxu0 %v3681
        %v3705 = vpop.f32.mrf.mxu0
        %v3706 = vadd.f32 0.0, %v3705
        %v3707 = vpop.f32.mrf.mxu0
        %v3708 = vadd.f32 0.0, %v3707
        %3709 = vmatmul.bf16.gmra.mxu0 %v3684
        %v3710 = vpop.f32.mrf.mxu0
        %v3711 = vadd.f32 0.0, %v3710
        %v3712 = vpop.f32.mrf.mxu0
        %v3713 = vadd.f32 0.0, %v3712
        %3714 = vdwg.mxu0
        %v3723 = vunpack.c.l.b16 %v3513
        %v3724 = vunpack.c.l.b16 %v3514
        %v3725 = vunpack.c.l.b16 %v3515
        %v3726 = vunpack.c.l.b16 %v3516
        %v3727 = vunpack.c.l.b16 %v3517
        %v3728 = vunpack.c.l.b16 %v3518
        %v3729 = vunpack.c.l.b16 %v3519
        %v3730 = vunpack.c.l.b16 %v3520
        %v3731 = vpack.c.b16 %v3724, %v3723
        %v3732 = vpack.c.b16 %v3726, %v3725
        %v3733 = vpack.c.b16 %v3728, %v3727
        %v3734 = vpack.c.b16 %v3730, %v3729
        %v3735 = vunpack.c.l.b16 %v1983
        %v3736 = vunpack.c.l.b16 %v1985
        %v3737 = vunpack.c.l.b16 %v1987
        %v3738 = vunpack.c.l.b16 %v1989
        %v3739 = vunpack.c.l.b16 %v1991
        %v3740 = vunpack.c.l.b16 %v1993
        %v3741 = vunpack.c.l.b16 %v1995
        %v3742 = vunpack.c.l.b16 %v1997
        %v3743 = vpack.c.b16 %v3736, %v3735
        %v3744 = vpack.c.b16 %v3738, %v3737
        %v3745 = vpack.c.b16 %v3740, %v3739
        %v3746 = vpack.c.b16 %v3742, %v3741
        %v3752 = vsel %vm2792, %v3731, 0
        %v3755 = vsel %vm2792, %v3732, 0
        %v3758 = vsel %vm2792, %v3733, 0
        %v3761 = vsel %vm2792, %v3734, 0
        %3763 = vmatpush.bf16.msra.mxu0 0
        %3764 = vmatpush.bf16.msra.mxu0 0
        %3765 = vmatpush.bf16.msra.mxu0 0
        %3766 = vmatpush.bf16.msra.mxu0 0
        %3767 = vmatpush.bf16.msra.mxu0 %v3746
        %3768 = vmatpush.bf16.msra.mxu0 %v3745
        %3769 = vmatpush.bf16.msra.mxu0 %v3744
        %3770 = vmatpush.bf16.msra.mxu0 %v3743
        %3771 = vmatmul.bf16.gmra.mxu0 %v3752
        %v3772 = vpop.f32.mrf.mxu0
        %v3773 = vadd.f32 0.0, %v3772
        %v3774 = vpop.f32.mrf.mxu0
        %v3775 = vadd.f32 0.0, %v3774
        %3776 = vmatmul.bf16.gmra.mxu0 %v3755
        %v3777 = vpop.f32.mrf.mxu0
        %v3778 = vadd.f32 0.0, %v3777
        %v3779 = vpop.f32.mrf.mxu0
        %v3780 = vadd.f32 0.0, %v3779
        %3781 = vmatmul.bf16.gmra.mxu0 %v3758
        %v3782 = vpop.f32.mrf.mxu0
        %v3783 = vadd.f32 0.0, %v3782
        %v3784 = vpop.f32.mrf.mxu0
        %v3785 = vadd.f32 0.0, %v3784
        %3786 = vmatmul.bf16.gmra.mxu0 %v3761
        %v3787 = vpop.f32.mrf.mxu0
        %v3788 = vadd.f32 0.0, %v3787
        %v3789 = vpop.f32.mrf.mxu0
        %v3790 = vadd.f32 0.0, %v3789
        %3791 = vdwg.mxu0
        %v3800 = vunpack.c.l.b16 %v3521
        %v3801 = vunpack.c.l.b16 %v3522
        %v3802 = vunpack.c.l.b16 %v3523
        %v3803 = vunpack.c.l.b16 %v3524
        %v3804 = vunpack.c.l.b16 %v3525
        %v3805 = vunpack.c.l.b16 %v3526
        %v3806 = vunpack.c.l.b16 %v3527
        %v3807 = vunpack.c.l.b16 %v3528
        %v3808 = vpack.c.b16 %v3801, %v3800
        %v3809 = vpack.c.b16 %v3803, %v3802
        %v3810 = vpack.c.b16 %v3805, %v3804
        %v3811 = vpack.c.b16 %v3807, %v3806
        %v3812 = vunpack.c.l.b16 %v2015
        %v3813 = vunpack.c.l.b16 %v2017
        %v3814 = vunpack.c.l.b16 %v2019
        %v3815 = vunpack.c.l.b16 %v2021
        %v3816 = vunpack.c.l.b16 %v2023
        %v3817 = vunpack.c.l.b16 %v2025
        %v3818 = vunpack.c.l.b16 %v2027
        %v3819 = vunpack.c.l.b16 %v2029
        %v3820 = vpack.c.b16 %v3813, %v3812
        %v3821 = vpack.c.b16 %v3815, %v3814
        %v3822 = vpack.c.b16 %v3817, %v3816
        %v3823 = vpack.c.b16 %v3819, %v3818
        %v3829 = vsel %vm2792, %v3808, 0
        %v3832 = vsel %vm2792, %v3809, 0
        %v3835 = vsel %vm2792, %v3810, 0
        %v3838 = vsel %vm2792, %v3811, 0
        %3840 = vmatpush.bf16.msra.mxu0 0
        %3841 = vmatpush.bf16.msra.mxu0 0
        %3842 = vmatpush.bf16.msra.mxu0 0
        %3843 = vmatpush.bf16.msra.mxu0 0
        %3844 = vmatpush.bf16.msra.mxu0 %v3823
        %3845 = vmatpush.bf16.msra.mxu0 %v3822
        %3846 = vmatpush.bf16.msra.mxu0 %v3821
        %3847 = vmatpush.bf16.msra.mxu0 %v3820
        %3848 = vmatmul.bf16.gmra.mxu0 %v3829
        %v3849 = vpop.f32.mrf.mxu0
        %v3850 = vadd.f32 0.0, %v3849
        %v3851 = vpop.f32.mrf.mxu0
        %v3852 = vadd.f32 0.0, %v3851
        %3853 = vmatmul.bf16.gmra.mxu0 %v3832
        %v3854 = vpop.f32.mrf.mxu0
        %v3855 = vadd.f32 0.0, %v3854
        %v3856 = vpop.f32.mrf.mxu0
        %v3857 = vadd.f32 0.0, %v3856
        %3858 = vmatmul.bf16.gmra.mxu0 %v3835
        %v3859 = vpop.f32.mrf.mxu0
        %v3860 = vadd.f32 0.0, %v3859
        %v3861 = vpop.f32.mrf.mxu0
        %v3862 = vadd.f32 0.0, %v3861
        %3863 = vmatmul.bf16.gmra.mxu0 %v3838
        %v3864 = vpop.f32.mrf.mxu0
        %v3865 = vadd.f32 0.0, %v3864
        %v3866 = vpop.f32.mrf.mxu0
        %v3867 = vadd.f32 0.0, %v3866
        %3868 = vdwg.mxu0
        %v3877 = vunpack.c.l.b16 %v3529
        %v3878 = vunpack.c.l.b16 %v3530
        %v3879 = vunpack.c.l.b16 %v3531
        %v3880 = vunpack.c.l.b16 %v3532
        %v3881 = vunpack.c.l.b16 %v3533
        %v3882 = vunpack.c.l.b16 %v3534
        %v3883 = vunpack.c.l.b16 %v3535
        %v3884 = vunpack.c.l.b16 %v3536
        %v3885 = vpack.c.b16 %v3878, %v3877
        %v3886 = vpack.c.b16 %v3880, %v3879
        %v3887 = vpack.c.b16 %v3882, %v3881
        %v3888 = vpack.c.b16 %v3884, %v3883
        %v3889 = vunpack.c.l.b16 %v2047
        %v3890 = vunpack.c.l.b16 %v2049
        %v3891 = vunpack.c.l.b16 %v2051
        %v3892 = vunpack.c.l.b16 %v2053
        %v3893 = vunpack.c.l.b16 %v2055
        %v3894 = vunpack.c.l.b16 %v2057
        %v3895 = vunpack.c.l.b16 %v2059
        %v3896 = vunpack.c.l.b16 %v2061
        %v3897 = vpack.c.b16 %v3890, %v3889
        %v3898 = vpack.c.b16 %v3892, %v3891
        %v3899 = vpack.c.b16 %v3894, %v3893
        %v3900 = vpack.c.b16 %v3896, %v3895
        %v3906 = vsel %vm2792, %v3885, 0
        %v3909 = vsel %vm2792, %v3886, 0
        %v3912 = vsel %vm2792, %v3887, 0
        %v3915 = vsel %vm2792, %v3888, 0
        %3917 = vmatpush.bf16.msra.mxu0 0
        %3918 = vmatpush.bf16.msra.mxu0 0
        %3919 = vmatpush.bf16.msra.mxu0 0
        %3920 = vmatpush.bf16.msra.mxu0 0
        %3921 = vmatpush.bf16.msra.mxu0 %v3900
        %3922 = vmatpush.bf16.msra.mxu0 %v3899
        %3923 = vmatpush.bf16.msra.mxu0 %v3898
        %3924 = vmatpush.bf16.msra.mxu0 %v3897
        %3925 = vmatmul.bf16.gmra.mxu0 %v3906
        %v3926 = vpop.f32.mrf.mxu0
        %v3927 = vadd.f32 0.0, %v3926
        %v3928 = vpop.f32.mrf.mxu0
        %v3929 = vadd.f32 0.0, %v3928
        %3930 = vmatmul.bf16.gmra.mxu0 %v3909
        %v3931 = vpop.f32.mrf.mxu0
        %v3932 = vadd.f32 0.0, %v3931
        %v3933 = vpop.f32.mrf.mxu0
        %v3934 = vadd.f32 0.0, %v3933
        %3935 = vmatmul.bf16.gmra.mxu0 %v3912
        %v3936 = vpop.f32.mrf.mxu0
        %v3937 = vadd.f32 0.0, %v3936
        %v3938 = vpop.f32.mrf.mxu0
        %v3939 = vadd.f32 0.0, %v3938
        %3940 = vmatmul.bf16.gmra.mxu0 %v3915
        %v3941 = vpop.f32.mrf.mxu0
        %v3942 = vadd.f32 0.0, %v3941
        %v3943 = vpop.f32.mrf.mxu0
        %v3944 = vadd.f32 0.0, %v3943
        %3945 = vdwg.mxu0
        %v3954 = vunpack.c.l.b16 %v3537
        %v3955 = vunpack.c.l.b16 %v3538
        %v3956 = vunpack.c.l.b16 %v3539
        %v3957 = vunpack.c.l.b16 %v3540
        %v3958 = vunpack.c.l.b16 %v3541
        %v3959 = vunpack.c.l.b16 %v3542
        %v3960 = vunpack.c.l.b16 %v3543
        %v3961 = vunpack.c.l.b16 %v3544
        %v3962 = vpack.c.b16 %v3955, %v3954
        %v3963 = vpack.c.b16 %v3957, %v3956
        %v3964 = vpack.c.b16 %v3959, %v3958
        %v3965 = vpack.c.b16 %v3961, %v3960
        %v3966 = vunpack.c.l.b16 %v2079
        %v3967 = vunpack.c.l.b16 %v2081
        %v3968 = vunpack.c.l.b16 %v2083
        %v3969 = vunpack.c.l.b16 %v2085
        %v3970 = vunpack.c.l.b16 %v2087
        %v3971 = vunpack.c.l.b16 %v2089
        %v3972 = vunpack.c.l.b16 %v2091
        %v3973 = vunpack.c.l.b16 %v2093
        %v3974 = vpack.c.b16 %v3967, %v3966
        %v3975 = vpack.c.b16 %v3969, %v3968
        %v3976 = vpack.c.b16 %v3971, %v3970
        %v3977 = vpack.c.b16 %v3973, %v3972
        %v3983 = vsel %vm2792, %v3962, 0
        %v3986 = vsel %vm2792, %v3963, 0
        %v3989 = vsel %vm2792, %v3964, 0
        %v3992 = vsel %vm2792, %v3965, 0
        %3994 = vmatpush.bf16.msra.mxu0 0
        %3995 = vmatpush.bf16.msra.mxu0 0
        %3996 = vmatpush.bf16.msra.mxu0 0
        %3997 = vmatpush.bf16.msra.mxu0 0
        %3998 = vmatpush.bf16.msra.mxu0 %v3977
        %3999 = vmatpush.bf16.msra.mxu0 %v3976
        %4000 = vmatpush.bf16.msra.mxu0 %v3975
        %4001 = vmatpush.bf16.msra.mxu0 %v3974
        %4002 = vmatmul.bf16.gmra.mxu0 %v3983
        %v4003 = vpop.f32.mrf.mxu0
        %v4004 = vadd.f32 0.0, %v4003
        %v4005 = vpop.f32.mrf.mxu0
        %v4006 = vadd.f32 0.0, %v4005
        %4007 = vmatmul.bf16.gmra.mxu0 %v3986
        %v4008 = vpop.f32.mrf.mxu0
        %v4009 = vadd.f32 0.0, %v4008
        %v4010 = vpop.f32.mrf.mxu0
        %v4011 = vadd.f32 0.0, %v4010
        %4012 = vmatmul.bf16.gmra.mxu0 %v3989
        %v4013 = vpop.f32.mrf.mxu0
        %v4014 = vadd.f32 0.0, %v4013
        %v4015 = vpop.f32.mrf.mxu0
        %v4016 = vadd.f32 0.0, %v4015
        %4017 = vmatmul.bf16.gmra.mxu0 %v3992
        %v4018 = vpop.f32.mrf.mxu0
        %v4019 = vadd.f32 0.0, %v4018
        %v4020 = vpop.f32.mrf.mxu0
        %v4021 = vadd.f32 0.0, %v4020
        %4022 = vdwg.mxu0
        %v4031 = vunpack.c.l.b16 %v3545
        %v4032 = vunpack.c.l.b16 %v3546
        %v4033 = vunpack.c.l.b16 %v3547
        %v4034 = vunpack.c.l.b16 %v3548
        %v4035 = vunpack.c.l.b16 %v3549
        %v4036 = vunpack.c.l.b16 %v3550
        %v4037 = vunpack.c.l.b16 %v3551
        %v4038 = vunpack.c.l.b16 %v3552
        %v4039 = vpack.c.b16 %v4032, %v4031
        %v4040 = vpack.c.b16 %v4034, %v4033
        %v4041 = vpack.c.b16 %v4036, %v4035
        %v4042 = vpack.c.b16 %v4038, %v4037
        %v4043 = vunpack.c.l.b16 %v2111
        %v4044 = vunpack.c.l.b16 %v2113
        %v4045 = vunpack.c.l.b16 %v2115
        %v4046 = vunpack.c.l.b16 %v2117
        %v4047 = vunpack.c.l.b16 %v2119
        %v4048 = vunpack.c.l.b16 %v2121
        %v4049 = vunpack.c.l.b16 %v2123
        %v4050 = vunpack.c.l.b16 %v2125
        %v4051 = vpack.c.b16 %v4044, %v4043
        %v4052 = vpack.c.b16 %v4046, %v4045
        %v4053 = vpack.c.b16 %v4048, %v4047
        %v4054 = vpack.c.b16 %v4050, %v4049
        %v4060 = vsel %vm2792, %v4039, 0
        %v4063 = vsel %vm2792, %v4040, 0
        %v4066 = vsel %vm2792, %v4041, 0
        %v4069 = vsel %vm2792, %v4042, 0
        %4071 = vmatpush.bf16.msra.mxu0 0
        %4072 = vmatpush.bf16.msra.mxu0 0
        %4073 = vmatpush.bf16.msra.mxu0 0
        %4074 = vmatpush.bf16.msra.mxu0 0
        %4075 = vmatpush.bf16.msra.mxu0 %v4054
        %4076 = vmatpush.bf16.msra.mxu0 %v4053
        %4077 = vmatpush.bf16.msra.mxu0 %v4052
        %4078 = vmatpush.bf16.msra.mxu0 %v4051
        %4079 = vmatmul.bf16.gmra.mxu0 %v4060
        %v4080 = vpop.f32.mrf.mxu0
        %v4081 = vadd.f32 0.0, %v4080
        %v4082 = vpop.f32.mrf.mxu0
        %v4083 = vadd.f32 0.0, %v4082
        %4084 = vmatmul.bf16.gmra.mxu0 %v4063
        %v4085 = vpop.f32.mrf.mxu0
        %v4086 = vadd.f32 0.0, %v4085
        %v4087 = vpop.f32.mrf.mxu0
        %v4088 = vadd.f32 0.0, %v4087
        %4089 = vmatmul.bf16.gmra.mxu0 %v4066
        %v4090 = vpop.f32.mrf.mxu0
        %v4091 = vadd.f32 0.0, %v4090
        %v4092 = vpop.f32.mrf.mxu0
        %v4093 = vadd.f32 0.0, %v4092
        %4094 = vmatmul.bf16.gmra.mxu0 %v4069
        %v4095 = vpop.f32.mrf.mxu0
        %v4096 = vadd.f32 0.0, %v4095
        %v4097 = vpop.f32.mrf.mxu0
        %v4098 = vadd.f32 0.0, %v4097
        %4099 = vdwg.mxu0
        %v4108 = vunpack.c.l.b16 %v3553
        %v4109 = vunpack.c.l.b16 %v3554
        %v4110 = vunpack.c.l.b16 %v3555
        %v4111 = vunpack.c.l.b16 %v3556
        %v4112 = vunpack.c.l.b16 %v3557
        %v4113 = vunpack.c.l.b16 %v3558
        %v4114 = vunpack.c.l.b16 %v3559
        %v4115 = vunpack.c.l.b16 %v3560
        %v4116 = vpack.c.b16 %v4109, %v4108
        %v4117 = vpack.c.b16 %v4111, %v4110
        %v4118 = vpack.c.b16 %v4113, %v4112
        %v4119 = vpack.c.b16 %v4115, %v4114
        %v4120 = vunpack.c.l.b16 %v2143
        %v4121 = vunpack.c.l.b16 %v2145
        %v4122 = vunpack.c.l.b16 %v2147
        %v4123 = vunpack.c.l.b16 %v2149
        %v4124 = vunpack.c.l.b16 %v2151
        %v4125 = vunpack.c.l.b16 %v2153
        %v4126 = vunpack.c.l.b16 %v2155
        %v4127 = vunpack.c.l.b16 %v2157
        %v4128 = vpack.c.b16 %v4121, %v4120
        %v4129 = vpack.c.b16 %v4123, %v4122
        %v4130 = vpack.c.b16 %v4125, %v4124
        %v4131 = vpack.c.b16 %v4127, %v4126
        %v4137 = vsel %vm2792, %v4116, 0
        %v4140 = vsel %vm2792, %v4117, 0
        %v4143 = vsel %vm2792, %v4118, 0
        %v4146 = vsel %vm2792, %v4119, 0
        %4148 = vmatpush.bf16.msra.mxu0 0
        %4149 = vmatpush.bf16.msra.mxu0 0
        %4150 = vmatpush.bf16.msra.mxu0 0
        %4151 = vmatpush.bf16.msra.mxu0 0
        %4152 = vmatpush.bf16.msra.mxu0 %v4131
        %4153 = vmatpush.bf16.msra.mxu0 %v4130
        %4154 = vmatpush.bf16.msra.mxu0 %v4129
        %4155 = vmatpush.bf16.msra.mxu0 %v4128
        %4156 = vmatmul.bf16.gmra.mxu0 %v4137
        %v4157 = vpop.f32.mrf.mxu0
        %v4158 = vadd.f32 0.0, %v4157
        %v4159 = vpop.f32.mrf.mxu0
        %v4160 = vadd.f32 0.0, %v4159
        %4161 = vmatmul.bf16.gmra.mxu0 %v4140
        %v4162 = vpop.f32.mrf.mxu0
        %v4163 = vadd.f32 0.0, %v4162
        %v4164 = vpop.f32.mrf.mxu0
        %v4165 = vadd.f32 0.0, %v4164
        %4166 = vmatmul.bf16.gmra.mxu0 %v4143
        %v4167 = vpop.f32.mrf.mxu0
        %v4168 = vadd.f32 0.0, %v4167
        %v4169 = vpop.f32.mrf.mxu0
        %v4170 = vadd.f32 0.0, %v4169
        %4171 = vmatmul.bf16.gmra.mxu0 %v4146
        %v4172 = vpop.f32.mrf.mxu0
        %v4173 = vadd.f32 0.0, %v4172
        %v4174 = vpop.f32.mrf.mxu0
        %v4175 = vadd.f32 0.0, %v4174
        %4176 = vdwg.mxu0
        %v4177 = vpack.c.bf16 %v3619, %v3619
        %v4178 = vpack.c.bf16 %v3621, %v3621
        %v4179 = vpack.c.bf16 %v3624, %v3624
        %v4180 = vpack.c.bf16 %v3626, %v3626
        %v4181 = vpack.c.bf16 %v3629, %v3629
        %v4182 = vpack.c.bf16 %v3631, %v3631
        %v4183 = vpack.c.bf16 %v3634, %v3634
        %v4184 = vpack.c.bf16 %v3636, %v3636
        %v4185 = vpack.c.bf16 %v3696, %v3696
        %v4186 = vpack.c.bf16 %v3698, %v3698
        %v4187 = vpack.c.bf16 %v3701, %v3701
        %v4188 = vpack.c.bf16 %v3703, %v3703
        %v4189 = vpack.c.bf16 %v3706, %v3706
        %v4190 = vpack.c.bf16 %v3708, %v3708
        %v4191 = vpack.c.bf16 %v3711, %v3711
        %v4192 = vpack.c.bf16 %v3713, %v3713
        %v4193 = vpack.c.bf16 %v3773, %v3773
        %v4194 = vpack.c.bf16 %v3775, %v3775
        %v4195 = vpack.c.bf16 %v3778, %v3778
        %v4196 = vpack.c.bf16 %v3780, %v3780
        %v4197 = vpack.c.bf16 %v3783, %v3783
        %v4198 = vpack.c.bf16 %v3785, %v3785
        %v4199 = vpack.c.bf16 %v3788, %v3788
        %v4200 = vpack.c.bf16 %v3790, %v3790
        %v4201 = vpack.c.bf16 %v3850, %v3850
        %v4202 = vpack.c.bf16 %v3852, %v3852
        %v4203 = vpack.c.bf16 %v3855, %v3855
        %v4204 = vpack.c.bf16 %v3857, %v3857
        %v4205 = vpack.c.bf16 %v3860, %v3860
        %v4206 = vpack.c.bf16 %v3862, %v3862
        %v4207 = vpack.c.bf16 %v3865, %v3865
        %v4208 = vpack.c.bf16 %v3867, %v3867
        %v4209 = vpack.c.bf16 %v3927, %v3927
        %v4210 = vpack.c.bf16 %v3929, %v3929
        %v4211 = vpack.c.bf16 %v3932, %v3932
        %v4212 = vpack.c.bf16 %v3934, %v3934
        %v4213 = vpack.c.bf16 %v3937, %v3937
        %v4214 = vpack.c.bf16 %v3939, %v3939
        %v4215 = vpack.c.bf16 %v3942, %v3942
        %v4216 = vpack.c.bf16 %v3944, %v3944
        %v4217 = vpack.c.bf16 %v4004, %v4004
        %v4218 = vpack.c.bf16 %v4006, %v4006
        %v4219 = vpack.c.bf16 %v4009, %v4009
        %v4220 = vpack.c.bf16 %v4011, %v4011
        %v4221 = vpack.c.bf16 %v4014, %v4014
        %v4222 = vpack.c.bf16 %v4016, %v4016
        %v4223 = vpack.c.bf16 %v4019, %v4019
        %v4224 = vpack.c.bf16 %v4021, %v4021
        %v4225 = vpack.c.bf16 %v4081, %v4081
        %v4226 = vpack.c.bf16 %v4083, %v4083
        %v4227 = vpack.c.bf16 %v4086, %v4086
        %v4228 = vpack.c.bf16 %v4088, %v4088
        %v4229 = vpack.c.bf16 %v4091, %v4091
        %v4230 = vpack.c.bf16 %v4093, %v4093
        %v4231 = vpack.c.bf16 %v4096, %v4096
        %v4232 = vpack.c.bf16 %v4098, %v4098
        %v4233 = vpack.c.bf16 %v4158, %v4158
        %v4234 = vpack.c.bf16 %v4160, %v4160
        %v4235 = vpack.c.bf16 %v4163, %v4163
        %v4236 = vpack.c.bf16 %v4165, %v4165
        %v4237 = vpack.c.bf16 %v4168, %v4168
        %v4238 = vpack.c.bf16 %v4170, %v4170
        %v4239 = vpack.c.bf16 %v4173, %v4173
        %v4240 = vpack.c.bf16 %v4175, %v4175
        %v4241 = vld [vmem:[%s592] sm:$0xf]
        %v4242 = vld [vmem:[%s592 + $0x4] sm:$0xf]
        %v4251 = vunpack.c.l.b16 %v4177
        %v4252 = vunpack.c.l.b16 %v4178
        %v4253 = vunpack.c.l.b16 %v4179
        %v4254 = vunpack.c.l.b16 %v4180
        %v4255 = vunpack.c.l.b16 %v4181
        %v4256 = vunpack.c.l.b16 %v4182
        %v4257 = vunpack.c.l.b16 %v4183
        %v4258 = vunpack.c.l.b16 %v4184
        %v4259 = vpack.c.b16 %v4252, %v4251
        %v4260 = vpack.c.b16 %v4254, %v4253
        %v4261 = vpack.c.b16 %v4256, %v4255
        %v4262 = vpack.c.b16 %v4258, %v4257
        %v4265 = vunpack.c.l.b16 %v4241
        %v4266 = vunpack.c.l.b16 %v4242
        %v4267 = vpack.c.b16 %v4266, %v4265
        %v4270 = vsel %vm2199, %v4259, 0
        %v4273 = vsel %vm2199, %v4260, 0
        %v4276 = vsel %vm2199, %v4261, 0
        %v4279 = vsel %vm2199, %v4262, 0
        %4281 = vmatpush.bf16.msra.mxu0 0
        %4282 = vmatpush.bf16.msra.mxu0 0
        %4283 = vmatpush.bf16.msra.mxu0 0
        %4284 = vmatpush.bf16.msra.mxu0 0
        %4285 = vmatpush.bf16.msra.mxu0 0
        %4286 = vmatpush.bf16.msra.mxu0 0
        %4287 = vmatpush.bf16.msra.mxu0 0
        %4288 = vmatpush.bf16.msra.mxu0 %v4267
        %4289 = vmatmul.bf16.gmra.mxu0 %v4270
        %v4290 = vpop.f32.mrf.mxu0
        %v4291 = vadd.f32 0.0, %v4290
        %v4292 = vpop.f32.mrf.mxu0
        %v4293 = vadd.f32 0.0, %v4292
        %4294 = vmatmul.bf16.gmra.mxu0 %v4273
        %v4295 = vpop.f32.mrf.mxu0
        %v4296 = vadd.f32 0.0, %v4295
        %v4297 = vpop.f32.mrf.mxu0
        %v4298 = vadd.f32 0.0, %v4297
        %4299 = vmatmul.bf16.gmra.mxu0 %v4276
        %v4300 = vpop.f32.mrf.mxu0
        %v4301 = vadd.f32 0.0, %v4300
        %v4302 = vpop.f32.mrf.mxu0
        %v4303 = vadd.f32 0.0, %v4302
        %4304 = vmatmul.bf16.gmra.mxu0 %v4279
        %v4305 = vpop.f32.mrf.mxu0
        %v4306 = vadd.f32 0.0, %v4305
        %v4307 = vpop.f32.mrf.mxu0
        %v4308 = vadd.f32 0.0, %v4307
        %4309 = vdwg.mxu0
        %v4311 = vperm.slane %v2174, 0
        %v4313 = vadd.f32 %v4311, %v4291
        %v4314 = vadd.f32 %v4311, %v4293
        %v4315 = vadd.f32 %v4311, %v4296
        %v4316 = vadd.f32 %v4311, %v4298
        %v4317 = vadd.f32 %v4311, %v4301
        %v4318 = vadd.f32 %v4311, %v4303
        %v4319 = vadd.f32 %v4311, %v4306
        %v4320 = vadd.f32 %v4311, %v4308
        %v4321 = vld [vmem:[%s592 + $0x8] sm:$0xf]
        %v4322 = vld [vmem:[%s592 + $0xc] sm:$0xf]
        %v4331 = vunpack.c.l.b16 %v4185
        %v4332 = vunpack.c.l.b16 %v4186
        %v4333 = vunpack.c.l.b16 %v4187
        %v4334 = vunpack.c.l.b16 %v4188
        %v4335 = vunpack.c.l.b16 %v4189
        %v4336 = vunpack.c.l.b16 %v4190
        %v4337 = vunpack.c.l.b16 %v4191
        %v4338 = vunpack.c.l.b16 %v4192
        %v4339 = vpack.c.b16 %v4332, %v4331
        %v4340 = vpack.c.b16 %v4334, %v4333
        %v4341 = vpack.c.b16 %v4336, %v4335
        %v4342 = vpack.c.b16 %v4338, %v4337
        %v4345 = vunpack.c.l.b16 %v4321
        %v4346 = vunpack.c.l.b16 %v4322
        %v4347 = vpack.c.b16 %v4346, %v4345
        %v4350 = vsel %vm2199, %v4339, 0
        %v4353 = vsel %vm2199, %v4340, 0
        %v4356 = vsel %vm2199, %v4341, 0
        %v4359 = vsel %vm2199, %v4342, 0
        %4361 = vmatpush.bf16.msra.mxu0 0
        %4362 = vmatpush.bf16.msra.mxu0 0
        %4363 = vmatpush.bf16.msra.mxu0 0
        %4364 = vmatpush.bf16.msra.mxu0 0
        %4365 = vmatpush.bf16.msra.mxu0 0
        %4366 = vmatpush.bf16.msra.mxu0 0
        %4367 = vmatpush.bf16.msra.mxu0 0
        %4368 = vmatpush.bf16.msra.mxu0 %v4347
        %4369 = vmatmul.bf16.gmra.mxu0 %v4350
        %v4370 = vpop.f32.mrf.mxu0
        %v4371 = vadd.f32 0.0, %v4370
        %v4372 = vpop.f32.mrf.mxu0
        %v4373 = vadd.f32 0.0, %v4372
        %4374 = vmatmul.bf16.gmra.mxu0 %v4353
        %v4375 = vpop.f32.mrf.mxu0
        %v4376 = vadd.f32 0.0, %v4375
        %v4377 = vpop.f32.mrf.mxu0
        %v4378 = vadd.f32 0.0, %v4377
        %4379 = vmatmul.bf16.gmra.mxu0 %v4356
        %v4380 = vpop.f32.mrf.mxu0
        %v4381 = vadd.f32 0.0, %v4380
        %v4382 = vpop.f32.mrf.mxu0
        %v4383 = vadd.f32 0.0, %v4382
        %4384 = vmatmul.bf16.gmra.mxu0 %v4359
        %v4385 = vpop.f32.mrf.mxu0
        %v4386 = vadd.f32 0.0, %v4385
        %v4387 = vpop.f32.mrf.mxu0
        %v4388 = vadd.f32 0.0, %v4387
        %4389 = vdwg.mxu0
        %v4390 = vadd.f32 %v4313, %v4371
        %v4391 = vadd.f32 %v4314, %v4373
        %v4392 = vadd.f32 %v4315, %v4376
        %v4393 = vadd.f32 %v4316, %v4378
        %v4394 = vadd.f32 %v4317, %v4381
        %v4395 = vadd.f32 %v4318, %v4383
        %v4396 = vadd.f32 %v4319, %v4386
        %v4397 = vadd.f32 %v4320, %v4388
        %v4398 = vld [vmem:[%s592 + $0x10] sm:$0xf]
        %v4399 = vld [vmem:[%s592 + $0x14] sm:$0xf]
        %v4408 = vunpack.c.l.b16 %v4193
        %v4409 = vunpack.c.l.b16 %v4194
        %v4410 = vunpack.c.l.b16 %v4195
        %v4411 = vunpack.c.l.b16 %v4196
        %v4412 = vunpack.c.l.b16 %v4197
        %v4413 = vunpack.c.l.b16 %v4198
        %v4414 = vunpack.c.l.b16 %v4199
        %v4415 = vunpack.c.l.b16 %v4200
        %v4416 = vpack.c.b16 %v4409, %v4408
        %v4417 = vpack.c.b16 %v4411, %v4410
        %v4418 = vpack.c.b16 %v4413, %v4412
        %v4419 = vpack.c.b16 %v4415, %v4414
        %v4422 = vunpack.c.l.b16 %v4398
        %v4423 = vunpack.c.l.b16 %v4399
        %v4424 = vpack.c.b16 %v4423, %v4422
        %v4427 = vsel %vm2199, %v4416, 0
        %v4430 = vsel %vm2199, %v4417, 0
        %v4433 = vsel %vm2199, %v4418, 0
        %v4436 = vsel %vm2199, %v4419, 0
        %4438 = vmatpush.bf16.msra.mxu0 0
        %4439 = vmatpush.bf16.msra.mxu0 0
        %4440 = vmatpush.bf16.msra.mxu0 0
        %4441 = vmatpush.bf16.msra.mxu0 0
        %4442 = vmatpush.bf16.msra.mxu0 0
        %4443 = vmatpush.bf16.msra.mxu0 0
        %4444 = vmatpush.bf16.msra.mxu0 0
        %4445 = vmatpush.bf16.msra.mxu0 %v4424
        %4446 = vmatmul.bf16.gmra.mxu0 %v4427
        %v4447 = vpop.f32.mrf.mxu0
        %v4448 = vadd.f32 0.0, %v4447
        %v4449 = vpop.f32.mrf.mxu0
        %v4450 = vadd.f32 0.0, %v4449
        %4451 = vmatmul.bf16.gmra.mxu0 %v4430
        %v4452 = vpop.f32.mrf.mxu0
        %v4453 = vadd.f32 0.0, %v4452
        %v4454 = vpop.f32.mrf.mxu0
        %v4455 = vadd.f32 0.0, %v4454
        %4456 = vmatmul.bf16.gmra.mxu0 %v4433
        %v4457 = vpop.f32.mrf.mxu0
        %v4458 = vadd.f32 0.0, %v4457
        %v4459 = vpop.f32.mrf.mxu0
        %v4460 = vadd.f32 0.0, %v4459
        %4461 = vmatmul.bf16.gmra.mxu0 %v4436
        %v4462 = vpop.f32.mrf.mxu0
        %v4463 = vadd.f32 0.0, %v4462
        %v4464 = vpop.f32.mrf.mxu0
        %v4465 = vadd.f32 0.0, %v4464
        %4466 = vdwg.mxu0
        %v4467 = vadd.f32 %v4390, %v4448
        %v4468 = vadd.f32 %v4391, %v4450
        %v4469 = vadd.f32 %v4392, %v4453
        %v4470 = vadd.f32 %v4393, %v4455
        %v4471 = vadd.f32 %v4394, %v4458
        %v4472 = vadd.f32 %v4395, %v4460
        %v4473 = vadd.f32 %v4396, %v4463
        %v4474 = vadd.f32 %v4397, %v4465
        %v4475 = vld [vmem:[%s592 + $0x18] sm:$0xf]
        %v4476 = vld [vmem:[%s592 + $0x1c] sm:$0xf]
        %v4485 = vunpack.c.l.b16 %v4201
        %v4486 = vunpack.c.l.b16 %v4202
        %v4487 = vunpack.c.l.b16 %v4203
        %v4488 = vunpack.c.l.b16 %v4204
        %v4489 = vunpack.c.l.b16 %v4205
        %v4490 = vunpack.c.l.b16 %v4206
        %v4491 = vunpack.c.l.b16 %v4207
        %v4492 = vunpack.c.l.b16 %v4208
        %v4493 = vpack.c.b16 %v4486, %v4485
        %v4494 = vpack.c.b16 %v4488, %v4487
        %v4495 = vpack.c.b16 %v4490, %v4489
        %v4496 = vpack.c.b16 %v4492, %v4491
        %v4499 = vunpack.c.l.b16 %v4475
        %v4500 = vunpack.c.l.b16 %v4476
        %v4501 = vpack.c.b16 %v4500, %v4499
        %v4504 = vsel %vm2199, %v4493, 0
        %v4507 = vsel %vm2199, %v4494, 0
        %v4510 = vsel %vm2199, %v4495, 0
        %v4513 = vsel %vm2199, %v4496, 0
        %4515 = vmatpush.bf16.msra.mxu0 0
        %4516 = vmatpush.bf16.msra.mxu0 0
        %4517 = vmatpush.bf16.msra.mxu0 0
        %4518 = vmatpush.bf16.msra.mxu0 0
        %4519 = vmatpush.bf16.msra.mxu0 0
        %4520 = vmatpush.bf16.msra.mxu0 0
        %4521 = vmatpush.bf16.msra.mxu0 0
        %4522 = vmatpush.bf16.msra.mxu0 %v4501
        %4523 = vmatmul.bf16.gmra.mxu0 %v4504
        %v4524 = vpop.f32.mrf.mxu0
        %v4525 = vadd.f32 0.0, %v4524
        %v4526 = vpop.f32.mrf.mxu0
        %v4527 = vadd.f32 0.0, %v4526
        %4528 = vmatmul.bf16.gmra.mxu0 %v4507
        %v4529 = vpop.f32.mrf.mxu0
        %v4530 = vadd.f32 0.0, %v4529
        %v4531 = vpop.f32.mrf.mxu0
        %v4532 = vadd.f32 0.0, %v4531
        %4533 = vmatmul.bf16.gmra.mxu0 %v4510
        %v4534 = vpop.f32.mrf.mxu0
        %v4535 = vadd.f32 0.0, %v4534
        %v4536 = vpop.f32.mrf.mxu0
        %v4537 = vadd.f32 0.0, %v4536
        %4538 = vmatmul.bf16.gmra.mxu0 %v4513
        %v4539 = vpop.f32.mrf.mxu0
        %v4540 = vadd.f32 0.0, %v4539
        %v4541 = vpop.f32.mrf.mxu0
        %v4542 = vadd.f32 0.0, %v4541
        %4543 = vdwg.mxu0
        %v4544 = vadd.f32 %v4467, %v4525
        %v4545 = vadd.f32 %v4468, %v4527
        %v4546 = vadd.f32 %v4469, %v4530
        %v4547 = vadd.f32 %v4470, %v4532
        %v4548 = vadd.f32 %v4471, %v4535
        %v4549 = vadd.f32 %v4472, %v4537
        %v4550 = vadd.f32 %v4473, %v4540
        %v4551 = vadd.f32 %v4474, %v4542
        %v4552 = vld [vmem:[%s592 + $0x20] sm:$0xf]
        %v4553 = vld [vmem:[%s592 + $0x24] sm:$0xf]
        %v4562 = vunpack.c.l.b16 %v4209
        %v4563 = vunpack.c.l.b16 %v4210
        %v4564 = vunpack.c.l.b16 %v4211
        %v4565 = vunpack.c.l.b16 %v4212
        %v4566 = vunpack.c.l.b16 %v4213
        %v4567 = vunpack.c.l.b16 %v4214
        %v4568 = vunpack.c.l.b16 %v4215
        %v4569 = vunpack.c.l.b16 %v4216
        %v4570 = vpack.c.b16 %v4563, %v4562
        %v4571 = vpack.c.b16 %v4565, %v4564
        %v4572 = vpack.c.b16 %v4567, %v4566
        %v4573 = vpack.c.b16 %v4569, %v4568
        %v4576 = vunpack.c.l.b16 %v4552
        %v4577 = vunpack.c.l.b16 %v4553
        %v4578 = vpack.c.b16 %v4577, %v4576
        %v4581 = vsel %vm2199, %v4570, 0
        %v4584 = vsel %vm2199, %v4571, 0
        %v4587 = vsel %vm2199, %v4572, 0
        %v4590 = vsel %vm2199, %v4573, 0
        %4592 = vmatpush.bf16.msra.mxu0 0
        %4593 = vmatpush.bf16.msra.mxu0 0
        %4594 = vmatpush.bf16.msra.mxu0 0
        %4595 = vmatpush.bf16.msra.mxu0 0
        %4596 = vmatpush.bf16.msra.mxu0 0
        %4597 = vmatpush.bf16.msra.mxu0 0
        %4598 = vmatpush.bf16.msra.mxu0 0
        %4599 = vmatpush.bf16.msra.mxu0 %v4578
        %4600 = vmatmul.bf16.gmra.mxu0 %v4581
        %v4601 = vpop.f32.mrf.mxu0
        %v4602 = vadd.f32 0.0, %v4601
        %v4603 = vpop.f32.mrf.mxu0
        %v4604 = vadd.f32 0.0, %v4603
        %4605 = vmatmul.bf16.gmra.mxu0 %v4584
        %v4606 = vpop.f32.mrf.mxu0
        %v4607 = vadd.f32 0.0, %v4606
        %v4608 = vpop.f32.mrf.mxu0
        %v4609 = vadd.f32 0.0, %v4608
        %4610 = vmatmul.bf16.gmra.mxu0 %v4587
        %v4611 = vpop.f32.mrf.mxu0
        %v4612 = vadd.f32 0.0, %v4611
        %v4613 = vpop.f32.mrf.mxu0
        %v4614 = vadd.f32 0.0, %v4613
        %4615 = vmatmul.bf16.gmra.mxu0 %v4590
        %v4616 = vpop.f32.mrf.mxu0
        %v4617 = vadd.f32 0.0, %v4616
        %v4618 = vpop.f32.mrf.mxu0
        %v4619 = vadd.f32 0.0, %v4618
        %4620 = vdwg.mxu0
        %v4621 = vadd.f32 %v4544, %v4602
        %v4622 = vadd.f32 %v4545, %v4604
        %v4623 = vadd.f32 %v4546, %v4607
        %v4624 = vadd.f32 %v4547, %v4609
        %v4625 = vadd.f32 %v4548, %v4612
        %v4626 = vadd.f32 %v4549, %v4614
        %v4627 = vadd.f32 %v4550, %v4617
        %v4628 = vadd.f32 %v4551, %v4619
        %v4629 = vld [vmem:[%s592 + $0x28] sm:$0xf]
        %v4630 = vld [vmem:[%s592 + $0x2c] sm:$0xf]
        %v4639 = vunpack.c.l.b16 %v4217
        %v4640 = vunpack.c.l.b16 %v4218
        %v4641 = vunpack.c.l.b16 %v4219
        %v4642 = vunpack.c.l.b16 %v4220
        %v4643 = vunpack.c.l.b16 %v4221
        %v4644 = vunpack.c.l.b16 %v4222
        %v4645 = vunpack.c.l.b16 %v4223
        %v4646 = vunpack.c.l.b16 %v4224
        %v4647 = vpack.c.b16 %v4640, %v4639
        %v4648 = vpack.c.b16 %v4642, %v4641
        %v4649 = vpack.c.b16 %v4644, %v4643
        %v4650 = vpack.c.b16 %v4646, %v4645
        %v4653 = vunpack.c.l.b16 %v4629
        %v4654 = vunpack.c.l.b16 %v4630
        %v4655 = vpack.c.b16 %v4654, %v4653
        %v4658 = vsel %vm2199, %v4647, 0
        %v4661 = vsel %vm2199, %v4648, 0
        %v4664 = vsel %vm2199, %v4649, 0
        %v4667 = vsel %vm2199, %v4650, 0
        %4669 = vmatpush.bf16.msra.mxu0 0
        %4670 = vmatpush.bf16.msra.mxu0 0
        %4671 = vmatpush.bf16.msra.mxu0 0
        %4672 = vmatpush.bf16.msra.mxu0 0
        %4673 = vmatpush.bf16.msra.mxu0 0
        %4674 = vmatpush.bf16.msra.mxu0 0
        %4675 = vmatpush.bf16.msra.mxu0 0
        %4676 = vmatpush.bf16.msra.mxu0 %v4655
        %4677 = vmatmul.bf16.gmra.mxu0 %v4658
        %v4678 = vpop.f32.mrf.mxu0
        %v4679 = vadd.f32 0.0, %v4678
        %v4680 = vpop.f32.mrf.mxu0
        %v4681 = vadd.f32 0.0, %v4680
        %4682 = vmatmul.bf16.gmra.mxu0 %v4661
        %v4683 = vpop.f32.mrf.mxu0
        %v4684 = vadd.f32 0.0, %v4683
        %v4685 = vpop.f32.mrf.mxu0
        %v4686 = vadd.f32 0.0, %v4685
        %4687 = vmatmul.bf16.gmra.mxu0 %v4664
        %v4688 = vpop.f32.mrf.mxu0
        %v4689 = vadd.f32 0.0, %v4688
        %v4690 = vpop.f32.mrf.mxu0
        %v4691 = vadd.f32 0.0, %v4690
        %4692 = vmatmul.bf16.gmra.mxu0 %v4667
        %v4693 = vpop.f32.mrf.mxu0
        %v4694 = vadd.f32 0.0, %v4693
        %v4695 = vpop.f32.mrf.mxu0
        %v4696 = vadd.f32 0.0, %v4695
        %4697 = vdwg.mxu0
        %v4698 = vadd.f32 %v4621, %v4679
        %v4699 = vadd.f32 %v4622, %v4681
        %v4700 = vadd.f32 %v4623, %v4684
        %v4701 = vadd.f32 %v4624, %v4686
        %v4702 = vadd.f32 %v4625, %v4689
        %v4703 = vadd.f32 %v4626, %v4691
        %v4704 = vadd.f32 %v4627, %v4694
        %v4705 = vadd.f32 %v4628, %v4696
        %v4706 = vld [vmem:[%s592 + $0x30] sm:$0xf]
        %v4707 = vld [vmem:[%s592 + $0x34] sm:$0xf]
        %v4716 = vunpack.c.l.b16 %v4225
        %v4717 = vunpack.c.l.b16 %v4226
        %v4718 = vunpack.c.l.b16 %v4227
        %v4719 = vunpack.c.l.b16 %v4228
        %v4720 = vunpack.c.l.b16 %v4229
        %v4721 = vunpack.c.l.b16 %v4230
        %v4722 = vunpack.c.l.b16 %v4231
        %v4723 = vunpack.c.l.b16 %v4232
        %v4724 = vpack.c.b16 %v4717, %v4716
        %v4725 = vpack.c.b16 %v4719, %v4718
        %v4726 = vpack.c.b16 %v4721, %v4720
        %v4727 = vpack.c.b16 %v4723, %v4722
        %v4730 = vunpack.c.l.b16 %v4706
        %v4731 = vunpack.c.l.b16 %v4707
        %v4732 = vpack.c.b16 %v4731, %v4730
        %v4735 = vsel %vm2199, %v4724, 0
        %v4738 = vsel %vm2199, %v4725, 0
        %v4741 = vsel %vm2199, %v4726, 0
        %v4744 = vsel %vm2199, %v4727, 0
        %4746 = vmatpush.bf16.msra.mxu0 0
        %4747 = vmatpush.bf16.msra.mxu0 0
        %4748 = vmatpush.bf16.msra.mxu0 0
        %4749 = vmatpush.bf16.msra.mxu0 0
        %4750 = vmatpush.bf16.msra.mxu0 0
        %4751 = vmatpush.bf16.msra.mxu0 0
        %4752 = vmatpush.bf16.msra.mxu0 0
        %4753 = vmatpush.bf16.msra.mxu0 %v4732
        %4754 = vmatmul.bf16.gmra.mxu0 %v4735
        %v4755 = vpop.f32.mrf.mxu0
        %v4756 = vadd.f32 0.0, %v4755
        %v4757 = vpop.f32.mrf.mxu0
        %v4758 = vadd.f32 0.0, %v4757
        %4759 = vmatmul.bf16.gmra.mxu0 %v4738
        %v4760 = vpop.f32.mrf.mxu0
        %v4761 = vadd.f32 0.0, %v4760
        %v4762 = vpop.f32.mrf.mxu0
        %v4763 = vadd.f32 0.0, %v4762
        %4764 = vmatmul.bf16.gmra.mxu0 %v4741
        %v4765 = vpop.f32.mrf.mxu0
        %v4766 = vadd.f32 0.0, %v4765
        %v4767 = vpop.f32.mrf.mxu0
        %v4768 = vadd.f32 0.0, %v4767
        %4769 = vmatmul.bf16.gmra.mxu0 %v4744
        %v4770 = vpop.f32.mrf.mxu0
        %v4771 = vadd.f32 0.0, %v4770
        %v4772 = vpop.f32.mrf.mxu0
        %v4773 = vadd.f32 0.0, %v4772
        %4774 = vdwg.mxu0
        %v4775 = vadd.f32 %v4698, %v4756
        %v4776 = vadd.f32 %v4699, %v4758
        %v4777 = vadd.f32 %v4700, %v4761
        %v4778 = vadd.f32 %v4701, %v4763
        %v4779 = vadd.f32 %v4702, %v4766
        %v4780 = vadd.f32 %v4703, %v4768
        %v4781 = vadd.f32 %v4704, %v4771
        %v4782 = vadd.f32 %v4705, %v4773
        %v4783 = vld [vmem:[%s592 + $0x38] sm:$0xf]
        %v4784 = vld [vmem:[%s592 + $0x3c] sm:$0xf]
        %v4793 = vunpack.c.l.b16 %v4233
        %v4794 = vunpack.c.l.b16 %v4234
        %v4795 = vunpack.c.l.b16 %v4235
        %v4796 = vunpack.c.l.b16 %v4236
        %v4797 = vunpack.c.l.b16 %v4237
        %v4798 = vunpack.c.l.b16 %v4238
        %v4799 = vunpack.c.l.b16 %v4239
        %v4800 = vunpack.c.l.b16 %v4240
        %v4801 = vpack.c.b16 %v4794, %v4793
        %v4802 = vpack.c.b16 %v4796, %v4795
        %v4803 = vpack.c.b16 %v4798, %v4797
        %v4804 = vpack.c.b16 %v4800, %v4799
        %v4807 = vunpack.c.l.b16 %v4783
        %v4808 = vunpack.c.l.b16 %v4784
        %v4809 = vpack.c.b16 %v4808, %v4807
        %v4812 = vsel %vm2199, %v4801, 0
        %v4815 = vsel %vm2199, %v4802, 0
        %v4818 = vsel %vm2199, %v4803, 0
        %v4821 = vsel %vm2199, %v4804, 0
        %4823 = vmatpush.bf16.msra.mxu0 0
        %4824 = vmatpush.bf16.msra.mxu0 0
        %4825 = vmatpush.bf16.msra.mxu0 0
        %4826 = vmatpush.bf16.msra.mxu0 0
        %4827 = vmatpush.bf16.msra.mxu0 0
        %4828 = vmatpush.bf16.msra.mxu0 0
        %4829 = vmatpush.bf16.msra.mxu0 0
        %4830 = vmatpush.bf16.msra.mxu0 %v4809
        %4831 = vmatmul.bf16.gmra.mxu0 %v4812
        %v4832 = vpop.f32.mrf.mxu0
        %v4833 = vadd.f32 0.0, %v4832
        %v4834 = vpop.f32.mrf.mxu0
        %v4835 = vadd.f32 0.0, %v4834
        %4836 = vmatmul.bf16.gmra.mxu0 %v4815
        %v4837 = vpop.f32.mrf.mxu0
        %v4838 = vadd.f32 0.0, %v4837
        %v4839 = vpop.f32.mrf.mxu0
        %v4840 = vadd.f32 0.0, %v4839
        %4841 = vmatmul.bf16.gmra.mxu0 %v4818
        %v4842 = vpop.f32.mrf.mxu0
        %v4843 = vadd.f32 0.0, %v4842
        %v4844 = vpop.f32.mrf.mxu0
        %v4845 = vadd.f32 0.0, %v4844
        %4846 = vmatmul.bf16.gmra.mxu0 %v4821
        %v4847 = vpop.f32.mrf.mxu0
        %v4848 = vadd.f32 0.0, %v4847
        %v4849 = vpop.f32.mrf.mxu0
        %v4850 = vadd.f32 0.0, %v4849
        %4851 = vdwg.mxu0
        %v4852 = vadd.f32 %v4775, %v4833
        %v4853 = vadd.f32 %v4776, %v4835
        %v4854 = vadd.f32 %v4777, %v4838
        %v4855 = vadd.f32 %v4778, %v4840
        %v4856 = vadd.f32 %v4779, %v4843
        %v4857 = vadd.f32 %v4780, %v4845
        %v4858 = vadd.f32 %v4781, %v4848
        %v4859 = vadd.f32 %v4782, %v4850
        %v4860 = vunpack.c.l.b16 %v1414
        %v4861 = vunpack.c.l.b16 %v1415
        %v4862 = vunpack.c.l.b16 %v1416
        %v4863 = vunpack.c.l.b16 %v1417
        %v4864 = vunpack.c.l.b16 %v1418
        %v4865 = vunpack.c.l.b16 %v1419
        %v4866 = vunpack.c.l.b16 %v1420
        %v4867 = vunpack.c.l.b16 %v1421
        %v4868 = vpack.c.b16 %v4861, %v4860
        %v4869 = vpack.c.b16 %v4863, %v4862
        %v4870 = vpack.c.b16 %v4865, %v4864
        %v4871 = vpack.c.b16 %v4867, %v4866
        %v4872 = vunpack.c.l.b16 %v1430
        %v4873 = vunpack.c.l.b16 %v1431
        %v4874 = vunpack.c.l.b16 %v1432
        %v4875 = vunpack.c.l.b16 %v1433
        %v4876 = vunpack.c.l.b16 %v1434
        %v4877 = vunpack.c.l.b16 %v1435
        %v4878 = vunpack.c.l.b16 %v1436
        %v4879 = vunpack.c.l.b16 %v1437
        %v4880 = vpack.c.b16 %v4873, %v4872
        %v4881 = vpack.c.b16 %v4875, %v4874
        %v4882 = vpack.c.b16 %v4877, %v4876
        %v4883 = vpack.c.b16 %v4879, %v4878
        %v4885 = vsel %vm2199, %v4868, 0
        %v4888 = vsel %vm2199, %v4869, 0
        %v4891 = vsel %vm2199, %v4870, 0
        %v4894 = vsel %vm2199, %v4871, 0
        %v4897 = vsel %vm2199, %v4880, 0
        %v4900 = vsel %vm2199, %v4881, 0
        %v4903 = vsel %vm2199, %v4882, 0
        %v4906 = vsel %vm2199, %v4883, 0
        %4908 = vmatpush.bf16.xpose.msra.mxu0 0
        %4909 = vmatpush.bf16.xpose.msra.mxu0 0
        %4910 = vmatpush.bf16.xpose.msra.mxu0 0
        %4911 = vmatpush.bf16.xpose.msra.mxu0 0
        %4912 = vmatpush.bf16.xpose.msra.mxu0 %v4906
        %4913 = vmatpush.bf16.xpose.msra.mxu0 %v4903
        %4914 = vmatpush.bf16.xpose.msra.mxu0 %v4900
        %4915 = vmatpush.bf16.xpose.msra.mxu0 %v4897
        %4916 = vmatmul.bf16.gmra.mxu0 %v4885
        %v4917 = vpop.f32.mrf.mxu0
        %v4918 = vadd.f32 0.0, %v4917
        %v4919 = vpop.f32.mrf.mxu0
        %v4920 = vadd.f32 0.0, %v4919
        %4921 = vmatmul.bf16.gmra.mxu0 %v4888
        %v4922 = vpop.f32.mrf.mxu0
        %v4923 = vadd.f32 0.0, %v4922
        %v4924 = vpop.f32.mrf.mxu0
        %v4925 = vadd.f32 0.0, %v4924
        %4926 = vmatmul.bf16.gmra.mxu0 %v4891
        %v4927 = vpop.f32.mrf.mxu0
        %v4928 = vadd.f32 0.0, %v4927
        %v4929 = vpop.f32.mrf.mxu0
        %v4930 = vadd.f32 0.0, %v4929
        %4931 = vmatmul.bf16.gmra.mxu0 %v4894
        %v4932 = vpop.f32.mrf.mxu0
        %v4933 = vadd.f32 0.0, %v4932
        %v4934 = vpop.f32.mrf.mxu0
        %v4935 = vadd.f32 0.0, %v4934
        %4936 = vdwg.mxu0
        %v4937 = vunpack.c.l.b16 %v1487
        %v4938 = vunpack.c.l.b16 %v1489
        %v4939 = vunpack.c.l.b16 %v1491
        %v4940 = vunpack.c.l.b16 %v1493
        %v4941 = vunpack.c.l.b16 %v1495
        %v4942 = vunpack.c.l.b16 %v1497
        %v4943 = vunpack.c.l.b16 %v1499
        %v4944 = vunpack.c.l.b16 %v1501
        %v4945 = vpack.c.b16 %v4938, %v4937
        %v4946 = vpack.c.b16 %v4940, %v4939
        %v4947 = vpack.c.b16 %v4942, %v4941
        %v4948 = vpack.c.b16 %v4944, %v4943
        %v4949 = vunpack.c.l.b16 %v1727
        %v4950 = vunpack.c.l.b16 %v1729
        %v4951 = vunpack.c.l.b16 %v1731
        %v4952 = vunpack.c.l.b16 %v1733
        %v4953 = vunpack.c.l.b16 %v1735
        %v4954 = vunpack.c.l.b16 %v1737
        %v4955 = vunpack.c.l.b16 %v1739
        %v4956 = vunpack.c.l.b16 %v1741
        %v4957 = vpack.c.b16 %v4950, %v4949
        %v4958 = vpack.c.b16 %v4952, %v4951
        %v4959 = vpack.c.b16 %v4954, %v4953
        %v4960 = vpack.c.b16 %v4956, %v4955
        %v4962 = vsel %vm2199, %v4945, 0
        %v4965 = vsel %vm2199, %v4946, 0
        %v4968 = vsel %vm2199, %v4947, 0
        %v4971 = vsel %vm2199, %v4948, 0
        %v4974 = vsel %vm2199, %v4957, 0
        %v4977 = vsel %vm2199, %v4958, 0
        %v4980 = vsel %vm2199, %v4959, 0
        %v4983 = vsel %vm2199, %v4960, 0
        %4985 = vmatpush.bf16.xpose.msra.mxu0 0
        %4986 = vmatpush.bf16.xpose.msra.mxu0 0
        %4987 = vmatpush.bf16.xpose.msra.mxu0 0
        %4988 = vmatpush.bf16.xpose.msra.mxu0 0
        %4989 = vmatpush.bf16.xpose.msra.mxu0 %v4983
        %4990 = vmatpush.bf16.xpose.msra.mxu0 %v4980
        %4991 = vmatpush.bf16.xpose.msra.mxu0 %v4977
        %4992 = vmatpush.bf16.xpose.msra.mxu0 %v4974
        %4993 = vmatmul.bf16.gmra.mxu0 %v4962
        %v4994 = vpop.f32.mrf.mxu0
        %v4995 = vadd.f32 0.0, %v4994
        %v4996 = vpop.f32.mrf.mxu0
        %v4997 = vadd.f32 0.0, %v4996
        %4998 = vmatmul.bf16.gmra.mxu0 %v4965
        %v4999 = vpop.f32.mrf.mxu0
        %v5000 = vadd.f32 0.0, %v4999
        %v5001 = vpop.f32.mrf.mxu0
        %v5002 = vadd.f32 0.0, %v5001
        %5003 = vmatmul.bf16.gmra.mxu0 %v4968
        %v5004 = vpop.f32.mrf.mxu0
        %v5005 = vadd.f32 0.0, %v5004
        %v5006 = vpop.f32.mrf.mxu0
        %v5007 = vadd.f32 0.0, %v5006
        %5008 = vmatmul.bf16.gmra.mxu0 %v4971
        %v5009 = vpop.f32.mrf.mxu0
        %v5010 = vadd.f32 0.0, %v5009
        %v5011 = vpop.f32.mrf.mxu0
        %v5012 = vadd.f32 0.0, %v5011
        %5013 = vdwg.mxu0
        %v5014 = vunpack.c.l.b16 %v1519
        %v5015 = vunpack.c.l.b16 %v1521
        %v5016 = vunpack.c.l.b16 %v1523
        %v5017 = vunpack.c.l.b16 %v1525
        %v5018 = vunpack.c.l.b16 %v1527
        %v5019 = vunpack.c.l.b16 %v1529
        %v5020 = vunpack.c.l.b16 %v1531
        %v5021 = vunpack.c.l.b16 %v1533
        %v5022 = vpack.c.b16 %v5015, %v5014
        %v5023 = vpack.c.b16 %v5017, %v5016
        %v5024 = vpack.c.b16 %v5019, %v5018
        %v5025 = vpack.c.b16 %v5021, %v5020
        %v5026 = vunpack.c.l.b16 %v1759
        %v5027 = vunpack.c.l.b16 %v1761
        %v5028 = vunpack.c.l.b16 %v1763
        %v5029 = vunpack.c.l.b16 %v1765
        %v5030 = vunpack.c.l.b16 %v1767
        %v5031 = vunpack.c.l.b16 %v1769
        %v5032 = vunpack.c.l.b16 %v1771
        %v5033 = vunpack.c.l.b16 %v1773
        %v5034 = vpack.c.b16 %v5027, %v5026
        %v5035 = vpack.c.b16 %v5029, %v5028
        %v5036 = vpack.c.b16 %v5031, %v5030
        %v5037 = vpack.c.b16 %v5033, %v5032
        %v5039 = vsel %vm2199, %v5022, 0
        %v5042 = vsel %vm2199, %v5023, 0
        %v5045 = vsel %vm2199, %v5024, 0
        %v5048 = vsel %vm2199, %v5025, 0
        %v5051 = vsel %vm2199, %v5034, 0
        %v5054 = vsel %vm2199, %v5035, 0
        %v5057 = vsel %vm2199, %v5036, 0
        %v5060 = vsel %vm2199, %v5037, 0
        %5062 = vmatpush.bf16.xpose.msra.mxu0 0
        %5063 = vmatpush.bf16.xpose.msra.mxu0 0
        %5064 = vmatpush.bf16.xpose.msra.mxu0 0
        %5065 = vmatpush.bf16.xpose.msra.mxu0 0
        %5066 = vmatpush.bf16.xpose.msra.mxu0 %v5060
        %5067 = vmatpush.bf16.xpose.msra.mxu0 %v5057
        %5068 = vmatpush.bf16.xpose.msra.mxu0 %v5054
        %5069 = vmatpush.bf16.xpose.msra.mxu0 %v5051
        %5070 = vmatmul.bf16.gmra.mxu0 %v5039
        %v5071 = vpop.f32.mrf.mxu0
        %v5072 = vadd.f32 0.0, %v5071
        %v5073 = vpop.f32.mrf.mxu0
        %v5074 = vadd.f32 0.0, %v5073
        %5075 = vmatmul.bf16.gmra.mxu0 %v5042
        %v5076 = vpop.f32.mrf.mxu0
        %v5077 = vadd.f32 0.0, %v5076
        %v5078 = vpop.f32.mrf.mxu0
        %v5079 = vadd.f32 0.0, %v5078
        %5080 = vmatmul.bf16.gmra.mxu0 %v5045
        %v5081 = vpop.f32.mrf.mxu0
        %v5082 = vadd.f32 0.0, %v5081
        %v5083 = vpop.f32.mrf.mxu0
        %v5084 = vadd.f32 0.0, %v5083
        %5085 = vmatmul.bf16.gmra.mxu0 %v5048
        %v5086 = vpop.f32.mrf.mxu0
        %v5087 = vadd.f32 0.0, %v5086
        %v5088 = vpop.f32.mrf.mxu0
        %v5089 = vadd.f32 0.0, %v5088
        %5090 = vdwg.mxu0
        %v5091 = vunpack.c.l.b16 %v1551
        %v5092 = vunpack.c.l.b16 %v1553
        %v5093 = vunpack.c.l.b16 %v1555
        %v5094 = vunpack.c.l.b16 %v1557
        %v5095 = vunpack.c.l.b16 %v1559
        %v5096 = vunpack.c.l.b16 %v1561
        %v5097 = vunpack.c.l.b16 %v1563
        %v5098 = vunpack.c.l.b16 %v1565
        %v5099 = vpack.c.b16 %v5092, %v5091
        %v5100 = vpack.c.b16 %v5094, %v5093
        %v5101 = vpack.c.b16 %v5096, %v5095
        %v5102 = vpack.c.b16 %v5098, %v5097
        %v5103 = vunpack.c.l.b16 %v1791
        %v5104 = vunpack.c.l.b16 %v1793
        %v5105 = vunpack.c.l.b16 %v1795
        %v5106 = vunpack.c.l.b16 %v1797
        %v5107 = vunpack.c.l.b16 %v1799
        %v5108 = vunpack.c.l.b16 %v1801
        %v5109 = vunpack.c.l.b16 %v1803
        %v5110 = vunpack.c.l.b16 %v1805
        %v5111 = vpack.c.b16 %v5104, %v5103
        %v5112 = vpack.c.b16 %v5106, %v5105
        %v5113 = vpack.c.b16 %v5108, %v5107
        %v5114 = vpack.c.b16 %v5110, %v5109
        %v5116 = vsel %vm2199, %v5099, 0
        %v5119 = vsel %vm2199, %v5100, 0
        %v5122 = vsel %vm2199, %v5101, 0
        %v5125 = vsel %vm2199, %v5102, 0
        %v5128 = vsel %vm2199, %v5111, 0
        %v5131 = vsel %vm2199, %v5112, 0
        %v5134 = vsel %vm2199, %v5113, 0
        %v5137 = vsel %vm2199, %v5114, 0
        %5139 = vmatpush.bf16.xpose.msra.mxu0 0
        %5140 = vmatpush.bf16.xpose.msra.mxu0 0
        %5141 = vmatpush.bf16.xpose.msra.mxu0 0
        %5142 = vmatpush.bf16.xpose.msra.mxu0 0
        %5143 = vmatpush.bf16.xpose.msra.mxu0 %v5137
        %5144 = vmatpush.bf16.xpose.msra.mxu0 %v5134
        %5145 = vmatpush.bf16.xpose.msra.mxu0 %v5131
        %5146 = vmatpush.bf16.xpose.msra.mxu0 %v5128
        %5147 = vmatmul.bf16.gmra.mxu0 %v5116
        %v5148 = vpop.f32.mrf.mxu0
        %v5149 = vadd.f32 0.0, %v5148
        %v5150 = vpop.f32.mrf.mxu0
        %v5151 = vadd.f32 0.0, %v5150
        %5152 = vmatmul.bf16.gmra.mxu0 %v5119
        %v5153 = vpop.f32.mrf.mxu0
        %v5154 = vadd.f32 0.0, %v5153
        %v5155 = vpop.f32.mrf.mxu0
        %v5156 = vadd.f32 0.0, %v5155
        %5157 = vmatmul.bf16.gmra.mxu0 %v5122
        %v5158 = vpop.f32.mrf.mxu0
        %v5159 = vadd.f32 0.0, %v5158
        %v5160 = vpop.f32.mrf.mxu0
        %v5161 = vadd.f32 0.0, %v5160
        %5162 = vmatmul.bf16.gmra.mxu0 %v5125
        %v5163 = vpop.f32.mrf.mxu0
        %v5164 = vadd.f32 0.0, %v5163
        %v5165 = vpop.f32.mrf.mxu0
        %v5166 = vadd.f32 0.0, %v5165
        %5167 = vdwg.mxu0
        %v5168 = vunpack.c.l.b16 %v1583
        %v5169 = vunpack.c.l.b16 %v1585
        %v5170 = vunpack.c.l.b16 %v1587
        %v5171 = vunpack.c.l.b16 %v1589
        %v5172 = vunpack.c.l.b16 %v1591
        %v5173 = vunpack.c.l.b16 %v1593
        %v5174 = vunpack.c.l.b16 %v1595
        %v5175 = vunpack.c.l.b16 %v1597
        %v5176 = vpack.c.b16 %v5169, %v5168
        %v5177 = vpack.c.b16 %v5171, %v5170
        %v5178 = vpack.c.b16 %v5173, %v5172
        %v5179 = vpack.c.b16 %v5175, %v5174
        %v5180 = vunpack.c.l.b16 %v1823
        %v5181 = vunpack.c.l.b16 %v1825
        %v5182 = vunpack.c.l.b16 %v1827
        %v5183 = vunpack.c.l.b16 %v1829
        %v5184 = vunpack.c.l.b16 %v1831
        %v5185 = vunpack.c.l.b16 %v1833
        %v5186 = vunpack.c.l.b16 %v1835
        %v5187 = vunpack.c.l.b16 %v1837
        %v5188 = vpack.c.b16 %v5181, %v5180
        %v5189 = vpack.c.b16 %v5183, %v5182
        %v5190 = vpack.c.b16 %v5185, %v5184
        %v5191 = vpack.c.b16 %v5187, %v5186
        %v5193 = vsel %vm2199, %v5176, 0
        %v5196 = vsel %vm2199, %v5177, 0
        %v5199 = vsel %vm2199, %v5178, 0
        %v5202 = vsel %vm2199, %v5179, 0
        %v5205 = vsel %vm2199, %v5188, 0
        %v5208 = vsel %vm2199, %v5189, 0
        %v5211 = vsel %vm2199, %v5190, 0
        %v5214 = vsel %vm2199, %v5191, 0
        %5216 = vmatpush.bf16.xpose.msra.mxu0 0
        %5217 = vmatpush.bf16.xpose.msra.mxu0 0
        %5218 = vmatpush.bf16.xpose.msra.mxu0 0
        %5219 = vmatpush.bf16.xpose.msra.mxu0 0
        %5220 = vmatpush.bf16.xpose.msra.mxu0 %v5214
        %5221 = vmatpush.bf16.xpose.msra.mxu0 %v5211
        %5222 = vmatpush.bf16.xpose.msra.mxu0 %v5208
        %5223 = vmatpush.bf16.xpose.msra.mxu0 %v5205
        %5224 = vmatmul.bf16.gmra.mxu0 %v5193
        %v5225 = vpop.f32.mrf.mxu0
        %v5226 = vadd.f32 0.0, %v5225
        %v5227 = vpop.f32.mrf.mxu0
        %v5228 = vadd.f32 0.0, %v5227
        %5229 = vmatmul.bf16.gmra.mxu0 %v5196
        %v5230 = vpop.f32.mrf.mxu0
        %v5231 = vadd.f32 0.0, %v5230
        %v5232 = vpop.f32.mrf.mxu0
        %v5233 = vadd.f32 0.0, %v5232
        %5234 = vmatmul.bf16.gmra.mxu0 %v5199
        %v5235 = vpop.f32.mrf.mxu0
        %v5236 = vadd.f32 0.0, %v5235
        %v5237 = vpop.f32.mrf.mxu0
        %v5238 = vadd.f32 0.0, %v5237
        %5239 = vmatmul.bf16.gmra.mxu0 %v5202
        %v5240 = vpop.f32.mrf.mxu0
        %v5241 = vadd.f32 0.0, %v5240
        %v5242 = vpop.f32.mrf.mxu0
        %v5243 = vadd.f32 0.0, %v5242
        %5244 = vdwg.mxu0
        %v5245 = vunpack.c.l.b16 %v1615
        %v5246 = vunpack.c.l.b16 %v1617
        %v5247 = vunpack.c.l.b16 %v1619
        %v5248 = vunpack.c.l.b16 %v1621
        %v5249 = vunpack.c.l.b16 %v1623
        %v5250 = vunpack.c.l.b16 %v1625
        %v5251 = vunpack.c.l.b16 %v1627
        %v5252 = vunpack.c.l.b16 %v1629
        %v5253 = vpack.c.b16 %v5246, %v5245
        %v5254 = vpack.c.b16 %v5248, %v5247
        %v5255 = vpack.c.b16 %v5250, %v5249
        %v5256 = vpack.c.b16 %v5252, %v5251
        %v5257 = vunpack.c.l.b16 %v1855
        %v5258 = vunpack.c.l.b16 %v1857
        %v5259 = vunpack.c.l.b16 %v1859
        %v5260 = vunpack.c.l.b16 %v1861
        %v5261 = vunpack.c.l.b16 %v1863
        %v5262 = vunpack.c.l.b16 %v1865
        %v5263 = vunpack.c.l.b16 %v1867
        %v5264 = vunpack.c.l.b16 %v1869
        %v5265 = vpack.c.b16 %v5258, %v5257
        %v5266 = vpack.c.b16 %v5260, %v5259
        %v5267 = vpack.c.b16 %v5262, %v5261
        %v5268 = vpack.c.b16 %v5264, %v5263
        %v5270 = vsel %vm2199, %v5253, 0
        %v5273 = vsel %vm2199, %v5254, 0
        %v5276 = vsel %vm2199, %v5255, 0
        %v5279 = vsel %vm2199, %v5256, 0
        %v5282 = vsel %vm2199, %v5265, 0
        %v5285 = vsel %vm2199, %v5266, 0
        %v5288 = vsel %vm2199, %v5267, 0
        %v5291 = vsel %vm2199, %v5268, 0
        %5293 = vmatpush.bf16.xpose.msra.mxu0 0
        %5294 = vmatpush.bf16.xpose.msra.mxu0 0
        %5295 = vmatpush.bf16.xpose.msra.mxu0 0
        %5296 = vmatpush.bf16.xpose.msra.mxu0 0
        %5297 = vmatpush.bf16.xpose.msra.mxu0 %v5291
        %5298 = vmatpush.bf16.xpose.msra.mxu0 %v5288
        %5299 = vmatpush.bf16.xpose.msra.mxu0 %v5285
        %5300 = vmatpush.bf16.xpose.msra.mxu0 %v5282
        %5301 = vmatmul.bf16.gmra.mxu0 %v5270
        %v5302 = vpop.f32.mrf.mxu0
        %v5303 = vadd.f32 0.0, %v5302
        %v5304 = vpop.f32.mrf.mxu0
        %v5305 = vadd.f32 0.0, %v5304
        %5306 = vmatmul.bf16.gmra.mxu0 %v5273
        %v5307 = vpop.f32.mrf.mxu0
        %v5308 = vadd.f32 0.0, %v5307
        %v5309 = vpop.f32.mrf.mxu0
        %v5310 = vadd.f32 0.0, %v5309
        %5311 = vmatmul.bf16.gmra.mxu0 %v5276
        %v5312 = vpop.f32.mrf.mxu0
        %v5313 = vadd.f32 0.0, %v5312
        %v5314 = vpop.f32.mrf.mxu0
        %v5315 = vadd.f32 0.0, %v5314
        %5316 = vmatmul.bf16.gmra.mxu0 %v5279
        %v5317 = vpop.f32.mrf.mxu0
        %v5318 = vadd.f32 0.0, %v5317
        %v5319 = vpop.f32.mrf.mxu0
        %v5320 = vadd.f32 0.0, %v5319
        %5321 = vdwg.mxu0
        %v5322 = vunpack.c.l.b16 %v1647
        %v5323 = vunpack.c.l.b16 %v1649
        %v5324 = vunpack.c.l.b16 %v1651
        %v5325 = vunpack.c.l.b16 %v1653
        %v5326 = vunpack.c.l.b16 %v1655
        %v5327 = vunpack.c.l.b16 %v1657
        %v5328 = vunpack.c.l.b16 %v1659
        %v5329 = vunpack.c.l.b16 %v1661
        %v5330 = vpack.c.b16 %v5323, %v5322
        %v5331 = vpack.c.b16 %v5325, %v5324
        %v5332 = vpack.c.b16 %v5327, %v5326
        %v5333 = vpack.c.b16 %v5329, %v5328
        %v5334 = vunpack.c.l.b16 %v1887
        %v5335 = vunpack.c.l.b16 %v1889
        %v5336 = vunpack.c.l.b16 %v1891
        %v5337 = vunpack.c.l.b16 %v1893
        %v5338 = vunpack.c.l.b16 %v1895
        %v5339 = vunpack.c.l.b16 %v1897
        %v5340 = vunpack.c.l.b16 %v1899
        %v5341 = vunpack.c.l.b16 %v1901
        %v5342 = vpack.c.b16 %v5335, %v5334
        %v5343 = vpack.c.b16 %v5337, %v5336
        %v5344 = vpack.c.b16 %v5339, %v5338
        %v5345 = vpack.c.b16 %v5341, %v5340
        %v5347 = vsel %vm2199, %v5330, 0
        %v5350 = vsel %vm2199, %v5331, 0
        %v5353 = vsel %vm2199, %v5332, 0
        %v5356 = vsel %vm2199, %v5333, 0
        %v5359 = vsel %vm2199, %v5342, 0
        %v5362 = vsel %vm2199, %v5343, 0
        %v5365 = vsel %vm2199, %v5344, 0
        %v5368 = vsel %vm2199, %v5345, 0
        %5370 = vmatpush.bf16.xpose.msra.mxu0 0
        %5371 = vmatpush.bf16.xpose.msra.mxu0 0
        %5372 = vmatpush.bf16.xpose.msra.mxu0 0
        %5373 = vmatpush.bf16.xpose.msra.mxu0 0
        %5374 = vmatpush.bf16.xpose.msra.mxu0 %v5368
        %5375 = vmatpush.bf16.xpose.msra.mxu0 %v5365
        %5376 = vmatpush.bf16.xpose.msra.mxu0 %v5362
        %5377 = vmatpush.bf16.xpose.msra.mxu0 %v5359
        %5378 = vmatmul.bf16.gmra.mxu0 %v5347
        %v5379 = vpop.f32.mrf.mxu0
        %v5380 = vadd.f32 0.0, %v5379
        %v5381 = vpop.f32.mrf.mxu0
        %v5382 = vadd.f32 0.0, %v5381
        %5383 = vmatmul.bf16.gmra.mxu0 %v5350
        %v5384 = vpop.f32.mrf.mxu0
        %v5385 = vadd.f32 0.0, %v5384
        %v5386 = vpop.f32.mrf.mxu0
        %v5387 = vadd.f32 0.0, %v5386
        %5388 = vmatmul.bf16.gmra.mxu0 %v5353
        %v5389 = vpop.f32.mrf.mxu0
        %v5390 = vadd.f32 0.0, %v5389
        %v5391 = vpop.f32.mrf.mxu0
        %v5392 = vadd.f32 0.0, %v5391
        %5393 = vmatmul.bf16.gmra.mxu0 %v5356
        %v5394 = vpop.f32.mrf.mxu0
        %v5395 = vadd.f32 0.0, %v5394
        %v5396 = vpop.f32.mrf.mxu0
        %v5397 = vadd.f32 0.0, %v5396
        %5398 = vdwg.mxu0
        %v5399 = vunpack.c.l.b16 %v1679
        %v5400 = vunpack.c.l.b16 %v1681
        %v5401 = vunpack.c.l.b16 %v1683
        %v5402 = vunpack.c.l.b16 %v1685
        %v5403 = vunpack.c.l.b16 %v1687
        %v5404 = vunpack.c.l.b16 %v1689
        %v5405 = vunpack.c.l.b16 %v1691
        %v5406 = vunpack.c.l.b16 %v1693
        %v5407 = vpack.c.b16 %v5400, %v5399
        %v5408 = vpack.c.b16 %v5402, %v5401
        %v5409 = vpack.c.b16 %v5404, %v5403
        %v5410 = vpack.c.b16 %v5406, %v5405
        %v5411 = vunpack.c.l.b16 %v1919
        %v5412 = vunpack.c.l.b16 %v1921
        %v5413 = vunpack.c.l.b16 %v1923
        %v5414 = vunpack.c.l.b16 %v1925
        %v5415 = vunpack.c.l.b16 %v1927
        %v5416 = vunpack.c.l.b16 %v1929
        %v5417 = vunpack.c.l.b16 %v1931
        %v5418 = vunpack.c.l.b16 %v1933
        %v5419 = vpack.c.b16 %v5412, %v5411
        %v5420 = vpack.c.b16 %v5414, %v5413
        %v5421 = vpack.c.b16 %v5416, %v5415
        %v5422 = vpack.c.b16 %v5418, %v5417
        %v5424 = vsel %vm2199, %v5407, 0
        %v5427 = vsel %vm2199, %v5408, 0
        %v5430 = vsel %vm2199, %v5409, 0
        %v5433 = vsel %vm2199, %v5410, 0
        %v5436 = vsel %vm2199, %v5419, 0
        %v5439 = vsel %vm2199, %v5420, 0
        %v5442 = vsel %vm2199, %v5421, 0
        %v5445 = vsel %vm2199, %v5422, 0
        %5447 = vmatpush.bf16.xpose.msra.mxu0 0
        %5448 = vmatpush.bf16.xpose.msra.mxu0 0
        %5449 = vmatpush.bf16.xpose.msra.mxu0 0
        %5450 = vmatpush.bf16.xpose.msra.mxu0 0
        %5451 = vmatpush.bf16.xpose.msra.mxu0 %v5445
        %5452 = vmatpush.bf16.xpose.msra.mxu0 %v5442
        %5453 = vmatpush.bf16.xpose.msra.mxu0 %v5439
        %5454 = vmatpush.bf16.xpose.msra.mxu0 %v5436
        %5455 = vmatmul.bf16.gmra.mxu0 %v5424
        %v5456 = vpop.f32.mrf.mxu0
        %v5457 = vadd.f32 0.0, %v5456
        %v5458 = vpop.f32.mrf.mxu0
        %v5459 = vadd.f32 0.0, %v5458
        %5460 = vmatmul.bf16.gmra.mxu0 %v5427
        %v5461 = vpop.f32.mrf.mxu0
        %v5462 = vadd.f32 0.0, %v5461
        %v5463 = vpop.f32.mrf.mxu0
        %v5464 = vadd.f32 0.0, %v5463
        %5465 = vmatmul.bf16.gmra.mxu0 %v5430
        %v5466 = vpop.f32.mrf.mxu0
        %v5467 = vadd.f32 0.0, %v5466
        %v5468 = vpop.f32.mrf.mxu0
        %v5469 = vadd.f32 0.0, %v5468
        %5470 = vmatmul.bf16.gmra.mxu0 %v5433
        %v5471 = vpop.f32.mrf.mxu0
        %v5472 = vadd.f32 0.0, %v5471
        %v5473 = vpop.f32.mrf.mxu0
        %v5474 = vadd.f32 0.0, %v5473
        %5475 = vdwg.mxu0
        %v5476 = vsel %vm2792, %v4918, -inf
        %5477 = vmax.xlane.f32.xlu0 %v5476
        %v5478 = vpop.xlane.xlu0 %5477
        %v5479 = vsel %vm2792, %v4920, -inf
        %5480 = vmax.xlane.f32.xlu0 %v5479
        %v5481 = vpop.xlane.xlu0 %5480
        %v5482 = vsel %vm2792, %v4923, -inf
        %5483 = vmax.xlane.f32.xlu0 %v5482
        %v5484 = vpop.xlane.xlu0 %5483
        %v5485 = vsel %vm2792, %v4925, -inf
        %5486 = vmax.xlane.f32.xlu0 %v5485
        %v5487 = vpop.xlane.xlu0 %5486
        %v5488 = vsel %vm2792, %v4928, -inf
        %5489 = vmax.xlane.f32.xlu0 %v5488
        %v5490 = vpop.xlane.xlu0 %5489
        %v5491 = vsel %vm2792, %v4930, -inf
        %5492 = vmax.xlane.f32.xlu0 %v5491
        %v5493 = vpop.xlane.xlu0 %5492
        %v5494 = vsel %vm2792, %v4933, -inf
        %5495 = vmax.xlane.f32.xlu0 %v5494
        %v5496 = vpop.xlane.xlu0 %5495
        %v5497 = vsel %vm2792, %v4935, -inf
        %5498 = vmax.xlane.f32.xlu0 %v5497
        %v5499 = vpop.xlane.xlu0 %5498
        %v5500 = vsel %vm2792, %v4995, -inf
        %5501 = vmax.xlane.f32.xlu0 %v5500
        %v5502 = vpop.xlane.xlu0 %5501
        %v5503 = vsel %vm2792, %v4997, -inf
        %5504 = vmax.xlane.f32.xlu0 %v5503
        %v5505 = vpop.xlane.xlu0 %5504
        %v5506 = vsel %vm2792, %v5000, -inf
        %5507 = vmax.xlane.f32.xlu0 %v5506
        %v5508 = vpop.xlane.xlu0 %5507
        %v5509 = vsel %vm2792, %v5002, -inf
        %5510 = vmax.xlane.f32.xlu0 %v5509
        %v5511 = vpop.xlane.xlu0 %5510
        %v5512 = vsel %vm2792, %v5005, -inf
        %5513 = vmax.xlane.f32.xlu0 %v5512
        %v5514 = vpop.xlane.xlu0 %5513
        %v5515 = vsel %vm2792, %v5007, -inf
        %5516 = vmax.xlane.f32.xlu0 %v5515
        %v5517 = vpop.xlane.xlu0 %5516
        %v5518 = vsel %vm2792, %v5010, -inf
        %5519 = vmax.xlane.f32.xlu0 %v5518
        %v5520 = vpop.xlane.xlu0 %5519
        %v5521 = vsel %vm2792, %v5012, -inf
        %5522 = vmax.xlane.f32.xlu0 %v5521
        %v5523 = vpop.xlane.xlu0 %5522
        %v5524 = vsel %vm2792, %v5072, -inf
        %5525 = vmax.xlane.f32.xlu0 %v5524
        %v5526 = vpop.xlane.xlu0 %5525
        %v5527 = vsel %vm2792, %v5074, -inf
        %5528 = vmax.xlane.f32.xlu0 %v5527
        %v5529 = vpop.xlane.xlu0 %5528
        %v5530 = vsel %vm2792, %v5077, -inf
        %5531 = vmax.xlane.f32.xlu0 %v5530
        %v5532 = vpop.xlane.xlu0 %5531
        %v5533 = vsel %vm2792, %v5079, -inf
        %5534 = vmax.xlane.f32.xlu0 %v5533
        %v5535 = vpop.xlane.xlu0 %5534
        %v5536 = vsel %vm2792, %v5082, -inf
        %5537 = vmax.xlane.f32.xlu0 %v5536
        %v5538 = vpop.xlane.xlu0 %5537
        %v5539 = vsel %vm2792, %v5084, -inf
        %5540 = vmax.xlane.f32.xlu0 %v5539
        %v5541 = vpop.xlane.xlu0 %5540
        %v5542 = vsel %vm2792, %v5087, -inf
        %5543 = vmax.xlane.f32.xlu0 %v5542
        %v5544 = vpop.xlane.xlu0 %5543
        %v5545 = vsel %vm2792, %v5089, -inf
        %5546 = vmax.xlane.f32.xlu0 %v5545
        %v5547 = vpop.xlane.xlu0 %5546
        %v5548 = vsel %vm2792, %v5149, -inf
        %5549 = vmax.xlane.f32.xlu0 %v5548
        %v5550 = vpop.xlane.xlu0 %5549
        %v5551 = vsel %vm2792, %v5151, -inf
        %5552 = vmax.xlane.f32.xlu0 %v5551
        %v5553 = vpop.xlane.xlu0 %5552
        %v5554 = vsel %vm2792, %v5154, -inf
        %5555 = vmax.xlane.f32.xlu0 %v5554
        %v5556 = vpop.xlane.xlu0 %5555
        %v5557 = vsel %vm2792, %v5156, -inf
        %5558 = vmax.xlane.f32.xlu0 %v5557
        %v5559 = vpop.xlane.xlu0 %5558
        %v5560 = vsel %vm2792, %v5159, -inf
        %5561 = vmax.xlane.f32.xlu0 %v5560
        %v5562 = vpop.xlane.xlu0 %5561
        %v5563 = vsel %vm2792, %v5161, -inf
        %5564 = vmax.xlane.f32.xlu0 %v5563
        %v5565 = vpop.xlane.xlu0 %5564
        %v5566 = vsel %vm2792, %v5164, -inf
        %5567 = vmax.xlane.f32.xlu0 %v5566
        %v5568 = vpop.xlane.xlu0 %5567
        %v5569 = vsel %vm2792, %v5166, -inf
        %5570 = vmax.xlane.f32.xlu0 %v5569
        %v5571 = vpop.xlane.xlu0 %5570
        %v5572 = vsel %vm2792, %v5226, -inf
        %5573 = vmax.xlane.f32.xlu0 %v5572
        %v5574 = vpop.xlane.xlu0 %5573
        %v5575 = vsel %vm2792, %v5228, -inf
        %5576 = vmax.xlane.f32.xlu0 %v5575
        %v5577 = vpop.xlane.xlu0 %5576
        %v5578 = vsel %vm2792, %v5231, -inf
        %5579 = vmax.xlane.f32.xlu0 %v5578
        %v5580 = vpop.xlane.xlu0 %5579
        %v5581 = vsel %vm2792, %v5233, -inf
        %5582 = vmax.xlane.f32.xlu0 %v5581
        %v5583 = vpop.xlane.xlu0 %5582
        %v5584 = vsel %vm2792, %v5236, -inf
        %5585 = vmax.xlane.f32.xlu0 %v5584
        %v5586 = vpop.xlane.xlu0 %5585
        %v5587 = vsel %vm2792, %v5238, -inf
        %5588 = vmax.xlane.f32.xlu0 %v5587
        %v5589 = vpop.xlane.xlu0 %5588
        %v5590 = vsel %vm2792, %v5241, -inf
        %5591 = vmax.xlane.f32.xlu0 %v5590
        %v5592 = vpop.xlane.xlu0 %5591
        %v5593 = vsel %vm2792, %v5243, -inf
        %5594 = vmax.xlane.f32.xlu0 %v5593
        %v5595 = vpop.xlane.xlu0 %5594
        %v5596 = vsel %vm2792, %v5303, -inf
        %5597 = vmax.xlane.f32.xlu0 %v5596
        %v5598 = vpop.xlane.xlu0 %5597
        %v5599 = vsel %vm2792, %v5305, -inf
        %5600 = vmax.xlane.f32.xlu0 %v5599
        %v5601 = vpop.xlane.xlu0 %5600
        %v5602 = vsel %vm2792, %v5308, -inf
        %5603 = vmax.xlane.f32.xlu0 %v5602
        %v5604 = vpop.xlane.xlu0 %5603
        %v5605 = vsel %vm2792, %v5310, -inf
        %5606 = vmax.xlane.f32.xlu0 %v5605
        %v5607 = vpop.xlane.xlu0 %5606
        %v5608 = vsel %vm2792, %v5313, -inf
        %5609 = vmax.xlane.f32.xlu0 %v5608
        %v5610 = vpop.xlane.xlu0 %5609
        %v5611 = vsel %vm2792, %v5315, -inf
        %5612 = vmax.xlane.f32.xlu0 %v5611
        %v5613 = vpop.xlane.xlu0 %5612
        %v5614 = vsel %vm2792, %v5318, -inf
        %5615 = vmax.xlane.f32.xlu0 %v5614
        %v5616 = vpop.xlane.xlu0 %5615
        %v5617 = vsel %vm2792, %v5320, -inf
        %5618 = vmax.xlane.f32.xlu0 %v5617
        %v5619 = vpop.xlane.xlu0 %5618
        %v5620 = vsel %vm2792, %v5380, -inf
        %5621 = vmax.xlane.f32.xlu0 %v5620
        %v5622 = vpop.xlane.xlu0 %5621
        %v5623 = vsel %vm2792, %v5382, -inf
        %5624 = vmax.xlane.f32.xlu0 %v5623
        %v5625 = vpop.xlane.xlu0 %5624
        %v5626 = vsel %vm2792, %v5385, -inf
        %5627 = vmax.xlane.f32.xlu0 %v5626
        %v5628 = vpop.xlane.xlu0 %5627
        %v5629 = vsel %vm2792, %v5387, -inf
        %5630 = vmax.xlane.f32.xlu0 %v5629
        %v5631 = vpop.xlane.xlu0 %5630
        %v5632 = vsel %vm2792, %v5390, -inf
        %5633 = vmax.xlane.f32.xlu0 %v5632
        %v5634 = vpop.xlane.xlu0 %5633
        %v5635 = vsel %vm2792, %v5392, -inf
        %5636 = vmax.xlane.f32.xlu0 %v5635
        %v5637 = vpop.xlane.xlu0 %5636
        %v5638 = vsel %vm2792, %v5395, -inf
        %5639 = vmax.xlane.f32.xlu0 %v5638
        %v5640 = vpop.xlane.xlu0 %5639
        %v5641 = vsel %vm2792, %v5397, -inf
        %5642 = vmax.xlane.f32.xlu0 %v5641
        %v5643 = vpop.xlane.xlu0 %5642
        %v5644 = vsel %vm2792, %v5457, -inf
        %5645 = vmax.xlane.f32.xlu0 %v5644
        %v5646 = vpop.xlane.xlu0 %5645
        %v5647 = vsel %vm2792, %v5459, -inf
        %5648 = vmax.xlane.f32.xlu0 %v5647
        %v5649 = vpop.xlane.xlu0 %5648
        %v5650 = vsel %vm2792, %v5462, -inf
        %5651 = vmax.xlane.f32.xlu0 %v5650
        %v5652 = vpop.xlane.xlu0 %5651
        %v5653 = vsel %vm2792, %v5464, -inf
        %5654 = vmax.xlane.f32.xlu0 %v5653
        %v5655 = vpop.xlane.xlu0 %5654
        %v5656 = vsel %vm2792, %v5467, -inf
        %5657 = vmax.xlane.f32.xlu0 %v5656
        %v5658 = vpop.xlane.xlu0 %5657
        %v5659 = vsel %vm2792, %v5469, -inf
        %5660 = vmax.xlane.f32.xlu0 %v5659
        %v5661 = vpop.xlane.xlu0 %5660
        %v5662 = vsel %vm2792, %v5472, -inf
        %5663 = vmax.xlane.f32.xlu0 %v5662
        %v5664 = vpop.xlane.xlu0 %5663
        %v5665 = vsel %vm2792, %v5474, -inf
        %5666 = vmax.xlane.f32.xlu0 %v5665
        %v5667 = vpop.xlane.xlu0 %5666
        %v5668 = vsub.f32 %v4918, %v5478
        %v5669 = vsub.f32 %v4920, %v5481
        %v5670 = vsub.f32 %v4923, %v5484
        %v5671 = vsub.f32 %v4925, %v5487
        %v5672 = vsub.f32 %v4928, %v5490
        %v5673 = vsub.f32 %v4930, %v5493
        %v5674 = vsub.f32 %v4933, %v5496
        %v5675 = vsub.f32 %v4935, %v5499
        %v5676 = vsub.f32 %v4995, %v5502
        %v5677 = vsub.f32 %v4997, %v5505
        %v5678 = vsub.f32 %v5000, %v5508
        %v5679 = vsub.f32 %v5002, %v5511
        %v5680 = vsub.f32 %v5005, %v5514
        %v5681 = vsub.f32 %v5007, %v5517
        %v5682 = vsub.f32 %v5010, %v5520
        %v5683 = vsub.f32 %v5012, %v5523
        %v5684 = vsub.f32 %v5072, %v5526
        %v5685 = vsub.f32 %v5074, %v5529
        %v5686 = vsub.f32 %v5077, %v5532
        %v5687 = vsub.f32 %v5079, %v5535
        %v5688 = vsub.f32 %v5082, %v5538
        %v5689 = vsub.f32 %v5084, %v5541
        %v5690 = vsub.f32 %v5087, %v5544
        %v5691 = vsub.f32 %v5089, %v5547
        %v5692 = vsub.f32 %v5149, %v5550
        %v5693 = vsub.f32 %v5151, %v5553
        %v5694 = vsub.f32 %v5154, %v5556
        %v5695 = vsub.f32 %v5156, %v5559
        %v5696 = vsub.f32 %v5159, %v5562
        %v5697 = vsub.f32 %v5161, %v5565
        %v5698 = vsub.f32 %v5164, %v5568
        %v5699 = vsub.f32 %v5166, %v5571
        %v5700 = vsub.f32 %v5226, %v5574
        %v5701 = vsub.f32 %v5228, %v5577
        %v5702 = vsub.f32 %v5231, %v5580
        %v5703 = vsub.f32 %v5233, %v5583
        %v5704 = vsub.f32 %v5236, %v5586
        %v5705 = vsub.f32 %v5238, %v5589
        %v5706 = vsub.f32 %v5241, %v5592
        %v5707 = vsub.f32 %v5243, %v5595
        %v5708 = vsub.f32 %v5303, %v5598
        %v5709 = vsub.f32 %v5305, %v5601
        %v5710 = vsub.f32 %v5308, %v5604
        %v5711 = vsub.f32 %v5310, %v5607
        %v5712 = vsub.f32 %v5313, %v5610
        %v5713 = vsub.f32 %v5315, %v5613
        %v5714 = vsub.f32 %v5318, %v5616
        %v5715 = vsub.f32 %v5320, %v5619
        %v5716 = vsub.f32 %v5380, %v5622
        %v5717 = vsub.f32 %v5382, %v5625
        %v5718 = vsub.f32 %v5385, %v5628
        %v5719 = vsub.f32 %v5387, %v5631
        %v5720 = vsub.f32 %v5390, %v5634
        %v5721 = vsub.f32 %v5392, %v5637
        %v5722 = vsub.f32 %v5395, %v5640
        %v5723 = vsub.f32 %v5397, %v5643
        %v5724 = vsub.f32 %v5457, %v5646
        %v5725 = vsub.f32 %v5459, %v5649
        %v5726 = vsub.f32 %v5462, %v5652
        %v5727 = vsub.f32 %v5464, %v5655
        %v5728 = vsub.f32 %v5467, %v5658
        %v5729 = vsub.f32 %v5469, %v5661
        %v5730 = vsub.f32 %v5472, %v5664
        %v5731 = vsub.f32 %v5474, %v5667
        %v5732 = vmul.f32 %v5668, 1.442695
        %v5733 = vpow.pop %v5732
        %v5734 = vmul.f32 %v5669, 1.442695
        %v5735 = vpow.pop %v5734
        %v5736 = vmul.f32 %v5670, 1.442695
        %v5737 = vpow.pop %v5736
        %v5738 = vmul.f32 %v5671, 1.442695
        %v5739 = vpow.pop %v5738
        %v5740 = vmul.f32 %v5672, 1.442695
        %v5741 = vpow.pop %v5740
        %v5742 = vmul.f32 %v5673, 1.442695
        %v5743 = vpow.pop %v5742
        %v5744 = vmul.f32 %v5674, 1.442695
        %v5745 = vpow.pop %v5744
        %v5746 = vmul.f32 %v5675, 1.442695
        %v5747 = vpow.pop %v5746
        %v5748 = vmul.f32 %v5676, 1.442695
        %v5749 = vpow.pop %v5748
        %v5750 = vmul.f32 %v5677, 1.442695
        %v5751 = vpow.pop %v5750
        %v5752 = vmul.f32 %v5678, 1.442695
        %v5753 = vpow.pop %v5752
        %v5754 = vmul.f32 %v5679, 1.442695
        %v5755 = vpow.pop %v5754
        %v5756 = vmul.f32 %v5680, 1.442695
        %v5757 = vpow.pop %v5756
        %v5758 = vmul.f32 %v5681, 1.442695
        %v5759 = vpow.pop %v5758
        %v5760 = vmul.f32 %v5682, 1.442695
        %v5761 = vpow.pop %v5760
        %v5762 = vmul.f32 %v5683, 1.442695
        %v5763 = vpow.pop %v5762
        %v5764 = vmul.f32 %v5684, 1.442695
        %v5765 = vpow.pop %v5764
        %v5766 = vmul.f32 %v5685, 1.442695
        %v5767 = vpow.pop %v5766
        %v5768 = vmul.f32 %v5686, 1.442695
        %v5769 = vpow.pop %v5768
        %v5770 = vmul.f32 %v5687, 1.442695
        %v5771 = vpow.pop %v5770
        %v5772 = vmul.f32 %v5688, 1.442695
        %v5773 = vpow.pop %v5772
        %v5774 = vmul.f32 %v5689, 1.442695
        %v5775 = vpow.pop %v5774
        %v5776 = vmul.f32 %v5690, 1.442695
        %v5777 = vpow.pop %v5776
        %v5778 = vmul.f32 %v5691, 1.442695
        %v5779 = vpow.pop %v5778
        %v5780 = vmul.f32 %v5692, 1.442695
        %v5781 = vpow.pop %v5780
        %v5782 = vmul.f32 %v5693, 1.442695
        %v5783 = vpow.pop %v5782
        %v5784 = vmul.f32 %v5694, 1.442695
        %v5785 = vpow.pop %v5784
        %v5786 = vmul.f32 %v5695, 1.442695
        %v5787 = vpow.pop %v5786
        %v5788 = vmul.f32 %v5696, 1.442695
        %v5789 = vpow.pop %v5788
        %v5790 = vmul.f32 %v5697, 1.442695
        %v5791 = vpow.pop %v5790
        %v5792 = vmul.f32 %v5698, 1.442695
        %v5793 = vpow.pop %v5792
        %v5794 = vmul.f32 %v5699, 1.442695
        %v5795 = vpow.pop %v5794
        %v5796 = vmul.f32 %v5700, 1.442695
        %v5797 = vpow.pop %v5796
        %v5798 = vmul.f32 %v5701, 1.442695
        %v5799 = vpow.pop %v5798
        %v5800 = vmul.f32 %v5702, 1.442695
        %v5801 = vpow.pop %v5800
        %v5802 = vmul.f32 %v5703, 1.442695
        %v5803 = vpow.pop %v5802
        %v5804 = vmul.f32 %v5704, 1.442695
        %v5805 = vpow.pop %v5804
        %v5806 = vmul.f32 %v5705, 1.442695
        %v5807 = vpow.pop %v5806
        %v5808 = vmul.f32 %v5706, 1.442695
        %v5809 = vpow.pop %v5808
        %v5810 = vmul.f32 %v5707, 1.442695
        %v5811 = vpow.pop %v5810
        %v5812 = vmul.f32 %v5708, 1.442695
        %v5813 = vpow.pop %v5812
        %v5814 = vmul.f32 %v5709, 1.442695
        %v5815 = vpow.pop %v5814
        %v5816 = vmul.f32 %v5710, 1.442695
        %v5817 = vpow.pop %v5816
        %v5818 = vmul.f32 %v5711, 1.442695
        %v5819 = vpow.pop %v5818
        %v5820 = vmul.f32 %v5712, 1.442695
        %v5821 = vpow.pop %v5820
        %v5822 = vmul.f32 %v5713, 1.442695
        %v5823 = vpow.pop %v5822
        %v5824 = vmul.f32 %v5714, 1.442695
        %v5825 = vpow.pop %v5824
        %v5826 = vmul.f32 %v5715, 1.442695
        %v5827 = vpow.pop %v5826
        %v5828 = vmul.f32 %v5716, 1.442695
        %v5829 = vpow.pop %v5828
        %v5830 = vmul.f32 %v5717, 1.442695
        %v5831 = vpow.pop %v5830
        %v5832 = vmul.f32 %v5718, 1.442695
        %v5833 = vpow.pop %v5832
        %v5834 = vmul.f32 %v5719, 1.442695
        %v5835 = vpow.pop %v5834
        %v5836 = vmul.f32 %v5720, 1.442695
        %v5837 = vpow.pop %v5836
        %v5838 = vmul.f32 %v5721, 1.442695
        %v5839 = vpow.pop %v5838
        %v5840 = vmul.f32 %v5722, 1.442695
        %v5841 = vpow.pop %v5840
        %v5842 = vmul.f32 %v5723, 1.442695
        %v5843 = vpow.pop %v5842
        %v5844 = vmul.f32 %v5724, 1.442695
        %v5845 = vpow.pop %v5844
        %v5846 = vmul.f32 %v5725, 1.442695
        %v5847 = vpow.pop %v5846
        %v5848 = vmul.f32 %v5726, 1.442695
        %v5849 = vpow.pop %v5848
        %v5850 = vmul.f32 %v5727, 1.442695
        %v5851 = vpow.pop %v5850
        %v5852 = vmul.f32 %v5728, 1.442695
        %v5853 = vpow.pop %v5852
        %v5854 = vmul.f32 %v5729, 1.442695
        %v5855 = vpow.pop %v5854
        %v5856 = vmul.f32 %v5730, 1.442695
        %v5857 = vpow.pop %v5856
        %v5858 = vmul.f32 %v5731, 1.442695
        %v5859 = vpow.pop %v5858
        %v5860 = vsel %vm2792, %v5733, 0.0
        %5861 = vadd.xlane.f32.xlu0 %v5860
        %v5862 = vpop.xlane.xlu0 %5861
        %v5863 = vsel %vm2792, %v5735, 0.0
        %5864 = vadd.xlane.f32.xlu0 %v5863
        %v5865 = vpop.xlane.xlu0 %5864
        %v5866 = vsel %vm2792, %v5737, 0.0
        %5867 = vadd.xlane.f32.xlu0 %v5866
        %v5868 = vpop.xlane.xlu0 %5867
        %v5869 = vsel %vm2792, %v5739, 0.0
        %5870 = vadd.xlane.f32.xlu0 %v5869
        %v5871 = vpop.xlane.xlu0 %5870
        %v5872 = vsel %vm2792, %v5741, 0.0
        %5873 = vadd.xlane.f32.xlu0 %v5872
        %v5874 = vpop.xlane.xlu0 %5873
        %v5875 = vsel %vm2792, %v5743, 0.0
        %5876 = vadd.xlane.f32.xlu0 %v5875
        %v5877 = vpop.xlane.xlu0 %5876
        %v5878 = vsel %vm2792, %v5745, 0.0
        %5879 = vadd.xlane.f32.xlu0 %v5878
        %v5880 = vpop.xlane.xlu0 %5879
        %v5881 = vsel %vm2792, %v5747, 0.0
        %5882 = vadd.xlane.f32.xlu0 %v5881
        %v5883 = vpop.xlane.xlu0 %5882
        %v5884 = vsel %vm2792, %v5749, 0.0
        %5885 = vadd.xlane.f32.xlu0 %v5884
        %v5886 = vpop.xlane.xlu0 %5885
        %v5887 = vsel %vm2792, %v5751, 0.0
        %5888 = vadd.xlane.f32.xlu0 %v5887
        %v5889 = vpop.xlane.xlu0 %5888
        %v5890 = vsel %vm2792, %v5753, 0.0
        %5891 = vadd.xlane.f32.xlu0 %v5890
        %v5892 = vpop.xlane.xlu0 %5891
        %v5893 = vsel %vm2792, %v5755, 0.0
        %5894 = vadd.xlane.f32.xlu0 %v5893
        %v5895 = vpop.xlane.xlu0 %5894
        %v5896 = vsel %vm2792, %v5757, 0.0
        %5897 = vadd.xlane.f32.xlu0 %v5896
        %v5898 = vpop.xlane.xlu0 %5897
        %v5899 = vsel %vm2792, %v5759, 0.0
        %5900 = vadd.xlane.f32.xlu0 %v5899
        %v5901 = vpop.xlane.xlu0 %5900
        %v5902 = vsel %vm2792, %v5761, 0.0
        %5903 = vadd.xlane.f32.xlu0 %v5902
        %v5904 = vpop.xlane.xlu0 %5903
        %v5905 = vsel %vm2792, %v5763, 0.0
        %5906 = vadd.xlane.f32.xlu0 %v5905
        %v5907 = vpop.xlane.xlu0 %5906
        %v5908 = vsel %vm2792, %v5765, 0.0
        %5909 = vadd.xlane.f32.xlu0 %v5908
        %v5910 = vpop.xlane.xlu0 %5909
        %v5911 = vsel %vm2792, %v5767, 0.0
        %5912 = vadd.xlane.f32.xlu0 %v5911
        %v5913 = vpop.xlane.xlu0 %5912
        %v5914 = vsel %vm2792, %v5769, 0.0
        %5915 = vadd.xlane.f32.xlu0 %v5914
        %v5916 = vpop.xlane.xlu0 %5915
        %v5917 = vsel %vm2792, %v5771, 0.0
        %5918 = vadd.xlane.f32.xlu0 %v5917
        %v5919 = vpop.xlane.xlu0 %5918
        %v5920 = vsel %vm2792, %v5773, 0.0
        %5921 = vadd.xlane.f32.xlu0 %v5920
        %v5922 = vpop.xlane.xlu0 %5921
        %v5923 = vsel %vm2792, %v5775, 0.0
        %5924 = vadd.xlane.f32.xlu0 %v5923
        %v5925 = vpop.xlane.xlu0 %5924
        %v5926 = vsel %vm2792, %v5777, 0.0
        %5927 = vadd.xlane.f32.xlu0 %v5926
        %v5928 = vpop.xlane.xlu0 %5927
        %v5929 = vsel %vm2792, %v5779, 0.0
        %5930 = vadd.xlane.f32.xlu0 %v5929
        %v5931 = vpop.xlane.xlu0 %5930
        %v5932 = vsel %vm2792, %v5781, 0.0
        %5933 = vadd.xlane.f32.xlu0 %v5932
        %v5934 = vpop.xlane.xlu0 %5933
        %v5935 = vsel %vm2792, %v5783, 0.0
        %5936 = vadd.xlane.f32.xlu0 %v5935
        %v5937 = vpop.xlane.xlu0 %5936
        %v5938 = vsel %vm2792, %v5785, 0.0
        %5939 = vadd.xlane.f32.xlu0 %v5938
        %v5940 = vpop.xlane.xlu0 %5939
        %v5941 = vsel %vm2792, %v5787, 0.0
        %5942 = vadd.xlane.f32.xlu0 %v5941
        %v5943 = vpop.xlane.xlu0 %5942
        %v5944 = vsel %vm2792, %v5789, 0.0
        %5945 = vadd.xlane.f32.xlu0 %v5944
        %v5946 = vpop.xlane.xlu0 %5945
        %v5947 = vsel %vm2792, %v5791, 0.0
        %5948 = vadd.xlane.f32.xlu0 %v5947
        %v5949 = vpop.xlane.xlu0 %5948
        %v5950 = vsel %vm2792, %v5793, 0.0
        %5951 = vadd.xlane.f32.xlu0 %v5950
        %v5952 = vpop.xlane.xlu0 %5951
        %v5953 = vsel %vm2792, %v5795, 0.0
        %5954 = vadd.xlane.f32.xlu0 %v5953
        %v5955 = vpop.xlane.xlu0 %5954
        %v5956 = vsel %vm2792, %v5797, 0.0
        %5957 = vadd.xlane.f32.xlu0 %v5956
        %v5958 = vpop.xlane.xlu0 %5957
        %v5959 = vsel %vm2792, %v5799, 0.0
        %5960 = vadd.xlane.f32.xlu0 %v5959
        %v5961 = vpop.xlane.xlu0 %5960
        %v5962 = vsel %vm2792, %v5801, 0.0
        %5963 = vadd.xlane.f32.xlu0 %v5962
        %v5964 = vpop.xlane.xlu0 %5963
        %v5965 = vsel %vm2792, %v5803, 0.0
        %5966 = vadd.xlane.f32.xlu0 %v5965
        %v5967 = vpop.xlane.xlu0 %5966
        %v5968 = vsel %vm2792, %v5805, 0.0
        %5969 = vadd.xlane.f32.xlu0 %v5968
        %v5970 = vpop.xlane.xlu0 %5969
        %v5971 = vsel %vm2792, %v5807, 0.0
        %5972 = vadd.xlane.f32.xlu0 %v5971
        %v5973 = vpop.xlane.xlu0 %5972
        %v5974 = vsel %vm2792, %v5809, 0.0
        %5975 = vadd.xlane.f32.xlu0 %v5974
        %v5976 = vpop.xlane.xlu0 %5975
        %v5977 = vsel %vm2792, %v5811, 0.0
        %5978 = vadd.xlane.f32.xlu0 %v5977
        %v5979 = vpop.xlane.xlu0 %5978
        %v5980 = vsel %vm2792, %v5813, 0.0
        %5981 = vadd.xlane.f32.xlu0 %v5980
        %v5982 = vpop.xlane.xlu0 %5981
        %v5983 = vsel %vm2792, %v5815, 0.0
        %5984 = vadd.xlane.f32.xlu0 %v5983
        %v5985 = vpop.xlane.xlu0 %5984
        %v5986 = vsel %vm2792, %v5817, 0.0
        %5987 = vadd.xlane.f32.xlu0 %v5986
        %v5988 = vpop.xlane.xlu0 %5987
        %v5989 = vsel %vm2792, %v5819, 0.0
        %5990 = vadd.xlane.f32.xlu0 %v5989
        %v5991 = vpop.xlane.xlu0 %5990
        %v5992 = vsel %vm2792, %v5821, 0.0
        %5993 = vadd.xlane.f32.xlu0 %v5992
        %v5994 = vpop.xlane.xlu0 %5993
        %v5995 = vsel %vm2792, %v5823, 0.0
        %5996 = vadd.xlane.f32.xlu0 %v5995
        %v5997 = vpop.xlane.xlu0 %5996
        %v5998 = vsel %vm2792, %v5825, 0.0
        %5999 = vadd.xlane.f32.xlu0 %v5998
        %v6000 = vpop.xlane.xlu0 %5999
        %v6001 = vsel %vm2792, %v5827, 0.0
        %6002 = vadd.xlane.f32.xlu0 %v6001
        %v6003 = vpop.xlane.xlu0 %6002
        %v6004 = vsel %vm2792, %v5829, 0.0
        %6005 = vadd.xlane.f32.xlu0 %v6004
        %v6006 = vpop.xlane.xlu0 %6005
        %v6007 = vsel %vm2792, %v5831, 0.0
        %6008 = vadd.xlane.f32.xlu0 %v6007
        %v6009 = vpop.xlane.xlu0 %6008
        %v6010 = vsel %vm2792, %v5833, 0.0
        %6011 = vadd.xlane.f32.xlu0 %v6010
        %v6012 = vpop.xlane.xlu0 %6011
        %v6013 = vsel %vm2792, %v5835, 0.0
        %6014 = vadd.xlane.f32.xlu0 %v6013
        %v6015 = vpop.xlane.xlu0 %6014
        %v6016 = vsel %vm2792, %v5837, 0.0
        %6017 = vadd.xlane.f32.xlu0 %v6016
        %v6018 = vpop.xlane.xlu0 %6017
        %v6019 = vsel %vm2792, %v5839, 0.0
        %6020 = vadd.xlane.f32.xlu0 %v6019
        %v6021 = vpop.xlane.xlu0 %6020
        %v6022 = vsel %vm2792, %v5841, 0.0
        %6023 = vadd.xlane.f32.xlu0 %v6022
        %v6024 = vpop.xlane.xlu0 %6023
        %v6025 = vsel %vm2792, %v5843, 0.0
        %6026 = vadd.xlane.f32.xlu0 %v6025
        %v6027 = vpop.xlane.xlu0 %6026
        %v6028 = vsel %vm2792, %v5845, 0.0
        %6029 = vadd.xlane.f32.xlu0 %v6028
        %v6030 = vpop.xlane.xlu0 %6029
        %v6031 = vsel %vm2792, %v5847, 0.0
        %6032 = vadd.xlane.f32.xlu0 %v6031
        %v6033 = vpop.xlane.xlu0 %6032
        %v6034 = vsel %vm2792, %v5849, 0.0
        %6035 = vadd.xlane.f32.xlu0 %v6034
        %v6036 = vpop.xlane.xlu0 %6035
        %v6037 = vsel %vm2792, %v5851, 0.0
        %6038 = vadd.xlane.f32.xlu0 %v6037
        %v6039 = vpop.xlane.xlu0 %6038
        %v6040 = vsel %vm2792, %v5853, 0.0
        %6041 = vadd.xlane.f32.xlu0 %v6040
        %v6042 = vpop.xlane.xlu0 %6041
        %v6043 = vsel %vm2792, %v5855, 0.0
        %6044 = vadd.xlane.f32.xlu0 %v6043
        %v6045 = vpop.xlane.xlu0 %6044
        %v6046 = vsel %vm2792, %v5857, 0.0
        %6047 = vadd.xlane.f32.xlu0 %v6046
        %v6048 = vpop.xlane.xlu0 %6047
        %v6049 = vsel %vm2792, %v5859, 0.0
        %6050 = vadd.xlane.f32.xlu0 %v6049
        %v6051 = vpop.xlane.xlu0 %6050
        %v6052 = vrcp.pop %v5862
        %v6053 = vrcp.pop %v5865
        %v6054 = vrcp.pop %v5868
        %v6055 = vrcp.pop %v5871
        %v6056 = vrcp.pop %v5874
        %v6057 = vrcp.pop %v5877
        %v6058 = vrcp.pop %v5880
        %v6059 = vrcp.pop %v5883
        %v6060 = vrcp.pop %v5886
        %v6061 = vrcp.pop %v5889
        %v6062 = vrcp.pop %v5892
        %v6063 = vrcp.pop %v5895
        %v6064 = vrcp.pop %v5898
        %v6065 = vrcp.pop %v5901
        %v6066 = vrcp.pop %v5904
        %v6067 = vrcp.pop %v5907
        %v6068 = vrcp.pop %v5910
        %v6069 = vrcp.pop %v5913
        %v6070 = vrcp.pop %v5916
        %v6071 = vrcp.pop %v5919
        %v6072 = vrcp.pop %v5922
        %v6073 = vrcp.pop %v5925
        %v6074 = vrcp.pop %v5928
        %v6075 = vrcp.pop %v5931
        %v6076 = vrcp.pop %v5934
        %v6077 = vrcp.pop %v5937
        %v6078 = vrcp.pop %v5940
        %v6079 = vrcp.pop %v5943
        %v6080 = vrcp.pop %v5946
        %v6081 = vrcp.pop %v5949
        %v6082 = vrcp.pop %v5952
        %v6083 = vrcp.pop %v5955
        %v6084 = vrcp.pop %v5958
        %v6085 = vrcp.pop %v5961
        %v6086 = vrcp.pop %v5964
        %v6087 = vrcp.pop %v5967
        %v6088 = vrcp.pop %v5970
        %v6089 = vrcp.pop %v5973
        %v6090 = vrcp.pop %v5976
        %v6091 = vrcp.pop %v5979
        %v6092 = vrcp.pop %v5982
        %v6093 = vrcp.pop %v5985
        %v6094 = vrcp.pop %v5988
        %v6095 = vrcp.pop %v5991
        %v6096 = vrcp.pop %v5994
        %v6097 = vrcp.pop %v5997
        %v6098 = vrcp.pop %v6000
        %v6099 = vrcp.pop %v6003
        %v6100 = vrcp.pop %v6006
        %v6101 = vrcp.pop %v6009
        %v6102 = vrcp.pop %v6012
        %v6103 = vrcp.pop %v6015
        %v6104 = vrcp.pop %v6018
        %v6105 = vrcp.pop %v6021
        %v6106 = vrcp.pop %v6024
        %v6107 = vrcp.pop %v6027
        %v6108 = vrcp.pop %v6030
        %v6109 = vrcp.pop %v6033
        %v6110 = vrcp.pop %v6036
        %v6111 = vrcp.pop %v6039
        %v6112 = vrcp.pop %v6042
        %v6113 = vrcp.pop %v6045
        %v6114 = vrcp.pop %v6048
        %v6115 = vrcp.pop %v6051
        %v6116 = vmul.f32 %v5733, %v6052
        %v6117 = vmul.f32 %v5735, %v6053
        %v6118 = vmul.f32 %v5737, %v6054
        %v6119 = vmul.f32 %v5739, %v6055
        %v6120 = vmul.f32 %v5741, %v6056
        %v6121 = vmul.f32 %v5743, %v6057
        %v6122 = vmul.f32 %v5745, %v6058
        %v6123 = vmul.f32 %v5747, %v6059
        %v6124 = vmul.f32 %v5749, %v6060
        %v6125 = vmul.f32 %v5751, %v6061
        %v6126 = vmul.f32 %v5753, %v6062
        %v6127 = vmul.f32 %v5755, %v6063
        %v6128 = vmul.f32 %v5757, %v6064
        %v6129 = vmul.f32 %v5759, %v6065
        %v6130 = vmul.f32 %v5761, %v6066
        %v6131 = vmul.f32 %v5763, %v6067
        %v6132 = vmul.f32 %v5765, %v6068
        %v6133 = vmul.f32 %v5767, %v6069
        %v6134 = vmul.f32 %v5769, %v6070
        %v6135 = vmul.f32 %v5771, %v6071
        %v6136 = vmul.f32 %v5773, %v6072
        %v6137 = vmul.f32 %v5775, %v6073
        %v6138 = vmul.f32 %v5777, %v6074
        %v6139 = vmul.f32 %v5779, %v6075
        %v6140 = vmul.f32 %v5781, %v6076
        %v6141 = vmul.f32 %v5783, %v6077
        %v6142 = vmul.f32 %v5785, %v6078
        %v6143 = vmul.f32 %v5787, %v6079
        %v6144 = vmul.f32 %v5789, %v6080
        %v6145 = vmul.f32 %v5791, %v6081
        %v6146 = vmul.f32 %v5793, %v6082
        %v6147 = vmul.f32 %v5795, %v6083
        %v6148 = vmul.f32 %v5797, %v6084
        %v6149 = vmul.f32 %v5799, %v6085
        %v6150 = vmul.f32 %v5801, %v6086
        %v6151 = vmul.f32 %v5803, %v6087
        %v6152 = vmul.f32 %v5805, %v6088
        %v6153 = vmul.f32 %v5807, %v6089
        %v6154 = vmul.f32 %v5809, %v6090
        %v6155 = vmul.f32 %v5811, %v6091
        %v6156 = vmul.f32 %v5813, %v6092
        %v6157 = vmul.f32 %v5815, %v6093
        %v6158 = vmul.f32 %v5817, %v6094
        %v6159 = vmul.f32 %v5819, %v6095
        %v6160 = vmul.f32 %v5821, %v6096
        %v6161 = vmul.f32 %v5823, %v6097
        %v6162 = vmul.f32 %v5825, %v6098
        %v6163 = vmul.f32 %v5827, %v6099
        %v6164 = vmul.f32 %v5829, %v6100
        %v6165 = vmul.f32 %v5831, %v6101
        %v6166 = vmul.f32 %v5833, %v6102
        %v6167 = vmul.f32 %v5835, %v6103
        %v6168 = vmul.f32 %v5837, %v6104
        %v6169 = vmul.f32 %v5839, %v6105
        %v6170 = vmul.f32 %v5841, %v6106
        %v6171 = vmul.f32 %v5843, %v6107
        %v6172 = vmul.f32 %v5845, %v6108
        %v6173 = vmul.f32 %v5847, %v6109
        %v6174 = vmul.f32 %v5849, %v6110
        %v6175 = vmul.f32 %v5851, %v6111
        %v6176 = vmul.f32 %v5853, %v6112
        %v6177 = vmul.f32 %v5855, %v6113
        %v6178 = vmul.f32 %v5857, %v6114
        %v6179 = vmul.f32 %v5859, %v6115
        %v6180 = vpack.c.bf16 %v6116, %v6116
        %v6181 = vpack.c.bf16 %v6117, %v6117
        %v6182 = vpack.c.bf16 %v6118, %v6118
        %v6183 = vpack.c.bf16 %v6119, %v6119
        %v6184 = vpack.c.bf16 %v6120, %v6120
        %v6185 = vpack.c.bf16 %v6121, %v6121
        %v6186 = vpack.c.bf16 %v6122, %v6122
        %v6187 = vpack.c.bf16 %v6123, %v6123
        %v6188 = vpack.c.bf16 %v6124, %v6124
        %v6189 = vpack.c.bf16 %v6125, %v6125
        %v6190 = vpack.c.bf16 %v6126, %v6126
        %v6191 = vpack.c.bf16 %v6127, %v6127
        %v6192 = vpack.c.bf16 %v6128, %v6128
        %v6193 = vpack.c.bf16 %v6129, %v6129
        %v6194 = vpack.c.bf16 %v6130, %v6130
        %v6195 = vpack.c.bf16 %v6131, %v6131
        %v6196 = vpack.c.bf16 %v6132, %v6132
        %v6197 = vpack.c.bf16 %v6133, %v6133
        %v6198 = vpack.c.bf16 %v6134, %v6134
        %v6199 = vpack.c.bf16 %v6135, %v6135
        %v6200 = vpack.c.bf16 %v6136, %v6136
        %v6201 = vpack.c.bf16 %v6137, %v6137
        %v6202 = vpack.c.bf16 %v6138, %v6138
        %v6203 = vpack.c.bf16 %v6139, %v6139
        %v6204 = vpack.c.bf16 %v6140, %v6140
        %v6205 = vpack.c.bf16 %v6141, %v6141
        %v6206 = vpack.c.bf16 %v6142, %v6142
        %v6207 = vpack.c.bf16 %v6143, %v6143
        %v6208 = vpack.c.bf16 %v6144, %v6144
        %v6209 = vpack.c.bf16 %v6145, %v6145
        %v6210 = vpack.c.bf16 %v6146, %v6146
        %v6211 = vpack.c.bf16 %v6147, %v6147
        %v6212 = vpack.c.bf16 %v6148, %v6148
        %v6213 = vpack.c.bf16 %v6149, %v6149
        %v6214 = vpack.c.bf16 %v6150, %v6150
        %v6215 = vpack.c.bf16 %v6151, %v6151
        %v6216 = vpack.c.bf16 %v6152, %v6152
        %v6217 = vpack.c.bf16 %v6153, %v6153
        %v6218 = vpack.c.bf16 %v6154, %v6154
        %v6219 = vpack.c.bf16 %v6155, %v6155
        %v6220 = vpack.c.bf16 %v6156, %v6156
        %v6221 = vpack.c.bf16 %v6157, %v6157
        %v6222 = vpack.c.bf16 %v6158, %v6158
        %v6223 = vpack.c.bf16 %v6159, %v6159
        %v6224 = vpack.c.bf16 %v6160, %v6160
        %v6225 = vpack.c.bf16 %v6161, %v6161
        %v6226 = vpack.c.bf16 %v6162, %v6162
        %v6227 = vpack.c.bf16 %v6163, %v6163
        %v6228 = vpack.c.bf16 %v6164, %v6164
        %v6229 = vpack.c.bf16 %v6165, %v6165
        %v6230 = vpack.c.bf16 %v6166, %v6166
        %v6231 = vpack.c.bf16 %v6167, %v6167
        %v6232 = vpack.c.bf16 %v6168, %v6168
        %v6233 = vpack.c.bf16 %v6169, %v6169
        %v6234 = vpack.c.bf16 %v6170, %v6170
        %v6235 = vpack.c.bf16 %v6171, %v6171
        %v6236 = vpack.c.bf16 %v6172, %v6172
        %v6237 = vpack.c.bf16 %v6173, %v6173
        %v6238 = vpack.c.bf16 %v6174, %v6174
        %v6239 = vpack.c.bf16 %v6175, %v6175
        %v6240 = vpack.c.bf16 %v6176, %v6176
        %v6241 = vpack.c.bf16 %v6177, %v6177
        %v6242 = vpack.c.bf16 %v6178, %v6178
        %v6243 = vpack.c.bf16 %v6179, %v6179
        %v6252 = vunpack.c.l.b16 %v6180
        %v6253 = vunpack.c.l.b16 %v6181
        %v6254 = vunpack.c.l.b16 %v6182
        %v6255 = vunpack.c.l.b16 %v6183
        %v6256 = vunpack.c.l.b16 %v6184
        %v6257 = vunpack.c.l.b16 %v6185
        %v6258 = vunpack.c.l.b16 %v6186
        %v6259 = vunpack.c.l.b16 %v6187
        %v6260 = vpack.c.b16 %v6253, %v6252
        %v6261 = vpack.c.b16 %v6255, %v6254
        %v6262 = vpack.c.b16 %v6257, %v6256
        %v6263 = vpack.c.b16 %v6259, %v6258
        %v6264 = vunpack.c.l.b16 %v1446
        %v6265 = vunpack.c.l.b16 %v1447
        %v6266 = vunpack.c.l.b16 %v1448
        %v6267 = vunpack.c.l.b16 %v1449
        %v6268 = vunpack.c.l.b16 %v1450
        %v6269 = vunpack.c.l.b16 %v1451
        %v6270 = vunpack.c.l.b16 %v1452
        %v6271 = vunpack.c.l.b16 %v1453
        %v6272 = vpack.c.b16 %v6265, %v6264
        %v6273 = vpack.c.b16 %v6267, %v6266
        %v6274 = vpack.c.b16 %v6269, %v6268
        %v6275 = vpack.c.b16 %v6271, %v6270
        %v6281 = vsel %vm2792, %v6260, 0
        %v6284 = vsel %vm2792, %v6261, 0
        %v6287 = vsel %vm2792, %v6262, 0
        %v6290 = vsel %vm2792, %v6263, 0
        %6292 = vmatpush.bf16.msra.mxu0 0
        %6293 = vmatpush.bf16.msra.mxu0 0
        %6294 = vmatpush.bf16.msra.mxu0 0
        %6295 = vmatpush.bf16.msra.mxu0 0
        %6296 = vmatpush.bf16.msra.mxu0 %v6275
        %6297 = vmatpush.bf16.msra.mxu0 %v6274
        %6298 = vmatpush.bf16.msra.mxu0 %v6273
        %6299 = vmatpush.bf16.msra.mxu0 %v6272
        %6300 = vmatmul.bf16.gmra.mxu0 %v6281
        %v6301 = vpop.f32.mrf.mxu0
        %v6302 = vadd.f32 0.0, %v6301
        %v6303 = vpop.f32.mrf.mxu0
        %v6304 = vadd.f32 0.0, %v6303
        %6305 = vmatmul.bf16.gmra.mxu0 %v6284
        %v6306 = vpop.f32.mrf.mxu0
        %v6307 = vadd.f32 0.0, %v6306
        %v6308 = vpop.f32.mrf.mxu0
        %v6309 = vadd.f32 0.0, %v6308
        %6310 = vmatmul.bf16.gmra.mxu0 %v6287
        %v6311 = vpop.f32.mrf.mxu0
        %v6312 = vadd.f32 0.0, %v6311
        %v6313 = vpop.f32.mrf.mxu0
        %v6314 = vadd.f32 0.0, %v6313
        %6315 = vmatmul.bf16.gmra.mxu0 %v6290
        %v6316 = vpop.f32.mrf.mxu0
        %v6317 = vadd.f32 0.0, %v6316
        %v6318 = vpop.f32.mrf.mxu0
        %v6319 = vadd.f32 0.0, %v6318
        %6320 = vdwg.mxu0
        %v6329 = vunpack.c.l.b16 %v6188
        %v6330 = vunpack.c.l.b16 %v6189
        %v6331 = vunpack.c.l.b16 %v6190
        %v6332 = vunpack.c.l.b16 %v6191
        %v6333 = vunpack.c.l.b16 %v6192
        %v6334 = vunpack.c.l.b16 %v6193
        %v6335 = vunpack.c.l.b16 %v6194
        %v6336 = vunpack.c.l.b16 %v6195
        %v6337 = vpack.c.b16 %v6330, %v6329
        %v6338 = vpack.c.b16 %v6332, %v6331
        %v6339 = vpack.c.b16 %v6334, %v6333
        %v6340 = vpack.c.b16 %v6336, %v6335
        %v6341 = vunpack.c.l.b16 %v1967
        %v6342 = vunpack.c.l.b16 %v1969
        %v6343 = vunpack.c.l.b16 %v1971
        %v6344 = vunpack.c.l.b16 %v1973
        %v6345 = vunpack.c.l.b16 %v1975
        %v6346 = vunpack.c.l.b16 %v1977
        %v6347 = vunpack.c.l.b16 %v1979
        %v6348 = vunpack.c.l.b16 %v1981
        %v6349 = vpack.c.b16 %v6342, %v6341
        %v6350 = vpack.c.b16 %v6344, %v6343
        %v6351 = vpack.c.b16 %v6346, %v6345
        %v6352 = vpack.c.b16 %v6348, %v6347
        %v6358 = vsel %vm2792, %v6337, 0
        %v6361 = vsel %vm2792, %v6338, 0
        %v6364 = vsel %vm2792, %v6339, 0
        %v6367 = vsel %vm2792, %v6340, 0
        %6369 = vmatpush.bf16.msra.mxu0 0
        %6370 = vmatpush.bf16.msra.mxu0 0
        %6371 = vmatpush.bf16.msra.mxu0 0
        %6372 = vmatpush.bf16.msra.mxu0 0
        %6373 = vmatpush.bf16.msra.mxu0 %v6352
        %6374 = vmatpush.bf16.msra.mxu0 %v6351
        %6375 = vmatpush.bf16.msra.mxu0 %v6350
        %6376 = vmatpush.bf16.msra.mxu0 %v6349
        %6377 = vmatmul.bf16.gmra.mxu0 %v6358
        %v6378 = vpop.f32.mrf.mxu0
        %v6379 = vadd.f32 0.0, %v6378
        %v6380 = vpop.f32.mrf.mxu0
        %v6381 = vadd.f32 0.0, %v6380
        %6382 = vmatmul.bf16.gmra.mxu0 %v6361
        %v6383 = vpop.f32.mrf.mxu0
        %v6384 = vadd.f32 0.0, %v6383
        %v6385 = vpop.f32.mrf.mxu0
        %v6386 = vadd.f32 0.0, %v6385
        %6387 = vmatmul.bf16.gmra.mxu0 %v6364
        %v6388 = vpop.f32.mrf.mxu0
        %v6389 = vadd.f32 0.0, %v6388
        %v6390 = vpop.f32.mrf.mxu0
        %v6391 = vadd.f32 0.0, %v6390
        %6392 = vmatmul.bf16.gmra.mxu0 %v6367
        %v6393 = vpop.f32.mrf.mxu0
        %v6394 = vadd.f32 0.0, %v6393
        %v6395 = vpop.f32.mrf.mxu0
        %v6396 = vadd.f32 0.0, %v6395
        %6397 = vdwg.mxu0
        %v6406 = vunpack.c.l.b16 %v6196
        %v6407 = vunpack.c.l.b16 %v6197
        %v6408 = vunpack.c.l.b16 %v6198
        %v6409 = vunpack.c.l.b16 %v6199
        %v6410 = vunpack.c.l.b16 %v6200
        %v6411 = vunpack.c.l.b16 %v6201
        %v6412 = vunpack.c.l.b16 %v6202
        %v6413 = vunpack.c.l.b16 %v6203
        %v6414 = vpack.c.b16 %v6407, %v6406
        %v6415 = vpack.c.b16 %v6409, %v6408
        %v6416 = vpack.c.b16 %v6411, %v6410
        %v6417 = vpack.c.b16 %v6413, %v6412
        %v6418 = vunpack.c.l.b16 %v1999
        %v6419 = vunpack.c.l.b16 %v2001
        %v6420 = vunpack.c.l.b16 %v2003
        %v6421 = vunpack.c.l.b16 %v2005
        %v6422 = vunpack.c.l.b16 %v2007
        %v6423 = vunpack.c.l.b16 %v2009
        %v6424 = vunpack.c.l.b16 %v2011
        %v6425 = vunpack.c.l.b16 %v2013
        %v6426 = vpack.c.b16 %v6419, %v6418
        %v6427 = vpack.c.b16 %v6421, %v6420
        %v6428 = vpack.c.b16 %v6423, %v6422
        %v6429 = vpack.c.b16 %v6425, %v6424
        %v6435 = vsel %vm2792, %v6414, 0
        %v6438 = vsel %vm2792, %v6415, 0
        %v6441 = vsel %vm2792, %v6416, 0
        %v6444 = vsel %vm2792, %v6417, 0
        %6446 = vmatpush.bf16.msra.mxu0 0
        %6447 = vmatpush.bf16.msra.mxu0 0
        %6448 = vmatpush.bf16.msra.mxu0 0
        %6449 = vmatpush.bf16.msra.mxu0 0
        %6450 = vmatpush.bf16.msra.mxu0 %v6429
        %6451 = vmatpush.bf16.msra.mxu0 %v6428
        %6452 = vmatpush.bf16.msra.mxu0 %v6427
        %6453 = vmatpush.bf16.msra.mxu0 %v6426
        %6454 = vmatmul.bf16.gmra.mxu0 %v6435
        %v6455 = vpop.f32.mrf.mxu0
        %v6456 = vadd.f32 0.0, %v6455
        %v6457 = vpop.f32.mrf.mxu0
        %v6458 = vadd.f32 0.0, %v6457
        %6459 = vmatmul.bf16.gmra.mxu0 %v6438
        %v6460 = vpop.f32.mrf.mxu0
        %v6461 = vadd.f32 0.0, %v6460
        %v6462 = vpop.f32.mrf.mxu0
        %v6463 = vadd.f32 0.0, %v6462
        %6464 = vmatmul.bf16.gmra.mxu0 %v6441
        %v6465 = vpop.f32.mrf.mxu0
        %v6466 = vadd.f32 0.0, %v6465
        %v6467 = vpop.f32.mrf.mxu0
        %v6468 = vadd.f32 0.0, %v6467
        %6469 = vmatmul.bf16.gmra.mxu0 %v6444
        %v6470 = vpop.f32.mrf.mxu0
        %v6471 = vadd.f32 0.0, %v6470
        %v6472 = vpop.f32.mrf.mxu0
        %v6473 = vadd.f32 0.0, %v6472
        %6474 = vdwg.mxu0
        %v6483 = vunpack.c.l.b16 %v6204
        %v6484 = vunpack.c.l.b16 %v6205
        %v6485 = vunpack.c.l.b16 %v6206
        %v6486 = vunpack.c.l.b16 %v6207
        %v6487 = vunpack.c.l.b16 %v6208
        %v6488 = vunpack.c.l.b16 %v6209
        %v6489 = vunpack.c.l.b16 %v6210
        %v6490 = vunpack.c.l.b16 %v6211
        %v6491 = vpack.c.b16 %v6484, %v6483
        %v6492 = vpack.c.b16 %v6486, %v6485
        %v6493 = vpack.c.b16 %v6488, %v6487
        %v6494 = vpack.c.b16 %v6490, %v6489
        %v6495 = vunpack.c.l.b16 %v2031
        %v6496 = vunpack.c.l.b16 %v2033
        %v6497 = vunpack.c.l.b16 %v2035
        %v6498 = vunpack.c.l.b16 %v2037
        %v6499 = vunpack.c.l.b16 %v2039
        %v6500 = vunpack.c.l.b16 %v2041
        %v6501 = vunpack.c.l.b16 %v2043
        %v6502 = vunpack.c.l.b16 %v2045
        %v6503 = vpack.c.b16 %v6496, %v6495
        %v6504 = vpack.c.b16 %v6498, %v6497
        %v6505 = vpack.c.b16 %v6500, %v6499
        %v6506 = vpack.c.b16 %v6502, %v6501
        %v6512 = vsel %vm2792, %v6491, 0
        %v6515 = vsel %vm2792, %v6492, 0
        %v6518 = vsel %vm2792, %v6493, 0
        %v6521 = vsel %vm2792, %v6494, 0
        %6523 = vmatpush.bf16.msra.mxu0 0
        %6524 = vmatpush.bf16.msra.mxu0 0
        %6525 = vmatpush.bf16.msra.mxu0 0
        %6526 = vmatpush.bf16.msra.mxu0 0
        %6527 = vmatpush.bf16.msra.mxu0 %v6506
        %6528 = vmatpush.bf16.msra.mxu0 %v6505
        %6529 = vmatpush.bf16.msra.mxu0 %v6504
        %6530 = vmatpush.bf16.msra.mxu0 %v6503
        %6531 = vmatmul.bf16.gmra.mxu0 %v6512
        %v6532 = vpop.f32.mrf.mxu0
        %v6533 = vadd.f32 0.0, %v6532
        %v6534 = vpop.f32.mrf.mxu0
        %v6535 = vadd.f32 0.0, %v6534
        %6536 = vmatmul.bf16.gmra.mxu0 %v6515
        %v6537 = vpop.f32.mrf.mxu0
        %v6538 = vadd.f32 0.0, %v6537
        %v6539 = vpop.f32.mrf.mxu0
        %v6540 = vadd.f32 0.0, %v6539
        %6541 = vmatmul.bf16.gmra.mxu0 %v6518
        %v6542 = vpop.f32.mrf.mxu0
        %v6543 = vadd.f32 0.0, %v6542
        %v6544 = vpop.f32.mrf.mxu0
        %v6545 = vadd.f32 0.0, %v6544
        %6546 = vmatmul.bf16.gmra.mxu0 %v6521
        %v6547 = vpop.f32.mrf.mxu0
        %v6548 = vadd.f32 0.0, %v6547
        %v6549 = vpop.f32.mrf.mxu0
        %v6550 = vadd.f32 0.0, %v6549
        %6551 = vdwg.mxu0
        %v6560 = vunpack.c.l.b16 %v6212
        %v6561 = vunpack.c.l.b16 %v6213
        %v6562 = vunpack.c.l.b16 %v6214
        %v6563 = vunpack.c.l.b16 %v6215
        %v6564 = vunpack.c.l.b16 %v6216
        %v6565 = vunpack.c.l.b16 %v6217
        %v6566 = vunpack.c.l.b16 %v6218
        %v6567 = vunpack.c.l.b16 %v6219
        %v6568 = vpack.c.b16 %v6561, %v6560
        %v6569 = vpack.c.b16 %v6563, %v6562
        %v6570 = vpack.c.b16 %v6565, %v6564
        %v6571 = vpack.c.b16 %v6567, %v6566
        %v6572 = vunpack.c.l.b16 %v2063
        %v6573 = vunpack.c.l.b16 %v2065
        %v6574 = vunpack.c.l.b16 %v2067
        %v6575 = vunpack.c.l.b16 %v2069
        %v6576 = vunpack.c.l.b16 %v2071
        %v6577 = vunpack.c.l.b16 %v2073
        %v6578 = vunpack.c.l.b16 %v2075
        %v6579 = vunpack.c.l.b16 %v2077
        %v6580 = vpack.c.b16 %v6573, %v6572
        %v6581 = vpack.c.b16 %v6575, %v6574
        %v6582 = vpack.c.b16 %v6577, %v6576
        %v6583 = vpack.c.b16 %v6579, %v6578
        %v6589 = vsel %vm2792, %v6568, 0
        %v6592 = vsel %vm2792, %v6569, 0
        %v6595 = vsel %vm2792, %v6570, 0
        %v6598 = vsel %vm2792, %v6571, 0
        %6600 = vmatpush.bf16.msra.mxu0 0
        %6601 = vmatpush.bf16.msra.mxu0 0
        %6602 = vmatpush.bf16.msra.mxu0 0
        %6603 = vmatpush.bf16.msra.mxu0 0
        %6604 = vmatpush.bf16.msra.mxu0 %v6583
        %6605 = vmatpush.bf16.msra.mxu0 %v6582
        %6606 = vmatpush.bf16.msra.mxu0 %v6581
        %6607 = vmatpush.bf16.msra.mxu0 %v6580
        %6608 = vmatmul.bf16.gmra.mxu0 %v6589
        %v6609 = vpop.f32.mrf.mxu0
        %v6610 = vadd.f32 0.0, %v6609
        %v6611 = vpop.f32.mrf.mxu0
        %v6612 = vadd.f32 0.0, %v6611
        %6613 = vmatmul.bf16.gmra.mxu0 %v6592
        %v6614 = vpop.f32.mrf.mxu0
        %v6615 = vadd.f32 0.0, %v6614
        %v6616 = vpop.f32.mrf.mxu0
        %v6617 = vadd.f32 0.0, %v6616
        %6618 = vmatmul.bf16.gmra.mxu0 %v6595
        %v6619 = vpop.f32.mrf.mxu0
        %v6620 = vadd.f32 0.0, %v6619
        %v6621 = vpop.f32.mrf.mxu0
        %v6622 = vadd.f32 0.0, %v6621
        %6623 = vmatmul.bf16.gmra.mxu0 %v6598
        %v6624 = vpop.f32.mrf.mxu0
        %v6625 = vadd.f32 0.0, %v6624
        %v6626 = vpop.f32.mrf.mxu0
        %v6627 = vadd.f32 0.0, %v6626
        %6628 = vdwg.mxu0
        %v6637 = vunpack.c.l.b16 %v6220
        %v6638 = vunpack.c.l.b16 %v6221
        %v6639 = vunpack.c.l.b16 %v6222
        %v6640 = vunpack.c.l.b16 %v6223
        %v6641 = vunpack.c.l.b16 %v6224
        %v6642 = vunpack.c.l.b16 %v6225
        %v6643 = vunpack.c.l.b16 %v6226
        %v6644 = vunpack.c.l.b16 %v6227
        %v6645 = vpack.c.b16 %v6638, %v6637
        %v6646 = vpack.c.b16 %v6640, %v6639
        %v6647 = vpack.c.b16 %v6642, %v6641
        %v6648 = vpack.c.b16 %v6644, %v6643
        %v6649 = vunpack.c.l.b16 %v2095
        %v6650 = vunpack.c.l.b16 %v2097
        %v6651 = vunpack.c.l.b16 %v2099
        %v6652 = vunpack.c.l.b16 %v2101
        %v6653 = vunpack.c.l.b16 %v2103
        %v6654 = vunpack.c.l.b16 %v2105
        %v6655 = vunpack.c.l.b16 %v2107
        %v6656 = vunpack.c.l.b16 %v2109
        %v6657 = vpack.c.b16 %v6650, %v6649
        %v6658 = vpack.c.b16 %v6652, %v6651
        %v6659 = vpack.c.b16 %v6654, %v6653
        %v6660 = vpack.c.b16 %v6656, %v6655
        %v6666 = vsel %vm2792, %v6645, 0
        %v6669 = vsel %vm2792, %v6646, 0
        %v6672 = vsel %vm2792, %v6647, 0
        %v6675 = vsel %vm2792, %v6648, 0
        %6677 = vmatpush.bf16.msra.mxu0 0
        %6678 = vmatpush.bf16.msra.mxu0 0
        %6679 = vmatpush.bf16.msra.mxu0 0
        %6680 = vmatpush.bf16.msra.mxu0 0
        %6681 = vmatpush.bf16.msra.mxu0 %v6660
        %6682 = vmatpush.bf16.msra.mxu0 %v6659
        %6683 = vmatpush.bf16.msra.mxu0 %v6658
        %6684 = vmatpush.bf16.msra.mxu0 %v6657
        %6685 = vmatmul.bf16.gmra.mxu0 %v6666
        %v6686 = vpop.f32.mrf.mxu0
        %v6687 = vadd.f32 0.0, %v6686
        %v6688 = vpop.f32.mrf.mxu0
        %v6689 = vadd.f32 0.0, %v6688
        %6690 = vmatmul.bf16.gmra.mxu0 %v6669
        %v6691 = vpop.f32.mrf.mxu0
        %v6692 = vadd.f32 0.0, %v6691
        %v6693 = vpop.f32.mrf.mxu0
        %v6694 = vadd.f32 0.0, %v6693
        %6695 = vmatmul.bf16.gmra.mxu0 %v6672
        %v6696 = vpop.f32.mrf.mxu0
        %v6697 = vadd.f32 0.0, %v6696
        %v6698 = vpop.f32.mrf.mxu0
        %v6699 = vadd.f32 0.0, %v6698
        %6700 = vmatmul.bf16.gmra.mxu0 %v6675
        %v6701 = vpop.f32.mrf.mxu0
        %v6702 = vadd.f32 0.0, %v6701
        %v6703 = vpop.f32.mrf.mxu0
        %v6704 = vadd.f32 0.0, %v6703
        %6705 = vdwg.mxu0
        %v6714 = vunpack.c.l.b16 %v6228
        %v6715 = vunpack.c.l.b16 %v6229
        %v6716 = vunpack.c.l.b16 %v6230
        %v6717 = vunpack.c.l.b16 %v6231
        %v6718 = vunpack.c.l.b16 %v6232
        %v6719 = vunpack.c.l.b16 %v6233
        %v6720 = vunpack.c.l.b16 %v6234
        %v6721 = vunpack.c.l.b16 %v6235
        %v6722 = vpack.c.b16 %v6715, %v6714
        %v6723 = vpack.c.b16 %v6717, %v6716
        %v6724 = vpack.c.b16 %v6719, %v6718
        %v6725 = vpack.c.b16 %v6721, %v6720
        %v6726 = vunpack.c.l.b16 %v2127
        %v6727 = vunpack.c.l.b16 %v2129
        %v6728 = vunpack.c.l.b16 %v2131
        %v6729 = vunpack.c.l.b16 %v2133
        %v6730 = vunpack.c.l.b16 %v2135
        %v6731 = vunpack.c.l.b16 %v2137
        %v6732 = vunpack.c.l.b16 %v2139
        %v6733 = vunpack.c.l.b16 %v2141
        %v6734 = vpack.c.b16 %v6727, %v6726
        %v6735 = vpack.c.b16 %v6729, %v6728
        %v6736 = vpack.c.b16 %v6731, %v6730
        %v6737 = vpack.c.b16 %v6733, %v6732
        %v6743 = vsel %vm2792, %v6722, 0
        %v6746 = vsel %vm2792, %v6723, 0
        %v6749 = vsel %vm2792, %v6724, 0
        %v6752 = vsel %vm2792, %v6725, 0
        %6754 = vmatpush.bf16.msra.mxu0 0
        %6755 = vmatpush.bf16.msra.mxu0 0
        %6756 = vmatpush.bf16.msra.mxu0 0
        %6757 = vmatpush.bf16.msra.mxu0 0
        %6758 = vmatpush.bf16.msra.mxu0 %v6737
        %6759 = vmatpush.bf16.msra.mxu0 %v6736
        %6760 = vmatpush.bf16.msra.mxu0 %v6735
        %6761 = vmatpush.bf16.msra.mxu0 %v6734
        %6762 = vmatmul.bf16.gmra.mxu0 %v6743
        %v6763 = vpop.f32.mrf.mxu0
        %v6764 = vadd.f32 0.0, %v6763
        %v6765 = vpop.f32.mrf.mxu0
        %v6766 = vadd.f32 0.0, %v6765
        %6767 = vmatmul.bf16.gmra.mxu0 %v6746
        %v6768 = vpop.f32.mrf.mxu0
        %v6769 = vadd.f32 0.0, %v6768
        %v6770 = vpop.f32.mrf.mxu0
        %v6771 = vadd.f32 0.0, %v6770
        %6772 = vmatmul.bf16.gmra.mxu0 %v6749
        %v6773 = vpop.f32.mrf.mxu0
        %v6774 = vadd.f32 0.0, %v6773
        %v6775 = vpop.f32.mrf.mxu0
        %v6776 = vadd.f32 0.0, %v6775
        %6777 = vmatmul.bf16.gmra.mxu0 %v6752
        %v6778 = vpop.f32.mrf.mxu0
        %v6779 = vadd.f32 0.0, %v6778
        %v6780 = vpop.f32.mrf.mxu0
        %v6781 = vadd.f32 0.0, %v6780
        %6782 = vdwg.mxu0
        %v6791 = vunpack.c.l.b16 %v6236
        %v6792 = vunpack.c.l.b16 %v6237
        %v6793 = vunpack.c.l.b16 %v6238
        %v6794 = vunpack.c.l.b16 %v6239
        %v6795 = vunpack.c.l.b16 %v6240
        %v6796 = vunpack.c.l.b16 %v6241
        %v6797 = vunpack.c.l.b16 %v6242
        %v6798 = vunpack.c.l.b16 %v6243
        %v6799 = vpack.c.b16 %v6792, %v6791
        %v6800 = vpack.c.b16 %v6794, %v6793
        %v6801 = vpack.c.b16 %v6796, %v6795
        %v6802 = vpack.c.b16 %v6798, %v6797
        %v6803 = vunpack.c.l.b16 %v2159
        %v6804 = vunpack.c.l.b16 %v2161
        %v6805 = vunpack.c.l.b16 %v2163
        %v6806 = vunpack.c.l.b16 %v2165
        %v6807 = vunpack.c.l.b16 %v2167
        %v6808 = vunpack.c.l.b16 %v2169
        %v6809 = vunpack.c.l.b16 %v2171
        %v6810 = vunpack.c.l.b16 %v2173
        %v6811 = vpack.c.b16 %v6804, %v6803
        %v6812 = vpack.c.b16 %v6806, %v6805
        %v6813 = vpack.c.b16 %v6808, %v6807
        %v6814 = vpack.c.b16 %v6810, %v6809
        %v6820 = vsel %vm2792, %v6799, 0
        %v6823 = vsel %vm2792, %v6800, 0
        %v6826 = vsel %vm2792, %v6801, 0
        %v6829 = vsel %vm2792, %v6802, 0
        %6831 = vmatpush.bf16.msra.mxu0 0
        %6832 = vmatpush.bf16.msra.mxu0 0
        %6833 = vmatpush.bf16.msra.mxu0 0
        %6834 = vmatpush.bf16.msra.mxu0 0
        %6835 = vmatpush.bf16.msra.mxu0 %v6814
        %6836 = vmatpush.bf16.msra.mxu0 %v6813
        %6837 = vmatpush.bf16.msra.mxu0 %v6812
        %6838 = vmatpush.bf16.msra.mxu0 %v6811
        %6839 = vmatmul.bf16.gmra.mxu0 %v6820
        %v6840 = vpop.f32.mrf.mxu0
        %v6841 = vadd.f32 0.0, %v6840
        %v6842 = vpop.f32.mrf.mxu0
        %v6843 = vadd.f32 0.0, %v6842
        %6844 = vmatmul.bf16.gmra.mxu0 %v6823
        %v6845 = vpop.f32.mrf.mxu0
        %v6846 = vadd.f32 0.0, %v6845
        %v6847 = vpop.f32.mrf.mxu0
        %v6848 = vadd.f32 0.0, %v6847
        %6849 = vmatmul.bf16.gmra.mxu0 %v6826
        %v6850 = vpop.f32.mrf.mxu0
        %v6851 = vadd.f32 0.0, %v6850
        %v6852 = vpop.f32.mrf.mxu0
        %v6853 = vadd.f32 0.0, %v6852
        %6854 = vmatmul.bf16.gmra.mxu0 %v6829
        %v6855 = vpop.f32.mrf.mxu0
        %v6856 = vadd.f32 0.0, %v6855
        %v6857 = vpop.f32.mrf.mxu0
        %v6858 = vadd.f32 0.0, %v6857
        %6859 = vdwg.mxu0
        %v6860 = vpack.c.bf16 %v6302, %v6302
        %v6861 = vpack.c.bf16 %v6304, %v6304
        %v6862 = vpack.c.bf16 %v6307, %v6307
        %v6863 = vpack.c.bf16 %v6309, %v6309
        %v6864 = vpack.c.bf16 %v6312, %v6312
        %v6865 = vpack.c.bf16 %v6314, %v6314
        %v6866 = vpack.c.bf16 %v6317, %v6317
        %v6867 = vpack.c.bf16 %v6319, %v6319
        %v6868 = vpack.c.bf16 %v6379, %v6379
        %v6869 = vpack.c.bf16 %v6381, %v6381
        %v6870 = vpack.c.bf16 %v6384, %v6384
        %v6871 = vpack.c.bf16 %v6386, %v6386
        %v6872 = vpack.c.bf16 %v6389, %v6389
        %v6873 = vpack.c.bf16 %v6391, %v6391
        %v6874 = vpack.c.bf16 %v6394, %v6394
        %v6875 = vpack.c.bf16 %v6396, %v6396
        %v6876 = vpack.c.bf16 %v6456, %v6456
        %v6877 = vpack.c.bf16 %v6458, %v6458
        %v6878 = vpack.c.bf16 %v6461, %v6461
        %v6879 = vpack.c.bf16 %v6463, %v6463
        %v6880 = vpack.c.bf16 %v6466, %v6466
        %v6881 = vpack.c.bf16 %v6468, %v6468
        %v6882 = vpack.c.bf16 %v6471, %v6471
        %v6883 = vpack.c.bf16 %v6473, %v6473
        %v6884 = vpack.c.bf16 %v6533, %v6533
        %v6885 = vpack.c.bf16 %v6535, %v6535
        %v6886 = vpack.c.bf16 %v6538, %v6538
        %v6887 = vpack.c.bf16 %v6540, %v6540
        %v6888 = vpack.c.bf16 %v6543, %v6543
        %v6889 = vpack.c.bf16 %v6545, %v6545
        %v6890 = vpack.c.bf16 %v6548, %v6548
        %v6891 = vpack.c.bf16 %v6550, %v6550
        %v6892 = vpack.c.bf16 %v6610, %v6610
        %v6893 = vpack.c.bf16 %v6612, %v6612
        %v6894 = vpack.c.bf16 %v6615, %v6615
        %v6895 = vpack.c.bf16 %v6617, %v6617
        %v6896 = vpack.c.bf16 %v6620, %v6620
        %v6897 = vpack.c.bf16 %v6622, %v6622
        %v6898 = vpack.c.bf16 %v6625, %v6625
        %v6899 = vpack.c.bf16 %v6627, %v6627
        %v6900 = vpack.c.bf16 %v6687, %v6687
        %v6901 = vpack.c.bf16 %v6689, %v6689
        %v6902 = vpack.c.bf16 %v6692, %v6692
        %v6903 = vpack.c.bf16 %v6694, %v6694
        %v6904 = vpack.c.bf16 %v6697, %v6697
        %v6905 = vpack.c.bf16 %v6699, %v6699
        %v6906 = vpack.c.bf16 %v6702, %v6702
        %v6907 = vpack.c.bf16 %v6704, %v6704
        %v6908 = vpack.c.bf16 %v6764, %v6764
        %v6909 = vpack.c.bf16 %v6766, %v6766
        %v6910 = vpack.c.bf16 %v6769, %v6769
        %v6911 = vpack.c.bf16 %v6771, %v6771
        %v6912 = vpack.c.bf16 %v6774, %v6774
        %v6913 = vpack.c.bf16 %v6776, %v6776
        %v6914 = vpack.c.bf16 %v6779, %v6779
        %v6915 = vpack.c.bf16 %v6781, %v6781
        %v6916 = vpack.c.bf16 %v6841, %v6841
        %v6917 = vpack.c.bf16 %v6843, %v6843
        %v6918 = vpack.c.bf16 %v6846, %v6846
        %v6919 = vpack.c.bf16 %v6848, %v6848
        %v6920 = vpack.c.bf16 %v6851, %v6851
        %v6921 = vpack.c.bf16 %v6853, %v6853
        %v6922 = vpack.c.bf16 %v6856, %v6856
        %v6923 = vpack.c.bf16 %v6858, %v6858
        %v6924 = vld [vmem:[%s592] sm:$0xf]
        %v6925 = vld [vmem:[%s592 + $0x4] sm:$0xf]
        %v6934 = vunpack.c.l.b16 %v6860
        %v6935 = vunpack.c.l.b16 %v6861
        %v6936 = vunpack.c.l.b16 %v6862
        %v6937 = vunpack.c.l.b16 %v6863
        %v6938 = vunpack.c.l.b16 %v6864
        %v6939 = vunpack.c.l.b16 %v6865
        %v6940 = vunpack.c.l.b16 %v6866
        %v6941 = vunpack.c.l.b16 %v6867
        %v6942 = vpack.c.b16 %v6935, %v6934
        %v6943 = vpack.c.b16 %v6937, %v6936
        %v6944 = vpack.c.b16 %v6939, %v6938
        %v6945 = vpack.c.b16 %v6941, %v6940
        %v6948 = vunpack.c.l.b16 %v6924
        %v6949 = vunpack.c.l.b16 %v6925
        %v6950 = vpack.c.b16 %v6949, %v6948
        %v6953 = vsel %vm2199, %v6942, 0
        %v6956 = vsel %vm2199, %v6943, 0
        %v6959 = vsel %vm2199, %v6944, 0
        %v6962 = vsel %vm2199, %v6945, 0
        %6964 = vmatpush.bf16.msra.mxu0 0
        %6965 = vmatpush.bf16.msra.mxu0 0
        %6966 = vmatpush.bf16.msra.mxu0 0
        %6967 = vmatpush.bf16.msra.mxu0 0
        %6968 = vmatpush.bf16.msra.mxu0 0
        %6969 = vmatpush.bf16.msra.mxu0 0
        %6970 = vmatpush.bf16.msra.mxu0 0
        %6971 = vmatpush.bf16.msra.mxu0 %v6950
        %6972 = vmatmul.bf16.gmra.mxu0 %v6953
        %v6973 = vpop.f32.mrf.mxu0
        %v6974 = vadd.f32 0.0, %v6973
        %v6975 = vpop.f32.mrf.mxu0
        %v6976 = vadd.f32 0.0, %v6975
        %6977 = vmatmul.bf16.gmra.mxu0 %v6956
        %v6978 = vpop.f32.mrf.mxu0
        %v6979 = vadd.f32 0.0, %v6978
        %v6980 = vpop.f32.mrf.mxu0
        %v6981 = vadd.f32 0.0, %v6980
        %6982 = vmatmul.bf16.gmra.mxu0 %v6959
        %v6983 = vpop.f32.mrf.mxu0
        %v6984 = vadd.f32 0.0, %v6983
        %v6985 = vpop.f32.mrf.mxu0
        %v6986 = vadd.f32 0.0, %v6985
        %6987 = vmatmul.bf16.gmra.mxu0 %v6962
        %v6988 = vpop.f32.mrf.mxu0
        %v6989 = vadd.f32 0.0, %v6988
        %v6990 = vpop.f32.mrf.mxu0
        %v6991 = vadd.f32 0.0, %v6990
        %6992 = vdwg.mxu0
        %v6993 = vadd.f32 %v4311, %v6974
        %v6994 = vadd.f32 %v4311, %v6976
        %v6995 = vadd.f32 %v4311, %v6979
        %v6996 = vadd.f32 %v4311, %v6981
        %v6997 = vadd.f32 %v4311, %v6984
        %v6998 = vadd.f32 %v4311, %v6986
        %v6999 = vadd.f32 %v4311, %v6989
        %v7000 = vadd.f32 %v4311, %v6991
        %v7001 = vld [vmem:[%s592 + $0x8] sm:$0xf]
        %v7002 = vld [vmem:[%s592 + $0xc] sm:$0xf]
        %v7011 = vunpack.c.l.b16 %v6868
        %v7012 = vunpack.c.l.b16 %v6869
        %v7013 = vunpack.c.l.b16 %v6870
        %v7014 = vunpack.c.l.b16 %v6871
        %v7015 = vunpack.c.l.b16 %v6872
        %v7016 = vunpack.c.l.b16 %v6873
        %v7017 = vunpack.c.l.b16 %v6874
        %v7018 = vunpack.c.l.b16 %v6875
        %v7019 = vpack.c.b16 %v7012, %v7011
        %v7020 = vpack.c.b16 %v7014, %v7013
        %v7021 = vpack.c.b16 %v7016, %v7015
        %v7022 = vpack.c.b16 %v7018, %v7017
        %v7025 = vunpack.c.l.b16 %v7001
        %v7026 = vunpack.c.l.b16 %v7002
        %v7027 = vpack.c.b16 %v7026, %v7025
        %v7030 = vsel %vm2199, %v7019, 0
        %v7033 = vsel %vm2199, %v7020, 0
        %v7036 = vsel %vm2199, %v7021, 0
        %v7039 = vsel %vm2199, %v7022, 0
        %7041 = vmatpush.bf16.msra.mxu0 0
        %7042 = vmatpush.bf16.msra.mxu0 0
        %7043 = vmatpush.bf16.msra.mxu0 0
        %7044 = vmatpush.bf16.msra.mxu0 0
        %7045 = vmatpush.bf16.msra.mxu0 0
        %7046 = vmatpush.bf16.msra.mxu0 0
        %7047 = vmatpush.bf16.msra.mxu0 0
        %7048 = vmatpush.bf16.msra.mxu0 %v7027
        %7049 = vmatmul.bf16.gmra.mxu0 %v7030
        %v7050 = vpop.f32.mrf.mxu0
        %v7051 = vadd.f32 0.0, %v7050
        %v7052 = vpop.f32.mrf.mxu0
        %v7053 = vadd.f32 0.0, %v7052
        %7054 = vmatmul.bf16.gmra.mxu0 %v7033
        %v7055 = vpop.f32.mrf.mxu0
        %v7056 = vadd.f32 0.0, %v7055
        %v7057 = vpop.f32.mrf.mxu0
        %v7058 = vadd.f32 0.0, %v7057
        %7059 = vmatmul.bf16.gmra.mxu0 %v7036
        %v7060 = vpop.f32.mrf.mxu0
        %v7061 = vadd.f32 0.0, %v7060
        %v7062 = vpop.f32.mrf.mxu0
        %v7063 = vadd.f32 0.0, %v7062
        %7064 = vmatmul.bf16.gmra.mxu0 %v7039
        %v7065 = vpop.f32.mrf.mxu0
        %v7066 = vadd.f32 0.0, %v7065
        %v7067 = vpop.f32.mrf.mxu0
        %v7068 = vadd.f32 0.0, %v7067
        %7069 = vdwg.mxu0
        %v7070 = vadd.f32 %v6993, %v7051
        %v7071 = vadd.f32 %v6994, %v7053
        %v7072 = vadd.f32 %v6995, %v7056
        %v7073 = vadd.f32 %v6996, %v7058
        %v7074 = vadd.f32 %v6997, %v7061
        %v7075 = vadd.f32 %v6998, %v7063
        %v7076 = vadd.f32 %v6999, %v7066
        %v7077 = vadd.f32 %v7000, %v7068
        %v7078 = vld [vmem:[%s592 + $0x10] sm:$0xf]
        %v7079 = vld [vmem:[%s592 + $0x14] sm:$0xf]
        %v7088 = vunpack.c.l.b16 %v6876
        %v7089 = vunpack.c.l.b16 %v6877
        %v7090 = vunpack.c.l.b16 %v6878
        %v7091 = vunpack.c.l.b16 %v6879
        %v7092 = vunpack.c.l.b16 %v6880
        %v7093 = vunpack.c.l.b16 %v6881
        %v7094 = vunpack.c.l.b16 %v6882
        %v7095 = vunpack.c.l.b16 %v6883
        %v7096 = vpack.c.b16 %v7089, %v7088
        %v7097 = vpack.c.b16 %v7091, %v7090
        %v7098 = vpack.c.b16 %v7093, %v7092
        %v7099 = vpack.c.b16 %v7095, %v7094
        %v7102 = vunpack.c.l.b16 %v7078
        %v7103 = vunpack.c.l.b16 %v7079
        %v7104 = vpack.c.b16 %v7103, %v7102
        %v7107 = vsel %vm2199, %v7096, 0
        %v7110 = vsel %vm2199, %v7097, 0
        %v7113 = vsel %vm2199, %v7098, 0
        %v7116 = vsel %vm2199, %v7099, 0
        %7118 = vmatpush.bf16.msra.mxu0 0
        %7119 = vmatpush.bf16.msra.mxu0 0
        %7120 = vmatpush.bf16.msra.mxu0 0
        %7121 = vmatpush.bf16.msra.mxu0 0
        %7122 = vmatpush.bf16.msra.mxu0 0
        %7123 = vmatpush.bf16.msra.mxu0 0
        %7124 = vmatpush.bf16.msra.mxu0 0
        %7125 = vmatpush.bf16.msra.mxu0 %v7104
        %7126 = vmatmul.bf16.gmra.mxu0 %v7107
        %v7127 = vpop.f32.mrf.mxu0
        %v7128 = vadd.f32 0.0, %v7127
        %v7129 = vpop.f32.mrf.mxu0
        %v7130 = vadd.f32 0.0, %v7129
        %7131 = vmatmul.bf16.gmra.mxu0 %v7110
        %v7132 = vpop.f32.mrf.mxu0
        %v7133 = vadd.f32 0.0, %v7132
        %v7134 = vpop.f32.mrf.mxu0
        %v7135 = vadd.f32 0.0, %v7134
        %7136 = vmatmul.bf16.gmra.mxu0 %v7113
        %v7137 = vpop.f32.mrf.mxu0
        %v7138 = vadd.f32 0.0, %v7137
        %v7139 = vpop.f32.mrf.mxu0
        %v7140 = vadd.f32 0.0, %v7139
        %7141 = vmatmul.bf16.gmra.mxu0 %v7116
        %v7142 = vpop.f32.mrf.mxu0
        %v7143 = vadd.f32 0.0, %v7142
        %v7144 = vpop.f32.mrf.mxu0
        %v7145 = vadd.f32 0.0, %v7144
        %7146 = vdwg.mxu0
        %v7147 = vadd.f32 %v7070, %v7128
        %v7148 = vadd.f32 %v7071, %v7130
        %v7149 = vadd.f32 %v7072, %v7133
        %v7150 = vadd.f32 %v7073, %v7135
        %v7151 = vadd.f32 %v7074, %v7138
        %v7152 = vadd.f32 %v7075, %v7140
        %v7153 = vadd.f32 %v7076, %v7143
        %v7154 = vadd.f32 %v7077, %v7145
        %v7155 = vld [vmem:[%s592 + $0x18] sm:$0xf]
        %v7156 = vld [vmem:[%s592 + $0x1c] sm:$0xf]
        %v7165 = vunpack.c.l.b16 %v6884
        %v7166 = vunpack.c.l.b16 %v6885
        %v7167 = vunpack.c.l.b16 %v6886
        %v7168 = vunpack.c.l.b16 %v6887
        %v7169 = vunpack.c.l.b16 %v6888
        %v7170 = vunpack.c.l.b16 %v6889
        %v7171 = vunpack.c.l.b16 %v6890
        %v7172 = vunpack.c.l.b16 %v6891
        %v7173 = vpack.c.b16 %v7166, %v7165
        %v7174 = vpack.c.b16 %v7168, %v7167
        %v7175 = vpack.c.b16 %v7170, %v7169
        %v7176 = vpack.c.b16 %v7172, %v7171
        %v7179 = vunpack.c.l.b16 %v7155
        %v7180 = vunpack.c.l.b16 %v7156
        %v7181 = vpack.c.b16 %v7180, %v7179
        %v7184 = vsel %vm2199, %v7173, 0
        %v7187 = vsel %vm2199, %v7174, 0
        %v7190 = vsel %vm2199, %v7175, 0
        %v7193 = vsel %vm2199, %v7176, 0
        %7195 = vmatpush.bf16.msra.mxu0 0
        %7196 = vmatpush.bf16.msra.mxu0 0
        %7197 = vmatpush.bf16.msra.mxu0 0
        %7198 = vmatpush.bf16.msra.mxu0 0
        %7199 = vmatpush.bf16.msra.mxu0 0
        %7200 = vmatpush.bf16.msra.mxu0 0
        %7201 = vmatpush.bf16.msra.mxu0 0
        %7202 = vmatpush.bf16.msra.mxu0 %v7181
        %7203 = vmatmul.bf16.gmra.mxu0 %v7184
        %v7204 = vpop.f32.mrf.mxu0
        %v7205 = vadd.f32 0.0, %v7204
        %v7206 = vpop.f32.mrf.mxu0
        %v7207 = vadd.f32 0.0, %v7206
        %7208 = vmatmul.bf16.gmra.mxu0 %v7187
        %v7209 = vpop.f32.mrf.mxu0
        %v7210 = vadd.f32 0.0, %v7209
        %v7211 = vpop.f32.mrf.mxu0
        %v7212 = vadd.f32 0.0, %v7211
        %7213 = vmatmul.bf16.gmra.mxu0 %v7190
        %v7214 = vpop.f32.mrf.mxu0
        %v7215 = vadd.f32 0.0, %v7214
        %v7216 = vpop.f32.mrf.mxu0
        %v7217 = vadd.f32 0.0, %v7216
        %7218 = vmatmul.bf16.gmra.mxu0 %v7193
        %v7219 = vpop.f32.mrf.mxu0
        %v7220 = vadd.f32 0.0, %v7219
        %v7221 = vpop.f32.mrf.mxu0
        %v7222 = vadd.f32 0.0, %v7221
        %7223 = vdwg.mxu0
        %v7224 = vadd.f32 %v7147, %v7205
        %v7225 = vadd.f32 %v7148, %v7207
        %v7226 = vadd.f32 %v7149, %v7210
        %v7227 = vadd.f32 %v7150, %v7212
        %v7228 = vadd.f32 %v7151, %v7215
        %v7229 = vadd.f32 %v7152, %v7217
        %v7230 = vadd.f32 %v7153, %v7220
        %v7231 = vadd.f32 %v7154, %v7222
        %v7232 = vld [vmem:[%s592 + $0x20] sm:$0xf]
        %v7233 = vld [vmem:[%s592 + $0x24] sm:$0xf]
        %v7242 = vunpack.c.l.b16 %v6892
        %v7243 = vunpack.c.l.b16 %v6893
        %v7244 = vunpack.c.l.b16 %v6894
        %v7245 = vunpack.c.l.b16 %v6895
        %v7246 = vunpack.c.l.b16 %v6896
        %v7247 = vunpack.c.l.b16 %v6897
        %v7248 = vunpack.c.l.b16 %v6898
        %v7249 = vunpack.c.l.b16 %v6899
        %v7250 = vpack.c.b16 %v7243, %v7242
        %v7251 = vpack.c.b16 %v7245, %v7244
        %v7252 = vpack.c.b16 %v7247, %v7246
        %v7253 = vpack.c.b16 %v7249, %v7248
        %v7256 = vunpack.c.l.b16 %v7232
        %v7257 = vunpack.c.l.b16 %v7233
        %v7258 = vpack.c.b16 %v7257, %v7256
        %v7261 = vsel %vm2199, %v7250, 0
        %v7264 = vsel %vm2199, %v7251, 0
        %v7267 = vsel %vm2199, %v7252, 0
        %v7270 = vsel %vm2199, %v7253, 0
        %7272 = vmatpush.bf16.msra.mxu0 0
        %7273 = vmatpush.bf16.msra.mxu0 0
        %7274 = vmatpush.bf16.msra.mxu0 0
        %7275 = vmatpush.bf16.msra.mxu0 0
        %7276 = vmatpush.bf16.msra.mxu0 0
        %7277 = vmatpush.bf16.msra.mxu0 0
        %7278 = vmatpush.bf16.msra.mxu0 0
        %7279 = vmatpush.bf16.msra.mxu0 %v7258
        %7280 = vmatmul.bf16.gmra.mxu0 %v7261
        %v7281 = vpop.f32.mrf.mxu0
        %v7282 = vadd.f32 0.0, %v7281
        %v7283 = vpop.f32.mrf.mxu0
        %v7284 = vadd.f32 0.0, %v7283
        %7285 = vmatmul.bf16.gmra.mxu0 %v7264
        %v7286 = vpop.f32.mrf.mxu0
        %v7287 = vadd.f32 0.0, %v7286
        %v7288 = vpop.f32.mrf.mxu0
        %v7289 = vadd.f32 0.0, %v7288
        %7290 = vmatmul.bf16.gmra.mxu0 %v7267
        %v7291 = vpop.f32.mrf.mxu0
        %v7292 = vadd.f32 0.0, %v7291
        %v7293 = vpop.f32.mrf.mxu0
        %v7294 = vadd.f32 0.0, %v7293
        %7295 = vmatmul.bf16.gmra.mxu0 %v7270
        %v7296 = vpop.f32.mrf.mxu0
        %v7297 = vadd.f32 0.0, %v7296
        %v7298 = vpop.f32.mrf.mxu0
        %v7299 = vadd.f32 0.0, %v7298
        %7300 = vdwg.mxu0
        %v7301 = vadd.f32 %v7224, %v7282
        %v7302 = vadd.f32 %v7225, %v7284
        %v7303 = vadd.f32 %v7226, %v7287
        %v7304 = vadd.f32 %v7227, %v7289
        %v7305 = vadd.f32 %v7228, %v7292
        %v7306 = vadd.f32 %v7229, %v7294
        %v7307 = vadd.f32 %v7230, %v7297
        %v7308 = vadd.f32 %v7231, %v7299
        %v7309 = vld [vmem:[%s592 + $0x28] sm:$0xf]
        %v7310 = vld [vmem:[%s592 + $0x2c] sm:$0xf]
        %v7319 = vunpack.c.l.b16 %v6900
        %v7320 = vunpack.c.l.b16 %v6901
        %v7321 = vunpack.c.l.b16 %v6902
        %v7322 = vunpack.c.l.b16 %v6903
        %v7323 = vunpack.c.l.b16 %v6904
        %v7324 = vunpack.c.l.b16 %v6905
        %v7325 = vunpack.c.l.b16 %v6906
        %v7326 = vunpack.c.l.b16 %v6907
        %v7327 = vpack.c.b16 %v7320, %v7319
        %v7328 = vpack.c.b16 %v7322, %v7321
        %v7329 = vpack.c.b16 %v7324, %v7323
        %v7330 = vpack.c.b16 %v7326, %v7325
        %v7333 = vunpack.c.l.b16 %v7309
        %v7334 = vunpack.c.l.b16 %v7310
        %v7335 = vpack.c.b16 %v7334, %v7333
        %v7338 = vsel %vm2199, %v7327, 0
        %v7341 = vsel %vm2199, %v7328, 0
        %v7344 = vsel %vm2199, %v7329, 0
        %v7347 = vsel %vm2199, %v7330, 0
        %7349 = vmatpush.bf16.msra.mxu0 0
        %7350 = vmatpush.bf16.msra.mxu0 0
        %7351 = vmatpush.bf16.msra.mxu0 0
        %7352 = vmatpush.bf16.msra.mxu0 0
        %7353 = vmatpush.bf16.msra.mxu0 0
        %7354 = vmatpush.bf16.msra.mxu0 0
        %7355 = vmatpush.bf16.msra.mxu0 0
        %7356 = vmatpush.bf16.msra.mxu0 %v7335
        %7357 = vmatmul.bf16.gmra.mxu0 %v7338
        %v7358 = vpop.f32.mrf.mxu0
        %v7359 = vadd.f32 0.0, %v7358
        %v7360 = vpop.f32.mrf.mxu0
        %v7361 = vadd.f32 0.0, %v7360
        %7362 = vmatmul.bf16.gmra.mxu0 %v7341
        %v7363 = vpop.f32.mrf.mxu0
        %v7364 = vadd.f32 0.0, %v7363
        %v7365 = vpop.f32.mrf.mxu0
        %v7366 = vadd.f32 0.0, %v7365
        %7367 = vmatmul.bf16.gmra.mxu0 %v7344
        %v7368 = vpop.f32.mrf.mxu0
        %v7369 = vadd.f32 0.0, %v7368
        %v7370 = vpop.f32.mrf.mxu0
        %v7371 = vadd.f32 0.0, %v7370
        %7372 = vmatmul.bf16.gmra.mxu0 %v7347
        %v7373 = vpop.f32.mrf.mxu0
        %v7374 = vadd.f32 0.0, %v7373
        %v7375 = vpop.f32.mrf.mxu0
        %v7376 = vadd.f32 0.0, %v7375
        %7377 = vdwg.mxu0
        %v7378 = vadd.f32 %v7301, %v7359
        %v7379 = vadd.f32 %v7302, %v7361
        %v7380 = vadd.f32 %v7303, %v7364
        %v7381 = vadd.f32 %v7304, %v7366
        %v7382 = vadd.f32 %v7305, %v7369
        %v7383 = vadd.f32 %v7306, %v7371
        %v7384 = vadd.f32 %v7307, %v7374
        %v7385 = vadd.f32 %v7308, %v7376
        %v7386 = vld [vmem:[%s592 + $0x30] sm:$0xf]
        %v7387 = vld [vmem:[%s592 + $0x34] sm:$0xf]
        %v7396 = vunpack.c.l.b16 %v6908
        %v7397 = vunpack.c.l.b16 %v6909
        %v7398 = vunpack.c.l.b16 %v6910
        %v7399 = vunpack.c.l.b16 %v6911
        %v7400 = vunpack.c.l.b16 %v6912
        %v7401 = vunpack.c.l.b16 %v6913
        %v7402 = vunpack.c.l.b16 %v6914
        %v7403 = vunpack.c.l.b16 %v6915
        %v7404 = vpack.c.b16 %v7397, %v7396
        %v7405 = vpack.c.b16 %v7399, %v7398
        %v7406 = vpack.c.b16 %v7401, %v7400
        %v7407 = vpack.c.b16 %v7403, %v7402
        %v7410 = vunpack.c.l.b16 %v7386
        %v7411 = vunpack.c.l.b16 %v7387
        %v7412 = vpack.c.b16 %v7411, %v7410
        %v7415 = vsel %vm2199, %v7404, 0
        %v7418 = vsel %vm2199, %v7405, 0
        %v7421 = vsel %vm2199, %v7406, 0
        %v7424 = vsel %vm2199, %v7407, 0
        %7426 = vmatpush.bf16.msra.mxu0 0
        %7427 = vmatpush.bf16.msra.mxu0 0
        %7428 = vmatpush.bf16.msra.mxu0 0
        %7429 = vmatpush.bf16.msra.mxu0 0
        %7430 = vmatpush.bf16.msra.mxu0 0
        %7431 = vmatpush.bf16.msra.mxu0 0
        %7432 = vmatpush.bf16.msra.mxu0 0
        %7433 = vmatpush.bf16.msra.mxu0 %v7412
        %7434 = vmatmul.bf16.gmra.mxu0 %v7415
        %v7435 = vpop.f32.mrf.mxu0
        %v7436 = vadd.f32 0.0, %v7435
        %v7437 = vpop.f32.mrf.mxu0
        %v7438 = vadd.f32 0.0, %v7437
        %7439 = vmatmul.bf16.gmra.mxu0 %v7418
        %v7440 = vpop.f32.mrf.mxu0
        %v7441 = vadd.f32 0.0, %v7440
        %v7442 = vpop.f32.mrf.mxu0
        %v7443 = vadd.f32 0.0, %v7442
        %7444 = vmatmul.bf16.gmra.mxu0 %v7421
        %v7445 = vpop.f32.mrf.mxu0
        %v7446 = vadd.f32 0.0, %v7445
        %v7447 = vpop.f32.mrf.mxu0
        %v7448 = vadd.f32 0.0, %v7447
        %7449 = vmatmul.bf16.gmra.mxu0 %v7424
        %v7450 = vpop.f32.mrf.mxu0
        %v7451 = vadd.f32 0.0, %v7450
        %v7452 = vpop.f32.mrf.mxu0
        %v7453 = vadd.f32 0.0, %v7452
        %7454 = vdwg.mxu0
        %v7455 = vadd.f32 %v7378, %v7436
        %v7456 = vadd.f32 %v7379, %v7438
        %v7457 = vadd.f32 %v7380, %v7441
        %v7458 = vadd.f32 %v7381, %v7443
        %v7459 = vadd.f32 %v7382, %v7446
        %v7460 = vadd.f32 %v7383, %v7448
        %v7461 = vadd.f32 %v7384, %v7451
        %v7462 = vadd.f32 %v7385, %v7453
        %v7463 = vld [vmem:[%s592 + $0x38] sm:$0xf]
        %v7464 = vld [vmem:[%s592 + $0x3c] sm:$0xf]
        %v7473 = vunpack.c.l.b16 %v6916
        %v7474 = vunpack.c.l.b16 %v6917
        %v7475 = vunpack.c.l.b16 %v6918
        %v7476 = vunpack.c.l.b16 %v6919
        %v7477 = vunpack.c.l.b16 %v6920
        %v7478 = vunpack.c.l.b16 %v6921
        %v7479 = vunpack.c.l.b16 %v6922
        %v7480 = vunpack.c.l.b16 %v6923
        %v7481 = vpack.c.b16 %v7474, %v7473
        %v7482 = vpack.c.b16 %v7476, %v7475
        %v7483 = vpack.c.b16 %v7478, %v7477
        %v7484 = vpack.c.b16 %v7480, %v7479
        %v7487 = vunpack.c.l.b16 %v7463
        %v7488 = vunpack.c.l.b16 %v7464
        %v7489 = vpack.c.b16 %v7488, %v7487
        %v7492 = vsel %vm2199, %v7481, 0
        %v7495 = vsel %vm2199, %v7482, 0
        %v7498 = vsel %vm2199, %v7483, 0
        %v7501 = vsel %vm2199, %v7484, 0
        %7503 = vmatpush.bf16.msra.mxu0 0
        %7504 = vmatpush.bf16.msra.mxu0 0
        %7505 = vmatpush.bf16.msra.mxu0 0
        %7506 = vmatpush.bf16.msra.mxu0 0
        %7507 = vmatpush.bf16.msra.mxu0 0
        %7508 = vmatpush.bf16.msra.mxu0 0
        %7509 = vmatpush.bf16.msra.mxu0 0
        %7510 = vmatpush.bf16.msra.mxu0 %v7489
        %7511 = vmatmul.bf16.gmra.mxu0 %v7492
        %v7512 = vpop.f32.mrf.mxu0
        %v7513 = vadd.f32 0.0, %v7512
        %v7514 = vpop.f32.mrf.mxu0
        %v7515 = vadd.f32 0.0, %v7514
        %7516 = vmatmul.bf16.gmra.mxu0 %v7495
        %v7517 = vpop.f32.mrf.mxu0
        %v7518 = vadd.f32 0.0, %v7517
        %v7519 = vpop.f32.mrf.mxu0
        %v7520 = vadd.f32 0.0, %v7519
        %7521 = vmatmul.bf16.gmra.mxu0 %v7498
        %v7522 = vpop.f32.mrf.mxu0
        %v7523 = vadd.f32 0.0, %v7522
        %v7524 = vpop.f32.mrf.mxu0
        %v7525 = vadd.f32 0.0, %v7524
        %7526 = vmatmul.bf16.gmra.mxu0 %v7501
        %v7527 = vpop.f32.mrf.mxu0
        %v7528 = vadd.f32 0.0, %v7527
        %v7529 = vpop.f32.mrf.mxu0
        %v7530 = vadd.f32 0.0, %v7529
        %7531 = vdwg.mxu0
        %v7532 = vadd.f32 %v7455, %v7513
        %v7533 = vadd.f32 %v7456, %v7515
        %v7534 = vadd.f32 %v7457, %v7518
        %v7535 = vadd.f32 %v7458, %v7520
        %v7536 = vadd.f32 %v7459, %v7523
        %v7537 = vadd.f32 %v7460, %v7525
        %v7538 = vadd.f32 %v7461, %v7528
        %v7539 = vadd.f32 %v7462, %v7530
        %v7540 = vstv %s669
        %v7541 = vmul.f32 %v7540, %v4852
        %v7542 = vmul.f32 %v7540, %v4853
        %v7543 = vmul.f32 %v7540, %v4854
        %v7544 = vmul.f32 %v7540, %v4855
        %v7545 = vmul.f32 %v7540, %v4856
        %v7546 = vmul.f32 %v7540, %v4857
        %v7547 = vmul.f32 %v7540, %v4858
        %v7548 = vmul.f32 %v7540, %v4859
        %v7549 = vmul.f32 %v7540, %v7532
        %v7550 = vmul.f32 %v7540, %v7533
        %v7551 = vmul.f32 %v7540, %v7534
        %v7552 = vmul.f32 %v7540, %v7535
        %v7553 = vmul.f32 %v7540, %v7536
        %v7554 = vmul.f32 %v7540, %v7537
        %v7555 = vmul.f32 %v7540, %v7538
        %v7556 = vmul.f32 %v7540, %v7539
        %v7557 = vadd.f32 %v651, %v7541
        %v7558 = vadd.f32 %v652, %v7542
        %v7559 = vadd.f32 %v653, %v7543
        %v7560 = vadd.f32 %v654, %v7544
        %v7561 = vadd.f32 %v655, %v7545
        %v7562 = vadd.f32 %v656, %v7546
        %v7563 = vadd.f32 %v657, %v7547
        %v7564 = vadd.f32 %v658, %v7548
        %v7565 = vadd.f32 %v659, %v7549
        %v7566 = vadd.f32 %v660, %v7550
        %v7567 = vadd.f32 %v661, %v7551
        %v7568 = vadd.f32 %v662, %v7552
        %v7569 = vadd.f32 %v663, %v7553
        %v7570 = vadd.f32 %v664, %v7554
        %v7571 = vadd.f32 %v665, %v7555
        %v7572 = vadd.f32 %v666, %v7556
        %7573 = vadd.xlane.f32.xlu0 %v7557
        %v7574 = vpop.xlane.xlu0 %7573
        %7575 = vadd.xlane.f32.xlu0 %v7558
        %v7576 = vpop.xlane.xlu0 %7575
        %7577 = vadd.xlane.f32.xlu0 %v7559
        %v7578 = vpop.xlane.xlu0 %7577
        %7579 = vadd.xlane.f32.xlu0 %v7560
        %v7580 = vpop.xlane.xlu0 %7579
        %7581 = vadd.xlane.f32.xlu0 %v7561
        %v7582 = vpop.xlane.xlu0 %7581
        %7583 = vadd.xlane.f32.xlu0 %v7562
        %v7584 = vpop.xlane.xlu0 %7583
        %7585 = vadd.xlane.f32.xlu0 %v7563
        %v7586 = vpop.xlane.xlu0 %7585
        %7587 = vadd.xlane.f32.xlu0 %v7564
        %v7588 = vpop.xlane.xlu0 %7587
        %7589 = vadd.xlane.f32.xlu0 %v7565
        %v7590 = vpop.xlane.xlu0 %7589
        %7591 = vadd.xlane.f32.xlu0 %v7566
        %v7592 = vpop.xlane.xlu0 %7591
        %7593 = vadd.xlane.f32.xlu0 %v7567
        %v7594 = vpop.xlane.xlu0 %7593
        %7595 = vadd.xlane.f32.xlu0 %v7568
        %v7596 = vpop.xlane.xlu0 %7595
        %7597 = vadd.xlane.f32.xlu0 %v7569
        %v7598 = vpop.xlane.xlu0 %7597
        %7599 = vadd.xlane.f32.xlu0 %v7570
        %v7600 = vpop.xlane.xlu0 %7599
        %7601 = vadd.xlane.f32.xlu0 %v7571
        %v7602 = vpop.xlane.xlu0 %7601
        %7603 = vadd.xlane.f32.xlu0 %v7572
        %v7604 = vpop.xlane.xlu0 %7603
        %v7605 = vmul.f32 %v7574, %v708
        %v7606 = vmul.f32 %v7576, %v708
        %v7607 = vmul.f32 %v7578, %v708
        %v7608 = vmul.f32 %v7580, %v708
        %v7609 = vmul.f32 %v7582, %v708
        %v7610 = vmul.f32 %v7584, %v708
        %v7611 = vmul.f32 %v7586, %v708
        %v7612 = vmul.f32 %v7588, %v708
        %v7613 = vmul.f32 %v7590, %v708
        %v7614 = vmul.f32 %v7592, %v708
        %v7615 = vmul.f32 %v7594, %v708
        %v7616 = vmul.f32 %v7596, %v708
        %v7617 = vmul.f32 %v7598, %v708
        %v7618 = vmul.f32 %v7600, %v708
        %v7619 = vmul.f32 %v7602, %v708
        %v7620 = vmul.f32 %v7604, %v708
        %v7621 = vmul.f32 %v7557, %v7557
        %v7622 = vmul.f32 %v7558, %v7558
        %v7623 = vmul.f32 %v7559, %v7559
        %v7624 = vmul.f32 %v7560, %v7560
        %v7625 = vmul.f32 %v7561, %v7561
        %v7626 = vmul.f32 %v7562, %v7562
        %v7627 = vmul.f32 %v7563, %v7563
        %v7628 = vmul.f32 %v7564, %v7564
        %v7629 = vmul.f32 %v7565, %v7565
        %v7630 = vmul.f32 %v7566, %v7566
        %v7631 = vmul.f32 %v7567, %v7567
        %v7632 = vmul.f32 %v7568, %v7568
        %v7633 = vmul.f32 %v7569, %v7569
        %v7634 = vmul.f32 %v7570, %v7570
        %v7635 = vmul.f32 %v7571, %v7571
        %v7636 = vmul.f32 %v7572, %v7572
        %7637 = vadd.xlane.f32.xlu0 %v7621
        %v7638 = vpop.xlane.xlu0 %7637
        %7639 = vadd.xlane.f32.xlu0 %v7622
        %v7640 = vpop.xlane.xlu0 %7639
        %7641 = vadd.xlane.f32.xlu0 %v7623
        %v7642 = vpop.xlane.xlu0 %7641
        %7643 = vadd.xlane.f32.xlu0 %v7624
        %v7644 = vpop.xlane.xlu0 %7643
        %7645 = vadd.xlane.f32.xlu0 %v7625
        %v7646 = vpop.xlane.xlu0 %7645
        %7647 = vadd.xlane.f32.xlu0 %v7626
        %v7648 = vpop.xlane.xlu0 %7647
        %7649 = vadd.xlane.f32.xlu0 %v7627
        %v7650 = vpop.xlane.xlu0 %7649
        %7651 = vadd.xlane.f32.xlu0 %v7628
        %v7652 = vpop.xlane.xlu0 %7651
        %7653 = vadd.xlane.f32.xlu0 %v7629
        %v7654 = vpop.xlane.xlu0 %7653
        %7655 = vadd.xlane.f32.xlu0 %v7630
        %v7656 = vpop.xlane.xlu0 %7655
        %7657 = vadd.xlane.f32.xlu0 %v7631
        %v7658 = vpop.xlane.xlu0 %7657
        %7659 = vadd.xlane.f32.xlu0 %v7632
        %v7660 = vpop.xlane.xlu0 %7659
        %7661 = vadd.xlane.f32.xlu0 %v7633
        %v7662 = vpop.xlane.xlu0 %7661
        %7663 = vadd.xlane.f32.xlu0 %v7634
        %v7664 = vpop.xlane.xlu0 %7663
        %7665 = vadd.xlane.f32.xlu0 %v7635
        %v7666 = vpop.xlane.xlu0 %7665
        %7667 = vadd.xlane.f32.xlu0 %v7636
        %v7668 = vpop.xlane.xlu0 %7667
        %v7669 = vmul.f32 %v7638, %v708
        %v7670 = vmul.f32 %v7640, %v708
        %v7671 = vmul.f32 %v7642, %v708
        %v7672 = vmul.f32 %v7644, %v708
        %v7673 = vmul.f32 %v7646, %v708
        %v7674 = vmul.f32 %v7648, %v708
        %v7675 = vmul.f32 %v7650, %v708
        %v7676 = vmul.f32 %v7652, %v708
        %v7677 = vmul.f32 %v7654, %v708
        %v7678 = vmul.f32 %v7656, %v708
        %v7679 = vmul.f32 %v7658, %v708
        %v7680 = vmul.f32 %v7660, %v708
        %v7681 = vmul.f32 %v7662, %v708
        %v7682 = vmul.f32 %v7664, %v708
        %v7683 = vmul.f32 %v7666, %v708
        %v7684 = vmul.f32 %v7668, %v708
        %v7685 = vmul.f32 %v7605, %v7605
        %v7686 = vmul.f32 %v7606, %v7606
        %v7687 = vmul.f32 %v7607, %v7607
        %v7688 = vmul.f32 %v7608, %v7608
        %v7689 = vmul.f32 %v7609, %v7609
        %v7690 = vmul.f32 %v7610, %v7610
        %v7691 = vmul.f32 %v7611, %v7611
        %v7692 = vmul.f32 %v7612, %v7612
        %v7693 = vmul.f32 %v7613, %v7613
        %v7694 = vmul.f32 %v7614, %v7614
        %v7695 = vmul.f32 %v7615, %v7615
        %v7696 = vmul.f32 %v7616, %v7616
        %v7697 = vmul.f32 %v7617, %v7617
        %v7698 = vmul.f32 %v7618, %v7618
        %v7699 = vmul.f32 %v7619, %v7619
        %v7700 = vmul.f32 %v7620, %v7620
        %v7701 = vsub.f32 %v7669, %v7685
        %v7702 = vsub.f32 %v7670, %v7686
        %v7703 = vsub.f32 %v7671, %v7687
        %v7704 = vsub.f32 %v7672, %v7688
        %v7705 = vsub.f32 %v7673, %v7689
        %v7706 = vsub.f32 %v7674, %v7690
        %v7707 = vsub.f32 %v7675, %v7691
        %v7708 = vsub.f32 %v7676, %v7692
        %v7709 = vsub.f32 %v7677, %v7693
        %v7710 = vsub.f32 %v7678, %v7694
        %v7711 = vsub.f32 %v7679, %v7695
        %v7712 = vsub.f32 %v7680, %v7696
        %v7713 = vsub.f32 %v7681, %v7697
        %v7714 = vsub.f32 %v7682, %v7698
        %v7715 = vsub.f32 %v7683, %v7699
        %v7716 = vsub.f32 %v7684, %v7700
        %v7717 = vsub.f32 %v7557, %v7605
        %v7718 = vsub.f32 %v7558, %v7606
        %v7719 = vsub.f32 %v7559, %v7607
        %v7720 = vsub.f32 %v7560, %v7608
        %v7721 = vsub.f32 %v7561, %v7609
        %v7722 = vsub.f32 %v7562, %v7610
        %v7723 = vsub.f32 %v7563, %v7611
        %v7724 = vsub.f32 %v7564, %v7612
        %v7725 = vsub.f32 %v7565, %v7613
        %v7726 = vsub.f32 %v7566, %v7614
        %v7727 = vsub.f32 %v7567, %v7615
        %v7728 = vsub.f32 %v7568, %v7616
        %v7729 = vsub.f32 %v7569, %v7617
        %v7730 = vsub.f32 %v7570, %v7618
        %v7731 = vsub.f32 %v7571, %v7619
        %v7732 = vsub.f32 %v7572, %v7620
        %v7733 = vadd.f32 %v7701, 1e-05
        %v7734 = vadd.f32 %v7702, 1e-05
        %v7735 = vadd.f32 %v7703, 1e-05
        %v7736 = vadd.f32 %v7704, 1e-05
        %v7737 = vadd.f32 %v7705, 1e-05
        %v7738 = vadd.f32 %v7706, 1e-05
        %v7739 = vadd.f32 %v7707, 1e-05
        %v7740 = vadd.f32 %v7708, 1e-05
        %v7741 = vadd.f32 %v7709, 1e-05
        %v7742 = vadd.f32 %v7710, 1e-05
        %v7743 = vadd.f32 %v7711, 1e-05
        %v7744 = vadd.f32 %v7712, 1e-05
        %v7745 = vadd.f32 %v7713, 1e-05
        %v7746 = vadd.f32 %v7714, 1e-05
        %v7747 = vadd.f32 %v7715, 1e-05
        %v7748 = vadd.f32 %v7716, 1e-05
        %v7749 = vrsqrt.pop %v7733
        %v7750 = vmul.f32 %v7749, %v7733
        %v7751 = vmul.f32 %v7750, %v7749
        %v7752 = vmul.f32 0.5, %v7751
        %v7753 = vsub.f32 1.5, %v7752
        %v7754 = vmul.f32 %v7749, %v7753
        %vm7755 = vweird.f32 %v7733
        %vm7756 = vweird.f32 %v7749
        %vm7757 = vmor %vm7755, %vm7756
        %v7758 = vsel %vm7757, %v7749, %v7754
        %v7759 = vrsqrt.pop %v7734
        %v7760 = vmul.f32 %v7759, %v7734
        %v7761 = vmul.f32 %v7760, %v7759
        %v7762 = vmul.f32 0.5, %v7761
        %v7763 = vsub.f32 1.5, %v7762
        %v7764 = vmul.f32 %v7759, %v7763
        %vm7765 = vweird.f32 %v7734
        %vm7766 = vweird.f32 %v7759
        %vm7767 = vmor %vm7765, %vm7766
        %v7768 = vsel %vm7767, %v7759, %v7764
        %v7769 = vrsqrt.pop %v7735
        %v7770 = vmul.f32 %v7769, %v7735
        %v7771 = vmul.f32 %v7770, %v7769
        %v7772 = vmul.f32 0.5, %v7771
        %v7773 = vsub.f32 1.5, %v7772
        %v7774 = vmul.f32 %v7769, %v7773
        %vm7775 = vweird.f32 %v7735
        %vm7776 = vweird.f32 %v7769
        %vm7777 = vmor %vm7775, %vm7776
        %v7778 = vsel %vm7777, %v7769, %v7774
        %v7779 = vrsqrt.pop %v7736
        %v7780 = vmul.f32 %v7779, %v7736
        %v7781 = vmul.f32 %v7780, %v7779
        %v7782 = vmul.f32 0.5, %v7781
        %v7783 = vsub.f32 1.5, %v7782
        %v7784 = vmul.f32 %v7779, %v7783
        %vm7785 = vweird.f32 %v7736
        %vm7786 = vweird.f32 %v7779
        %vm7787 = vmor %vm7785, %vm7786
        %v7788 = vsel %vm7787, %v7779, %v7784
        %v7789 = vrsqrt.pop %v7737
        %v7790 = vmul.f32 %v7789, %v7737
        %v7791 = vmul.f32 %v7790, %v7789
        %v7792 = vmul.f32 0.5, %v7791
        %v7793 = vsub.f32 1.5, %v7792
        %v7794 = vmul.f32 %v7789, %v7793
        %vm7795 = vweird.f32 %v7737
        %vm7796 = vweird.f32 %v7789
        %vm7797 = vmor %vm7795, %vm7796
        %v7798 = vsel %vm7797, %v7789, %v7794
        %v7799 = vrsqrt.pop %v7738
        %v7800 = vmul.f32 %v7799, %v7738
        %v7801 = vmul.f32 %v7800, %v7799
        %v7802 = vmul.f32 0.5, %v7801
        %v7803 = vsub.f32 1.5, %v7802
        %v7804 = vmul.f32 %v7799, %v7803
        %vm7805 = vweird.f32 %v7738
        %vm7806 = vweird.f32 %v7799
        %vm7807 = vmor %vm7805, %vm7806
        %v7808 = vsel %vm7807, %v7799, %v7804
        %v7809 = vrsqrt.pop %v7739
        %v7810 = vmul.f32 %v7809, %v7739
        %v7811 = vmul.f32 %v7810, %v7809
        %v7812 = vmul.f32 0.5, %v7811
        %v7813 = vsub.f32 1.5, %v7812
        %v7814 = vmul.f32 %v7809, %v7813
        %vm7815 = vweird.f32 %v7739
        %vm7816 = vweird.f32 %v7809
        %vm7817 = vmor %vm7815, %vm7816
        %v7818 = vsel %vm7817, %v7809, %v7814
        %v7819 = vrsqrt.pop %v7740
        %v7820 = vmul.f32 %v7819, %v7740
        %v7821 = vmul.f32 %v7820, %v7819
        %v7822 = vmul.f32 0.5, %v7821
        %v7823 = vsub.f32 1.5, %v7822
        %v7824 = vmul.f32 %v7819, %v7823
        %vm7825 = vweird.f32 %v7740
        %vm7826 = vweird.f32 %v7819
        %vm7827 = vmor %vm7825, %vm7826
        %v7828 = vsel %vm7827, %v7819, %v7824
        %v7829 = vrsqrt.pop %v7741
        %v7830 = vmul.f32 %v7829, %v7741
        %v7831 = vmul.f32 %v7830, %v7829
        %v7832 = vmul.f32 0.5, %v7831
        %v7833 = vsub.f32 1.5, %v7832
        %v7834 = vmul.f32 %v7829, %v7833
        %vm7835 = vweird.f32 %v7741
        %vm7836 = vweird.f32 %v7829
        %vm7837 = vmor %vm7835, %vm7836
        %v7838 = vsel %vm7837, %v7829, %v7834
        %v7839 = vrsqrt.pop %v7742
        %v7840 = vmul.f32 %v7839, %v7742
        %v7841 = vmul.f32 %v7840, %v7839
        %v7842 = vmul.f32 0.5, %v7841
        %v7843 = vsub.f32 1.5, %v7842
        %v7844 = vmul.f32 %v7839, %v7843
        %vm7845 = vweird.f32 %v7742
        %vm7846 = vweird.f32 %v7839
        %vm7847 = vmor %vm7845, %vm7846
        %v7848 = vsel %vm7847, %v7839, %v7844
        %v7849 = vrsqrt.pop %v7743
        %v7850 = vmul.f32 %v7849, %v7743
        %v7851 = vmul.f32 %v7850, %v7849
        %v7852 = vmul.f32 0.5, %v7851
        %v7853 = vsub.f32 1.5, %v7852
        %v7854 = vmul.f32 %v7849, %v7853
        %vm7855 = vweird.f32 %v7743
        %vm7856 = vweird.f32 %v7849
        %vm7857 = vmor %vm7855, %vm7856
        %v7858 = vsel %vm7857, %v7849, %v7854
        %v7859 = vrsqrt.pop %v7744
        %v7860 = vmul.f32 %v7859, %v7744
        %v7861 = vmul.f32 %v7860, %v7859
        %v7862 = vmul.f32 0.5, %v7861
        %v7863 = vsub.f32 1.5, %v7862
        %v7864 = vmul.f32 %v7859, %v7863
        %vm7865 = vweird.f32 %v7744
        %vm7866 = vweird.f32 %v7859
        %vm7867 = vmor %vm7865, %vm7866
        %v7868 = vsel %vm7867, %v7859, %v7864
        %v7869 = vrsqrt.pop %v7745
        %v7870 = vmul.f32 %v7869, %v7745
        %v7871 = vmul.f32 %v7870, %v7869
        %v7872 = vmul.f32 0.5, %v7871
        %v7873 = vsub.f32 1.5, %v7872
        %v7874 = vmul.f32 %v7869, %v7873
        %vm7875 = vweird.f32 %v7745
        %vm7876 = vweird.f32 %v7869
        %vm7877 = vmor %vm7875, %vm7876
        %v7878 = vsel %vm7877, %v7869, %v7874
        %v7879 = vrsqrt.pop %v7746
        %v7880 = vmul.f32 %v7879, %v7746
        %v7881 = vmul.f32 %v7880, %v7879
        %v7882 = vmul.f32 0.5, %v7881
        %v7883 = vsub.f32 1.5, %v7882
        %v7884 = vmul.f32 %v7879, %v7883
        %vm7885 = vweird.f32 %v7746
        %vm7886 = vweird.f32 %v7879
        %vm7887 = vmor %vm7885, %vm7886
        %v7888 = vsel %vm7887, %v7879, %v7884
        %v7889 = vrsqrt.pop %v7747
        %v7890 = vmul.f32 %v7889, %v7747
        %v7891 = vmul.f32 %v7890, %v7889
        %v7892 = vmul.f32 0.5, %v7891
        %v7893 = vsub.f32 1.5, %v7892
        %v7894 = vmul.f32 %v7889, %v7893
        %vm7895 = vweird.f32 %v7747
        %vm7896 = vweird.f32 %v7889
        %vm7897 = vmor %vm7895, %vm7896
        %v7898 = vsel %vm7897, %v7889, %v7894
        %v7899 = vrsqrt.pop %v7748
        %v7900 = vmul.f32 %v7899, %v7748
        %v7901 = vmul.f32 %v7900, %v7899
        %v7902 = vmul.f32 0.5, %v7901
        %v7903 = vsub.f32 1.5, %v7902
        %v7904 = vmul.f32 %v7899, %v7903
        %vm7905 = vweird.f32 %v7748
        %vm7906 = vweird.f32 %v7899
        %vm7907 = vmor %vm7905, %vm7906
        %v7908 = vsel %vm7907, %v7899, %v7904
        %v7909 = vmul.f32 %v7717, %v7758
        %v7910 = vmul.f32 %v7718, %v7768
        %v7911 = vmul.f32 %v7719, %v7778
        %v7912 = vmul.f32 %v7720, %v7788
        %v7913 = vmul.f32 %v7721, %v7798
        %v7914 = vmul.f32 %v7722, %v7808
        %v7915 = vmul.f32 %v7723, %v7818
        %v7916 = vmul.f32 %v7724, %v7828
        %v7917 = vmul.f32 %v7725, %v7838
        %v7918 = vmul.f32 %v7726, %v7848
        %v7919 = vmul.f32 %v7727, %v7858
        %v7920 = vmul.f32 %v7728, %v7868
        %v7921 = vmul.f32 %v7729, %v7878
        %v7922 = vmul.f32 %v7730, %v7888
        %v7923 = vmul.f32 %v7731, %v7898
        %v7924 = vmul.f32 %v7732, %v7908
        %v7925 = vmul.f32 %v7909, %v1030
        %v7926 = vmul.f32 %v7910, %v1030
        %v7927 = vmul.f32 %v7911, %v1030
        %v7928 = vmul.f32 %v7912, %v1030
        %v7929 = vmul.f32 %v7913, %v1030
        %v7930 = vmul.f32 %v7914, %v1030
        %v7931 = vmul.f32 %v7915, %v1030
        %v7932 = vmul.f32 %v7916, %v1030
        %v7933 = vmul.f32 %v7917, %v1030
        %v7934 = vmul.f32 %v7918, %v1030
        %v7935 = vmul.f32 %v7919, %v1030
        %v7936 = vmul.f32 %v7920, %v1030
        %v7937 = vmul.f32 %v7921, %v1030
        %v7938 = vmul.f32 %v7922, %v1030
        %v7939 = vmul.f32 %v7923, %v1030
        %v7940 = vmul.f32 %v7924, %v1030
        %v7941 = vadd.f32 %v7925, %v1049
        %v7942 = vadd.f32 %v7926, %v1049
        %v7943 = vadd.f32 %v7927, %v1049
        %v7944 = vadd.f32 %v7928, %v1049
        %v7945 = vadd.f32 %v7929, %v1049
        %v7946 = vadd.f32 %v7930, %v1049
        %v7947 = vadd.f32 %v7931, %v1049
        %v7948 = vadd.f32 %v7932, %v1049
        %v7949 = vadd.f32 %v7933, %v1049
        %v7950 = vadd.f32 %v7934, %v1049
        %v7951 = vadd.f32 %v7935, %v1049
        %v7952 = vadd.f32 %v7936, %v1049
        %v7953 = vadd.f32 %v7937, %v1049
        %v7954 = vadd.f32 %v7938, %v1049
        %v7955 = vadd.f32 %v7939, %v1049
        %v7956 = vadd.f32 %v7940, %v1049
        %v7957 = vpack.c.bf16 %v7942, %v7941
        %v7958 = vpack.c.bf16 %v7944, %v7943
        %v7959 = vpack.c.bf16 %v7946, %v7945
        %v7960 = vpack.c.bf16 %v7948, %v7947
        %v7961 = vpack.c.bf16 %v7950, %v7949
        %v7962 = vpack.c.bf16 %v7952, %v7951
        %v7963 = vpack.c.bf16 %v7954, %v7953
        %v7964 = vpack.c.bf16 %v7956, %v7955
        %v7965 = vld [vmem:[%s600] sm:$0xff]
        %v7966 = vld [vmem:[%s600 + $0x8] sm:$0xff]
        %v7967 = vld [vmem:[%s600 + $0x10] sm:$0xff]
        %v7968 = vld [vmem:[%s600 + $0x18] sm:$0xff]
        %v7969 = vld [vmem:[%s600 + $0x20] sm:$0xff]
        %v7970 = vld [vmem:[%s600 + $0x28] sm:$0xff]
        %v7971 = vld [vmem:[%s600 + $0x30] sm:$0xff]
        %v7972 = vld [vmem:[%s600 + $0x38] sm:$0xff]
        %v7973 = vld [vmem:[%s600 + $0x40] sm:$0xff]
        %v7974 = vld [vmem:[%s600 + $0x48] sm:$0xff]
        %v7975 = vld [vmem:[%s600 + $0x50] sm:$0xff]
        %v7976 = vld [vmem:[%s600 + $0x58] sm:$0xff]
        %v7977 = vld [vmem:[%s600 + $0x60] sm:$0xff]
        %v7978 = vld [vmem:[%s600 + $0x68] sm:$0xff]
        %v7979 = vld [vmem:[%s600 + $0x70] sm:$0xff]
        %v7980 = vld [vmem:[%s600 + $0x78] sm:$0xff]
        %v7981 = vld [vmem:[%s604] sm:$0x3]
        %v7983 = vperm.slane %v7981, 0
        %v7984 = vperm.slane %v7981, 1
        %v8003 = vunpack.c.l.b16 %v7965
        %v8004 = vunpack.c.h.b16 %v7965
        %v8005 = vunpack.c.l.b16 %v7966
        %v8006 = vunpack.c.h.b16 %v7966
        %v8007 = vunpack.c.l.b16 %v7967
        %v8008 = vunpack.c.h.b16 %v7967
        %v8009 = vunpack.c.l.b16 %v7968
        %v8010 = vunpack.c.h.b16 %v7968
        %v8011 = vunpack.c.l.b16 %v7969
        %v8012 = vunpack.c.h.b16 %v7969
        %v8013 = vunpack.c.l.b16 %v7970
        %v8014 = vunpack.c.h.b16 %v7970
        %v8015 = vunpack.c.l.b16 %v7971
        %v8016 = vunpack.c.h.b16 %v7971
        %v8017 = vunpack.c.l.b16 %v7972
        %v8018 = vunpack.c.h.b16 %v7972
        %v8019 = vunpack.c.l.b16 %v7973
        %v8020 = vunpack.c.h.b16 %v7973
        %v8021 = vunpack.c.l.b16 %v7974
        %v8022 = vunpack.c.h.b16 %v7974
        %v8023 = vunpack.c.l.b16 %v7975
        %v8024 = vunpack.c.h.b16 %v7975
        %v8025 = vunpack.c.l.b16 %v7976
        %v8026 = vunpack.c.h.b16 %v7976
        %v8027 = vunpack.c.l.b16 %v7977
        %v8028 = vunpack.c.h.b16 %v7977
        %v8029 = vunpack.c.l.b16 %v7978
        %v8030 = vunpack.c.h.b16 %v7978
        %v8031 = vunpack.c.l.b16 %v7979
        %v8032 = vunpack.c.h.b16 %v7979
        %v8033 = vunpack.c.l.b16 %v7980
        %v8034 = vunpack.c.h.b16 %v7980
        %v8035 = vpack.c.b16 %v8005, %v8003
        %v8036 = vpack.c.b16 %v8006, %v8004
        %v8037 = vpack.c.b16 %v8009, %v8007
        %v8038 = vpack.c.b16 %v8010, %v8008
        %v8039 = vpack.c.b16 %v8013, %v8011
        %v8040 = vpack.c.b16 %v8014, %v8012
        %v8041 = vpack.c.b16 %v8017, %v8015
        %v8042 = vpack.c.b16 %v8018, %v8016
        %v8043 = vpack.c.b16 %v8021, %v8019
        %v8044 = vpack.c.b16 %v8022, %v8020
        %v8045 = vpack.c.b16 %v8025, %v8023
        %v8046 = vpack.c.b16 %v8026, %v8024
        %v8047 = vpack.c.b16 %v8029, %v8027
        %v8048 = vpack.c.b16 %v8030, %v8028
        %v8049 = vpack.c.b16 %v8033, %v8031
        %v8050 = vpack.c.b16 %v8034, %v8032
        %8067 = vmatpush.bf16.msra.mxu0 %v8049
        %8068 = vmatpush.bf16.msra.mxu0 %v8047
        %8069 = vmatpush.bf16.msra.mxu0 %v8045
        %8070 = vmatpush.bf16.msra.mxu0 %v8043
        %8071 = vmatpush.bf16.msra.mxu0 %v8041
        %8072 = vmatpush.bf16.msra.mxu0 %v8039
        %8073 = vmatpush.bf16.msra.mxu0 %v8037
        %8074 = vmatpush.bf16.msra.mxu0 %v8035
        %8075 = vmatmul.bf16.gmra.mxu0 %v7957
        %v8076 = vpop.f32.mrf.mxu0
        %v8077 = vadd.f32 %v7983, %v8076
        %v8078 = vpop.f32.mrf.mxu0
        %v8079 = vadd.f32 %v7983, %v8078
        %8080 = vmatmul.bf16.gmra.mxu0 %v7958
        %v8081 = vpop.f32.mrf.mxu0
        %v8082 = vadd.f32 %v7983, %v8081
        %v8083 = vpop.f32.mrf.mxu0
        %v8084 = vadd.f32 %v7983, %v8083
        %8085 = vmatmul.bf16.gmra.mxu0 %v7959
        %v8086 = vpop.f32.mrf.mxu0
        %v8087 = vadd.f32 %v7983, %v8086
        %v8088 = vpop.f32.mrf.mxu0
        %v8089 = vadd.f32 %v7983, %v8088
        %8090 = vmatmul.bf16.gmra.mxu0 %v7960
        %v8091 = vpop.f32.mrf.mxu0
        %v8092 = vadd.f32 %v7983, %v8091
        %v8093 = vpop.f32.mrf.mxu0
        %v8094 = vadd.f32 %v7983, %v8093
        %8095 = vmatmul.bf16.gmra.mxu0 %v7961
        %v8096 = vpop.f32.mrf.mxu0
        %v8097 = vadd.f32 %v7983, %v8096
        %v8098 = vpop.f32.mrf.mxu0
        %v8099 = vadd.f32 %v7983, %v8098
        %8100 = vmatmul.bf16.gmra.mxu0 %v7962
        %v8101 = vpop.f32.mrf.mxu0
        %v8102 = vadd.f32 %v7983, %v8101
        %v8103 = vpop.f32.mrf.mxu0
        %v8104 = vadd.f32 %v7983, %v8103
        %8105 = vmatmul.bf16.gmra.mxu0 %v7963
        %v8106 = vpop.f32.mrf.mxu0
        %v8107 = vadd.f32 %v7983, %v8106
        %v8108 = vpop.f32.mrf.mxu0
        %v8109 = vadd.f32 %v7983, %v8108
        %8110 = vmatmul.bf16.gmra.mxu0 %v7964
        %v8111 = vpop.f32.mrf.mxu0
        %v8112 = vadd.f32 %v7983, %v8111
        %v8113 = vpop.f32.mrf.mxu0
        %v8114 = vadd.f32 %v7983, %v8113
        %8115 = vdwg.mxu0
        %8116 = vmatpush.bf16.msra.mxu0 %v8050
        %8117 = vmatpush.bf16.msra.mxu0 %v8048
        %8118 = vmatpush.bf16.msra.mxu0 %v8046
        %8119 = vmatpush.bf16.msra.mxu0 %v8044
        %8120 = vmatpush.bf16.msra.mxu0 %v8042
        %8121 = vmatpush.bf16.msra.mxu0 %v8040
        %8122 = vmatpush.bf16.msra.mxu0 %v8038
        %8123 = vmatpush.bf16.msra.mxu0 %v8036
        %8124 = vmatmul.bf16.gmra.mxu0 %v7957
        %v8125 = vpop.f32.mrf.mxu0
        %v8126 = vadd.f32 %v7984, %v8125
        %v8127 = vpop.f32.mrf.mxu0
        %v8128 = vadd.f32 %v7984, %v8127
        %8129 = vmatmul.bf16.gmra.mxu0 %v7958
        %v8130 = vpop.f32.mrf.mxu0
        %v8131 = vadd.f32 %v7984, %v8130
        %v8132 = vpop.f32.mrf.mxu0
        %v8133 = vadd.f32 %v7984, %v8132
        %8134 = vmatmul.bf16.gmra.mxu0 %v7959
        %v8135 = vpop.f32.mrf.mxu0
        %v8136 = vadd.f32 %v7984, %v8135
        %v8137 = vpop.f32.mrf.mxu0
        %v8138 = vadd.f32 %v7984, %v8137
        %8139 = vmatmul.bf16.gmra.mxu0 %v7960
        %v8140 = vpop.f32.mrf.mxu0
        %v8141 = vadd.f32 %v7984, %v8140
        %v8142 = vpop.f32.mrf.mxu0
        %v8143 = vadd.f32 %v7984, %v8142
        %8144 = vmatmul.bf16.gmra.mxu0 %v7961
        %v8145 = vpop.f32.mrf.mxu0
        %v8146 = vadd.f32 %v7984, %v8145
        %v8147 = vpop.f32.mrf.mxu0
        %v8148 = vadd.f32 %v7984, %v8147
        %8149 = vmatmul.bf16.gmra.mxu0 %v7962
        %v8150 = vpop.f32.mrf.mxu0
        %v8151 = vadd.f32 %v7984, %v8150
        %v8152 = vpop.f32.mrf.mxu0
        %v8153 = vadd.f32 %v7984, %v8152
        %8154 = vmatmul.bf16.gmra.mxu0 %v7963
        %v8155 = vpop.f32.mrf.mxu0
        %v8156 = vadd.f32 %v7984, %v8155
        %v8157 = vpop.f32.mrf.mxu0
        %v8158 = vadd.f32 %v7984, %v8157
        %8159 = vmatmul.bf16.gmra.mxu0 %v7964
        %v8160 = vpop.f32.mrf.mxu0
        %v8161 = vadd.f32 %v7984, %v8160
        %v8162 = vpop.f32.mrf.mxu0
        %v8163 = vadd.f32 %v7984, %v8162
        %8164 = vdwg.mxu0
        %v8165 = vmul.f32 %v8077, 0.5
        %v8166 = vmul.f32 %v8126, 0.5
        %v8167 = vmul.f32 %v8079, 0.5
        %v8168 = vmul.f32 %v8128, 0.5
        %v8169 = vmul.f32 %v8082, 0.5
        %v8170 = vmul.f32 %v8131, 0.5
        %v8171 = vmul.f32 %v8084, 0.5
        %v8172 = vmul.f32 %v8133, 0.5
        %v8173 = vmul.f32 %v8087, 0.5
        %v8174 = vmul.f32 %v8136, 0.5
        %v8175 = vmul.f32 %v8089, 0.5
        %v8176 = vmul.f32 %v8138, 0.5
        %v8177 = vmul.f32 %v8092, 0.5
        %v8178 = vmul.f32 %v8141, 0.5
        %v8179 = vmul.f32 %v8094, 0.5
        %v8180 = vmul.f32 %v8143, 0.5
        %v8181 = vmul.f32 %v8097, 0.5
        %v8182 = vmul.f32 %v8146, 0.5
        %v8183 = vmul.f32 %v8099, 0.5
        %v8184 = vmul.f32 %v8148, 0.5
        %v8185 = vmul.f32 %v8102, 0.5
        %v8186 = vmul.f32 %v8151, 0.5
        %v8187 = vmul.f32 %v8104, 0.5
        %v8188 = vmul.f32 %v8153, 0.5
        %v8189 = vmul.f32 %v8107, 0.5
        %v8190 = vmul.f32 %v8156, 0.5
        %v8191 = vmul.f32 %v8109, 0.5
        %v8192 = vmul.f32 %v8158, 0.5
        %v8193 = vmul.f32 %v8112, 0.5
        %v8194 = vmul.f32 %v8161, 0.5
        %v8195 = vmul.f32 %v8114, 0.5
        %v8196 = vmul.f32 %v8163, 0.5
        %v8197 = vmul.f32 %v8077, 0.70710677
        %v8198 = vmul.f32 %v8126, 0.70710677
        %v8199 = vmul.f32 %v8079, 0.70710677
        %v8200 = vmul.f32 %v8128, 0.70710677
        %v8201 = vmul.f32 %v8082, 0.70710677
        %v8202 = vmul.f32 %v8131, 0.70710677
        %v8203 = vmul.f32 %v8084, 0.70710677
        %v8204 = vmul.f32 %v8133, 0.70710677
        %v8205 = vmul.f32 %v8087, 0.70710677
        %v8206 = vmul.f32 %v8136, 0.70710677
        %v8207 = vmul.f32 %v8089, 0.70710677
        %v8208 = vmul.f32 %v8138, 0.70710677
        %v8209 = vmul.f32 %v8092, 0.70710677
        %v8210 = vmul.f32 %v8141, 0.70710677
        %v8211 = vmul.f32 %v8094, 0.70710677
        %v8212 = vmul.f32 %v8143, 0.70710677
        %v8213 = vmul.f32 %v8097, 0.70710677
        %v8214 = vmul.f32 %v8146, 0.70710677
        %v8215 = vmul.f32 %v8099, 0.70710677
        %v8216 = vmul.f32 %v8148, 0.70710677
        %v8217 = vmul.f32 %v8102, 0.70710677
        %v8218 = vmul.f32 %v8151, 0.70710677
        %v8219 = vmul.f32 %v8104, 0.70710677
        %v8220 = vmul.f32 %v8153, 0.70710677
        %v8221 = vmul.f32 %v8107, 0.70710677
        %v8222 = vmul.f32 %v8156, 0.70710677
        %v8223 = vmul.f32 %v8109, 0.70710677
        %v8224 = vmul.f32 %v8158, 0.70710677
        %v8225 = vmul.f32 %v8112, 0.70710677
        %v8226 = vmul.f32 %v8161, 0.70710677
        %v8227 = vmul.f32 %v8114, 0.70710677
        %v8228 = vmul.f32 %v8163, 0.70710677
        %vm8229 = vcmp.ge.f32.partialorder %v8197, 0.0
        %vm8230 = vcmp.ge.f32.partialorder %v8198, 0.0
        %vm8231 = vcmp.ge.f32.partialorder %v8199, 0.0
        %vm8232 = vcmp.ge.f32.partialorder %v8200, 0.0
        %vm8233 = vcmp.ge.f32.partialorder %v8201, 0.0
        %vm8234 = vcmp.ge.f32.partialorder %v8202, 0.0
        %vm8235 = vcmp.ge.f32.partialorder %v8203, 0.0
        %vm8236 = vcmp.ge.f32.partialorder %v8204, 0.0
        %vm8237 = vcmp.ge.f32.partialorder %v8205, 0.0
        %vm8238 = vcmp.ge.f32.partialorder %v8206, 0.0
        %vm8239 = vcmp.ge.f32.partialorder %v8207, 0.0
        %vm8240 = vcmp.ge.f32.partialorder %v8208, 0.0
        %vm8241 = vcmp.ge.f32.partialorder %v8209, 0.0
        %vm8242 = vcmp.ge.f32.partialorder %v8210, 0.0
        %vm8243 = vcmp.ge.f32.partialorder %v8211, 0.0
        %vm8244 = vcmp.ge.f32.partialorder %v8212, 0.0
        %vm8245 = vcmp.ge.f32.partialorder %v8213, 0.0
        %vm8246 = vcmp.ge.f32.partialorder %v8214, 0.0
        %vm8247 = vcmp.ge.f32.partialorder %v8215, 0.0
        %vm8248 = vcmp.ge.f32.partialorder %v8216, 0.0
        %vm8249 = vcmp.ge.f32.partialorder %v8217, 0.0
        %vm8250 = vcmp.ge.f32.partialorder %v8218, 0.0
        %vm8251 = vcmp.ge.f32.partialorder %v8219, 0.0
        %vm8252 = vcmp.ge.f32.partialorder %v8220, 0.0
        %vm8253 = vcmp.ge.f32.partialorder %v8221, 0.0
        %vm8254 = vcmp.ge.f32.partialorder %v8222, 0.0
        %vm8255 = vcmp.ge.f32.partialorder %v8223, 0.0
        %vm8256 = vcmp.ge.f32.partialorder %v8224, 0.0
        %vm8257 = vcmp.ge.f32.partialorder %v8225, 0.0
        %vm8258 = vcmp.ge.f32.partialorder %v8226, 0.0
        %vm8259 = vcmp.ge.f32.partialorder %v8227, 0.0
        %vm8260 = vcmp.ge.f32.partialorder %v8228, 0.0
        %v8261 = vsel %vm8229, 1.0, -1.0
        %v8262 = vsel %vm8230, 1.0, -1.0
        %v8263 = vsel %vm8231, 1.0, -1.0
        %v8264 = vsel %vm8232, 1.0, -1.0
        %v8265 = vsel %vm8233, 1.0, -1.0
        %v8266 = vsel %vm8234, 1.0, -1.0
        %v8267 = vsel %vm8235, 1.0, -1.0
        %v8268 = vsel %vm8236, 1.0, -1.0
        %v8269 = vsel %vm8237, 1.0, -1.0
        %v8270 = vsel %vm8238, 1.0, -1.0
        %v8271 = vsel %vm8239, 1.0, -1.0
        %v8272 = vsel %vm8240, 1.0, -1.0
        %v8273 = vsel %vm8241, 1.0, -1.0
        %v8274 = vsel %vm8242, 1.0, -1.0
        %v8275 = vsel %vm8243, 1.0, -1.0
        %v8276 = vsel %vm8244, 1.0, -1.0
        %v8277 = vsel %vm8245, 1.0, -1.0
        %v8278 = vsel %vm8246, 1.0, -1.0
        %v8279 = vsel %vm8247, 1.0, -1.0
        %v8280 = vsel %vm8248, 1.0, -1.0
        %v8281 = vsel %vm8249, 1.0, -1.0
        %v8282 = vsel %vm8250, 1.0, -1.0
        %v8283 = vsel %vm8251, 1.0, -1.0
        %v8284 = vsel %vm8252, 1.0, -1.0
        %v8285 = vsel %vm8253, 1.0, -1.0
        %v8286 = vsel %vm8254, 1.0, -1.0
        %v8287 = vsel %vm8255, 1.0, -1.0
        %v8288 = vsel %vm8256, 1.0, -1.0
        %v8289 = vsel %vm8257, 1.0, -1.0
        %v8290 = vsel %vm8258, 1.0, -1.0
        %v8291 = vsel %vm8259, 1.0, -1.0
        %v8292 = vsel %vm8260, 1.0, -1.0
        %v8293 = vand.u32 2147483647, %v8197
        %v8294 = vand.u32 2147483647, %v8198
        %v8295 = vand.u32 2147483647, %v8199
        %v8296 = vand.u32 2147483647, %v8200
        %v8297 = vand.u32 2147483647, %v8201
        %v8298 = vand.u32 2147483647, %v8202
        %v8299 = vand.u32 2147483647, %v8203
        %v8300 = vand.u32 2147483647, %v8204
        %v8301 = vand.u32 2147483647, %v8205
        %v8302 = vand.u32 2147483647, %v8206
        %v8303 = vand.u32 2147483647, %v8207
        %v8304 = vand.u32 2147483647, %v8208
        %v8305 = vand.u32 2147483647, %v8209
        %v8306 = vand.u32 2147483647, %v8210
        %v8307 = vand.u32 2147483647, %v8211
        %v8308 = vand.u32 2147483647, %v8212
        %v8309 = vand.u32 2147483647, %v8213
        %v8310 = vand.u32 2147483647, %v8214
        %v8311 = vand.u32 2147483647, %v8215
        %v8312 = vand.u32 2147483647, %v8216
        %v8313 = vand.u32 2147483647, %v8217
        %v8314 = vand.u32 2147483647, %v8218
        %v8315 = vand.u32 2147483647, %v8219
        %v8316 = vand.u32 2147483647, %v8220
        %v8317 = vand.u32 2147483647, %v8221
        %v8318 = vand.u32 2147483647, %v8222
        %v8319 = vand.u32 2147483647, %v8223
        %v8320 = vand.u32 2147483647, %v8224
        %v8321 = vand.u32 2147483647, %v8225
        %v8322 = vand.u32 2147483647, %v8226
        %v8323 = vand.u32 2147483647, %v8227
        %v8324 = vand.u32 2147483647, %v8228
        %v8325 = vmul.f32 %v8293, 0.3275911
        %v8326 = vmul.f32 %v8294, 0.3275911
        %v8327 = vmul.f32 %v8295, 0.3275911
        %v8328 = vmul.f32 %v8296, 0.3275911
        %v8329 = vmul.f32 %v8297, 0.3275911
        %v8330 = vmul.f32 %v8298, 0.3275911
        %v8331 = vmul.f32 %v8299, 0.3275911
        %v8332 = vmul.f32 %v8300, 0.3275911
        %v8333 = vmul.f32 %v8301, 0.3275911
        %v8334 = vmul.f32 %v8302, 0.3275911
        %v8335 = vmul.f32 %v8303, 0.3275911
        %v8336 = vmul.f32 %v8304, 0.3275911
        %v8337 = vmul.f32 %v8305, 0.3275911
        %v8338 = vmul.f32 %v8306, 0.3275911
        %v8339 = vmul.f32 %v8307, 0.3275911
        %v8340 = vmul.f32 %v8308, 0.3275911
        %v8341 = vmul.f32 %v8309, 0.3275911
        %v8342 = vmul.f32 %v8310, 0.3275911
        %v8343 = vmul.f32 %v8311, 0.3275911
        %v8344 = vmul.f32 %v8312, 0.3275911
        %v8345 = vmul.f32 %v8313, 0.3275911
        %v8346 = vmul.f32 %v8314, 0.3275911
        %v8347 = vmul.f32 %v8315, 0.3275911
        %v8348 = vmul.f32 %v8316, 0.3275911
        %v8349 = vmul.f32 %v8317, 0.3275911
        %v8350 = vmul.f32 %v8318, 0.3275911
        %v8351 = vmul.f32 %v8319, 0.3275911
        %v8352 = vmul.f32 %v8320, 0.3275911
        %v8353 = vmul.f32 %v8321, 0.3275911
        %v8354 = vmul.f32 %v8322, 0.3275911
        %v8355 = vmul.f32 %v8323, 0.3275911
        %v8356 = vmul.f32 %v8324, 0.3275911
        %v8357 = vadd.f32 %v8325, 1.0
        %v8358 = vadd.f32 %v8326, 1.0
        %v8359 = vadd.f32 %v8327, 1.0
        %v8360 = vadd.f32 %v8328, 1.0
        %v8361 = vadd.f32 %v8329, 1.0
        %v8362 = vadd.f32 %v8330, 1.0
        %v8363 = vadd.f32 %v8331, 1.0
        %v8364 = vadd.f32 %v8332, 1.0
        %v8365 = vadd.f32 %v8333, 1.0
        %v8366 = vadd.f32 %v8334, 1.0
        %v8367 = vadd.f32 %v8335, 1.0
        %v8368 = vadd.f32 %v8336, 1.0
        %v8369 = vadd.f32 %v8337, 1.0
        %v8370 = vadd.f32 %v8338, 1.0
        %v8371 = vadd.f32 %v8339, 1.0
        %v8372 = vadd.f32 %v8340, 1.0
        %v8373 = vadd.f32 %v8341, 1.0
        %v8374 = vadd.f32 %v8342, 1.0
        %v8375 = vadd.f32 %v8343, 1.0
        %v8376 = vadd.f32 %v8344, 1.0
        %v8377 = vadd.f32 %v8345, 1.0
        %v8378 = vadd.f32 %v8346, 1.0
        %v8379 = vadd.f32 %v8347, 1.0
        %v8380 = vadd.f32 %v8348, 1.0
        %v8381 = vadd.f32 %v8349, 1.0
        %v8382 = vadd.f32 %v8350, 1.0
        %v8383 = vadd.f32 %v8351, 1.0
        %v8384 = vadd.f32 %v8352, 1.0
        %v8385 = vadd.f32 %v8353, 1.0
        %v8386 = vadd.f32 %v8354, 1.0
        %v8387 = vadd.f32 %v8355, 1.0
        %v8388 = vadd.f32 %v8356, 1.0
        %v8389 = vrcp.pop %v8357
        %v8390 = vmul.f32 %v8357, %v8389
        %v8391 = vsub.f32 1.0, %v8390
        %v8392 = vmul.f32 %v8389, %v8391
        %v8393 = vadd.f32 %v8389, %v8392
        %vm8394 = vweird.f32 %v8357
        %vm8395 = vweird.f32 %v8389
        %vm8396 = vmor %vm8394, %vm8395
        %v8397 = vsel %vm8396, %v8389, %v8393
        %v8398 = vand.u32 2147483647, %v8357
        %vm8399 = vcmp.eq.f32.partialorder %v8398, 8.507059e+37
        %v8400 = vand.u32 %v8357, 2147483648
        %v8401 = vor.u32 1.1754944e-38, %v8400
        %v8402 = vsel %vm8399, %v8401, %v8397
        %v8403 = vmul.f32 1.0, %v8402
        %v8404 = vrcp.pop %v8358
        %v8405 = vmul.f32 %v8358, %v8404
        %v8406 = vsub.f32 1.0, %v8405
        %v8407 = vmul.f32 %v8404, %v8406
        %v8408 = vadd.f32 %v8404, %v8407
        %vm8409 = vweird.f32 %v8358
        %vm8410 = vweird.f32 %v8404
        %vm8411 = vmor %vm8409, %vm8410
        %v8412 = vsel %vm8411, %v8404, %v8408
        %v8413 = vand.u32 2147483647, %v8358
        %vm8414 = vcmp.eq.f32.partialorder %v8413, 8.507059e+37
        %v8415 = vand.u32 %v8358, 2147483648
        %v8416 = vor.u32 1.1754944e-38, %v8415
        %v8417 = vsel %vm8414, %v8416, %v8412
        %v8418 = vmul.f32 1.0, %v8417
        %v8419 = vrcp.pop %v8359
        %v8420 = vmul.f32 %v8359, %v8419
        %v8421 = vsub.f32 1.0, %v8420
        %v8422 = vmul.f32 %v8419, %v8421
        %v8423 = vadd.f32 %v8419, %v8422
        %vm8424 = vweird.f32 %v8359
        %vm8425 = vweird.f32 %v8419
        %vm8426 = vmor %vm8424, %vm8425
        %v8427 = vsel %vm8426, %v8419, %v8423
        %v8428 = vand.u32 2147483647, %v8359
        %vm8429 = vcmp.eq.f32.partialorder %v8428, 8.507059e+37
        %v8430 = vand.u32 %v8359, 2147483648
        %v8431 = vor.u32 1.1754944e-38, %v8430
        %v8432 = vsel %vm8429, %v8431, %v8427
        %v8433 = vmul.f32 1.0, %v8432
        %v8434 = vrcp.pop %v8360
        %v8435 = vmul.f32 %v8360, %v8434
        %v8436 = vsub.f32 1.0, %v8435
        %v8437 = vmul.f32 %v8434, %v8436
        %v8438 = vadd.f32 %v8434, %v8437
        %vm8439 = vweird.f32 %v8360
        %vm8440 = vweird.f32 %v8434
        %vm8441 = vmor %vm8439, %vm8440
        %v8442 = vsel %vm8441, %v8434, %v8438
        %v8443 = vand.u32 2147483647, %v8360
        %vm8444 = vcmp.eq.f32.partialorder %v8443, 8.507059e+37
        %v8445 = vand.u32 %v8360, 2147483648
        %v8446 = vor.u32 1.1754944e-38, %v8445
        %v8447 = vsel %vm8444, %v8446, %v8442
        %v8448 = vmul.f32 1.0, %v8447
        %v8449 = vrcp.pop %v8361
        %v8450 = vmul.f32 %v8361, %v8449
        %v8451 = vsub.f32 1.0, %v8450
        %v8452 = vmul.f32 %v8449, %v8451
        %v8453 = vadd.f32 %v8449, %v8452
        %vm8454 = vweird.f32 %v8361
        %vm8455 = vweird.f32 %v8449
        %vm8456 = vmor %vm8454, %vm8455
        %v8457 = vsel %vm8456, %v8449, %v8453
        %v8458 = vand.u32 2147483647, %v8361
        %vm8459 = vcmp.eq.f32.partialorder %v8458, 8.507059e+37
        %v8460 = vand.u32 %v8361, 2147483648
        %v8461 = vor.u32 1.1754944e-38, %v8460
        %v8462 = vsel %vm8459, %v8461, %v8457
        %v8463 = vmul.f32 1.0, %v8462
        %v8464 = vrcp.pop %v8362
        %v8465 = vmul.f32 %v8362, %v8464
        %v8466 = vsub.f32 1.0, %v8465
        %v8467 = vmul.f32 %v8464, %v8466
        %v8468 = vadd.f32 %v8464, %v8467
        %vm8469 = vweird.f32 %v8362
        %vm8470 = vweird.f32 %v8464
        %vm8471 = vmor %vm8469, %vm8470
        %v8472 = vsel %vm8471, %v8464, %v8468
        %v8473 = vand.u32 2147483647, %v8362
        %vm8474 = vcmp.eq.f32.partialorder %v8473, 8.507059e+37
        %v8475 = vand.u32 %v8362, 2147483648
        %v8476 = vor.u32 1.1754944e-38, %v8475
        %v8477 = vsel %vm8474, %v8476, %v8472
        %v8478 = vmul.f32 1.0, %v8477
        %v8479 = vrcp.pop %v8363
        %v8480 = vmul.f32 %v8363, %v8479
        %v8481 = vsub.f32 1.0, %v8480
        %v8482 = vmul.f32 %v8479, %v8481
        %v8483 = vadd.f32 %v8479, %v8482
        %vm8484 = vweird.f32 %v8363
        %vm8485 = vweird.f32 %v8479
        %vm8486 = vmor %vm8484, %vm8485
        %v8487 = vsel %vm8486, %v8479, %v8483
        %v8488 = vand.u32 2147483647, %v8363
        %vm8489 = vcmp.eq.f32.partialorder %v8488, 8.507059e+37
        %v8490 = vand.u32 %v8363, 2147483648
        %v8491 = vor.u32 1.1754944e-38, %v8490
        %v8492 = vsel %vm8489, %v8491, %v8487
        %v8493 = vmul.f32 1.0, %v8492
        %v8494 = vrcp.pop %v8364
        %v8495 = vmul.f32 %v8364, %v8494
        %v8496 = vsub.f32 1.0, %v8495
        %v8497 = vmul.f32 %v8494, %v8496
        %v8498 = vadd.f32 %v8494, %v8497
        %vm8499 = vweird.f32 %v8364
        %vm8500 = vweird.f32 %v8494
        %vm8501 = vmor %vm8499, %vm8500
        %v8502 = vsel %vm8501, %v8494, %v8498
        %v8503 = vand.u32 2147483647, %v8364
        %vm8504 = vcmp.eq.f32.partialorder %v8503, 8.507059e+37
        %v8505 = vand.u32 %v8364, 2147483648
        %v8506 = vor.u32 1.1754944e-38, %v8505
        %v8507 = vsel %vm8504, %v8506, %v8502
        %v8508 = vmul.f32 1.0, %v8507
        %v8509 = vrcp.pop %v8365
        %v8510 = vmul.f32 %v8365, %v8509
        %v8511 = vsub.f32 1.0, %v8510
        %v8512 = vmul.f32 %v8509, %v8511
        %v8513 = vadd.f32 %v8509, %v8512
        %vm8514 = vweird.f32 %v8365
        %vm8515 = vweird.f32 %v8509
        %vm8516 = vmor %vm8514, %vm8515
        %v8517 = vsel %vm8516, %v8509, %v8513
        %v8518 = vand.u32 2147483647, %v8365
        %vm8519 = vcmp.eq.f32.partialorder %v8518, 8.507059e+37
        %v8520 = vand.u32 %v8365, 2147483648
        %v8521 = vor.u32 1.1754944e-38, %v8520
        %v8522 = vsel %vm8519, %v8521, %v8517
        %v8523 = vmul.f32 1.0, %v8522
        %v8524 = vrcp.pop %v8366
        %v8525 = vmul.f32 %v8366, %v8524
        %v8526 = vsub.f32 1.0, %v8525
        %v8527 = vmul.f32 %v8524, %v8526
        %v8528 = vadd.f32 %v8524, %v8527
        %vm8529 = vweird.f32 %v8366
        %vm8530 = vweird.f32 %v8524
        %vm8531 = vmor %vm8529, %vm8530
        %v8532 = vsel %vm8531, %v8524, %v8528
        %v8533 = vand.u32 2147483647, %v8366
        %vm8534 = vcmp.eq.f32.partialorder %v8533, 8.507059e+37
        %v8535 = vand.u32 %v8366, 2147483648
        %v8536 = vor.u32 1.1754944e-38, %v8535
        %v8537 = vsel %vm8534, %v8536, %v8532
        %v8538 = vmul.f32 1.0, %v8537
        %v8539 = vrcp.pop %v8367
        %v8540 = vmul.f32 %v8367, %v8539
        %v8541 = vsub.f32 1.0, %v8540
        %v8542 = vmul.f32 %v8539, %v8541
        %v8543 = vadd.f32 %v8539, %v8542
        %vm8544 = vweird.f32 %v8367
        %vm8545 = vweird.f32 %v8539
        %vm8546 = vmor %vm8544, %vm8545
        %v8547 = vsel %vm8546, %v8539, %v8543
        %v8548 = vand.u32 2147483647, %v8367
        %vm8549 = vcmp.eq.f32.partialorder %v8548, 8.507059e+37
        %v8550 = vand.u32 %v8367, 2147483648
        %v8551 = vor.u32 1.1754944e-38, %v8550
        %v8552 = vsel %vm8549, %v8551, %v8547
        %v8553 = vmul.f32 1.0, %v8552
        %v8554 = vrcp.pop %v8368
        %v8555 = vmul.f32 %v8368, %v8554
        %v8556 = vsub.f32 1.0, %v8555
        %v8557 = vmul.f32 %v8554, %v8556
        %v8558 = vadd.f32 %v8554, %v8557
        %vm8559 = vweird.f32 %v8368
        %vm8560 = vweird.f32 %v8554
        %vm8561 = vmor %vm8559, %vm8560
        %v8562 = vsel %vm8561, %v8554, %v8558
        %v8563 = vand.u32 2147483647, %v8368
        %vm8564 = vcmp.eq.f32.partialorder %v8563, 8.507059e+37
        %v8565 = vand.u32 %v8368, 2147483648
        %v8566 = vor.u32 1.1754944e-38, %v8565
        %v8567 = vsel %vm8564, %v8566, %v8562
        %v8568 = vmul.f32 1.0, %v8567
        %v8569 = vrcp.pop %v8369
        %v8570 = vmul.f32 %v8369, %v8569
        %v8571 = vsub.f32 1.0, %v8570
        %v8572 = vmul.f32 %v8569, %v8571
        %v8573 = vadd.f32 %v8569, %v8572
        %vm8574 = vweird.f32 %v8369
        %vm8575 = vweird.f32 %v8569
        %vm8576 = vmor %vm8574, %vm8575
        %v8577 = vsel %vm8576, %v8569, %v8573
        %v8578 = vand.u32 2147483647, %v8369
        %vm8579 = vcmp.eq.f32.partialorder %v8578, 8.507059e+37
        %v8580 = vand.u32 %v8369, 2147483648
        %v8581 = vor.u32 1.1754944e-38, %v8580
        %v8582 = vsel %vm8579, %v8581, %v8577
        %v8583 = vmul.f32 1.0, %v8582
        %v8584 = vrcp.pop %v8370
        %v8585 = vmul.f32 %v8370, %v8584
        %v8586 = vsub.f32 1.0, %v8585
        %v8587 = vmul.f32 %v8584, %v8586
        %v8588 = vadd.f32 %v8584, %v8587
        %vm8589 = vweird.f32 %v8370
        %vm8590 = vweird.f32 %v8584
        %vm8591 = vmor %vm8589, %vm8590
        %v8592 = vsel %vm8591, %v8584, %v8588
        %v8593 = vand.u32 2147483647, %v8370
        %vm8594 = vcmp.eq.f32.partialorder %v8593, 8.507059e+37
        %v8595 = vand.u32 %v8370, 2147483648
        %v8596 = vor.u32 1.1754944e-38, %v8595
        %v8597 = vsel %vm8594, %v8596, %v8592
        %v8598 = vmul.f32 1.0, %v8597
        %v8599 = vrcp.pop %v8371
        %v8600 = vmul.f32 %v8371, %v8599
        %v8601 = vsub.f32 1.0, %v8600
        %v8602 = vmul.f32 %v8599, %v8601
        %v8603 = vadd.f32 %v8599, %v8602
        %vm8604 = vweird.f32 %v8371
        %vm8605 = vweird.f32 %v8599
        %vm8606 = vmor %vm8604, %vm8605
        %v8607 = vsel %vm8606, %v8599, %v8603
        %v8608 = vand.u32 2147483647, %v8371
        %vm8609 = vcmp.eq.f32.partialorder %v8608, 8.507059e+37
        %v8610 = vand.u32 %v8371, 2147483648
        %v8611 = vor.u32 1.1754944e-38, %v8610
        %v8612 = vsel %vm8609, %v8611, %v8607
        %v8613 = vmul.f32 1.0, %v8612
        %v8614 = vrcp.pop %v8372
        %v8615 = vmul.f32 %v8372, %v8614
        %v8616 = vsub.f32 1.0, %v8615
        %v8617 = vmul.f32 %v8614, %v8616
        %v8618 = vadd.f32 %v8614, %v8617
        %vm8619 = vweird.f32 %v8372
        %vm8620 = vweird.f32 %v8614
        %vm8621 = vmor %vm8619, %vm8620
        %v8622 = vsel %vm8621, %v8614, %v8618
        %v8623 = vand.u32 2147483647, %v8372
        %vm8624 = vcmp.eq.f32.partialorder %v8623, 8.507059e+37
        %v8625 = vand.u32 %v8372, 2147483648
        %v8626 = vor.u32 1.1754944e-38, %v8625
        %v8627 = vsel %vm8624, %v8626, %v8622
        %v8628 = vmul.f32 1.0, %v8627
        %v8629 = vrcp.pop %v8373
        %v8630 = vmul.f32 %v8373, %v8629
        %v8631 = vsub.f32 1.0, %v8630
        %v8632 = vmul.f32 %v8629, %v8631
        %v8633 = vadd.f32 %v8629, %v8632
        %vm8634 = vweird.f32 %v8373
        %vm8635 = vweird.f32 %v8629
        %vm8636 = vmor %vm8634, %vm8635
        %v8637 = vsel %vm8636, %v8629, %v8633
        %v8638 = vand.u32 2147483647, %v8373
        %vm8639 = vcmp.eq.f32.partialorder %v8638, 8.507059e+37
        %v8640 = vand.u32 %v8373, 2147483648
        %v8641 = vor.u32 1.1754944e-38, %v8640
        %v8642 = vsel %vm8639, %v8641, %v8637
        %v8643 = vmul.f32 1.0, %v8642
        %v8644 = vrcp.pop %v8374
        %v8645 = vmul.f32 %v8374, %v8644
        %v8646 = vsub.f32 1.0, %v8645
        %v8647 = vmul.f32 %v8644, %v8646
        %v8648 = vadd.f32 %v8644, %v8647
        %vm8649 = vweird.f32 %v8374
        %vm8650 = vweird.f32 %v8644
        %vm8651 = vmor %vm8649, %vm8650
        %v8652 = vsel %vm8651, %v8644, %v8648
        %v8653 = vand.u32 2147483647, %v8374
        %vm8654 = vcmp.eq.f32.partialorder %v8653, 8.507059e+37
        %v8655 = vand.u32 %v8374, 2147483648
        %v8656 = vor.u32 1.1754944e-38, %v8655
        %v8657 = vsel %vm8654, %v8656, %v8652
        %v8658 = vmul.f32 1.0, %v8657
        %v8659 = vrcp.pop %v8375
        %v8660 = vmul.f32 %v8375, %v8659
        %v8661 = vsub.f32 1.0, %v8660
        %v8662 = vmul.f32 %v8659, %v8661
        %v8663 = vadd.f32 %v8659, %v8662
        %vm8664 = vweird.f32 %v8375
        %vm8665 = vweird.f32 %v8659
        %vm8666 = vmor %vm8664, %vm8665
        %v8667 = vsel %vm8666, %v8659, %v8663
        %v8668 = vand.u32 2147483647, %v8375
        %vm8669 = vcmp.eq.f32.partialorder %v8668, 8.507059e+37
        %v8670 = vand.u32 %v8375, 2147483648
        %v8671 = vor.u32 1.1754944e-38, %v8670
        %v8672 = vsel %vm8669, %v8671, %v8667
        %v8673 = vmul.f32 1.0, %v8672
        %v8674 = vrcp.pop %v8376
        %v8675 = vmul.f32 %v8376, %v8674
        %v8676 = vsub.f32 1.0, %v8675
        %v8677 = vmul.f32 %v8674, %v8676
        %v8678 = vadd.f32 %v8674, %v8677
        %vm8679 = vweird.f32 %v8376
        %vm8680 = vweird.f32 %v8674
        %vm8681 = vmor %vm8679, %vm8680
        %v8682 = vsel %vm8681, %v8674, %v8678
        %v8683 = vand.u32 2147483647, %v8376
        %vm8684 = vcmp.eq.f32.partialorder %v8683, 8.507059e+37
        %v8685 = vand.u32 %v8376, 2147483648
        %v8686 = vor.u32 1.1754944e-38, %v8685
        %v8687 = vsel %vm8684, %v8686, %v8682
        %v8688 = vmul.f32 1.0, %v8687
        %v8689 = vrcp.pop %v8377
        %v8690 = vmul.f32 %v8377, %v8689
        %v8691 = vsub.f32 1.0, %v8690
        %v8692 = vmul.f32 %v8689, %v8691
        %v8693 = vadd.f32 %v8689, %v8692
        %vm8694 = vweird.f32 %v8377
        %vm8695 = vweird.f32 %v8689
        %vm8696 = vmor %vm8694, %vm8695
        %v8697 = vsel %vm8696, %v8689, %v8693
        %v8698 = vand.u32 2147483647, %v8377
        %vm8699 = vcmp.eq.f32.partialorder %v8698, 8.507059e+37
        %v8700 = vand.u32 %v8377, 2147483648
        %v8701 = vor.u32 1.1754944e-38, %v8700
        %v8702 = vsel %vm8699, %v8701, %v8697
        %v8703 = vmul.f32 1.0, %v8702
        %v8704 = vrcp.pop %v8378
        %v8705 = vmul.f32 %v8378, %v8704
        %v8706 = vsub.f32 1.0, %v8705
        %v8707 = vmul.f32 %v8704, %v8706
        %v8708 = vadd.f32 %v8704, %v8707
        %vm8709 = vweird.f32 %v8378
        %vm8710 = vweird.f32 %v8704
        %vm8711 = vmor %vm8709, %vm8710
        %v8712 = vsel %vm8711, %v8704, %v8708
        %v8713 = vand.u32 2147483647, %v8378
        %vm8714 = vcmp.eq.f32.partialorder %v8713, 8.507059e+37
        %v8715 = vand.u32 %v8378, 2147483648
        %v8716 = vor.u32 1.1754944e-38, %v8715
        %v8717 = vsel %vm8714, %v8716, %v8712
        %v8718 = vmul.f32 1.0, %v8717
        %v8719 = vrcp.pop %v8379
        %v8720 = vmul.f32 %v8379, %v8719
        %v8721 = vsub.f32 1.0, %v8720
        %v8722 = vmul.f32 %v8719, %v8721
        %v8723 = vadd.f32 %v8719, %v8722
        %vm8724 = vweird.f32 %v8379
        %vm8725 = vweird.f32 %v8719
        %vm8726 = vmor %vm8724, %vm8725
        %v8727 = vsel %vm8726, %v8719, %v8723
        %v8728 = vand.u32 2147483647, %v8379
        %vm8729 = vcmp.eq.f32.partialorder %v8728, 8.507059e+37
        %v8730 = vand.u32 %v8379, 2147483648
        %v8731 = vor.u32 1.1754944e-38, %v8730
        %v8732 = vsel %vm8729, %v8731, %v8727
        %v8733 = vmul.f32 1.0, %v8732
        %v8734 = vrcp.pop %v8380
        %v8735 = vmul.f32 %v8380, %v8734
        %v8736 = vsub.f32 1.0, %v8735
        %v8737 = vmul.f32 %v8734, %v8736
        %v8738 = vadd.f32 %v8734, %v8737
        %vm8739 = vweird.f32 %v8380
        %vm8740 = vweird.f32 %v8734
        %vm8741 = vmor %vm8739, %vm8740
        %v8742 = vsel %vm8741, %v8734, %v8738
        %v8743 = vand.u32 2147483647, %v8380
        %vm8744 = vcmp.eq.f32.partialorder %v8743, 8.507059e+37
        %v8745 = vand.u32 %v8380, 2147483648
        %v8746 = vor.u32 1.1754944e-38, %v8745
        %v8747 = vsel %vm8744, %v8746, %v8742
        %v8748 = vmul.f32 1.0, %v8747
        %v8749 = vrcp.pop %v8381
        %v8750 = vmul.f32 %v8381, %v8749
        %v8751 = vsub.f32 1.0, %v8750
        %v8752 = vmul.f32 %v8749, %v8751
        %v8753 = vadd.f32 %v8749, %v8752
        %vm8754 = vweird.f32 %v8381
        %vm8755 = vweird.f32 %v8749
        %vm8756 = vmor %vm8754, %vm8755
        %v8757 = vsel %vm8756, %v8749, %v8753
        %v8758 = vand.u32 2147483647, %v8381
        %vm8759 = vcmp.eq.f32.partialorder %v8758, 8.507059e+37
        %v8760 = vand.u32 %v8381, 2147483648
        %v8761 = vor.u32 1.1754944e-38, %v8760
        %v8762 = vsel %vm8759, %v8761, %v8757
        %v8763 = vmul.f32 1.0, %v8762
        %v8764 = vrcp.pop %v8382
        %v8765 = vmul.f32 %v8382, %v8764
        %v8766 = vsub.f32 1.0, %v8765
        %v8767 = vmul.f32 %v8764, %v8766
        %v8768 = vadd.f32 %v8764, %v8767
        %vm8769 = vweird.f32 %v8382
        %vm8770 = vweird.f32 %v8764
        %vm8771 = vmor %vm8769, %vm8770
        %v8772 = vsel %vm8771, %v8764, %v8768
        %v8773 = vand.u32 2147483647, %v8382
        %vm8774 = vcmp.eq.f32.partialorder %v8773, 8.507059e+37
        %v8775 = vand.u32 %v8382, 2147483648
        %v8776 = vor.u32 1.1754944e-38, %v8775
        %v8777 = vsel %vm8774, %v8776, %v8772
        %v8778 = vmul.f32 1.0, %v8777
        %v8779 = vrcp.pop %v8383
        %v8780 = vmul.f32 %v8383, %v8779
        %v8781 = vsub.f32 1.0, %v8780
        %v8782 = vmul.f32 %v8779, %v8781
        %v8783 = vadd.f32 %v8779, %v8782
        %vm8784 = vweird.f32 %v8383
        %vm8785 = vweird.f32 %v8779
        %vm8786 = vmor %vm8784, %vm8785
        %v8787 = vsel %vm8786, %v8779, %v8783
        %v8788 = vand.u32 2147483647, %v8383
        %vm8789 = vcmp.eq.f32.partialorder %v8788, 8.507059e+37
        %v8790 = vand.u32 %v8383, 2147483648
        %v8791 = vor.u32 1.1754944e-38, %v8790
        %v8792 = vsel %vm8789, %v8791, %v8787
        %v8793 = vmul.f32 1.0, %v8792
        %v8794 = vrcp.pop %v8384
        %v8795 = vmul.f32 %v8384, %v8794
        %v8796 = vsub.f32 1.0, %v8795
        %v8797 = vmul.f32 %v8794, %v8796
        %v8798 = vadd.f32 %v8794, %v8797
        %vm8799 = vweird.f32 %v8384
        %vm8800 = vweird.f32 %v8794
        %vm8801 = vmor %vm8799, %vm8800
        %v8802 = vsel %vm8801, %v8794, %v8798
        %v8803 = vand.u32 2147483647, %v8384
        %vm8804 = vcmp.eq.f32.partialorder %v8803, 8.507059e+37
        %v8805 = vand.u32 %v8384, 2147483648
        %v8806 = vor.u32 1.1754944e-38, %v8805
        %v8807 = vsel %vm8804, %v8806, %v8802
        %v8808 = vmul.f32 1.0, %v8807
        %v8809 = vrcp.pop %v8385
        %v8810 = vmul.f32 %v8385, %v8809
        %v8811 = vsub.f32 1.0, %v8810
        %v8812 = vmul.f32 %v8809, %v8811
        %v8813 = vadd.f32 %v8809, %v8812
        %vm8814 = vweird.f32 %v8385
        %vm8815 = vweird.f32 %v8809
        %vm8816 = vmor %vm8814, %vm8815
        %v8817 = vsel %vm8816, %v8809, %v8813
        %v8818 = vand.u32 2147483647, %v8385
        %vm8819 = vcmp.eq.f32.partialorder %v8818, 8.507059e+37
        %v8820 = vand.u32 %v8385, 2147483648
        %v8821 = vor.u32 1.1754944e-38, %v8820
        %v8822 = vsel %vm8819, %v8821, %v8817
        %v8823 = vmul.f32 1.0, %v8822
        %v8824 = vrcp.pop %v8386
        %v8825 = vmul.f32 %v8386, %v8824
        %v8826 = vsub.f32 1.0, %v8825
        %v8827 = vmul.f32 %v8824, %v8826
        %v8828 = vadd.f32 %v8824, %v8827
        %vm8829 = vweird.f32 %v8386
        %vm8830 = vweird.f32 %v8824
        %vm8831 = vmor %vm8829, %vm8830
        %v8832 = vsel %vm8831, %v8824, %v8828
        %v8833 = vand.u32 2147483647, %v8386
        %vm8834 = vcmp.eq.f32.partialorder %v8833, 8.507059e+37
        %v8835 = vand.u32 %v8386, 2147483648
        %v8836 = vor.u32 1.1754944e-38, %v8835
        %v8837 = vsel %vm8834, %v8836, %v8832
        %v8838 = vmul.f32 1.0, %v8837
        %v8839 = vrcp.pop %v8387
        %v8840 = vmul.f32 %v8387, %v8839
        %v8841 = vsub.f32 1.0, %v8840
        %v8842 = vmul.f32 %v8839, %v8841
        %v8843 = vadd.f32 %v8839, %v8842
        %vm8844 = vweird.f32 %v8387
        %vm8845 = vweird.f32 %v8839
        %vm8846 = vmor %vm8844, %vm8845
        %v8847 = vsel %vm8846, %v8839, %v8843
        %v8848 = vand.u32 2147483647, %v8387
        %vm8849 = vcmp.eq.f32.partialorder %v8848, 8.507059e+37
        %v8850 = vand.u32 %v8387, 2147483648
        %v8851 = vor.u32 1.1754944e-38, %v8850
        %v8852 = vsel %vm8849, %v8851, %v8847
        %v8853 = vmul.f32 1.0, %v8852
        %v8854 = vrcp.pop %v8388
        %v8855 = vmul.f32 %v8388, %v8854
        %v8856 = vsub.f32 1.0, %v8855
        %v8857 = vmul.f32 %v8854, %v8856
        %v8858 = vadd.f32 %v8854, %v8857
        %vm8859 = vweird.f32 %v8388
        %vm8860 = vweird.f32 %v8854
        %vm8861 = vmor %vm8859, %vm8860
        %v8862 = vsel %vm8861, %v8854, %v8858
        %v8863 = vand.u32 2147483647, %v8388
        %vm8864 = vcmp.eq.f32.partialorder %v8863, 8.507059e+37
        %v8865 = vand.u32 %v8388, 2147483648
        %v8866 = vor.u32 1.1754944e-38, %v8865
        %v8867 = vsel %vm8864, %v8866, %v8862
        %v8868 = vmul.f32 1.0, %v8867
        %v8869 = vmul.f32 %v8403, 1.0614054
        %v8870 = vmul.f32 %v8418, 1.0614054
        %v8871 = vmul.f32 %v8433, 1.0614054
        %v8872 = vmul.f32 %v8448, 1.0614054
        %v8873 = vmul.f32 %v8463, 1.0614054
        %v8874 = vmul.f32 %v8478, 1.0614054
        %v8875 = vmul.f32 %v8493, 1.0614054
        %v8876 = vmul.f32 %v8508, 1.0614054
        %v8877 = vmul.f32 %v8523, 1.0614054
        %v8878 = vmul.f32 %v8538, 1.0614054
        %v8879 = vmul.f32 %v8553, 1.0614054
        %v8880 = vmul.f32 %v8568, 1.0614054
        %v8881 = vmul.f32 %v8583, 1.0614054
        %v8882 = vmul.f32 %v8598, 1.0614054
        %v8883 = vmul.f32 %v8613, 1.0614054
        %v8884 = vmul.f32 %v8628, 1.0614054
        %v8885 = vmul.f32 %v8643, 1.0614054
        %v8886 = vmul.f32 %v8658, 1.0614054
        %v8887 = vmul.f32 %v8673, 1.0614054
        %v8888 = vmul.f32 %v8688, 1.0614054
        %v8889 = vmul.f32 %v8703, 1.0614054
        %v8890 = vmul.f32 %v8718, 1.0614054
        %v8891 = vmul.f32 %v8733, 1.0614054
        %v8892 = vmul.f32 %v8748, 1.0614054
        %v8893 = vmul.f32 %v8763, 1.0614054
        %v8894 = vmul.f32 %v8778, 1.0614054
        %v8895 = vmul.f32 %v8793, 1.0614054
        %v8896 = vmul.f32 %v8808, 1.0614054
        %v8897 = vmul.f32 %v8823, 1.0614054
        %v8898 = vmul.f32 %v8838, 1.0614054
        %v8899 = vmul.f32 %v8853, 1.0614054
        %v8900 = vmul.f32 %v8868, 1.0614054
        %v8901 = vadd.f32 %v8869, -1.4531521
        %v8902 = vadd.f32 %v8870, -1.4531521
        %v8903 = vadd.f32 %v8871, -1.4531521
        %v8904 = vadd.f32 %v8872, -1.4531521
        %v8905 = vadd.f32 %v8873, -1.4531521
        %v8906 = vadd.f32 %v8874, -1.4531521
        %v8907 = vadd.f32 %v8875, -1.4531521
        %v8908 = vadd.f32 %v8876, -1.4531521
        %v8909 = vadd.f32 %v8877, -1.4531521
        %v8910 = vadd.f32 %v8878, -1.4531521
        %v8911 = vadd.f32 %v8879, -1.4531521
        %v8912 = vadd.f32 %v8880, -1.4531521
        %v8913 = vadd.f32 %v8881, -1.4531521
        %v8914 = vadd.f32 %v8882, -1.4531521
        %v8915 = vadd.f32 %v8883, -1.4531521
        %v8916 = vadd.f32 %v8884, -1.4531521
        %v8917 = vadd.f32 %v8885, -1.4531521
        %v8918 = vadd.f32 %v8886, -1.4531521
        %v8919 = vadd.f32 %v8887, -1.4531521
        %v8920 = vadd.f32 %v8888, -1.4531521
        %v8921 = vadd.f32 %v8889, -1.4531521
        %v8922 = vadd.f32 %v8890, -1.4531521
        %v8923 = vadd.f32 %v8891, -1.4531521
        %v8924 = vadd.f32 %v8892, -1.4531521
        %v8925 = vadd.f32 %v8893, -1.4531521
        %v8926 = vadd.f32 %v8894, -1.4531521
        %v8927 = vadd.f32 %v8895, -1.4531521
        %v8928 = vadd.f32 %v8896, -1.4531521
        %v8929 = vadd.f32 %v8897, -1.4531521
        %v8930 = vadd.f32 %v8898, -1.4531521
        %v8931 = vadd.f32 %v8899, -1.4531521
        %v8932 = vadd.f32 %v8900, -1.4531521
        %v8933 = vmul.f32 %v8901, %v8403
        %v8934 = vmul.f32 %v8902, %v8418
        %v8935 = vmul.f32 %v8903, %v8433
        %v8936 = vmul.f32 %v8904, %v8448
        %v8937 = vmul.f32 %v8905, %v8463
        %v8938 = vmul.f32 %v8906, %v8478
        %v8939 = vmul.f32 %v8907, %v8493
        %v8940 = vmul.f32 %v8908, %v8508
        %v8941 = vmul.f32 %v8909, %v8523
        %v8942 = vmul.f32 %v8910, %v8538
        %v8943 = vmul.f32 %v8911, %v8553
        %v8944 = vmul.f32 %v8912, %v8568
        %v8945 = vmul.f32 %v8913, %v8583
        %v8946 = vmul.f32 %v8914, %v8598
        %v8947 = vmul.f32 %v8915, %v8613
        %v8948 = vmul.f32 %v8916, %v8628
        %v8949 = vmul.f32 %v8917, %v8643
        %v8950 = vmul.f32 %v8918, %v8658
        %v8951 = vmul.f32 %v8919, %v8673
        %v8952 = vmul.f32 %v8920, %v8688
        %v8953 = vmul.f32 %v8921, %v8703
        %v8954 = vmul.f32 %v8922, %v8718
        %v8955 = vmul.f32 %v8923, %v8733
        %v8956 = vmul.f32 %v8924, %v8748
        %v8957 = vmul.f32 %v8925, %v8763
        %v8958 = vmul.f32 %v8926, %v8778
        %v8959 = vmul.f32 %v8927, %v8793
        %v8960 = vmul.f32 %v8928, %v8808
        %v8961 = vmul.f32 %v8929, %v8823
        %v8962 = vmul.f32 %v8930, %v8838
        %v8963 = vmul.f32 %v8931, %v8853
        %v8964 = vmul.f32 %v8932, %v8868
        %v8965 = vadd.f32 %v8933, 1.4214138
        %v8966 = vadd.f32 %v8934, 1.4214138
        %v8967 = vadd.f32 %v8935, 1.4214138
        %v8968 = vadd.f32 %v8936, 1.4214138
        %v8969 = vadd.f32 %v8937, 1.4214138
        %v8970 = vadd.f32 %v8938, 1.4214138
        %v8971 = vadd.f32 %v8939, 1.4214138
        %v8972 = vadd.f32 %v8940, 1.4214138
        %v8973 = vadd.f32 %v8941, 1.4214138
        %v8974 = vadd.f32 %v8942, 1.4214138
        %v8975 = vadd.f32 %v8943, 1.4214138
        %v8976 = vadd.f32 %v8944, 1.4214138
        %v8977 = vadd.f32 %v8945, 1.4214138
        %v8978 = vadd.f32 %v8946, 1.4214138
        %v8979 = vadd.f32 %v8947, 1.4214138
        %v8980 = vadd.f32 %v8948, 1.4214138
        %v8981 = vadd.f32 %v8949, 1.4214138
        %v8982 = vadd.f32 %v8950, 1.4214138
        %v8983 = vadd.f32 %v8951, 1.4214138
        %v8984 = vadd.f32 %v8952, 1.4214138
        %v8985 = vadd.f32 %v8953, 1.4214138
        %v8986 = vadd.f32 %v8954, 1.4214138
        %v8987 = vadd.f32 %v8955, 1.4214138
        %v8988 = vadd.f32 %v8956, 1.4214138
        %v8989 = vadd.f32 %v8957, 1.4214138
        %v8990 = vadd.f32 %v8958, 1.4214138
        %v8991 = vadd.f32 %v8959, 1.4214138
        %v8992 = vadd.f32 %v8960, 1.4214138
        %v8993 = vadd.f32 %v8961, 1.4214138
        %v8994 = vadd.f32 %v8962, 1.4214138
        %v8995 = vadd.f32 %v8963, 1.4214138
        %v8996 = vadd.f32 %v8964, 1.4214138
        %v8997 = vmul.f32 %v8965, %v8403
        %v8998 = vmul.f32 %v8966, %v8418
        %v8999 = vmul.f32 %v8967, %v8433
        %v9000 = vmul.f32 %v8968, %v8448
        %v9001 = vmul.f32 %v8969, %v8463
        %v9002 = vmul.f32 %v8970, %v8478
        %v9003 = vmul.f32 %v8971, %v8493
        %v9004 = vmul.f32 %v8972, %v8508
        %v9005 = vmul.f32 %v8973, %v8523
        %v9006 = vmul.f32 %v8974, %v8538
        %v9007 = vmul.f32 %v8975, %v8553
        %v9008 = vmul.f32 %v8976, %v8568
        %v9009 = vmul.f32 %v8977, %v8583
        %v9010 = vmul.f32 %v8978, %v8598
        %v9011 = vmul.f32 %v8979, %v8613
        %v9012 = vmul.f32 %v8980, %v8628
        %v9013 = vmul.f32 %v8981, %v8643
        %v9014 = vmul.f32 %v8982, %v8658
        %v9015 = vmul.f32 %v8983, %v8673
        %v9016 = vmul.f32 %v8984, %v8688
        %v9017 = vmul.f32 %v8985, %v8703
        %v9018 = vmul.f32 %v8986, %v8718
        %v9019 = vmul.f32 %v8987, %v8733
        %v9020 = vmul.f32 %v8988, %v8748
        %v9021 = vmul.f32 %v8989, %v8763
        %v9022 = vmul.f32 %v8990, %v8778
        %v9023 = vmul.f32 %v8991, %v8793
        %v9024 = vmul.f32 %v8992, %v8808
        %v9025 = vmul.f32 %v8993, %v8823
        %v9026 = vmul.f32 %v8994, %v8838
        %v9027 = vmul.f32 %v8995, %v8853
        %v9028 = vmul.f32 %v8996, %v8868
        %v9029 = vadd.f32 %v8997, -0.28449672
        %v9030 = vadd.f32 %v8998, -0.28449672
        %v9031 = vadd.f32 %v8999, -0.28449672
        %v9032 = vadd.f32 %v9000, -0.28449672
        %v9033 = vadd.f32 %v9001, -0.28449672
        %v9034 = vadd.f32 %v9002, -0.28449672
        %v9035 = vadd.f32 %v9003, -0.28449672
        %v9036 = vadd.f32 %v9004, -0.28449672
        %v9037 = vadd.f32 %v9005, -0.28449672
        %v9038 = vadd.f32 %v9006, -0.28449672
        %v9039 = vadd.f32 %v9007, -0.28449672
        %v9040 = vadd.f32 %v9008, -0.28449672
        %v9041 = vadd.f32 %v9009, -0.28449672
        %v9042 = vadd.f32 %v9010, -0.28449672
        %v9043 = vadd.f32 %v9011, -0.28449672
        %v9044 = vadd.f32 %v9012, -0.28449672
        %v9045 = vadd.f32 %v9013, -0.28449672
        %v9046 = vadd.f32 %v9014, -0.28449672
        %v9047 = vadd.f32 %v9015, -0.28449672
        %v9048 = vadd.f32 %v9016, -0.28449672
        %v9049 = vadd.f32 %v9017, -0.28449672
        %v9050 = vadd.f32 %v9018, -0.28449672
        %v9051 = vadd.f32 %v9019, -0.28449672
        %v9052 = vadd.f32 %v9020, -0.28449672
        %v9053 = vadd.f32 %v9021, -0.28449672
        %v9054 = vadd.f32 %v9022, -0.28449672
        %v9055 = vadd.f32 %v9023, -0.28449672
        %v9056 = vadd.f32 %v9024, -0.28449672
        %v9057 = vadd.f32 %v9025, -0.28449672
        %v9058 = vadd.f32 %v9026, -0.28449672
        %v9059 = vadd.f32 %v9027, -0.28449672
        %v9060 = vadd.f32 %v9028, -0.28449672
        %v9061 = vmul.f32 %v9029, %v8403
        %v9062 = vmul.f32 %v9030, %v8418
        %v9063 = vmul.f32 %v9031, %v8433
        %v9064 = vmul.f32 %v9032, %v8448
        %v9065 = vmul.f32 %v9033, %v8463
        %v9066 = vmul.f32 %v9034, %v8478
        %v9067 = vmul.f32 %v9035, %v8493
        %v9068 = vmul.f32 %v9036, %v8508
        %v9069 = vmul.f32 %v9037, %v8523
        %v9070 = vmul.f32 %v9038, %v8538
        %v9071 = vmul.f32 %v9039, %v8553
        %v9072 = vmul.f32 %v9040, %v8568
        %v9073 = vmul.f32 %v9041, %v8583
        %v9074 = vmul.f32 %v9042, %v8598
        %v9075 = vmul.f32 %v9043, %v8613
        %v9076 = vmul.f32 %v9044, %v8628
        %v9077 = vmul.f32 %v9045, %v8643
        %v9078 = vmul.f32 %v9046, %v8658
        %v9079 = vmul.f32 %v9047, %v8673
        %v9080 = vmul.f32 %v9048, %v8688
        %v9081 = vmul.f32 %v9049, %v8703
        %v9082 = vmul.f32 %v9050, %v8718
        %v9083 = vmul.f32 %v9051, %v8733
        %v9084 = vmul.f32 %v9052, %v8748
        %v9085 = vmul.f32 %v9053, %v8763
        %v9086 = vmul.f32 %v9054, %v8778
        %v9087 = vmul.f32 %v9055, %v8793
        %v9088 = vmul.f32 %v9056, %v8808
        %v9089 = vmul.f32 %v9057, %v8823
        %v9090 = vmul.f32 %v9058, %v8838
        %v9091 = vmul.f32 %v9059, %v8853
        %v9092 = vmul.f32 %v9060, %v8868
        %v9093 = vadd.f32 %v9061, 0.2548296
        %v9094 = vadd.f32 %v9062, 0.2548296
        %v9095 = vadd.f32 %v9063, 0.2548296
        %v9096 = vadd.f32 %v9064, 0.2548296
        %v9097 = vadd.f32 %v9065, 0.2548296
        %v9098 = vadd.f32 %v9066, 0.2548296
        %v9099 = vadd.f32 %v9067, 0.2548296
        %v9100 = vadd.f32 %v9068, 0.2548296
        %v9101 = vadd.f32 %v9069, 0.2548296
        %v9102 = vadd.f32 %v9070, 0.2548296
        %v9103 = vadd.f32 %v9071, 0.2548296
        %v9104 = vadd.f32 %v9072, 0.2548296
        %v9105 = vadd.f32 %v9073, 0.2548296
        %v9106 = vadd.f32 %v9074, 0.2548296
        %v9107 = vadd.f32 %v9075, 0.2548296
        %v9108 = vadd.f32 %v9076, 0.2548296
        %v9109 = vadd.f32 %v9077, 0.2548296
        %v9110 = vadd.f32 %v9078, 0.2548296
        %v9111 = vadd.f32 %v9079, 0.2548296
        %v9112 = vadd.f32 %v9080, 0.2548296
        %v9113 = vadd.f32 %v9081, 0.2548296
        %v9114 = vadd.f32 %v9082, 0.2548296
        %v9115 = vadd.f32 %v9083, 0.2548296
        %v9116 = vadd.f32 %v9084, 0.2548296
        %v9117 = vadd.f32 %v9085, 0.2548296
        %v9118 = vadd.f32 %v9086, 0.2548296
        %v9119 = vadd.f32 %v9087, 0.2548296
        %v9120 = vadd.f32 %v9088, 0.2548296
        %v9121 = vadd.f32 %v9089, 0.2548296
        %v9122 = vadd.f32 %v9090, 0.2548296
        %v9123 = vadd.f32 %v9091, 0.2548296
        %v9124 = vadd.f32 %v9092, 0.2548296
        %v9125 = vmul.f32 %v9093, %v8403
        %v9126 = vmul.f32 %v9094, %v8418
        %v9127 = vmul.f32 %v9095, %v8433
        %v9128 = vmul.f32 %v9096, %v8448
        %v9129 = vmul.f32 %v9097, %v8463
        %v9130 = vmul.f32 %v9098, %v8478
        %v9131 = vmul.f32 %v9099, %v8493
        %v9132 = vmul.f32 %v9100, %v8508
        %v9133 = vmul.f32 %v9101, %v8523
        %v9134 = vmul.f32 %v9102, %v8538
        %v9135 = vmul.f32 %v9103, %v8553
        %v9136 = vmul.f32 %v9104, %v8568
        %v9137 = vmul.f32 %v9105, %v8583
        %v9138 = vmul.f32 %v9106, %v8598
        %v9139 = vmul.f32 %v9107, %v8613
        %v9140 = vmul.f32 %v9108, %v8628
        %v9141 = vmul.f32 %v9109, %v8643
        %v9142 = vmul.f32 %v9110, %v8658
        %v9143 = vmul.f32 %v9111, %v8673
        %v9144 = vmul.f32 %v9112, %v8688
        %v9145 = vmul.f32 %v9113, %v8703
        %v9146 = vmul.f32 %v9114, %v8718
        %v9147 = vmul.f32 %v9115, %v8733
        %v9148 = vmul.f32 %v9116, %v8748
        %v9149 = vmul.f32 %v9117, %v8763
        %v9150 = vmul.f32 %v9118, %v8778
        %v9151 = vmul.f32 %v9119, %v8793
        %v9152 = vmul.f32 %v9120, %v8808
        %v9153 = vmul.f32 %v9121, %v8823
        %v9154 = vmul.f32 %v9122, %v8838
        %v9155 = vmul.f32 %v9123, %v8853
        %v9156 = vmul.f32 %v9124, %v8868
        %v9157 = vsub.f32 0.0, %v8293
        %v9158 = vsub.f32 0.0, %v8294
        %v9159 = vsub.f32 0.0, %v8295
        %v9160 = vsub.f32 0.0, %v8296
        %v9161 = vsub.f32 0.0, %v8297
        %v9162 = vsub.f32 0.0, %v8298
        %v9163 = vsub.f32 0.0, %v8299
        %v9164 = vsub.f32 0.0, %v8300
        %v9165 = vsub.f32 0.0, %v8301
        %v9166 = vsub.f32 0.0, %v8302
        %v9167 = vsub.f32 0.0, %v8303
        %v9168 = vsub.f32 0.0, %v8304
        %v9169 = vsub.f32 0.0, %v8305
        %v9170 = vsub.f32 0.0, %v8306
        %v9171 = vsub.f32 0.0, %v8307
        %v9172 = vsub.f32 0.0, %v8308
        %v9173 = vsub.f32 0.0, %v8309
        %v9174 = vsub.f32 0.0, %v8310
        %v9175 = vsub.f32 0.0, %v8311
        %v9176 = vsub.f32 0.0, %v8312
        %v9177 = vsub.f32 0.0, %v8313
        %v9178 = vsub.f32 0.0, %v8314
        %v9179 = vsub.f32 0.0, %v8315
        %v9180 = vsub.f32 0.0, %v8316
        %v9181 = vsub.f32 0.0, %v8317
        %v9182 = vsub.f32 0.0, %v8318
        %v9183 = vsub.f32 0.0, %v8319
        %v9184 = vsub.f32 0.0, %v8320
        %v9185 = vsub.f32 0.0, %v8321
        %v9186 = vsub.f32 0.0, %v8322
        %v9187 = vsub.f32 0.0, %v8323
        %v9188 = vsub.f32 0.0, %v8324
        %v9189 = vmul.f32 %v9157, %v8293
        %v9190 = vmul.f32 %v9158, %v8294
        %v9191 = vmul.f32 %v9159, %v8295
        %v9192 = vmul.f32 %v9160, %v8296
        %v9193 = vmul.f32 %v9161, %v8297
        %v9194 = vmul.f32 %v9162, %v8298
        %v9195 = vmul.f32 %v9163, %v8299
        %v9196 = vmul.f32 %v9164, %v8300
        %v9197 = vmul.f32 %v9165, %v8301
        %v9198 = vmul.f32 %v9166, %v8302
        %v9199 = vmul.f32 %v9167, %v8303
        %v9200 = vmul.f32 %v9168, %v8304
        %v9201 = vmul.f32 %v9169, %v8305
        %v9202 = vmul.f32 %v9170, %v8306
        %v9203 = vmul.f32 %v9171, %v8307
        %v9204 = vmul.f32 %v9172, %v8308
        %v9205 = vmul.f32 %v9173, %v8309
        %v9206 = vmul.f32 %v9174, %v8310
        %v9207 = vmul.f32 %v9175, %v8311
        %v9208 = vmul.f32 %v9176, %v8312
        %v9209 = vmul.f32 %v9177, %v8313
        %v9210 = vmul.f32 %v9178, %v8314
        %v9211 = vmul.f32 %v9179, %v8315
        %v9212 = vmul.f32 %v9180, %v8316
        %v9213 = vmul.f32 %v9181, %v8317
        %v9214 = vmul.f32 %v9182, %v8318
        %v9215 = vmul.f32 %v9183, %v8319
        %v9216 = vmul.f32 %v9184, %v8320
        %v9217 = vmul.f32 %v9185, %v8321
        %v9218 = vmul.f32 %v9186, %v8322
        %v9219 = vmul.f32 %v9187, %v8323
        %v9220 = vmul.f32 %v9188, %v8324
        %v9221 = vmul.f32 %v9189, 1.442695
        %v9222 = vpow.pop %v9221
        %v9223 = vmul.f32 %v9190, 1.442695
        %v9224 = vpow.pop %v9223
        %v9225 = vmul.f32 %v9191, 1.442695
        %v9226 = vpow.pop %v9225
        %v9227 = vmul.f32 %v9192, 1.442695
        %v9228 = vpow.pop %v9227
        %v9229 = vmul.f32 %v9193, 1.442695
        %v9230 = vpow.pop %v9229
        %v9231 = vmul.f32 %v9194, 1.442695
        %v9232 = vpow.pop %v9231
        %v9233 = vmul.f32 %v9195, 1.442695
        %v9234 = vpow.pop %v9233
        %v9235 = vmul.f32 %v9196, 1.442695
        %v9236 = vpow.pop %v9235
        %v9237 = vmul.f32 %v9197, 1.442695
        %v9238 = vpow.pop %v9237
        %v9239 = vmul.f32 %v9198, 1.442695
        %v9240 = vpow.pop %v9239
        %v9241 = vmul.f32 %v9199, 1.442695
        %v9242 = vpow.pop %v9241
        %v9243 = vmul.f32 %v9200, 1.442695
        %v9244 = vpow.pop %v9243
        %v9245 = vmul.f32 %v9201, 1.442695
        %v9246 = vpow.pop %v9245
        %v9247 = vmul.f32 %v9202, 1.442695
        %v9248 = vpow.pop %v9247
        %v9249 = vmul.f32 %v9203, 1.442695
        %v9250 = vpow.pop %v9249
        %v9251 = vmul.f32 %v9204, 1.442695
        %v9252 = vpow.pop %v9251
        %v9253 = vmul.f32 %v9205, 1.442695
        %v9254 = vpow.pop %v9253
        %v9255 = vmul.f32 %v9206, 1.442695
        %v9256 = vpow.pop %v9255
        %v9257 = vmul.f32 %v9207, 1.442695
        %v9258 = vpow.pop %v9257
        %v9259 = vmul.f32 %v9208, 1.442695
        %v9260 = vpow.pop %v9259
        %v9261 = vmul.f32 %v9209, 1.442695
        %v9262 = vpow.pop %v9261
        %v9263 = vmul.f32 %v9210, 1.442695
        %v9264 = vpow.pop %v9263
        %v9265 = vmul.f32 %v9211, 1.442695
        %v9266 = vpow.pop %v9265
        %v9267 = vmul.f32 %v9212, 1.442695
        %v9268 = vpow.pop %v9267
        %v9269 = vmul.f32 %v9213, 1.442695
        %v9270 = vpow.pop %v9269
        %v9271 = vmul.f32 %v9214, 1.442695
        %v9272 = vpow.pop %v9271
        %v9273 = vmul.f32 %v9215, 1.442695
        %v9274 = vpow.pop %v9273
        %v9275 = vmul.f32 %v9216, 1.442695
        %v9276 = vpow.pop %v9275
        %v9277 = vmul.f32 %v9217, 1.442695
        %v9278 = vpow.pop %v9277
        %v9279 = vmul.f32 %v9218, 1.442695
        %v9280 = vpow.pop %v9279
        %v9281 = vmul.f32 %v9219, 1.442695
        %v9282 = vpow.pop %v9281
        %v9283 = vmul.f32 %v9220, 1.442695
        %v9284 = vpow.pop %v9283
        %v9285 = vmul.f32 %v9125, %v9222
        %v9286 = vmul.f32 %v9126, %v9224
        %v9287 = vmul.f32 %v9127, %v9226
        %v9288 = vmul.f32 %v9128, %v9228
        %v9289 = vmul.f32 %v9129, %v9230
        %v9290 = vmul.f32 %v9130, %v9232
        %v9291 = vmul.f32 %v9131, %v9234
        %v9292 = vmul.f32 %v9132, %v9236
        %v9293 = vmul.f32 %v9133, %v9238
        %v9294 = vmul.f32 %v9134, %v9240
        %v9295 = vmul.f32 %v9135, %v9242
        %v9296 = vmul.f32 %v9136, %v9244
        %v9297 = vmul.f32 %v9137, %v9246
        %v9298 = vmul.f32 %v9138, %v9248
        %v9299 = vmul.f32 %v9139, %v9250
        %v9300 = vmul.f32 %v9140, %v9252
        %v9301 = vmul.f32 %v9141, %v9254
        %v9302 = vmul.f32 %v9142, %v9256
        %v9303 = vmul.f32 %v9143, %v9258
        %v9304 = vmul.f32 %v9144, %v9260
        %v9305 = vmul.f32 %v9145, %v9262
        %v9306 = vmul.f32 %v9146, %v9264
        %v9307 = vmul.f32 %v9147, %v9266
        %v9308 = vmul.f32 %v9148, %v9268
        %v9309 = vmul.f32 %v9149, %v9270
        %v9310 = vmul.f32 %v9150, %v9272
        %v9311 = vmul.f32 %v9151, %v9274
        %v9312 = vmul.f32 %v9152, %v9276
        %v9313 = vmul.f32 %v9153, %v9278
        %v9314 = vmul.f32 %v9154, %v9280
        %v9315 = vmul.f32 %v9155, %v9282
        %v9316 = vmul.f32 %v9156, %v9284
        %v9317 = vsub.f32 1.0, %v9285
        %v9318 = vsub.f32 1.0, %v9286
        %v9319 = vsub.f32 1.0, %v9287
        %v9320 = vsub.f32 1.0, %v9288
        %v9321 = vsub.f32 1.0, %v9289
        %v9322 = vsub.f32 1.0, %v9290
        %v9323 = vsub.f32 1.0, %v9291
        %v9324 = vsub.f32 1.0, %v9292
        %v9325 = vsub.f32 1.0, %v9293
        %v9326 = vsub.f32 1.0, %v9294
        %v9327 = vsub.f32 1.0, %v9295
        %v9328 = vsub.f32 1.0, %v9296
        %v9329 = vsub.f32 1.0, %v9297
        %v9330 = vsub.f32 1.0, %v9298
        %v9331 = vsub.f32 1.0, %v9299
        %v9332 = vsub.f32 1.0, %v9300
        %v9333 = vsub.f32 1.0, %v9301
        %v9334 = vsub.f32 1.0, %v9302
        %v9335 = vsub.f32 1.0, %v9303
        %v9336 = vsub.f32 1.0, %v9304
        %v9337 = vsub.f32 1.0, %v9305
        %v9338 = vsub.f32 1.0, %v9306
        %v9339 = vsub.f32 1.0, %v9307
        %v9340 = vsub.f32 1.0, %v9308
        %v9341 = vsub.f32 1.0, %v9309
        %v9342 = vsub.f32 1.0, %v9310
        %v9343 = vsub.f32 1.0, %v9311
        %v9344 = vsub.f32 1.0, %v9312
        %v9345 = vsub.f32 1.0, %v9313
        %v9346 = vsub.f32 1.0, %v9314
        %v9347 = vsub.f32 1.0, %v9315
        %v9348 = vsub.f32 1.0, %v9316
        %v9349 = vmul.f32 %v8261, %v9317
        %v9350 = vmul.f32 %v8262, %v9318
        %v9351 = vmul.f32 %v8263, %v9319
        %v9352 = vmul.f32 %v8264, %v9320
        %v9353 = vmul.f32 %v8265, %v9321
        %v9354 = vmul.f32 %v8266, %v9322
        %v9355 = vmul.f32 %v8267, %v9323
        %v9356 = vmul.f32 %v8268, %v9324
        %v9357 = vmul.f32 %v8269, %v9325
        %v9358 = vmul.f32 %v8270, %v9326
        %v9359 = vmul.f32 %v8271, %v9327
        %v9360 = vmul.f32 %v8272, %v9328
        %v9361 = vmul.f32 %v8273, %v9329
        %v9362 = vmul.f32 %v8274, %v9330
        %v9363 = vmul.f32 %v8275, %v9331
        %v9364 = vmul.f32 %v8276, %v9332
        %v9365 = vmul.f32 %v8277, %v9333
        %v9366 = vmul.f32 %v8278, %v9334
        %v9367 = vmul.f32 %v8279, %v9335
        %v9368 = vmul.f32 %v8280, %v9336
        %v9369 = vmul.f32 %v8281, %v9337
        %v9370 = vmul.f32 %v8282, %v9338
        %v9371 = vmul.f32 %v8283, %v9339
        %v9372 = vmul.f32 %v8284, %v9340
        %v9373 = vmul.f32 %v8285, %v9341
        %v9374 = vmul.f32 %v8286, %v9342
        %v9375 = vmul.f32 %v8287, %v9343
        %v9376 = vmul.f32 %v8288, %v9344
        %v9377 = vmul.f32 %v8289, %v9345
        %v9378 = vmul.f32 %v8290, %v9346
        %v9379 = vmul.f32 %v8291, %v9347
        %v9380 = vmul.f32 %v8292, %v9348
        %v9381 = vadd.f32 %v9349, 1.0
        %v9382 = vadd.f32 %v9350, 1.0
        %v9383 = vadd.f32 %v9351, 1.0
        %v9384 = vadd.f32 %v9352, 1.0
        %v9385 = vadd.f32 %v9353, 1.0
        %v9386 = vadd.f32 %v9354, 1.0
        %v9387 = vadd.f32 %v9355, 1.0
        %v9388 = vadd.f32 %v9356, 1.0
        %v9389 = vadd.f32 %v9357, 1.0
        %v9390 = vadd.f32 %v9358, 1.0
        %v9391 = vadd.f32 %v9359, 1.0
        %v9392 = vadd.f32 %v9360, 1.0
        %v9393 = vadd.f32 %v9361, 1.0
        %v9394 = vadd.f32 %v9362, 1.0
        %v9395 = vadd.f32 %v9363, 1.0
        %v9396 = vadd.f32 %v9364, 1.0
        %v9397 = vadd.f32 %v9365, 1.0
        %v9398 = vadd.f32 %v9366, 1.0
        %v9399 = vadd.f32 %v9367, 1.0
        %v9400 = vadd.f32 %v9368, 1.0
        %v9401 = vadd.f32 %v9369, 1.0
        %v9402 = vadd.f32 %v9370, 1.0
        %v9403 = vadd.f32 %v9371, 1.0
        %v9404 = vadd.f32 %v9372, 1.0
        %v9405 = vadd.f32 %v9373, 1.0
        %v9406 = vadd.f32 %v9374, 1.0
        %v9407 = vadd.f32 %v9375, 1.0
        %v9408 = vadd.f32 %v9376, 1.0
        %v9409 = vadd.f32 %v9377, 1.0
        %v9410 = vadd.f32 %v9378, 1.0
        %v9411 = vadd.f32 %v9379, 1.0
        %v9412 = vadd.f32 %v9380, 1.0
        %v9413 = vmul.f32 %v8165, %v9381
        %v9414 = vmul.f32 %v8166, %v9382
        %v9415 = vmul.f32 %v8167, %v9383
        %v9416 = vmul.f32 %v8168, %v9384
        %v9417 = vmul.f32 %v8169, %v9385
        %v9418 = vmul.f32 %v8170, %v9386
        %v9419 = vmul.f32 %v8171, %v9387
        %v9420 = vmul.f32 %v8172, %v9388
        %v9421 = vmul.f32 %v8173, %v9389
        %v9422 = vmul.f32 %v8174, %v9390
        %v9423 = vmul.f32 %v8175, %v9391
        %v9424 = vmul.f32 %v8176, %v9392
        %v9425 = vmul.f32 %v8177, %v9393
        %v9426 = vmul.f32 %v8178, %v9394
        %v9427 = vmul.f32 %v8179, %v9395
        %v9428 = vmul.f32 %v8180, %v9396
        %v9429 = vmul.f32 %v8181, %v9397
        %v9430 = vmul.f32 %v8182, %v9398
        %v9431 = vmul.f32 %v8183, %v9399
        %v9432 = vmul.f32 %v8184, %v9400
        %v9433 = vmul.f32 %v8185, %v9401
        %v9434 = vmul.f32 %v8186, %v9402
        %v9435 = vmul.f32 %v8187, %v9403
        %v9436 = vmul.f32 %v8188, %v9404
        %v9437 = vmul.f32 %v8189, %v9405
        %v9438 = vmul.f32 %v8190, %v9406
        %v9439 = vmul.f32 %v8191, %v9407
        %v9440 = vmul.f32 %v8192, %v9408
        %v9441 = vmul.f32 %v8193, %v9409
        %v9442 = vmul.f32 %v8194, %v9410
        %v9443 = vmul.f32 %v8195, %v9411
        %v9444 = vmul.f32 %v8196, %v9412
        %v9445 = vpack.c.bf16 %v9415, %v9413
        %v9446 = vpack.c.bf16 %v9416, %v9414
        %v9447 = vpack.c.bf16 %v9419, %v9417
        %v9448 = vpack.c.bf16 %v9420, %v9418
        %v9449 = vpack.c.bf16 %v9423, %v9421
        %v9450 = vpack.c.bf16 %v9424, %v9422
        %v9451 = vpack.c.bf16 %v9427, %v9425
        %v9452 = vpack.c.bf16 %v9428, %v9426
        %v9453 = vpack.c.bf16 %v9431, %v9429
        %v9454 = vpack.c.bf16 %v9432, %v9430
        %v9455 = vpack.c.bf16 %v9435, %v9433
        %v9456 = vpack.c.bf16 %v9436, %v9434
        %v9457 = vpack.c.bf16 %v9439, %v9437
        %v9458 = vpack.c.bf16 %v9440, %v9438
        %v9459 = vpack.c.bf16 %v9443, %v9441
        %v9460 = vpack.c.bf16 %v9444, %v9442
        %v9461 = vld [vmem:[%s609] sm:$0xf]
        %v9462 = vld [vmem:[%s609 + $0x4] sm:$0xf]
        %v9463 = vld [vmem:[%s609 + $0x8] sm:$0xf]
        %v9464 = vld [vmem:[%s609 + $0xc] sm:$0xf]
        %v9465 = vld [vmem:[%s609 + $0x10] sm:$0xf]
        %v9466 = vld [vmem:[%s609 + $0x14] sm:$0xf]
        %v9467 = vld [vmem:[%s609 + $0x18] sm:$0xf]
        %v9468 = vld [vmem:[%s609 + $0x1c] sm:$0xf]
        %v9469 = vld [vmem:[%s609 + $0x20] sm:$0xf]
        %v9470 = vld [vmem:[%s609 + $0x24] sm:$0xf]
        %v9471 = vld [vmem:[%s609 + $0x28] sm:$0xf]
        %v9472 = vld [vmem:[%s609 + $0x2c] sm:$0xf]
        %v9473 = vld [vmem:[%s609 + $0x30] sm:$0xf]
        %v9474 = vld [vmem:[%s609 + $0x34] sm:$0xf]
        %v9475 = vld [vmem:[%s609 + $0x38] sm:$0xf]
        %v9476 = vld [vmem:[%s609 + $0x3c] sm:$0xf]
        %v9477 = vld [vmem:[%s609 + $0x40] sm:$0xf]
        %v9478 = vld [vmem:[%s609 + $0x44] sm:$0xf]
        %v9479 = vld [vmem:[%s609 + $0x48] sm:$0xf]
        %v9480 = vld [vmem:[%s609 + $0x4c] sm:$0xf]
        %v9481 = vld [vmem:[%s609 + $0x50] sm:$0xf]
        %v9482 = vld [vmem:[%s609 + $0x54] sm:$0xf]
        %v9483 = vld [vmem:[%s609 + $0x58] sm:$0xf]
        %v9484 = vld [vmem:[%s609 + $0x5c] sm:$0xf]
        %v9485 = vld [vmem:[%s609 + $0x60] sm:$0xf]
        %v9486 = vld [vmem:[%s609 + $0x64] sm:$0xf]
        %v9487 = vld [vmem:[%s609 + $0x68] sm:$0xf]
        %v9488 = vld [vmem:[%s609 + $0x6c] sm:$0xf]
        %v9489 = vld [vmem:[%s609 + $0x70] sm:$0xf]
        %v9490 = vld [vmem:[%s609 + $0x74] sm:$0xf]
        %v9491 = vld [vmem:[%s609 + $0x78] sm:$0xf]
        %v9492 = vld [vmem:[%s609 + $0x7c] sm:$0xf]
        %v9493 = vld [vmem:[%s612] sm:$0x1]
        %v9495 = vperm.slane %v9493, 0
        %v9529 = vunpack.c.l.b16 %v9461
        %v9530 = vunpack.c.l.b16 %v9462
        %v9531 = vunpack.c.l.b16 %v9463
        %v9532 = vunpack.c.l.b16 %v9464
        %v9533 = vunpack.c.l.b16 %v9465
        %v9534 = vunpack.c.l.b16 %v9466
        %v9535 = vunpack.c.l.b16 %v9467
        %v9536 = vunpack.c.l.b16 %v9468
        %v9537 = vunpack.c.l.b16 %v9469
        %v9538 = vunpack.c.l.b16 %v9470
        %v9539 = vunpack.c.l.b16 %v9471
        %v9540 = vunpack.c.l.b16 %v9472
        %v9541 = vunpack.c.l.b16 %v9473
        %v9542 = vunpack.c.l.b16 %v9474
        %v9543 = vunpack.c.l.b16 %v9475
        %v9544 = vunpack.c.l.b16 %v9476
        %v9545 = vunpack.c.l.b16 %v9477
        %v9546 = vunpack.c.l.b16 %v9478
        %v9547 = vunpack.c.l.b16 %v9479
        %v9548 = vunpack.c.l.b16 %v9480
        %v9549 = vunpack.c.l.b16 %v9481
        %v9550 = vunpack.c.l.b16 %v9482
        %v9551 = vunpack.c.l.b16 %v9483
        %v9552 = vunpack.c.l.b16 %v9484
        %v9553 = vunpack.c.l.b16 %v9485
        %v9554 = vunpack.c.l.b16 %v9486
        %v9555 = vunpack.c.l.b16 %v9487
        %v9556 = vunpack.c.l.b16 %v9488
        %v9557 = vunpack.c.l.b16 %v9489
        %v9558 = vunpack.c.l.b16 %v9490
        %v9559 = vunpack.c.l.b16 %v9491
        %v9560 = vunpack.c.l.b16 %v9492
        %v9561 = vpack.c.b16 %v9530, %v9529
        %v9562 = vpack.c.b16 %v9532, %v9531
        %v9563 = vpack.c.b16 %v9534, %v9533
        %v9564 = vpack.c.b16 %v9536, %v9535
        %v9565 = vpack.c.b16 %v9538, %v9537
        %v9566 = vpack.c.b16 %v9540, %v9539
        %v9567 = vpack.c.b16 %v9542, %v9541
        %v9568 = vpack.c.b16 %v9544, %v9543
        %v9569 = vpack.c.b16 %v9546, %v9545
        %v9570 = vpack.c.b16 %v9548, %v9547
        %v9571 = vpack.c.b16 %v9550, %v9549
        %v9572 = vpack.c.b16 %v9552, %v9551
        %v9573 = vpack.c.b16 %v9554, %v9553
        %v9574 = vpack.c.b16 %v9556, %v9555
        %v9575 = vpack.c.b16 %v9558, %v9557
        %v9576 = vpack.c.b16 %v9560, %v9559
        %9593 = vmatpush.bf16.msra.mxu0 %v9568
        %9594 = vmatpush.bf16.msra.mxu0 %v9567
        %9595 = vmatpush.bf16.msra.mxu0 %v9566
        %9596 = vmatpush.bf16.msra.mxu0 %v9565
        %9597 = vmatpush.bf16.msra.mxu0 %v9564
        %9598 = vmatpush.bf16.msra.mxu0 %v9563
        %9599 = vmatpush.bf16.msra.mxu0 %v9562
        %9600 = vmatpush.bf16.msra.mxu0 %v9561
        %9601 = vmatmul.bf16.gmra.mxu0 %v9445
        %v9602 = vpop.f32.mrf.mxu0
        %v9603 = vadd.f32 %v9495, %v9602
        %v9604 = vpop.f32.mrf.mxu0
        %v9605 = vadd.f32 %v9495, %v9604
        %9606 = vmatmul.bf16.gmra.mxu0 %v9447
        %v9607 = vpop.f32.mrf.mxu0
        %v9608 = vadd.f32 %v9495, %v9607
        %v9609 = vpop.f32.mrf.mxu0
        %v9610 = vadd.f32 %v9495, %v9609
        %9611 = vmatmul.bf16.gmra.mxu0 %v9449
        %v9612 = vpop.f32.mrf.mxu0
        %v9613 = vadd.f32 %v9495, %v9612
        %v9614 = vpop.f32.mrf.mxu0
        %v9615 = vadd.f32 %v9495, %v9614
        %9616 = vmatmul.bf16.gmra.mxu0 %v9451
        %v9617 = vpop.f32.mrf.mxu0
        %v9618 = vadd.f32 %v9495, %v9617
        %v9619 = vpop.f32.mrf.mxu0
        %v9620 = vadd.f32 %v9495, %v9619
        %9621 = vmatmul.bf16.gmra.mxu0 %v9453
        %v9622 = vpop.f32.mrf.mxu0
        %v9623 = vadd.f32 %v9495, %v9622
        %v9624 = vpop.f32.mrf.mxu0
        %v9625 = vadd.f32 %v9495, %v9624
        %9626 = vmatmul.bf16.gmra.mxu0 %v9455
        %v9627 = vpop.f32.mrf.mxu0
        %v9628 = vadd.f32 %v9495, %v9627
        %v9629 = vpop.f32.mrf.mxu0
        %v9630 = vadd.f32 %v9495, %v9629
        %9631 = vmatmul.bf16.gmra.mxu0 %v9457
        %v9632 = vpop.f32.mrf.mxu0
        %v9633 = vadd.f32 %v9495, %v9632
        %v9634 = vpop.f32.mrf.mxu0
        %v9635 = vadd.f32 %v9495, %v9634
        %9636 = vmatmul.bf16.gmra.mxu0 %v9459
        %v9637 = vpop.f32.mrf.mxu0
        %v9638 = vadd.f32 %v9495, %v9637
        %v9639 = vpop.f32.mrf.mxu0
        %v9640 = vadd.f32 %v9495, %v9639
        %9641 = vdwg.mxu0
        %9642 = vmatpush.bf16.msra.mxu0 %v9576
        %9643 = vmatpush.bf16.msra.mxu0 %v9575
        %9644 = vmatpush.bf16.msra.mxu0 %v9574
        %9645 = vmatpush.bf16.msra.mxu0 %v9573
        %9646 = vmatpush.bf16.msra.mxu0 %v9572
        %9647 = vmatpush.bf16.msra.mxu0 %v9571
        %9648 = vmatpush.bf16.msra.mxu0 %v9570
        %9649 = vmatpush.bf16.msra.mxu0 %v9569
        %9650 = vmatmul.bf16.gmra.mxu0 %v9446
        %v9651 = vpop.f32.mrf.mxu0
        %v9652 = vadd.f32 %v9603, %v9651
        %v9653 = vpop.f32.mrf.mxu0
        %v9654 = vadd.f32 %v9605, %v9653
        %9655 = vmatmul.bf16.gmra.mxu0 %v9448
        %v9656 = vpop.f32.mrf.mxu0
        %v9657 = vadd.f32 %v9608, %v9656
        %v9658 = vpop.f32.mrf.mxu0
        %v9659 = vadd.f32 %v9610, %v9658
        %9660 = vmatmul.bf16.gmra.mxu0 %v9450
        %v9661 = vpop.f32.mrf.mxu0
        %v9662 = vadd.f32 %v9613, %v9661
        %v9663 = vpop.f32.mrf.mxu0
        %v9664 = vadd.f32 %v9615, %v9663
        %9665 = vmatmul.bf16.gmra.mxu0 %v9452
        %v9666 = vpop.f32.mrf.mxu0
        %v9667 = vadd.f32 %v9618, %v9666
        %v9668 = vpop.f32.mrf.mxu0
        %v9669 = vadd.f32 %v9620, %v9668
        %9670 = vmatmul.bf16.gmra.mxu0 %v9454
        %v9671 = vpop.f32.mrf.mxu0
        %v9672 = vadd.f32 %v9623, %v9671
        %v9673 = vpop.f32.mrf.mxu0
        %v9674 = vadd.f32 %v9625, %v9673
        %9675 = vmatmul.bf16.gmra.mxu0 %v9456
        %v9676 = vpop.f32.mrf.mxu0
        %v9677 = vadd.f32 %v9628, %v9676
        %v9678 = vpop.f32.mrf.mxu0
        %v9679 = vadd.f32 %v9630, %v9678
        %9680 = vmatmul.bf16.gmra.mxu0 %v9458
        %v9681 = vpop.f32.mrf.mxu0
        %v9682 = vadd.f32 %v9633, %v9681
        %v9683 = vpop.f32.mrf.mxu0
        %v9684 = vadd.f32 %v9635, %v9683
        %9685 = vmatmul.bf16.gmra.mxu0 %v9460
        %v9686 = vpop.f32.mrf.mxu0
        %v9687 = vadd.f32 %v9638, %v9686
        %v9688 = vpop.f32.mrf.mxu0
        %v9689 = vadd.f32 %v9640, %v9688
        %9690 = vdwg.mxu0
        %v9691 = vmul.f32 %v7540, %v9652
        %v9692 = vmul.f32 %v7540, %v9654
        %v9693 = vmul.f32 %v7540, %v9657
        %v9694 = vmul.f32 %v7540, %v9659
        %v9695 = vmul.f32 %v7540, %v9662
        %v9696 = vmul.f32 %v7540, %v9664
        %v9697 = vmul.f32 %v7540, %v9667
        %v9698 = vmul.f32 %v7540, %v9669
        %v9699 = vmul.f32 %v7540, %v9672
        %v9700 = vmul.f32 %v7540, %v9674
        %v9701 = vmul.f32 %v7540, %v9677
        %v9702 = vmul.f32 %v7540, %v9679
        %v9703 = vmul.f32 %v7540, %v9682
        %v9704 = vmul.f32 %v7540, %v9684
        %v9705 = vmul.f32 %v7540, %v9687
        %v9706 = vmul.f32 %v7540, %v9689
        %v9707 = vadd.f32 %v7557, %v9691
        %v9708 = vadd.f32 %v7558, %v9692
        %v9709 = vadd.f32 %v7559, %v9693
        %v9710 = vadd.f32 %v7560, %v9694
        %v9711 = vadd.f32 %v7561, %v9695
        %v9712 = vadd.f32 %v7562, %v9696
        %v9713 = vadd.f32 %v7563, %v9697
        %v9714 = vadd.f32 %v7564, %v9698
        %v9715 = vadd.f32 %v7565, %v9699
        %v9716 = vadd.f32 %v7566, %v9700
        %v9717 = vadd.f32 %v7567, %v9701
        %v9718 = vadd.f32 %v7568, %v9702
        %v9719 = vadd.f32 %v7569, %v9703
        %v9720 = vadd.f32 %v7570, %v9704
        %v9721 = vadd.f32 %v7571, %v9705
        %v9722 = vadd.f32 %v7572, %v9706
        %9723 = vst [vmem:[%s565] sm:$0xff] %v9707
        %9724 = vst [vmem:[%s565 + $0x8] sm:$0xff] %v9708
        %9725 = vst [vmem:[%s565 + $0x10] sm:$0xff] %v9709
        %9726 = vst [vmem:[%s565 + $0x18] sm:$0xff] %v9710
        %9727 = vst [vmem:[%s565 + $0x20] sm:$0xff] %v9711
        %9728 = vst [vmem:[%s565 + $0x28] sm:$0xff] %v9712
        %9729 = vst [vmem:[%s565 + $0x30] sm:$0xff] %v9713
        %9730 = vst [vmem:[%s565 + $0x38] sm:$0xff] %v9714
        %9731 = vst [vmem:[%s565 + $0x40] sm:$0xff] %v9715
        %9732 = vst [vmem:[%s565 + $0x48] sm:$0xff] %v9716
        %9733 = vst [vmem:[%s565 + $0x50] sm:$0xff] %v9717
        %9734 = vst [vmem:[%s565 + $0x58] sm:$0xff] %v9718
        %9735 = vst [vmem:[%s565 + $0x60] sm:$0xff] %v9719
        %9736 = vst [vmem:[%s565 + $0x68] sm:$0xff] %v9720
        %9737 = vst [vmem:[%s565 + $0x70] sm:$0xff] %v9721
        %9738 = vst [vmem:[%s565 + $0x78] sm:$0xff] %v9722
        %s9739 = sand.u32 %s354, 1
        %s9740 = scalar_lea.sflag [#allocation3], %s9739
        %s9741 = sand.u32 %s354, 1
        %s9742 = smul.addr %s9741, 128
        %s9743 = scalar_lea.vmem [#allocation5], %s9742
        // Predicated region
        $region77: #{transformer_encoder_pallas.1} parent=67 // pred_check
          %p9744 = pneg %p364
        $region78: #{transformer_encoder_pallas.1} parent=67 // pred_check_branch
          %9746 = sbr.rel (%p9744) target = $region80
        $region79: #{transformer_encoder_pallas.1} parent=67 // pred_region
          %s9747 = smul.u32 2, %s31
          %9749 = vsyncadd %s9740, 0
          %s9750 = smul.addr %s9747, 8
          %s9751 = smul.addr %s9750, 8
          %s9752 = scalar_lea.hbm %s12, %s9751
          %s9753 = sshll.u32 %s9743, 4
          %s9754 = int_to_ptr.vmem [resolvable:$true] %s9753
          %s9755 = sshll.u32 %s9752, 4
          %s9756 = int_to_ptr.hbm [resolvable:$true] %s9755
          %9761 = dma.vmem_to_hbm [thread:$0]  %s9754, 2048, %s9756, %s9740, 128, 128, 8
        $region80: #{transformer_encoder_pallas.1} parent=67 // pred_fallthru
          _
      $region68: #{transformer_encoder_pallas.1} parent=5 // pred_fallthru
        _
      %p9762 = scmp.le.s32.totalorder 2, %s22
      // Predicated region
      $region81: #{transformer_encoder_pallas.1} parent=5 // pred_check
        %p9763 = pneg %p9762
      $region82: #{transformer_encoder_pallas.1} parent=5 // pred_check_branch
        %9765 = sbr.rel (%p9763) target = $region84
      $region83: #{transformer_encoder_pallas.1} parent=5 // pred_region
        %s9766 = ssub.s32 %s22, 2
        // Predicated region
        $region85: #{transformer_encoder_pallas.1} parent=83 // pred_check
          %p9767 = pneg %p370
        $region86: #{transformer_encoder_pallas.1} parent=83 // pred_check_branch
          %9769 = sbr.rel (%p9767) target = $region88
        $region87: #{transformer_encoder_pallas.1} parent=83 // pred_region
          %s9770 = sand.u32 %s355, 1
          %s9771 = scalar_lea.sflag [#allocation3], %s9770
          %s9772 = sand.u32 %s355, 1
          %s9773 = smul.addr %s9772, 128
          %s9774 = scalar_lea.vmem [#allocation5], %s9773
          %9776 = dma.done %s9771, 2048
        $region88: #{transformer_encoder_pallas.1} parent=83 // pred_fallthru
          _
      $region84: #{transformer_encoder_pallas.1} parent=5 // pred_fallthru
        _
    $region6: #{transformer_encoder_pallas.1} parent=1 // loop_footer
      %s26 = sadd.s32 1, %s22
    $region7: #{transformer_encoder_pallas.1} parent=1 // loop_footer_branch
      %21 = sbr.rel target = $region3
    $region8: #{transformer_encoder_pallas.1} parent=1 // loop_exit
      _
    %9777 = vsyncpa [#allocation3], 1
    %s9778 = scalar_lea.sflag [#allocation3], 1
    %9779 = vsyncpa %s9778, 1
    %9780 = vsyncpa [#allocation4], 1
    %s9781 = scalar_lea.sflag [#allocation4], 1
    %9782 = vsyncpa %s9781, 1

</llo_original>
